<compile_context>
chip_gen: v7x
topology: tpu7x:2x2x1
jax: 0.10.0
libtpu: 0.0.40
codegen_flags: <defaults>
</compile_context>

<pallas_src>
import functools

import jax
import jax.numpy as jnp
from jax import lax
from jax.experimental import pallas as pl
from jax.experimental.pallas import tpu as pltpu

EPS = 1e-5    # nn.InstanceNorm2d default eps (affine=False, no running stats)
EXTRA = 8     # spare scratch rows so the largest conv tap's slice stays in-bounds


def _make_kernel(H, W, C, compute_dtype):
    Wp = W + 2                  # padded width
    HWp = H * Wp                # rows of the row-padded layout (cols W, W+1 junk)
    PAD_ROWS = (H + 2) * Wp     # rows of a full (H+2, W+2) padded plane, flattened
    inv_count = 1.0 / float(H * W)

    def build_padded_plane(pad_ref, src, col):
        """Write the reflection-padded plane of `src` into pad_ref (vectorized).

        `src` is a (HWp, C) row-padded image: row r = pixel (r//Wp, r%Wp),
        columns W and W+1 are junk.  Storing src at flat offset Wp+1 places the
        interior of the padded plane (cell (h+1, w+1) == flat r + Wp + 1); the
        junk columns land on border cells, which are then rebuilt with three
        shifted full-slab loads + a column select and two (Wp, C) row copies.
        """
        pad_ref[pl.ds(Wp + 1, HWp), :] = src
        a = pad_ref[pl.ds(Wp, HWp), :]          # padded rows 1..H, current values
        ap2 = pad_ref[pl.ds(Wp + 2, HWp), :]    # value of col j+2 (left border j==0)
        am2 = pad_ref[pl.ds(Wp - 2, HWp), :]    # value of col j-2 (right border j==W+1)
        fixed = jnp.where(col == 0, ap2, jnp.where(col == W + 1, am2, a))
        pad_ref[pl.ds(Wp, HWp), :] = fixed
        # top border row <- padded row 2, bottom border row <- padded row H-1
        pad_ref[pl.ds(0, Wp), :] = pad_ref[pl.ds(2 * Wp, Wp), :]
        pad_ref[pl.ds((H + 1) * Wp, Wp), :] = pad_ref[pl.ds((H - 1) * Wp, Wp), :]

    def conv3x3(pad_ref, w_ref, b_ref):
        # 9 shifted contiguous-slice matmuls accumulated in fp32 on the MXU:
        #   out[r] += plane[r + dy*Wp + dx] @ W[dy, dx]
        # Operands are already in the compute dtype (single up-front cast).
        acc = None
        for t in range(9):
            dy, dx = divmod(t, 3)
            xs = pad_ref[pl.ds(dy * Wp + dx, HWp), :]
            p = jnp.dot(xs, w_ref[t], preferred_element_type=jnp.float32)
            acc = p if acc is None else acc + p
        return acc + b_ref[...].astype(jnp.float32)

    def instance_norm(y, valid):
        # Two-pass masked statistics (junk columns excluded), fp32, rsqrt * mul.
        ys = jnp.where(valid, y, 0.0)
        mean = jnp.sum(ys, axis=0, keepdims=True) * inv_count
        d = jnp.where(valid, y - mean, 0.0)
        var = jnp.sum(d * d, axis=0, keepdims=True) * inv_count
        return (y - mean) * lax.rsqrt(var + EPS)

    def kernel(x_ref, w1_ref, b1_ref, w2_ref, b2_ref, o_ref, pad_ref):
        # Column index of the row-padded layout, built in-kernel (no mask DMA).
        col = lax.broadcasted_iota(jnp.int32, (HWp, 1), 0) % Wp
        valid = col < W

        # Zero the spare tail rows once; they are only read by the taps of the
        # two junk output rows (masked out of the stats, sliced in the wrapper).
        @pl.when(pl.program_id(0) == 0)
        def _():
            pad_ref[pl.ds(PAD_ROWS, EXTRA), :] = jnp.zeros((EXTRA, C), compute_dtype)

        # ---- stage 1: ReflPad(x) -> Conv3x3 -> InstanceNorm -> ReLU ----
        build_padded_plane(pad_ref, x_ref[...].astype(compute_dtype), col)
        h1 = jnp.maximum(instance_norm(conv3x3(pad_ref, w1_ref, b1_ref), valid), 0.0)

        # ---- stage 2: ReflPad(h1) -> Conv3x3 -> InstanceNorm (scratch reused) ----
        build_padded_plane(pad_ref, h1.astype(compute_dtype), col)
        y2 = instance_norm(conv3x3(pad_ref, w2_ref, b2_ref), valid)

        # ---- residual add in fp32 (x re-read from its VMEM block) ----
        o_ref[...] = x_ref[...] + y2

    return kernel


def _weights_to_taps(w_oihw, dtype):
    # PyTorch Conv2d weight (Cout, Cin, 3, 3) -> (9, Cin, Cout), tap order (dy, dx).
    cout, cin = w_oihw.shape[0], w_oihw.shape[1]
    return jnp.transpose(w_oihw, (2, 3, 1, 0)).reshape(9, cin, cout).astype(dtype)


@functools.partial(jax.jit, static_argnames=("use_bf16",))
def residual_block_forward(x_nchw, w1, b1, w2, b2, use_bf16=True):
    """x_nchw: (N, C, H, W) float32; conv weights in PyTorch OIHW layout."""
    N, C, H, W = x_nchw.shape
    Wp = W + 2
    HWp = H * Wp
    compute_dtype = jnp.bfloat16 if use_bf16 else jnp.float32
    itemsize = 2 if use_bf16 else 4

    # Layout glue only: NCHW -> NHWC, constant-pad width W -> W+2 ("row-padded"
    # layout; junk columns handled in-kernel) and flatten.  No XLA reflect-pad:
    # the reflection border is built inside the kernel.
    x_nhwc = jnp.transpose(x_nchw, (0, 2, 3, 1)).astype(jnp.float32)
    xrp = jnp.pad(x_nhwc, ((0, 0), (0, 0), (0, 2), (0, 0))).reshape(N, HWp, C)

    w1_t = _weights_to_taps(w1, compute_dtype)
    w2_t = _weights_to_taps(w2, compute_dtype)
    b1_r = b1.reshape(1, C).astype(jnp.float32)
    b2_r = b2.reshape(1, C).astype(jnp.float32)

    # Raise the scoped VMEM limit for production-size instances (v5e 16 MiB /
    # v6e 32 MiB defaults).  v7x (64 MiB physical) needs the row-tiling TODO.
    slab = HWp * C * 4
    est = (4 * slab                                    # x + out, double-buffered
           + ((H + 2) * Wp + EXTRA) * C * itemsize     # padded-plane scratch
           + 4 * 9 * C * C * itemsize                  # both weight tensors, dbl-buffered
           + 6 * slab)                                 # live fp32 temporaries
    vmem_limit = None if est < 12 * (1 << 20) else min(int(est * 1.25), 96 * (1 << 20))

    kernel = _make_kernel(H, W, C, compute_dtype)

    out_rp = pl.pallas_call(
        kernel,
        out_shape=jax.ShapeDtypeStruct((N, HWp, C), jnp.float32),
        grid=(N,),
        in_specs=[
            pl.BlockSpec((None, HWp, C), lambda n: (n, 0, 0)),   # x (row-padded, fp32)
            pl.BlockSpec((9, C, C), lambda n: (0, 0, 0)),        # conv1 taps
            pl.BlockSpec((1, C), lambda n: (0, 0)),              # conv1 bias
            pl.BlockSpec((9, C, C), lambda n: (0, 0, 0)),        # conv2 taps
            pl.BlockSpec((1, C), lambda n: (0, 0)),              # conv2 bias
        ],
        out_specs=pl.BlockSpec((None, HWp, C), lambda n: (n, 0, 0)),
        scratch_shapes=[pltpu.VMEM(((H + 2) * Wp + EXTRA, C), compute_dtype)],
        compiler_params=pltpu.CompilerParams(
            dimension_semantics=("parallel",),
            vmem_limit_bytes=vmem_limit),
    )(xrp, w1_t, b1_r, w2_t, b2_r)

    # Drop the 2 junk columns per row (fuses with the NHWC->NCHW transpose).
    out_nhwc = out_rp.reshape(N, H, Wp, C)[:, :, :W, :]
    return jnp.transpose(out_nhwc, (0, 3, 1, 2))


# ----------------------------------------------------------------------------
# Pure-JAX reference (mirrors the PyTorch module semantics)
# ----------------------------------------------------------------------------
def _reference(x, w1, b1, w2, b2):
    def conv(x, w, b):
        xp = jnp.pad(x, ((0, 0), (0, 0), (1, 1), (1, 1)), mode="reflect")
        y = jax.lax.conv_general_dilated(
            xp, w, window_strides=(1, 1), padding="VALID",
            dimension_numbers=("NCHW", "OIHW", "NCHW"))
        return y + b[None, :, None, None]

    def inorm(y):
        m = jnp.mean(y, axis=(2, 3), keepdims=True)
        v = jnp.mean((y - m) ** 2, axis=(2, 3), keepdims=True)
        return (y - m) / jnp.sqrt(v + EPS)

    h = jax.nn.relu(inorm(conv(x, w1, b1)))
    h = inorm(conv(h, w2, b2))
    return x + h


if __name__ == "__main__":
    N, C, H, W = 2, 4, 16, 16

    key = jax.random.PRNGKey(0)
    kx, kw1, kb1, kw2, kb2 = jax.random.split(key, 5)
    x = jax.random.normal(kx, (N, C, H, W), dtype=jnp.float32)
    w1 = 0.1 * jax.random.normal(kw1, (C, C, 3, 3), dtype=jnp.float32)
    b1 = 0.1 * jax.random.normal(kb1, (C,), dtype=jnp.float32)
    w2 = 0.1 * jax.random.normal(kw2, (C, C, 3, 3), dtype=jnp.float32)
    b2 = 0.1 * jax.random.normal(kb2, (C,), dtype=jnp.float32)

    ref = jax.block_until_ready(_reference(x, w1, b1, w2, b2))

    # fp32 path: tight tolerance.
    out32 = jax.block_until_ready(
        residual_block_forward(x, w1, b1, w2, b2, use_bf16=False))
    assert out32.shape == (N, C, H, W)
    assert jnp.allclose(out32, ref, atol=5e-4, rtol=5e-4), (
        f"fp32 max abs err {jnp.max(jnp.abs(out32 - ref))}")

    # bf16 MXU path (perf config): bf16 matmul operands / bf16 h1 scratch,
    # fp32 accumulation, fp32 IN stats, fp32 residual.
    out16 = jax.block_until_ready(
        residual_block_forward(x, w1, b1, w2, b2, use_bf16=True))
    assert out16.shape == (N, C, H, W)
    assert jnp.allclose(out16, ref, atol=7e-2, rtol=7e-2), (
        f"bf16 max abs err {jnp.max(jnp.abs(out16 - ref))}")

    print("KERNEL_OK")
</pallas_src>

<mosaic_0001>
module attributes {stable_mosaic.version = 11 : i64} {
  func.func @kernel(%arg0: i32, %arg1: memref<1x288x4xf32, #tpu.memory_space<vmem>>, %arg2: memref<9x4x4xf32, #tpu.memory_space<vmem>>, %arg3: memref<1x4xf32, #tpu.memory_space<vmem>>, %arg4: memref<9x4x4xf32, #tpu.memory_space<vmem>>, %arg5: memref<1x4xf32, #tpu.memory_space<vmem>>, %arg6: memref<1x288x4xf32, #tpu.memory_space<vmem>>, %arg7: memref<332x4xf32, #tpu.memory_space<vmem>>) attributes {dimension_semantics = [#tpu.dimension_semantics<parallel>], iteration_bounds = array<i64: 2>, scalar_prefetch = 0 : i64, scratch_operands = 1 : i64, tpu.core_type = #tpu.core_type<tc>, window_params = [{transform_indices = @transform_0, window_bounds = array<i64: 1, 288, 4>}, {pipeline_mode = #tpu.pipeline_mode<synchronous>, transform_indices = @transform_1, window_bounds = array<i64: 9, 4, 4>}, {pipeline_mode = #tpu.pipeline_mode<synchronous>, transform_indices = @transform_2, window_bounds = array<i64: 1, 4>}, {pipeline_mode = #tpu.pipeline_mode<synchronous>, transform_indices = @transform_3, window_bounds = array<i64: 9, 4, 4>}, {pipeline_mode = #tpu.pipeline_mode<synchronous>, transform_indices = @transform_4, window_bounds = array<i64: 1, 4>}, {transform_indices = @transform_5, window_bounds = array<i64: 1, 288, 4>}]} {
    %0 = tpu.iota {dimensions = array<i32: 0>} : vector<288x1xi32>
    %c18_i32 = arith.constant 18 : i32
    %c0_i32 = arith.constant 0 : i32
    %1 = arith.cmpi eq, %c18_i32, %c0_i32 : i32
    %c1_i32 = arith.constant 1 : i32
    %2 = arith.select %1, %c1_i32, %c18_i32 : i32
    %3 = vector.broadcast %2 : i32 to vector<288x1xi32>
    %4 = arith.remsi %0, %3 : vector<288x1xi32>
    %c0_i32_0 = arith.constant 0 : i32
    %5 = vector.broadcast %c0_i32_0 : i32 to vector<288x1xi32>
    %6 = arith.cmpi ne, %4, %5 : vector<288x1xi32>
    %c0_i32_1 = arith.constant 0 : i32
    %7 = vector.broadcast %c0_i32_1 : i32 to vector<288x1xi32>
    %8 = arith.cmpi slt, %4, %7 : vector<288x1xi32>
    %c0_i32_2 = arith.constant 0 : i32
    %9 = arith.cmpi slt, %2, %c0_i32_2 : i32
    %10 = vector.broadcast %9 : i1 to vector<288x1xi1>
    %11 = vector.broadcast %10 : vector<288x1xi1> to vector<288x1xi1>
    %12 = arith.xori %8, %11 : vector<288x1xi1>
    %13 = arith.andi %12, %6 : vector<288x1xi1>
    %14 = vector.broadcast %2 : i32 to vector<288x1xi32>
    %15 = arith.addi %4, %14 : vector<288x1xi32>
    %16 = arith.select %13, %15, %4 : vector<288x1xi1>, vector<288x1xi32>
    %c16_i32 = arith.constant 16 : i32
    %17 = vector.broadcast %c16_i32 : i32 to vector<288x1xi32>
    %18 = arith.cmpi slt, %16, %17 : vector<288x1xi32>
    %c0_i32_3 = arith.constant 0 : i32
    %19 = arith.cmpi eq, %arg0, %c0_i32_3 : i32
    %20 = arith.extui %19 : i1 to i32
    %c0_i32_4 = arith.constant 0 : i32
    %21 = arith.cmpi ne, %20, %c0_i32_4 : i32
    scf.if %21 {
      %cst_161 = arith.constant 0.000000e+00 : f32
      %216 = vector.broadcast %cst_161 : f32 to vector<8x4xf32>
      %c324 = arith.constant 324 : index
      %c0_162 = arith.constant 0 : index
      %217 = vector.load %arg7[%c324, %c0_162] : memref<332x4xf32, #tpu.memory_space<vmem>>, vector<8x4xf32>
      tpu.vector_store %arg7[%c324, %c0_162], %216 {strides = array<i32>} : memref<332x4xf32, #tpu.memory_space<vmem>>, vector<8x4xf32>,
    } else {
    }
    %c0 = arith.constant 0 : index
    %c0_5 = arith.constant 0 : index
    %c0_6 = arith.constant 0 : index
    %22 = vector.load %arg1[%c0, %c0_5, %c0_6] : memref<1x288x4xf32, #tpu.memory_space<vmem>>, vector<1x288x4xf32>
    %23 = vector.shape_cast %22 : vector<1x288x4xf32> to vector<288x4xf32>
    %c19 = arith.constant 19 : index
    %c0_7 = arith.constant 0 : index
    %24 = vector.load %arg7[%c19, %c0_7] : memref<332x4xf32, #tpu.memory_space<vmem>>, vector<288x4xf32>
    tpu.vector_store %arg7[%c19, %c0_7], %23 {strides = array<i32>} : memref<332x4xf32, #tpu.memory_space<vmem>>, vector<288x4xf32>,
    %c18 = arith.constant 18 : index
    %c0_8 = arith.constant 0 : index
    %25 = vector.load %arg7[%c18, %c0_8] : memref<332x4xf32, #tpu.memory_space<vmem>>, vector<288x4xf32>
    %c20 = arith.constant 20 : index
    %c0_9 = arith.constant 0 : index
    %26 = vector.load %arg7[%c20, %c0_9] : memref<332x4xf32, #tpu.memory_space<vmem>>, vector<288x4xf32>
    %c16 = arith.constant 16 : index
    %c0_10 = arith.constant 0 : index
    %27 = vector.load %arg7[%c16, %c0_10] : memref<332x4xf32, #tpu.memory_space<vmem>>, vector<288x4xf32>
    %c0_i32_11 = arith.constant 0 : i32
    %28 = vector.broadcast %c0_i32_11 : i32 to vector<288x1xi32>
    %29 = arith.cmpi eq, %16, %28 : vector<288x1xi32>
    %c17_i32 = arith.constant 17 : i32
    %30 = vector.broadcast %c17_i32 : i32 to vector<288x1xi32>
    %31 = arith.cmpi eq, %16, %30 : vector<288x1xi32>
    %32 = vector.shape_cast %31 : vector<288x1xi1> to vector<288x1xi1>
    %33 = vector.broadcast %32 : vector<288x1xi1> to vector<288x4xi1>
    %34 = arith.select %33, %27, %25 : vector<288x4xi1>, vector<288x4xf32>
    %35 = vector.shape_cast %29 : vector<288x1xi1> to vector<288x1xi1>
    %36 = vector.broadcast %35 : vector<288x1xi1> to vector<288x4xi1>
    %37 = arith.select %36, %26, %34 : vector<288x4xi1>, vector<288x4xf32>
    %c18_12 = arith.constant 18 : index
    %c0_13 = arith.constant 0 : index
    %38 = vector.load %arg7[%c18_12, %c0_13] : memref<332x4xf32, #tpu.memory_space<vmem>>, vector<288x4xf32>
    tpu.vector_store %arg7[%c18_12, %c0_13], %37 {strides = array<i32>} : memref<332x4xf32, #tpu.memory_space<vmem>>, vector<288x4xf32>,
    %c36 = arith.constant 36 : index
    %c0_14 = arith.constant 0 : index
    %39 = vector.load %arg7[%c36, %c0_14] : memref<332x4xf32, #tpu.memory_space<vmem>>, vector<18x4xf32>
    %c0_15 = arith.constant 0 : index
    %c0_16 = arith.constant 0 : index
    %40 = vector.load %arg7[%c0_15, %c0_16] : memref<332x4xf32, #tpu.memory_space<vmem>>, vector<18x4xf32>
    tpu.vector_store %arg7[%c0_15, %c0_16], %39 {strides = array<i32>} : memref<332x4xf32, #tpu.memory_space<vmem>>, vector<18x4xf32>,
    %c270 = arith.constant 270 : index
    %c0_17 = arith.constant 0 : index
    %41 = vector.load %arg7[%c270, %c0_17] : memref<332x4xf32, #tpu.memory_space<vmem>>, vector<18x4xf32>
    %c306 = arith.constant 306 : index
    %c0_18 = arith.constant 0 : index
    %42 = vector.load %arg7[%c306, %c0_18] : memref<332x4xf32, #tpu.memory_space<vmem>>, vector<18x4xf32>
    tpu.vector_store %arg7[%c306, %c0_18], %41 {strides = array<i32>} : memref<332x4xf32, #tpu.memory_space<vmem>>, vector<18x4xf32>,
    %c0_19 = arith.constant 0 : index
    %c0_20 = arith.constant 0 : index
    %43 = vector.load %arg7[%c0_19, %c0_20] : memref<332x4xf32, #tpu.memory_space<vmem>>, vector<288x4xf32>
    %c0_21 = arith.constant 0 : index
    %c0_22 = arith.constant 0 : index
    %c0_23 = arith.constant 0 : index
    %44 = vector.load %arg2[%c0_21, %c0_22, %c0_23] : memref<9x4x4xf32, #tpu.memory_space<vmem>>, vector<1x4x4xf32>
    %45 = vector.shape_cast %44 : vector<1x4x4xf32> to vector<4x4xf32>
    %cst = arith.constant dense<0.000000e+00> : vector<288x4xf32>
    %46 = tpu.matmul %43, %45, %cst {dimension_numbers = #tpu.dot_dimension_numbers<[1], [0], [0], [1], [0, 0, 1, 1], [], []>} : vector<288x4xf32>, vector<4x4xf32>, vector<288x4xf32> -> vector<288x4xf32>
    %c1 = arith.constant 1 : index
    %c0_24 = arith.constant 0 : index
    %47 = vector.load %arg7[%c1, %c0_24] : memref<332x4xf32, #tpu.memory_space<vmem>>, vector<288x4xf32>
    %c1_25 = arith.constant 1 : index
    %c0_26 = arith.constant 0 : index
    %c0_27 = arith.constant 0 : index
    %48 = vector.load %arg2[%c1_25, %c0_26, %c0_27] : memref<9x4x4xf32, #tpu.memory_space<vmem>>, vector<1x4x4xf32>
    %49 = vector.shape_cast %48 : vector<1x4x4xf32> to vector<4x4xf32>
    %cst_28 = arith.constant dense<0.000000e+00> : vector<288x4xf32>
    %50 = tpu.matmul %47, %49, %cst_28 {dimension_numbers = #tpu.dot_dimension_numbers<[1], [0], [0], [1], [0, 0, 1, 1], [], []>} : vector<288x4xf32>, vector<4x4xf32>, vector<288x4xf32> -> vector<288x4xf32>
    %51 = arith.addf %46, %50 : vector<288x4xf32>
    %c2 = arith.constant 2 : index
    %c0_29 = arith.constant 0 : index
    %52 = vector.load %arg7[%c2, %c0_29] : memref<332x4xf32, #tpu.memory_space<vmem>>, vector<288x4xf32>
    %c2_30 = arith.constant 2 : index
    %c0_31 = arith.constant 0 : index
    %c0_32 = arith.constant 0 : index
    %53 = vector.load %arg2[%c2_30, %c0_31, %c0_32] : memref<9x4x4xf32, #tpu.memory_space<vmem>>, vector<1x4x4xf32>
    %54 = vector.shape_cast %53 : vector<1x4x4xf32> to vector<4x4xf32>
    %cst_33 = arith.constant dense<0.000000e+00> : vector<288x4xf32>
    %55 = tpu.matmul %52, %54, %cst_33 {dimension_numbers = #tpu.dot_dimension_numbers<[1], [0], [0], [1], [0, 0, 1, 1], [], []>} : vector<288x4xf32>, vector<4x4xf32>, vector<288x4xf32> -> vector<288x4xf32>
    %56 = arith.addf %51, %55 : vector<288x4xf32>
    %c18_34 = arith.constant 18 : index
    %c0_35 = arith.constant 0 : index
    %57 = vector.load %arg7[%c18_34, %c0_35] : memref<332x4xf32, #tpu.memory_space<vmem>>, vector<288x4xf32>
    %c3 = arith.constant 3 : index
    %c0_36 = arith.constant 0 : index
    %c0_37 = arith.constant 0 : index
    %58 = vector.load %arg2[%c3, %c0_36, %c0_37] : memref<9x4x4xf32, #tpu.memory_space<vmem>>, vector<1x4x4xf32>
    %59 = vector.shape_cast %58 : vector<1x4x4xf32> to vector<4x4xf32>
    %cst_38 = arith.constant dense<0.000000e+00> : vector<288x4xf32>
    %60 = tpu.matmul %57, %59, %cst_38 {dimension_numbers = #tpu.dot_dimension_numbers<[1], [0], [0], [1], [0, 0, 1, 1], [], []>} : vector<288x4xf32>, vector<4x4xf32>, vector<288x4xf32> -> vector<288x4xf32>
    %61 = arith.addf %56, %60 : vector<288x4xf32>
    %c19_39 = arith.constant 19 : index
    %c0_40 = arith.constant 0 : index
    %62 = vector.load %arg7[%c19_39, %c0_40] : memref<332x4xf32, #tpu.memory_space<vmem>>, vector<288x4xf32>
    %c4 = arith.constant 4 : index
    %c0_41 = arith.constant 0 : index
    %c0_42 = arith.constant 0 : index
    %63 = vector.load %arg2[%c4, %c0_41, %c0_42] : memref<9x4x4xf32, #tpu.memory_space<vmem>>, vector<1x4x4xf32>
    %64 = vector.shape_cast %63 : vector<1x4x4xf32> to vector<4x4xf32>
    %cst_43 = arith.constant dense<0.000000e+00> : vector<288x4xf32>
    %65 = tpu.matmul %62, %64, %cst_43 {dimension_numbers = #tpu.dot_dimension_numbers<[1], [0], [0], [1], [0, 0, 1, 1], [], []>} : vector<288x4xf32>, vector<4x4xf32>, vector<288x4xf32> -> vector<288x4xf32>
    %66 = arith.addf %61, %65 : vector<288x4xf32>
    %c20_44 = arith.constant 20 : index
    %c0_45 = arith.constant 0 : index
    %67 = vector.load %arg7[%c20_44, %c0_45] : memref<332x4xf32, #tpu.memory_space<vmem>>, vector<288x4xf32>
    %c5 = arith.constant 5 : index
    %c0_46 = arith.constant 0 : index
    %c0_47 = arith.constant 0 : index
    %68 = vector.load %arg2[%c5, %c0_46, %c0_47] : memref<9x4x4xf32, #tpu.memory_space<vmem>>, vector<1x4x4xf32>
    %69 = vector.shape_cast %68 : vector<1x4x4xf32> to vector<4x4xf32>
    %cst_48 = arith.constant dense<0.000000e+00> : vector<288x4xf32>
    %70 = tpu.matmul %67, %69, %cst_48 {dimension_numbers = #tpu.dot_dimension_numbers<[1], [0], [0], [1], [0, 0, 1, 1], [], []>} : vector<288x4xf32>, vector<4x4xf32>, vector<288x4xf32> -> vector<288x4xf32>
    %71 = arith.addf %66, %70 : vector<288x4xf32>
    %c36_49 = arith.constant 36 : index
    %c0_50 = arith.constant 0 : index
    %72 = vector.load %arg7[%c36_49, %c0_50] : memref<332x4xf32, #tpu.memory_space<vmem>>, vector<288x4xf32>
    %c6 = arith.constant 6 : index
    %c0_51 = arith.constant 0 : index
    %c0_52 = arith.constant 0 : index
    %73 = vector.load %arg2[%c6, %c0_51, %c0_52] : memref<9x4x4xf32, #tpu.memory_space<vmem>>, vector<1x4x4xf32>
    %74 = vector.shape_cast %73 : vector<1x4x4xf32> to vector<4x4xf32>
    %cst_53 = arith.constant dense<0.000000e+00> : vector<288x4xf32>
    %75 = tpu.matmul %72, %74, %cst_53 {dimension_numbers = #tpu.dot_dimension_numbers<[1], [0], [0], [1], [0, 0, 1, 1], [], []>} : vector<288x4xf32>, vector<4x4xf32>, vector<288x4xf32> -> vector<288x4xf32>
    %76 = arith.addf %71, %75 : vector<288x4xf32>
    %c37 = arith.constant 37 : index
    %c0_54 = arith.constant 0 : index
    %77 = vector.load %arg7[%c37, %c0_54] : memref<332x4xf32, #tpu.memory_space<vmem>>, vector<288x4xf32>
    %c7 = arith.constant 7 : index
    %c0_55 = arith.constant 0 : index
    %c0_56 = arith.constant 0 : index
    %78 = vector.load %arg2[%c7, %c0_55, %c0_56] : memref<9x4x4xf32, #tpu.memory_space<vmem>>, vector<1x4x4xf32>
    %79 = vector.shape_cast %78 : vector<1x4x4xf32> to vector<4x4xf32>
    %cst_57 = arith.constant dense<0.000000e+00> : vector<288x4xf32>
    %80 = tpu.matmul %77, %79, %cst_57 {dimension_numbers = #tpu.dot_dimension_numbers<[1], [0], [0], [1], [0, 0, 1, 1], [], []>} : vector<288x4xf32>, vector<4x4xf32>, vector<288x4xf32> -> vector<288x4xf32>
    %81 = arith.addf %76, %80 : vector<288x4xf32>
    %c38 = arith.constant 38 : index
    %c0_58 = arith.constant 0 : index
    %82 = vector.load %arg7[%c38, %c0_58] : memref<332x4xf32, #tpu.memory_space<vmem>>, vector<288x4xf32>
    %c8 = arith.constant 8 : index
    %c0_59 = arith.constant 0 : index
    %c0_60 = arith.constant 0 : index
    %83 = vector.load %arg2[%c8, %c0_59, %c0_60] : memref<9x4x4xf32, #tpu.memory_space<vmem>>, vector<1x4x4xf32>
    %84 = vector.shape_cast %83 : vector<1x4x4xf32> to vector<4x4xf32>
    %cst_61 = arith.constant dense<0.000000e+00> : vector<288x4xf32>
    %85 = tpu.matmul %82, %84, %cst_61 {dimension_numbers = #tpu.dot_dimension_numbers<[1], [0], [0], [1], [0, 0, 1, 1], [], []>} : vector<288x4xf32>, vector<4x4xf32>, vector<288x4xf32> -> vector<288x4xf32>
    %86 = arith.addf %81, %85 : vector<288x4xf32>
    %c0_62 = arith.constant 0 : index
    %c0_63 = arith.constant 0 : index
    %87 = vector.load %arg3[%c0_62, %c0_63] : memref<1x4xf32, #tpu.memory_space<vmem>>, vector<1x4xf32>
    %88 = vector.broadcast %87 : vector<1x4xf32> to vector<288x4xf32>
    %89 = arith.addf %86, %88 : vector<288x4xf32>
    %cst_64 = arith.constant 0.000000e+00 : f32
    %90 = vector.shape_cast %18 : vector<288x1xi1> to vector<288x1xi1>
    %91 = vector.broadcast %90 : vector<288x1xi1> to vector<288x4xi1>
    %92 = vector.broadcast %cst_64 : f32 to vector<288x4xf32>
    %93 = arith.select %91, %89, %92 : vector<288x4xi1>, vector<288x4xf32>
    %cst_65 = arith.constant dense<0.000000e+00> : vector<4xf32>
    %94 = vector.multi_reduction <add>, %93, %cst_65 [0] : vector<288x4xf32> to vector<4xf32>
    %95 = vector.shape_cast %94 : vector<4xf32> to vector<1x4xf32>
    %cst_66 = arith.constant 3.906250e-03 : f32
    %96 = vector.broadcast %cst_66 : f32 to vector<1x4xf32>
    %97 = arith.mulf %95, %96 : vector<1x4xf32>
    %98 = vector.broadcast %97 : vector<1x4xf32> to vector<288x4xf32>
    %99 = arith.subf %89, %98 : vector<288x4xf32>
    %cst_67 = arith.constant 0.000000e+00 : f32
    %100 = vector.shape_cast %18 : vector<288x1xi1> to vector<288x1xi1>
    %101 = vector.broadcast %100 : vector<288x1xi1> to vector<288x4xi1>
    %102 = vector.broadcast %cst_67 : f32 to vector<288x4xf32>
    %103 = arith.select %101, %99, %102 : vector<288x4xi1>, vector<288x4xf32>
    %104 = arith.mulf %103, %103 : vector<288x4xf32>
    %cst_68 = arith.constant dense<0.000000e+00> : vector<4xf32>
    %105 = vector.multi_reduction <add>, %104, %cst_68 [0] : vector<288x4xf32> to vector<4xf32>
    %106 = vector.shape_cast %105 : vector<4xf32> to vector<1x4xf32>
    %cst_69 = arith.constant 3.906250e-03 : f32
    %107 = vector.broadcast %cst_69 : f32 to vector<1x4xf32>
    %108 = arith.mulf %106, %107 : vector<1x4xf32>
    %109 = vector.broadcast %97 : vector<1x4xf32> to vector<288x4xf32>
    %110 = arith.subf %89, %109 : vector<288x4xf32>
    %cst_70 = arith.constant 9.99999974E-6 : f32
    %111 = vector.broadcast %cst_70 : f32 to vector<1x4xf32>
    %112 = arith.addf %108, %111 : vector<1x4xf32>
    %113 = math.rsqrt %112 : vector<1x4xf32>
    %114 = vector.broadcast %113 : vector<1x4xf32> to vector<288x4xf32>
    %115 = arith.mulf %110, %114 : vector<288x4xf32>
    %cst_71 = arith.constant 0.000000e+00 : f32
    %116 = vector.broadcast %cst_71 : f32 to vector<288x4xf32>
    %117 = arith.maximumf %115, %116 : vector<288x4xf32>
    %c19_72 = arith.constant 19 : index
    %c0_73 = arith.constant 0 : index
    %118 = vector.load %arg7[%c19_72, %c0_73] : memref<332x4xf32, #tpu.memory_space<vmem>>, vector<288x4xf32>
    tpu.vector_store %arg7[%c19_72, %c0_73], %117 {strides = array<i32>} : memref<332x4xf32, #tpu.memory_space<vmem>>, vector<288x4xf32>,
    %c18_74 = arith.constant 18 : index
    %c0_75 = arith.constant 0 : index
    %119 = vector.load %arg7[%c18_74, %c0_75] : memref<332x4xf32, #tpu.memory_space<vmem>>, vector<288x4xf32>
    %c20_76 = arith.constant 20 : index
    %c0_77 = arith.constant 0 : index
    %120 = vector.load %arg7[%c20_76, %c0_77] : memref<332x4xf32, #tpu.memory_space<vmem>>, vector<288x4xf32>
    %c16_78 = arith.constant 16 : index
    %c0_79 = arith.constant 0 : index
    %121 = vector.load %arg7[%c16_78, %c0_79] : memref<332x4xf32, #tpu.memory_space<vmem>>, vector<288x4xf32>
    %c0_i32_80 = arith.constant 0 : i32
    %122 = vector.broadcast %c0_i32_80 : i32 to vector<288x1xi32>
    %123 = arith.cmpi eq, %16, %122 : vector<288x1xi32>
    %c17_i32_81 = arith.constant 17 : i32
    %124 = vector.broadcast %c17_i32_81 : i32 to vector<288x1xi32>
    %125 = arith.cmpi eq, %16, %124 : vector<288x1xi32>
    %126 = vector.shape_cast %125 : vector<288x1xi1> to vector<288x1xi1>
    %127 = vector.broadcast %126 : vector<288x1xi1> to vector<288x4xi1>
    %128 = arith.select %127, %121, %119 : vector<288x4xi1>, vector<288x4xf32>
    %129 = vector.shape_cast %123 : vector<288x1xi1> to vector<288x1xi1>
    %130 = vector.broadcast %129 : vector<288x1xi1> to vector<288x4xi1>
    %131 = arith.select %130, %120, %128 : vector<288x4xi1>, vector<288x4xf32>
    %c18_82 = arith.constant 18 : index
    %c0_83 = arith.constant 0 : index
    %132 = vector.load %arg7[%c18_82, %c0_83] : memref<332x4xf32, #tpu.memory_space<vmem>>, vector<288x4xf32>
    tpu.vector_store %arg7[%c18_82, %c0_83], %131 {strides = array<i32>} : memref<332x4xf32, #tpu.memory_space<vmem>>, vector<288x4xf32>,
    %c36_84 = arith.constant 36 : index
    %c0_85 = arith.constant 0 : index
    %133 = vector.load %arg7[%c36_84, %c0_85] : memref<332x4xf32, #tpu.memory_space<vmem>>, vector<18x4xf32>
    %c0_86 = arith.constant 0 : index
    %c0_87 = arith.constant 0 : index
    %134 = vector.load %arg7[%c0_86, %c0_87] : memref<332x4xf32, #tpu.memory_space<vmem>>, vector<18x4xf32>
    tpu.vector_store %arg7[%c0_86, %c0_87], %133 {strides = array<i32>} : memref<332x4xf32, #tpu.memory_space<vmem>>, vector<18x4xf32>,
    %c270_88 = arith.constant 270 : index
    %c0_89 = arith.constant 0 : index
    %135 = vector.load %arg7[%c270_88, %c0_89] : memref<332x4xf32, #tpu.memory_space<vmem>>, vector<18x4xf32>
    %c306_90 = arith.constant 306 : index
    %c0_91 = arith.constant 0 : index
    %136 = vector.load %arg7[%c306_90, %c0_91] : memref<332x4xf32, #tpu.memory_space<vmem>>, vector<18x4xf32>
    tpu.vector_store %arg7[%c306_90, %c0_91], %135 {strides = array<i32>} : memref<332x4xf32, #tpu.memory_space<vmem>>, vector<18x4xf32>,
    %c0_92 = arith.constant 0 : index
    %c0_93 = arith.constant 0 : index
    %137 = vector.load %arg7[%c0_92, %c0_93] : memref<332x4xf32, #tpu.memory_space<vmem>>, vector<288x4xf32>
    %c0_94 = arith.constant 0 : index
    %c0_95 = arith.constant 0 : index
    %c0_96 = arith.constant 0 : index
    %138 = vector.load %arg4[%c0_94, %c0_95, %c0_96] : memref<9x4x4xf32, #tpu.memory_space<vmem>>, vector<1x4x4xf32>
    %139 = vector.shape_cast %138 : vector<1x4x4xf32> to vector<4x4xf32>
    %cst_97 = arith.constant dense<0.000000e+00> : vector<288x4xf32>
    %140 = tpu.matmul %137, %139, %cst_97 {dimension_numbers = #tpu.dot_dimension_numbers<[1], [0], [0], [1], [0, 0, 1, 1], [], []>} : vector<288x4xf32>, vector<4x4xf32>, vector<288x4xf32> -> vector<288x4xf32>
    %c1_98 = arith.constant 1 : index
    %c0_99 = arith.constant 0 : index
    %141 = vector.load %arg7[%c1_98, %c0_99] : memref<332x4xf32, #tpu.memory_space<vmem>>, vector<288x4xf32>
    %c1_100 = arith.constant 1 : index
    %c0_101 = arith.constant 0 : index
    %c0_102 = arith.constant 0 : index
    %142 = vector.load %arg4[%c1_100, %c0_101, %c0_102] : memref<9x4x4xf32, #tpu.memory_space<vmem>>, vector<1x4x4xf32>
    %143 = vector.shape_cast %142 : vector<1x4x4xf32> to vector<4x4xf32>
    %cst_103 = arith.constant dense<0.000000e+00> : vector<288x4xf32>
    %144 = tpu.matmul %141, %143, %cst_103 {dimension_numbers = #tpu.dot_dimension_numbers<[1], [0], [0], [1], [0, 0, 1, 1], [], []>} : vector<288x4xf32>, vector<4x4xf32>, vector<288x4xf32> -> vector<288x4xf32>
    %145 = arith.addf %140, %144 : vector<288x4xf32>
    %c2_104 = arith.constant 2 : index
    %c0_105 = arith.constant 0 : index
    %146 = vector.load %arg7[%c2_104, %c0_105] : memref<332x4xf32, #tpu.memory_space<vmem>>, vector<288x4xf32>
    %c2_106 = arith.constant 2 : index
    %c0_107 = arith.constant 0 : index
    %c0_108 = arith.constant 0 : index
    %147 = vector.load %arg4[%c2_106, %c0_107, %c0_108] : memref<9x4x4xf32, #tpu.memory_space<vmem>>, vector<1x4x4xf32>
    %148 = vector.shape_cast %147 : vector<1x4x4xf32> to vector<4x4xf32>
    %cst_109 = arith.constant dense<0.000000e+00> : vector<288x4xf32>
    %149 = tpu.matmul %146, %148, %cst_109 {dimension_numbers = #tpu.dot_dimension_numbers<[1], [0], [0], [1], [0, 0, 1, 1], [], []>} : vector<288x4xf32>, vector<4x4xf32>, vector<288x4xf32> -> vector<288x4xf32>
    %150 = arith.addf %145, %149 : vector<288x4xf32>
    %c18_110 = arith.constant 18 : index
    %c0_111 = arith.constant 0 : index
    %151 = vector.load %arg7[%c18_110, %c0_111] : memref<332x4xf32, #tpu.memory_space<vmem>>, vector<288x4xf32>
    %c3_112 = arith.constant 3 : index
    %c0_113 = arith.constant 0 : index
    %c0_114 = arith.constant 0 : index
    %152 = vector.load %arg4[%c3_112, %c0_113, %c0_114] : memref<9x4x4xf32, #tpu.memory_space<vmem>>, vector<1x4x4xf32>
    %153 = vector.shape_cast %152 : vector<1x4x4xf32> to vector<4x4xf32>
    %cst_115 = arith.constant dense<0.000000e+00> : vector<288x4xf32>
    %154 = tpu.matmul %151, %153, %cst_115 {dimension_numbers = #tpu.dot_dimension_numbers<[1], [0], [0], [1], [0, 0, 1, 1], [], []>} : vector<288x4xf32>, vector<4x4xf32>, vector<288x4xf32> -> vector<288x4xf32>
    %155 = arith.addf %150, %154 : vector<288x4xf32>
    %c19_116 = arith.constant 19 : index
    %c0_117 = arith.constant 0 : index
    %156 = vector.load %arg7[%c19_116, %c0_117] : memref<332x4xf32, #tpu.memory_space<vmem>>, vector<288x4xf32>
    %c4_118 = arith.constant 4 : index
    %c0_119 = arith.constant 0 : index
    %c0_120 = arith.constant 0 : index
    %157 = vector.load %arg4[%c4_118, %c0_119, %c0_120] : memref<9x4x4xf32, #tpu.memory_space<vmem>>, vector<1x4x4xf32>
    %158 = vector.shape_cast %157 : vector<1x4x4xf32> to vector<4x4xf32>
    %cst_121 = arith.constant dense<0.000000e+00> : vector<288x4xf32>
    %159 = tpu.matmul %156, %158, %cst_121 {dimension_numbers = #tpu.dot_dimension_numbers<[1], [0], [0], [1], [0, 0, 1, 1], [], []>} : vector<288x4xf32>, vector<4x4xf32>, vector<288x4xf32> -> vector<288x4xf32>
    %160 = arith.addf %155, %159 : vector<288x4xf32>
    %c20_122 = arith.constant 20 : index
    %c0_123 = arith.constant 0 : index
    %161 = vector.load %arg7[%c20_122, %c0_123] : memref<332x4xf32, #tpu.memory_space<vmem>>, vector<288x4xf32>
    %c5_124 = arith.constant 5 : index
    %c0_125 = arith.constant 0 : index
    %c0_126 = arith.constant 0 : index
    %162 = vector.load %arg4[%c5_124, %c0_125, %c0_126] : memref<9x4x4xf32, #tpu.memory_space<vmem>>, vector<1x4x4xf32>
    %163 = vector.shape_cast %162 : vector<1x4x4xf32> to vector<4x4xf32>
    %cst_127 = arith.constant dense<0.000000e+00> : vector<288x4xf32>
    %164 = tpu.matmul %161, %163, %cst_127 {dimension_numbers = #tpu.dot_dimension_numbers<[1], [0], [0], [1], [0, 0, 1, 1], [], []>} : vector<288x4xf32>, vector<4x4xf32>, vector<288x4xf32> -> vector<288x4xf32>
    %165 = arith.addf %160, %164 : vector<288x4xf32>
    %c36_128 = arith.constant 36 : index
    %c0_129 = arith.constant 0 : index
    %166 = vector.load %arg7[%c36_128, %c0_129] : memref<332x4xf32, #tpu.memory_space<vmem>>, vector<288x4xf32>
    %c6_130 = arith.constant 6 : index
    %c0_131 = arith.constant 0 : index
    %c0_132 = arith.constant 0 : index
    %167 = vector.load %arg4[%c6_130, %c0_131, %c0_132] : memref<9x4x4xf32, #tpu.memory_space<vmem>>, vector<1x4x4xf32>
    %168 = vector.shape_cast %167 : vector<1x4x4xf32> to vector<4x4xf32>
    %cst_133 = arith.constant dense<0.000000e+00> : vector<288x4xf32>
    %169 = tpu.matmul %166, %168, %cst_133 {dimension_numbers = #tpu.dot_dimension_numbers<[1], [0], [0], [1], [0, 0, 1, 1], [], []>} : vector<288x4xf32>, vector<4x4xf32>, vector<288x4xf32> -> vector<288x4xf32>
    %170 = arith.addf %165, %169 : vector<288x4xf32>
    %c37_134 = arith.constant 37 : index
    %c0_135 = arith.constant 0 : index
    %171 = vector.load %arg7[%c37_134, %c0_135] : memref<332x4xf32, #tpu.memory_space<vmem>>, vector<288x4xf32>
    %c7_136 = arith.constant 7 : index
    %c0_137 = arith.constant 0 : index
    %c0_138 = arith.constant 0 : index
    %172 = vector.load %arg4[%c7_136, %c0_137, %c0_138] : memref<9x4x4xf32, #tpu.memory_space<vmem>>, vector<1x4x4xf32>
    %173 = vector.shape_cast %172 : vector<1x4x4xf32> to vector<4x4xf32>
    %cst_139 = arith.constant dense<0.000000e+00> : vector<288x4xf32>
    %174 = tpu.matmul %171, %173, %cst_139 {dimension_numbers = #tpu.dot_dimension_numbers<[1], [0], [0], [1], [0, 0, 1, 1], [], []>} : vector<288x4xf32>, vector<4x4xf32>, vector<288x4xf32> -> vector<288x4xf32>
    %175 = arith.addf %170, %174 : vector<288x4xf32>
    %c38_140 = arith.constant 38 : index
    %c0_141 = arith.constant 0 : index
    %176 = vector.load %arg7[%c38_140, %c0_141] : memref<332x4xf32, #tpu.memory_space<vmem>>, vector<288x4xf32>
    %c8_142 = arith.constant 8 : index
    %c0_143 = arith.constant 0 : index
    %c0_144 = arith.constant 0 : index
    %177 = vector.load %arg4[%c8_142, %c0_143, %c0_144] : memref<9x4x4xf32, #tpu.memory_space<vmem>>, vector<1x4x4xf32>
    %178 = vector.shape_cast %177 : vector<1x4x4xf32> to vector<4x4xf32>
    %cst_145 = arith.constant dense<0.000000e+00> : vector<288x4xf32>
    %179 = tpu.matmul %176, %178, %cst_145 {dimension_numbers = #tpu.dot_dimension_numbers<[1], [0], [0], [1], [0, 0, 1, 1], [], []>} : vector<288x4xf32>, vector<4x4xf32>, vector<288x4xf32> -> vector<288x4xf32>
    %180 = arith.addf %175, %179 : vector<288x4xf32>
    %c0_146 = arith.constant 0 : index
    %c0_147 = arith.constant 0 : index
    %181 = vector.load %arg5[%c0_146, %c0_147] : memref<1x4xf32, #tpu.memory_space<vmem>>, vector<1x4xf32>
    %182 = vector.broadcast %181 : vector<1x4xf32> to vector<288x4xf32>
    %183 = arith.addf %180, %182 : vector<288x4xf32>
    %cst_148 = arith.constant 0.000000e+00 : f32
    %184 = vector.shape_cast %18 : vector<288x1xi1> to vector<288x1xi1>
    %185 = vector.broadcast %184 : vector<288x1xi1> to vector<288x4xi1>
    %186 = vector.broadcast %cst_148 : f32 to vector<288x4xf32>
    %187 = arith.select %185, %183, %186 : vector<288x4xi1>, vector<288x4xf32>
    %cst_149 = arith.constant dense<0.000000e+00> : vector<4xf32>
    %188 = vector.multi_reduction <add>, %187, %cst_149 [0] : vector<288x4xf32> to vector<4xf32>
    %189 = vector.shape_cast %188 : vector<4xf32> to vector<1x4xf32>
    %cst_150 = arith.constant 3.906250e-03 : f32
    %190 = vector.broadcast %cst_150 : f32 to vector<1x4xf32>
    %191 = arith.mulf %189, %190 : vector<1x4xf32>
    %192 = vector.broadcast %191 : vector<1x4xf32> to vector<288x4xf32>
    %193 = arith.subf %183, %192 : vector<288x4xf32>
    %cst_151 = arith.constant 0.000000e+00 : f32
    %194 = vector.shape_cast %18 : vector<288x1xi1> to vector<288x1xi1>
    %195 = vector.broadcast %194 : vector<288x1xi1> to vector<288x4xi1>
    %196 = vector.broadcast %cst_151 : f32 to vector<288x4xf32>
    %197 = arith.select %195, %193, %196 : vector<288x4xi1>, vector<288x4xf32>
    %198 = arith.mulf %197, %197 : vector<288x4xf32>
    %cst_152 = arith.constant dense<0.000000e+00> : vector<4xf32>
    %199 = vector.multi_reduction <add>, %198, %cst_152 [0] : vector<288x4xf32> to vector<4xf32>
    %200 = vector.shape_cast %199 : vector<4xf32> to vector<1x4xf32>
    %cst_153 = arith.constant 3.906250e-03 : f32
    %201 = vector.broadcast %cst_153 : f32 to vector<1x4xf32>
    %202 = arith.mulf %200, %201 : vector<1x4xf32>
    %203 = vector.broadcast %191 : vector<1x4xf32> to vector<288x4xf32>
    %204 = arith.subf %183, %203 : vector<288x4xf32>
    %cst_154 = arith.constant 9.99999974E-6 : f32
    %205 = vector.broadcast %cst_154 : f32 to vector<1x4xf32>
    %206 = arith.addf %202, %205 : vector<1x4xf32>
    %207 = math.rsqrt %206 : vector<1x4xf32>
    %208 = vector.broadcast %207 : vector<1x4xf32> to vector<288x4xf32>
    %209 = arith.mulf %204, %208 : vector<288x4xf32>
    %c0_155 = arith.constant 0 : index
    %c0_156 = arith.constant 0 : index
    %c0_157 = arith.constant 0 : index
    %210 = vector.load %arg1[%c0_155, %c0_156, %c0_157] : memref<1x288x4xf32, #tpu.memory_space<vmem>>, vector<1x288x4xf32>
    %211 = vector.shape_cast %210 : vector<1x288x4xf32> to vector<288x4xf32>
    %212 = arith.addf %211, %209 : vector<288x4xf32>
    %c0_158 = arith.constant 0 : index
    %c0_159 = arith.constant 0 : index
    %c0_160 = arith.constant 0 : index
    %213 = vector.load %arg6[%c0_158, %c0_159, %c0_160] : memref<1x288x4xf32, #tpu.memory_space<vmem>>, vector<1x288x4xf32>
    %214 = vector.shape_cast %213 : vector<1x288x4xf32> to vector<288x4xf32>
    %215 = vector.shape_cast %212 : vector<288x4xf32> to vector<1x288x4xf32>
    tpu.vector_store %arg6[%c0_158, %c0_159, %c0_160], %215 {strides = array<i32>} : memref<1x288x4xf32, #tpu.memory_space<vmem>>, vector<1x288x4xf32>,
    return
  }
  func.func @transform_0(%arg0: i32) -> (i32, i32, i32) {
    %c0_i32 = arith.constant 0 : i32
    %c0_i32_0 = arith.constant 0 : i32
    %c0_i32_1 = arith.constant 0 : i32
    return %arg0, %c0_i32, %c0_i32_0 : i32, i32, i32
  }
  func.func @transform_1(%arg0: i32) -> (i32, i32, i32) {
    %c0_i32 = arith.constant 0 : i32
    %c0_i32_0 = arith.constant 0 : i32
    %c0_i32_1 = arith.constant 0 : i32
    %c0_i32_2 = arith.constant 0 : i32
    return %c0_i32, %c0_i32_0, %c0_i32_1 : i32, i32, i32
  }
  func.func @transform_2(%arg0: i32) -> (i32, i32) {
    %c0_i32 = arith.constant 0 : i32
    %c0_i32_0 = arith.constant 0 : i32
    %c0_i32_1 = arith.constant 0 : i32
    return %c0_i32, %c0_i32_0 : i32, i32
  }
  func.func @transform_3(%arg0: i32) -> (i32, i32, i32) {
    %c0_i32 = arith.constant 0 : i32
    %c0_i32_0 = arith.constant 0 : i32
    %c0_i32_1 = arith.constant 0 : i32
    %c0_i32_2 = arith.constant 0 : i32
    return %c0_i32, %c0_i32_0, %c0_i32_1 : i32, i32, i32
  }
  func.func @transform_4(%arg0: i32) -> (i32, i32) {
    %c0_i32 = arith.constant 0 : i32
    %c0_i32_0 = arith.constant 0 : i32
    %c0_i32_1 = arith.constant 0 : i32
    return %c0_i32, %c0_i32_0 : i32, i32
  }
  func.func @transform_5(%arg0: i32) -> (i32, i32, i32) {
    %c0_i32 = arith.constant 0 : i32
    %c0_i32_0 = arith.constant 0 : i32
    %c0_i32_1 = arith.constant 0 : i32
    return %arg0, %c0_i32, %c0_i32_0 : i32, i32, i32
  }
}

</mosaic_0001>

<llo_original>
// kernel: residual_block_forward.1
$region0: #{residual_block_forward.1}
  #allocation0 [shape = 'u32[]', space=smem, size = 0x4, offset = 0x4, fixed_abs, tag = 'smem constant byte address 0x4 - core index']
  #allocation1 [shape = 'u32[144,128]{1,0:T(1,128)}', space=vmem, size = 0x12000, scoped, tag = 'internal scratch']
  #allocation2 [shape = 'f32[332,4]{1,0:T(8,128)}', space=vmem, size = 0x2a000, scoped, tag = 'scratch operand']
  %s0 = inlined_call_operand.vmem [shape: f32[2,288,4], index: 0, kind: input, shape index: {}]
  %s1 = inlined_call_operand.vmem [shape: f32[9,4,4], index: 1, kind: input, shape index: {}]
  %s2 = inlined_call_operand.vmem [shape: f32[1,4], index: 2, kind: input, shape index: {}]
  %s3 = inlined_call_operand.vmem [shape: f32[9,4,4], index: 3, kind: input, shape index: {}]
  %s4 = inlined_call_operand.vmem [shape: f32[1,4], index: 4, kind: input, shape index: {}]
  %s5 = inlined_call_operand.vmem [shape: f32[2,288,4], index: 5, kind: output, shape index: {}]
  %s6 = sld [smem:[#allocation0]]
  $region57: #{residual_block_forward.1} parent=0
    _
  %s8 = ssub.s32 1, %s6
  %s9 = scalar_select 0, %s8, %s6
  loop: start=0, step=1, limit=4
  $region2: #{residual_block_forward.1} parent=0 // loop_pre_header
    _
  $region3: #{residual_block_forward.1} parent=0 // loop_header
    %s11 = sphi 0, %s15
    %p12 = scmp.ge.s32.totalorder %s11, 4
    %s21 = sphi 0, %s23
    %s24 = sphi 0, %s21
    %s25 = sphi 0, %s24
    %s41 = sphi 0, %s25
    %s45 = sphi 0, %s45
    %s47 = sphi 0, %s45
    %s48 = sphi 0, %s47
    %s62 = sphi 0, %s48
    %s66 = sphi 0, %s66
    %s68 = sphi 0, %s66
    %s69 = sphi 0, %s68
    %s83 = sphi 0, %s69
    %s87 = sphi 0, %s87
    %s89 = sphi 0, %s87
    %s90 = sphi 0, %s89
    %s104 = sphi 0, %s90
    %s108 = sphi 0, %s108
    %s110 = sphi 0, %s108
    %s111 = sphi 0, %s110
    %s125 = sphi 0, %s111
    %s131 = sphi 0, %s133
    %s134 = sphi 0, %s131
    %s135 = sphi 0, %s134
    %s151 = sphi 0, %s135
  $region4: #{residual_block_forward.1} parent=0 // loop_header_branch
    %14 = sbr.rel (%p12) target = $region8
  $region5: #{residual_block_forward.1} parent=0 // loop_body
    %s16 = ssub.s32 %s11, 1
    %s17 = ssub.s32 %s11, 2
    %s18 = sadd.s32 %s11, 1
    %s19 = ssub.s32 %s11, %s18
    %p20 = scmp.eq.s32.totalorder %s19, 0
    %s22 = sadd.s32 %s21, 1
    %s23 = scalar_select %p20, %s21, %s22
    %p26 = pneg %p20
    %p27 = scmp.eq.s32.totalorder %s11, 1
    %p28 = por %p26, %p27
    %p29 = scmp.ne.s32.totalorder %s21, %s24
    %p30 = scmp.eq.s32.totalorder %s11, 0
    %p31 = por %p29, %p30
    %p32 = scmp.ne.s32.totalorder %s21, %s24
    %p33 = scmp.eq.s32.totalorder %s16, 1
    %p34 = por %p32, %p33
    %p35 = scmp.ne.s32.totalorder %s24, %s25
    %p36 = scmp.eq.s32.totalorder %s16, 0
    %p37 = por %p35, %p36
    %p38 = scmp.ne.s32.totalorder %s24, %s25
    %p39 = scmp.eq.s32.totalorder %s17, 1
    %p40 = por %p38, %p39
    %p42 = scmp.ne.s32.totalorder %s25, %s41
    %p43 = scmp.eq.s32.totalorder %s17, 0
    %p44 = por %p42, %p43
    %s46 = sadd.s32 %s45, 1
    %p49 = scmp.eq.s32.totalorder %s11, 1
    %p50 = scmp.ne.s32.totalorder %s45, %s47
    %p51 = scmp.eq.s32.totalorder %s11, 0
    %p52 = por %p50, %p51
    %p53 = scmp.ne.s32.totalorder %s45, %s47
    %p54 = scmp.eq.s32.totalorder %s16, 1
    %p55 = por %p53, %p54
    %p56 = scmp.ne.s32.totalorder %s47, %s48
    %p57 = scmp.eq.s32.totalorder %s16, 0
    %p58 = por %p56, %p57
    %p59 = scmp.ne.s32.totalorder %s47, %s48
    %p60 = scmp.eq.s32.totalorder %s17, 1
    %p61 = por %p59, %p60
    %p63 = scmp.ne.s32.totalorder %s48, %s62
    %p64 = scmp.eq.s32.totalorder %s17, 0
    %p65 = por %p63, %p64
    %s67 = sadd.s32 %s66, 1
    %p70 = scmp.eq.s32.totalorder %s11, 1
    %p71 = scmp.ne.s32.totalorder %s66, %s68
    %p72 = scmp.eq.s32.totalorder %s11, 0
    %p73 = por %p71, %p72
    %p74 = scmp.ne.s32.totalorder %s66, %s68
    %p75 = scmp.eq.s32.totalorder %s16, 1
    %p76 = por %p74, %p75
    %p77 = scmp.ne.s32.totalorder %s68, %s69
    %p78 = scmp.eq.s32.totalorder %s16, 0
    %p79 = por %p77, %p78
    %p80 = scmp.ne.s32.totalorder %s68, %s69
    %p81 = scmp.eq.s32.totalorder %s17, 1
    %p82 = por %p80, %p81
    %p84 = scmp.ne.s32.totalorder %s69, %s83
    %p85 = scmp.eq.s32.totalorder %s17, 0
    %p86 = por %p84, %p85
    %s88 = sadd.s32 %s87, 1
    %p91 = scmp.eq.s32.totalorder %s11, 1
    %p92 = scmp.ne.s32.totalorder %s87, %s89
    %p93 = scmp.eq.s32.totalorder %s11, 0
    %p94 = por %p92, %p93
    %p95 = scmp.ne.s32.totalorder %s87, %s89
    %p96 = scmp.eq.s32.totalorder %s16, 1
    %p97 = por %p95, %p96
    %p98 = scmp.ne.s32.totalorder %s89, %s90
    %p99 = scmp.eq.s32.totalorder %s16, 0
    %p100 = por %p98, %p99
    %p101 = scmp.ne.s32.totalorder %s89, %s90
    %p102 = scmp.eq.s32.totalorder %s17, 1
    %p103 = por %p101, %p102
    %p105 = scmp.ne.s32.totalorder %s90, %s104
    %p106 = scmp.eq.s32.totalorder %s17, 0
    %p107 = por %p105, %p106
    %s109 = sadd.s32 %s108, 1
    %p112 = scmp.eq.s32.totalorder %s11, 1
    %p113 = scmp.ne.s32.totalorder %s108, %s110
    %p114 = scmp.eq.s32.totalorder %s11, 0
    %p115 = por %p113, %p114
    %p116 = scmp.ne.s32.totalorder %s108, %s110
    %p117 = scmp.eq.s32.totalorder %s16, 1
    %p118 = por %p116, %p117
    %p119 = scmp.ne.s32.totalorder %s110, %s111
    %p120 = scmp.eq.s32.totalorder %s16, 0
    %p121 = por %p119, %p120
    %p122 = scmp.ne.s32.totalorder %s110, %s111
    %p123 = scmp.eq.s32.totalorder %s17, 1
    %p124 = por %p122, %p123
    %p126 = scmp.ne.s32.totalorder %s111, %s125
    %p127 = scmp.eq.s32.totalorder %s17, 0
    %p128 = por %p126, %p127
    %s129 = ssub.s32 %s11, %s18
    %p130 = scmp.eq.s32.totalorder %s129, 0
    %s132 = sadd.s32 %s131, 1
    %s133 = scalar_select %p130, %s131, %s132
    %p136 = pneg %p130
    %p137 = scmp.eq.s32.totalorder %s11, 1
    %p138 = por %p136, %p137
    %p139 = scmp.ne.s32.totalorder %s131, %s134
    %p140 = scmp.eq.s32.totalorder %s11, 0
    %p141 = por %p139, %p140
    %p142 = scmp.ne.s32.totalorder %s131, %s134
    %p143 = scmp.eq.s32.totalorder %s16, 1
    %p144 = por %p142, %p143
    %p145 = scmp.ne.s32.totalorder %s134, %s135
    %p146 = scmp.eq.s32.totalorder %s16, 0
    %p147 = por %p145, %p146
    %p148 = scmp.ne.s32.totalorder %s134, %s135
    %p149 = scmp.eq.s32.totalorder %s17, 1
    %p150 = por %p148, %p149
    %p152 = scmp.ne.s32.totalorder %s135, %s151
    %p153 = scmp.eq.s32.totalorder %s17, 0
    %p154 = por %p152, %p153
    %p155 = scmp.le.s32.totalorder 1, %s11
    %p156 = scmp.lt.s32.totalorder %s11, 3
    %p157 = pnand %p155, %p156
    %p158 = pneg %p157
    // Predicated region
    $region9: #{residual_block_forward.1} parent=5 // pred_check
      _
    $region10: #{residual_block_forward.1} parent=5 // pred_check_branch
      %160 = sbr.rel (%p157) target = $region12
    $region11: #{residual_block_forward.1} parent=5 // pred_region
      %s161 = ssub.s32 %s11, 1
      // Predicated region
      $region13: #{residual_block_forward.1} parent=11 // pred_check
        %p162 = pneg %p58
      $region14: #{residual_block_forward.1} parent=11 // pred_check_branch
        %164 = sbr.rel (%p162) target = $region16
      $region15: #{residual_block_forward.1} parent=11 // pred_region
        _
      $region16: #{residual_block_forward.1} parent=11 // pred_fallthru
        _
      // Predicated region
      $region17: #{residual_block_forward.1} parent=11 // pred_check
        %p165 = pneg %p79
      $region18: #{residual_block_forward.1} parent=11 // pred_check_branch
        %167 = sbr.rel (%p165) target = $region20
      $region19: #{residual_block_forward.1} parent=11 // pred_region
        _
      $region20: #{residual_block_forward.1} parent=11 // pred_fallthru
        _
      // Predicated region
      $region21: #{residual_block_forward.1} parent=11 // pred_check
        %p168 = pneg %p100
      $region22: #{residual_block_forward.1} parent=11 // pred_check_branch
        %170 = sbr.rel (%p168) target = $region24
      $region23: #{residual_block_forward.1} parent=11 // pred_region
        _
      $region24: #{residual_block_forward.1} parent=11 // pred_fallthru
        _
      // Predicated region
      $region25: #{residual_block_forward.1} parent=11 // pred_check
        %p171 = pneg %p121
      $region26: #{residual_block_forward.1} parent=11 // pred_check_branch
        %173 = sbr.rel (%p171) target = $region28
      $region27: #{residual_block_forward.1} parent=11 // pred_region
        _
      $region28: #{residual_block_forward.1} parent=11 // pred_fallthru
        _
    $region12: #{residual_block_forward.1} parent=5 // pred_fallthru
      _
    %p174 = scmp.lt.s32.totalorder %s11, 2
    // Predicated region
    $region29: #{residual_block_forward.1} parent=5 // pred_check
      %p175 = pneg %p174
    $region30: #{residual_block_forward.1} parent=5 // pred_check_branch
      %177 = sbr.rel (%p175) target = $region32
    $region31: #{residual_block_forward.1} parent=5 // pred_region
      // Predicated region
      $region33: #{residual_block_forward.1} parent=31 // pred_check
        %p178 = pneg %p31
      $region34: #{residual_block_forward.1} parent=31 // pred_check_branch
        %180 = sbr.rel (%p178) target = $region36
      $region35: #{residual_block_forward.1} parent=31 // pred_region
        %p181 = scmp.lt.s32.totalorder %s11, 1
        %s182 = scalar_select %p181, %s11, 1
        %s183 = smul.addr %s182, 36
        %s184 = smul.addr %s183, 8
        %s185 = scalar_lea.vmem %s0, %s184
      $region36: #{residual_block_forward.1} parent=31 // pred_fallthru
        _
    $region32: #{residual_block_forward.1} parent=5 // pred_fallthru
      _
    %p186 = scmp.le.s32.totalorder 1, %s11
    %p187 = scmp.lt.s32.totalorder %s11, 3
    %p188 = pnand %p186, %p187
    %p189 = pneg %p188
    // Predicated region
    $region37: #{residual_block_forward.1} parent=5 // pred_check
      _
    $region38: #{residual_block_forward.1} parent=5 // pred_check_branch
      %191 = sbr.rel (%p188) target = $region40
    $region39: #{residual_block_forward.1} parent=5 // pred_region
      %s192 = ssub.s32 %s11, 1
      %p193 = scmp.lt.s32.totalorder %s16, 1
      %s194 = scalar_select %p193, %s16, 1
      %s195 = smul.addr %s194, 36
      %s196 = smul.addr %s195, 8
      %s197 = scalar_lea.vmem %s0, %s196
      %p198 = pneg %p37
      %p199 = pneg %p34
      %p200 = pneg %p58
      %p201 = pneg %p55
      %p202 = pneg %p79
      %p203 = pneg %p76
      %p204 = pneg %p100
      %p205 = pneg %p97
      %p206 = pneg %p121
      %p207 = pneg %p118
      %p208 = pneg %p147
      %p209 = pneg %p144
      %p210 = scmp.lt.s32.totalorder %s16, 1
      %s211 = scalar_select %p210, %s16, 1
      %s212 = smul.addr %s211, 36
      %s213 = smul.addr %s212, 8
      %s214 = scalar_lea.vmem %s5, %s213
      %p215 = scmp.lt.s32.totalorder %s16, 1
      %s216 = scalar_select %p215, %s16, 1
      %s217 = smul.addr %s216, 36
      %s218 = smul.addr %s217, 8
      %s219 = scalar_lea.vmem %s0, %s218
      %p220 = scmp.lt.s32.totalorder %s16, 1
      %s221 = scalar_select %p220, %s16, 1
      %s222 = smul.addr %s221, 36
      %s223 = smul.addr %s222, 8
      %s224 = scalar_lea.vmem %s5, %s223
      %v225 = vlaneseq
      %v226 = vshrl.u32 %v225, 7
      %v227 = vadd.s32 %v226, 8
      %v228 = vadd.s32 %v226, 16
      %v229 = vadd.s32 %v226, 24
      %v230 = vadd.s32 %v226, 32
      %v231 = vadd.s32 %v226, 40
      %v232 = vadd.s32 %v226, 48
      %v233 = vadd.s32 %v226, 56
      %v234 = vadd.s32 %v226, 64
      %v235 = vadd.s32 %v226, 72
      %v236 = vadd.s32 %v226, 80
      %v237 = vadd.s32 %v226, 88
      %v238 = vadd.s32 %v226, 96
      %v239 = vadd.s32 %v226, 104
      %v240 = vadd.s32 %v226, 112
      %v241 = vadd.s32 %v226, 120
      %v242 = vadd.s32 %v226, 128
      %v243 = vadd.s32 %v226, 136
      %v244 = vadd.s32 %v226, 144
      %v245 = vadd.s32 %v226, 152
      %v246 = vadd.s32 %v226, 160
      %v247 = vadd.s32 %v226, 168
      %v248 = vadd.s32 %v226, 176
      %v249 = vadd.s32 %v226, 184
      %v250 = vadd.s32 %v226, 192
      %v251 = vadd.s32 %v226, 200
      %v252 = vadd.s32 %v226, 208
      %v253 = vadd.s32 %v226, 216
      %v254 = vadd.s32 %v226, 224
      %v255 = vadd.s32 %v226, 232
      %v256 = vadd.s32 %v226, 240
      %v257 = vadd.s32 %v226, 248
      %v258 = vadd.s32 %v226, 256
      %v259 = vadd.s32 %v226, 264
      %v260 = vadd.s32 %v226, 272
      %v261 = vadd.s32 %v226, 280
      %vm262 = vcmp.lt.s32.totalorder %v226, 0
      %v263 = vsub.s32 0, %v226
      %v264 = vsel %vm262, %v263, %v226
      %v265 = vmul.u32.u64.compose %v264, 3817748708
      %v266 = vextract.low.u32 %v265
      %v267 = vextract.high.u32 %v265
      %v268 = vshrl.u32 %v267, 4
      %v269 = vmul.u32 %v268, 18
      %v270 = vsub.s32 %v264, %v269
      %v271 = vsub.s32 0, %v270
      %v272 = vsel %vm262, %v271, %v270
      %vm273 = vcmp.lt.s32.totalorder %v227, 0
      %v274 = vsub.s32 0, %v227
      %v275 = vsel %vm273, %v274, %v227
      %v276 = vmul.u32.u64.compose %v275, 3817748708
      %v277 = vextract.low.u32 %v276
      %v278 = vextract.high.u32 %v276
      %v279 = vshrl.u32 %v278, 4
      %v280 = vmul.u32 %v279, 18
      %v281 = vsub.s32 %v275, %v280
      %v282 = vsub.s32 0, %v281
      %v283 = vsel %vm273, %v282, %v281
      %vm284 = vcmp.lt.s32.totalorder %v228, 0
      %v285 = vsub.s32 0, %v228
      %v286 = vsel %vm284, %v285, %v228
      %v287 = vmul.u32.u64.compose %v286, 3817748708
      %v288 = vextract.low.u32 %v287
      %v289 = vextract.high.u32 %v287
      %v290 = vshrl.u32 %v289, 4
      %v291 = vmul.u32 %v290, 18
      %v292 = vsub.s32 %v286, %v291
      %v293 = vsub.s32 0, %v292
      %v294 = vsel %vm284, %v293, %v292
      %vm295 = vcmp.lt.s32.totalorder %v229, 0
      %v296 = vsub.s32 0, %v229
      %v297 = vsel %vm295, %v296, %v229
      %v298 = vmul.u32.u64.compose %v297, 3817748708
      %v299 = vextract.low.u32 %v298
      %v300 = vextract.high.u32 %v298
      %v301 = vshrl.u32 %v300, 4
      %v302 = vmul.u32 %v301, 18
      %v303 = vsub.s32 %v297, %v302
      %v304 = vsub.s32 0, %v303
      %v305 = vsel %vm295, %v304, %v303
      %vm306 = vcmp.lt.s32.totalorder %v230, 0
      %v307 = vsub.s32 0, %v230
      %v308 = vsel %vm306, %v307, %v230
      %v309 = vmul.u32.u64.compose %v308, 3817748708
      %v310 = vextract.low.u32 %v309
      %v311 = vextract.high.u32 %v309
      %v312 = vshrl.u32 %v311, 4
      %v313 = vmul.u32 %v312, 18
      %v314 = vsub.s32 %v308, %v313
      %v315 = vsub.s32 0, %v314
      %v316 = vsel %vm306, %v315, %v314
      %vm317 = vcmp.lt.s32.totalorder %v231, 0
      %v318 = vsub.s32 0, %v231
      %v319 = vsel %vm317, %v318, %v231
      %v320 = vmul.u32.u64.compose %v319, 3817748708
      %v321 = vextract.low.u32 %v320
      %v322 = vextract.high.u32 %v320
      %v323 = vshrl.u32 %v322, 4
      %v324 = vmul.u32 %v323, 18
      %v325 = vsub.s32 %v319, %v324
      %v326 = vsub.s32 0, %v325
      %v327 = vsel %vm317, %v326, %v325
      %vm328 = vcmp.lt.s32.totalorder %v232, 0
      %v329 = vsub.s32 0, %v232
      %v330 = vsel %vm328, %v329, %v232
      %v331 = vmul.u32.u64.compose %v330, 3817748708
      %v332 = vextract.low.u32 %v331
      %v333 = vextract.high.u32 %v331
      %v334 = vshrl.u32 %v333, 4
      %v335 = vmul.u32 %v334, 18
      %v336 = vsub.s32 %v330, %v335
      %v337 = vsub.s32 0, %v336
      %v338 = vsel %vm328, %v337, %v336
      %vm339 = vcmp.lt.s32.totalorder %v233, 0
      %v340 = vsub.s32 0, %v233
      %v341 = vsel %vm339, %v340, %v233
      %v342 = vmul.u32.u64.compose %v341, 3817748708
      %v343 = vextract.low.u32 %v342
      %v344 = vextract.high.u32 %v342
      %v345 = vshrl.u32 %v344, 4
      %v346 = vmul.u32 %v345, 18
      %v347 = vsub.s32 %v341, %v346
      %v348 = vsub.s32 0, %v347
      %v349 = vsel %vm339, %v348, %v347
      %vm350 = vcmp.lt.s32.totalorder %v234, 0
      %v351 = vsub.s32 0, %v234
      %v352 = vsel %vm350, %v351, %v234
      %v353 = vmul.u32.u64.compose %v352, 3817748708
      %v354 = vextract.low.u32 %v353
      %v355 = vextract.high.u32 %v353
      %v356 = vshrl.u32 %v355, 4
      %v357 = vmul.u32 %v356, 18
      %v358 = vsub.s32 %v352, %v357
      %v359 = vsub.s32 0, %v358
      %v360 = vsel %vm350, %v359, %v358
      %vm361 = vcmp.lt.s32.totalorder %v235, 0
      %v362 = vsub.s32 0, %v235
      %v363 = vsel %vm361, %v362, %v235
      %v364 = vmul.u32.u64.compose %v363, 3817748708
      %v365 = vextract.low.u32 %v364
      %v366 = vextract.high.u32 %v364
      %v367 = vshrl.u32 %v366, 4
      %v368 = vmul.u32 %v367, 18
      %v369 = vsub.s32 %v363, %v368
      %v370 = vsub.s32 0, %v369
      %v371 = vsel %vm361, %v370, %v369
      %vm372 = vcmp.lt.s32.totalorder %v236, 0
      %v373 = vsub.s32 0, %v236
      %v374 = vsel %vm372, %v373, %v236
      %v375 = vmul.u32.u64.compose %v374, 3817748708
      %v376 = vextract.low.u32 %v375
      %v377 = vextract.high.u32 %v375
      %v378 = vshrl.u32 %v377, 4
      %v379 = vmul.u32 %v378, 18
      %v380 = vsub.s32 %v374, %v379
      %v381 = vsub.s32 0, %v380
      %v382 = vsel %vm372, %v381, %v380
      %vm383 = vcmp.lt.s32.totalorder %v237, 0
      %v384 = vsub.s32 0, %v237
      %v385 = vsel %vm383, %v384, %v237
      %v386 = vmul.u32.u64.compose %v385, 3817748708
      %v387 = vextract.low.u32 %v386
      %v388 = vextract.high.u32 %v386
      %v389 = vshrl.u32 %v388, 4
      %v390 = vmul.u32 %v389, 18
      %v391 = vsub.s32 %v385, %v390
      %v392 = vsub.s32 0, %v391
      %v393 = vsel %vm383, %v392, %v391
      %vm394 = vcmp.lt.s32.totalorder %v238, 0
      %v395 = vsub.s32 0, %v238
      %v396 = vsel %vm394, %v395, %v238
      %v397 = vmul.u32.u64.compose %v396, 3817748708
      %v398 = vextract.low.u32 %v397
      %v399 = vextract.high.u32 %v397
      %v400 = vshrl.u32 %v399, 4
      %v401 = vmul.u32 %v400, 18
      %v402 = vsub.s32 %v396, %v401
      %v403 = vsub.s32 0, %v402
      %v404 = vsel %vm394, %v403, %v402
      %vm405 = vcmp.lt.s32.totalorder %v239, 0
      %v406 = vsub.s32 0, %v239
      %v407 = vsel %vm405, %v406, %v239
      %v408 = vmul.u32.u64.compose %v407, 3817748708
      %v409 = vextract.low.u32 %v408
      %v410 = vextract.high.u32 %v408
      %v411 = vshrl.u32 %v410, 4
      %v412 = vmul.u32 %v411, 18
      %v413 = vsub.s32 %v407, %v412
      %v414 = vsub.s32 0, %v413
      %v415 = vsel %vm405, %v414, %v413
      %vm416 = vcmp.lt.s32.totalorder %v240, 0
      %v417 = vsub.s32 0, %v240
      %v418 = vsel %vm416, %v417, %v240
      %v419 = vmul.u32.u64.compose %v418, 3817748708
      %v420 = vextract.low.u32 %v419
      %v421 = vextract.high.u32 %v419
      %v422 = vshrl.u32 %v421, 4
      %v423 = vmul.u32 %v422, 18
      %v424 = vsub.s32 %v418, %v423
      %v425 = vsub.s32 0, %v424
      %v426 = vsel %vm416, %v425, %v424
      %vm427 = vcmp.lt.s32.totalorder %v241, 0
      %v428 = vsub.s32 0, %v241
      %v429 = vsel %vm427, %v428, %v241
      %v430 = vmul.u32.u64.compose %v429, 3817748708
      %v431 = vextract.low.u32 %v430
      %v432 = vextract.high.u32 %v430
      %v433 = vshrl.u32 %v432, 4
      %v434 = vmul.u32 %v433, 18
      %v435 = vsub.s32 %v429, %v434
      %v436 = vsub.s32 0, %v435
      %v437 = vsel %vm427, %v436, %v435
      %vm438 = vcmp.lt.s32.totalorder %v242, 0
      %v439 = vsub.s32 0, %v242
      %v440 = vsel %vm438, %v439, %v242
      %v441 = vmul.u32.u64.compose %v440, 3817748708
      %v442 = vextract.low.u32 %v441
      %v443 = vextract.high.u32 %v441
      %v444 = vshrl.u32 %v443, 4
      %v445 = vmul.u32 %v444, 18
      %v446 = vsub.s32 %v440, %v445
      %v447 = vsub.s32 0, %v446
      %v448 = vsel %vm438, %v447, %v446
      %vm449 = vcmp.lt.s32.totalorder %v243, 0
      %v450 = vsub.s32 0, %v243
      %v451 = vsel %vm449, %v450, %v243
      %v452 = vmul.u32.u64.compose %v451, 3817748708
      %v453 = vextract.low.u32 %v452
      %v454 = vextract.high.u32 %v452
      %v455 = vshrl.u32 %v454, 4
      %v456 = vmul.u32 %v455, 18
      %v457 = vsub.s32 %v451, %v456
      %v458 = vsub.s32 0, %v457
      %v459 = vsel %vm449, %v458, %v457
      %vm460 = vcmp.lt.s32.totalorder %v244, 0
      %v461 = vsub.s32 0, %v244
      %v462 = vsel %vm460, %v461, %v244
      %v463 = vmul.u32.u64.compose %v462, 3817748708
      %v464 = vextract.low.u32 %v463
      %v465 = vextract.high.u32 %v463
      %v466 = vshrl.u32 %v465, 4
      %v467 = vmul.u32 %v466, 18
      %v468 = vsub.s32 %v462, %v467
      %v469 = vsub.s32 0, %v468
      %v470 = vsel %vm460, %v469, %v468
      %vm471 = vcmp.lt.s32.totalorder %v245, 0
      %v472 = vsub.s32 0, %v245
      %v473 = vsel %vm471, %v472, %v245
      %v474 = vmul.u32.u64.compose %v473, 3817748708
      %v475 = vextract.low.u32 %v474
      %v476 = vextract.high.u32 %v474
      %v477 = vshrl.u32 %v476, 4
      %v478 = vmul.u32 %v477, 18
      %v479 = vsub.s32 %v473, %v478
      %v480 = vsub.s32 0, %v479
      %v481 = vsel %vm471, %v480, %v479
      %vm482 = vcmp.lt.s32.totalorder %v246, 0
      %v483 = vsub.s32 0, %v246
      %v484 = vsel %vm482, %v483, %v246
      %v485 = vmul.u32.u64.compose %v484, 3817748708
      %v486 = vextract.low.u32 %v485
      %v487 = vextract.high.u32 %v485
      %v488 = vshrl.u32 %v487, 4
      %v489 = vmul.u32 %v488, 18
      %v490 = vsub.s32 %v484, %v489
      %v491 = vsub.s32 0, %v490
      %v492 = vsel %vm482, %v491, %v490
      %vm493 = vcmp.lt.s32.totalorder %v247, 0
      %v494 = vsub.s32 0, %v247
      %v495 = vsel %vm493, %v494, %v247
      %v496 = vmul.u32.u64.compose %v495, 3817748708
      %v497 = vextract.low.u32 %v496
      %v498 = vextract.high.u32 %v496
      %v499 = vshrl.u32 %v498, 4
      %v500 = vmul.u32 %v499, 18
      %v501 = vsub.s32 %v495, %v500
      %v502 = vsub.s32 0, %v501
      %v503 = vsel %vm493, %v502, %v501
      %vm504 = vcmp.lt.s32.totalorder %v248, 0
      %v505 = vsub.s32 0, %v248
      %v506 = vsel %vm504, %v505, %v248
      %v507 = vmul.u32.u64.compose %v506, 3817748708
      %v508 = vextract.low.u32 %v507
      %v509 = vextract.high.u32 %v507
      %v510 = vshrl.u32 %v509, 4
      %v511 = vmul.u32 %v510, 18
      %v512 = vsub.s32 %v506, %v511
      %v513 = vsub.s32 0, %v512
      %v514 = vsel %vm504, %v513, %v512
      %vm515 = vcmp.lt.s32.totalorder %v249, 0
      %v516 = vsub.s32 0, %v249
      %v517 = vsel %vm515, %v516, %v249
      %v518 = vmul.u32.u64.compose %v517, 3817748708
      %v519 = vextract.low.u32 %v518
      %v520 = vextract.high.u32 %v518
      %v521 = vshrl.u32 %v520, 4
      %v522 = vmul.u32 %v521, 18
      %v523 = vsub.s32 %v517, %v522
      %v524 = vsub.s32 0, %v523
      %v525 = vsel %vm515, %v524, %v523
      %vm526 = vcmp.lt.s32.totalorder %v250, 0
      %v527 = vsub.s32 0, %v250
      %v528 = vsel %vm526, %v527, %v250
      %v529 = vmul.u32.u64.compose %v528, 3817748708
      %v530 = vextract.low.u32 %v529
      %v531 = vextract.high.u32 %v529
      %v532 = vshrl.u32 %v531, 4
      %v533 = vmul.u32 %v532, 18
      %v534 = vsub.s32 %v528, %v533
      %v535 = vsub.s32 0, %v534
      %v536 = vsel %vm526, %v535, %v534
      %vm537 = vcmp.lt.s32.totalorder %v251, 0
      %v538 = vsub.s32 0, %v251
      %v539 = vsel %vm537, %v538, %v251
      %v540 = vmul.u32.u64.compose %v539, 3817748708
      %v541 = vextract.low.u32 %v540
      %v542 = vextract.high.u32 %v540
      %v543 = vshrl.u32 %v542, 4
      %v544 = vmul.u32 %v543, 18
      %v545 = vsub.s32 %v539, %v544
      %v546 = vsub.s32 0, %v545
      %v547 = vsel %vm537, %v546, %v545
      %vm548 = vcmp.lt.s32.totalorder %v252, 0
      %v549 = vsub.s32 0, %v252
      %v550 = vsel %vm548, %v549, %v252
      %v551 = vmul.u32.u64.compose %v550, 3817748708
      %v552 = vextract.low.u32 %v551
      %v553 = vextract.high.u32 %v551
      %v554 = vshrl.u32 %v553, 4
      %v555 = vmul.u32 %v554, 18
      %v556 = vsub.s32 %v550, %v555
      %v557 = vsub.s32 0, %v556
      %v558 = vsel %vm548, %v557, %v556
      %vm559 = vcmp.lt.s32.totalorder %v253, 0
      %v560 = vsub.s32 0, %v253
      %v561 = vsel %vm559, %v560, %v253
      %v562 = vmul.u32.u64.compose %v561, 3817748708
      %v563 = vextract.low.u32 %v562
      %v564 = vextract.high.u32 %v562
      %v565 = vshrl.u32 %v564, 4
      %v566 = vmul.u32 %v565, 18
      %v567 = vsub.s32 %v561, %v566
      %v568 = vsub.s32 0, %v567
      %v569 = vsel %vm559, %v568, %v567
      %vm570 = vcmp.lt.s32.totalorder %v254, 0
      %v571 = vsub.s32 0, %v254
      %v572 = vsel %vm570, %v571, %v254
      %v573 = vmul.u32.u64.compose %v572, 3817748708
      %v574 = vextract.low.u32 %v573
      %v575 = vextract.high.u32 %v573
      %v576 = vshrl.u32 %v575, 4
      %v577 = vmul.u32 %v576, 18
      %v578 = vsub.s32 %v572, %v577
      %v579 = vsub.s32 0, %v578
      %v580 = vsel %vm570, %v579, %v578
      %vm581 = vcmp.lt.s32.totalorder %v255, 0
      %v582 = vsub.s32 0, %v255
      %v583 = vsel %vm581, %v582, %v255
      %v584 = vmul.u32.u64.compose %v583, 3817748708
      %v585 = vextract.low.u32 %v584
      %v586 = vextract.high.u32 %v584
      %v587 = vshrl.u32 %v586, 4
      %v588 = vmul.u32 %v587, 18
      %v589 = vsub.s32 %v583, %v588
      %v590 = vsub.s32 0, %v589
      %v591 = vsel %vm581, %v590, %v589
      %vm592 = vcmp.lt.s32.totalorder %v256, 0
      %v593 = vsub.s32 0, %v256
      %v594 = vsel %vm592, %v593, %v256
      %v595 = vmul.u32.u64.compose %v594, 3817748708
      %v596 = vextract.low.u32 %v595
      %v597 = vextract.high.u32 %v595
      %v598 = vshrl.u32 %v597, 4
      %v599 = vmul.u32 %v598, 18
      %v600 = vsub.s32 %v594, %v599
      %v601 = vsub.s32 0, %v600
      %v602 = vsel %vm592, %v601, %v600
      %vm603 = vcmp.lt.s32.totalorder %v257, 0
      %v604 = vsub.s32 0, %v257
      %v605 = vsel %vm603, %v604, %v257
      %v606 = vmul.u32.u64.compose %v605, 3817748708
      %v607 = vextract.low.u32 %v606
      %v608 = vextract.high.u32 %v606
      %v609 = vshrl.u32 %v608, 4
      %v610 = vmul.u32 %v609, 18
      %v611 = vsub.s32 %v605, %v610
      %v612 = vsub.s32 0, %v611
      %v613 = vsel %vm603, %v612, %v611
      %vm614 = vcmp.lt.s32.totalorder %v258, 0
      %v615 = vsub.s32 0, %v258
      %v616 = vsel %vm614, %v615, %v258
      %v617 = vmul.u32.u64.compose %v616, 3817748708
      %v618 = vextract.low.u32 %v617
      %v619 = vextract.high.u32 %v617
      %v620 = vshrl.u32 %v619, 4
      %v621 = vmul.u32 %v620, 18
      %v622 = vsub.s32 %v616, %v621
      %v623 = vsub.s32 0, %v622
      %v624 = vsel %vm614, %v623, %v622
      %vm625 = vcmp.lt.s32.totalorder %v259, 0
      %v626 = vsub.s32 0, %v259
      %v627 = vsel %vm625, %v626, %v259
      %v628 = vmul.u32.u64.compose %v627, 3817748708
      %v629 = vextract.low.u32 %v628
      %v630 = vextract.high.u32 %v628
      %v631 = vshrl.u32 %v630, 4
      %v632 = vmul.u32 %v631, 18
      %v633 = vsub.s32 %v627, %v632
      %v634 = vsub.s32 0, %v633
      %v635 = vsel %vm625, %v634, %v633
      %vm636 = vcmp.lt.s32.totalorder %v260, 0
      %v637 = vsub.s32 0, %v260
      %v638 = vsel %vm636, %v637, %v260
      %v639 = vmul.u32.u64.compose %v638, 3817748708
      %v640 = vextract.low.u32 %v639
      %v641 = vextract.high.u32 %v639
      %v642 = vshrl.u32 %v641, 4
      %v643 = vmul.u32 %v642, 18
      %v644 = vsub.s32 %v638, %v643
      %v645 = vsub.s32 0, %v644
      %v646 = vsel %vm636, %v645, %v644
      %vm647 = vcmp.lt.s32.totalorder %v261, 0
      %v648 = vsub.s32 0, %v261
      %v649 = vsel %vm647, %v648, %v261
      %v650 = vmul.u32.u64.compose %v649, 3817748708
      %v651 = vextract.low.u32 %v650
      %v652 = vextract.high.u32 %v650
      %v653 = vshrl.u32 %v652, 4
      %v654 = vmul.u32 %v653, 18
      %v655 = vsub.s32 %v649, %v654
      %v656 = vsub.s32 0, %v655
      %v657 = vsel %vm647, %v656, %v655
      %vm658 = vcmp.ne.s32.totalorder %v272, 0
      %vm659 = vcmp.ne.s32.totalorder %v283, 0
      %vm660 = vcmp.ne.s32.totalorder %v294, 0
      %vm661 = vcmp.ne.s32.totalorder %v305, 0
      %vm662 = vcmp.ne.s32.totalorder %v316, 0
      %vm663 = vcmp.ne.s32.totalorder %v327, 0
      %vm664 = vcmp.ne.s32.totalorder %v338, 0
      %vm665 = vcmp.ne.s32.totalorder %v349, 0
      %vm666 = vcmp.ne.s32.totalorder %v360, 0
      %vm667 = vcmp.ne.s32.totalorder %v371, 0
      %vm668 = vcmp.ne.s32.totalorder %v382, 0
      %vm669 = vcmp.ne.s32.totalorder %v393, 0
      %vm670 = vcmp.ne.s32.totalorder %v404, 0
      %vm671 = vcmp.ne.s32.totalorder %v415, 0
      %vm672 = vcmp.ne.s32.totalorder %v426, 0
      %vm673 = vcmp.ne.s32.totalorder %v437, 0
      %vm674 = vcmp.ne.s32.totalorder %v448, 0
      %vm675 = vcmp.ne.s32.totalorder %v459, 0
      %vm676 = vcmp.ne.s32.totalorder %v470, 0
      %vm677 = vcmp.ne.s32.totalorder %v481, 0
      %vm678 = vcmp.ne.s32.totalorder %v492, 0
      %vm679 = vcmp.ne.s32.totalorder %v503, 0
      %vm680 = vcmp.ne.s32.totalorder %v514, 0
      %vm681 = vcmp.ne.s32.totalorder %v525, 0
      %vm682 = vcmp.ne.s32.totalorder %v536, 0
      %vm683 = vcmp.ne.s32.totalorder %v547, 0
      %vm684 = vcmp.ne.s32.totalorder %v558, 0
      %vm685 = vcmp.ne.s32.totalorder %v569, 0
      %vm686 = vcmp.ne.s32.totalorder %v580, 0
      %vm687 = vcmp.ne.s32.totalorder %v591, 0
      %vm688 = vcmp.ne.s32.totalorder %v602, 0
      %vm689 = vcmp.ne.s32.totalorder %v613, 0
      %vm690 = vcmp.ne.s32.totalorder %v624, 0
      %vm691 = vcmp.ne.s32.totalorder %v635, 0
      %vm692 = vcmp.ne.s32.totalorder %v646, 0
      %vm693 = vcmp.ne.s32.totalorder %v657, 0
      %vm694 = vcmp.lt.s32.totalorder %v272, 0
      %vm695 = vcmp.lt.s32.totalorder %v283, 0
      %vm696 = vcmp.lt.s32.totalorder %v294, 0
      %vm697 = vcmp.lt.s32.totalorder %v305, 0
      %vm698 = vcmp.lt.s32.totalorder %v316, 0
      %vm699 = vcmp.lt.s32.totalorder %v327, 0
      %vm700 = vcmp.lt.s32.totalorder %v338, 0
      %vm701 = vcmp.lt.s32.totalorder %v349, 0
      %vm702 = vcmp.lt.s32.totalorder %v360, 0
      %vm703 = vcmp.lt.s32.totalorder %v371, 0
      %vm704 = vcmp.lt.s32.totalorder %v382, 0
      %vm705 = vcmp.lt.s32.totalorder %v393, 0
      %vm706 = vcmp.lt.s32.totalorder %v404, 0
      %vm707 = vcmp.lt.s32.totalorder %v415, 0
      %vm708 = vcmp.lt.s32.totalorder %v426, 0
      %vm709 = vcmp.lt.s32.totalorder %v437, 0
      %vm710 = vcmp.lt.s32.totalorder %v448, 0
      %vm711 = vcmp.lt.s32.totalorder %v459, 0
      %vm712 = vcmp.lt.s32.totalorder %v470, 0
      %vm713 = vcmp.lt.s32.totalorder %v481, 0
      %vm714 = vcmp.lt.s32.totalorder %v492, 0
      %vm715 = vcmp.lt.s32.totalorder %v503, 0
      %vm716 = vcmp.lt.s32.totalorder %v514, 0
      %vm717 = vcmp.lt.s32.totalorder %v525, 0
      %vm718 = vcmp.lt.s32.totalorder %v536, 0
      %vm719 = vcmp.lt.s32.totalorder %v547, 0
      %vm720 = vcmp.lt.s32.totalorder %v558, 0
      %vm721 = vcmp.lt.s32.totalorder %v569, 0
      %vm722 = vcmp.lt.s32.totalorder %v580, 0
      %vm723 = vcmp.lt.s32.totalorder %v591, 0
      %vm724 = vcmp.lt.s32.totalorder %v602, 0
      %vm725 = vcmp.lt.s32.totalorder %v613, 0
      %vm726 = vcmp.lt.s32.totalorder %v624, 0
      %vm727 = vcmp.lt.s32.totalorder %v635, 0
      %vm728 = vcmp.lt.s32.totalorder %v646, 0
      %vm729 = vcmp.lt.s32.totalorder %v657, 0
      %vm730 = vmand %vm694, %vm658
      %vm731 = vmand %vm695, %vm659
      %vm732 = vmand %vm696, %vm660
      %vm733 = vmand %vm697, %vm661
      %vm734 = vmand %vm698, %vm662
      %vm735 = vmand %vm699, %vm663
      %vm736 = vmand %vm700, %vm664
      %vm737 = vmand %vm701, %vm665
      %vm738 = vmand %vm702, %vm666
      %vm739 = vmand %vm703, %vm667
      %vm740 = vmand %vm704, %vm668
      %vm741 = vmand %vm705, %vm669
      %vm742 = vmand %vm706, %vm670
      %vm743 = vmand %vm707, %vm671
      %vm744 = vmand %vm708, %vm672
      %vm745 = vmand %vm709, %vm673
      %vm746 = vmand %vm710, %vm674
      %vm747 = vmand %vm711, %vm675
      %vm748 = vmand %vm712, %vm676
      %vm749 = vmand %vm713, %vm677
      %vm750 = vmand %vm714, %vm678
      %vm751 = vmand %vm715, %vm679
      %vm752 = vmand %vm716, %vm680
      %vm753 = vmand %vm717, %vm681
      %vm754 = vmand %vm718, %vm682
      %vm755 = vmand %vm719, %vm683
      %vm756 = vmand %vm720, %vm684
      %vm757 = vmand %vm721, %vm685
      %vm758 = vmand %vm722, %vm686
      %vm759 = vmand %vm723, %vm687
      %vm760 = vmand %vm724, %vm688
      %vm761 = vmand %vm725, %vm689
      %vm762 = vmand %vm726, %vm690
      %vm763 = vmand %vm727, %vm691
      %vm764 = vmand %vm728, %vm692
      %vm765 = vmand %vm729, %vm693
      %v766 = vadd.s32 %v272, 18
      %v767 = vadd.s32 %v283, 18
      %v768 = vadd.s32 %v294, 18
      %v769 = vadd.s32 %v305, 18
      %v770 = vadd.s32 %v316, 18
      %v771 = vadd.s32 %v327, 18
      %v772 = vadd.s32 %v338, 18
      %v773 = vadd.s32 %v349, 18
      %v774 = vadd.s32 %v360, 18
      %v775 = vadd.s32 %v371, 18
      %v776 = vadd.s32 %v382, 18
      %v777 = vadd.s32 %v393, 18
      %v778 = vadd.s32 %v404, 18
      %v779 = vadd.s32 %v415, 18
      %v780 = vadd.s32 %v426, 18
      %v781 = vadd.s32 %v437, 18
      %v782 = vadd.s32 %v448, 18
      %v783 = vadd.s32 %v459, 18
      %v784 = vadd.s32 %v470, 18
      %v785 = vadd.s32 %v481, 18
      %v786 = vadd.s32 %v492, 18
      %v787 = vadd.s32 %v503, 18
      %v788 = vadd.s32 %v514, 18
      %v789 = vadd.s32 %v525, 18
      %v790 = vadd.s32 %v536, 18
      %v791 = vadd.s32 %v547, 18
      %v792 = vadd.s32 %v558, 18
      %v793 = vadd.s32 %v569, 18
      %v794 = vadd.s32 %v580, 18
      %v795 = vadd.s32 %v591, 18
      %v796 = vadd.s32 %v602, 18
      %v797 = vadd.s32 %v613, 18
      %v798 = vadd.s32 %v624, 18
      %v799 = vadd.s32 %v635, 18
      %v800 = vadd.s32 %v646, 18
      %v801 = vadd.s32 %v657, 18
      %v802 = vsel %vm730, %v766, %v272
      %v803 = vsel %vm731, %v767, %v283
      %v804 = vsel %vm732, %v768, %v294
      %v805 = vsel %vm733, %v769, %v305
      %v806 = vsel %vm734, %v770, %v316
      %v807 = vsel %vm735, %v771, %v327
      %v808 = vsel %vm736, %v772, %v338
      %v809 = vsel %vm737, %v773, %v349
      %v810 = vsel %vm738, %v774, %v360
      %v811 = vsel %vm739, %v775, %v371
      %v812 = vsel %vm740, %v776, %v382
      %v813 = vsel %vm741, %v777, %v393
      %v814 = vsel %vm742, %v778, %v404
      %v815 = vsel %vm743, %v779, %v415
      %v816 = vsel %vm744, %v780, %v426
      %v817 = vsel %vm745, %v781, %v437
      %v818 = vsel %vm746, %v782, %v448
      %v819 = vsel %vm747, %v783, %v459
      %v820 = vsel %vm748, %v784, %v470
      %v821 = vsel %vm749, %v785, %v481
      %v822 = vsel %vm750, %v786, %v492
      %v823 = vsel %vm751, %v787, %v503
      %v824 = vsel %vm752, %v788, %v514
      %v825 = vsel %vm753, %v789, %v525
      %v826 = vsel %vm754, %v790, %v536
      %v827 = vsel %vm755, %v791, %v547
      %v828 = vsel %vm756, %v792, %v558
      %v829 = vsel %vm757, %v793, %v569
      %v830 = vsel %vm758, %v794, %v580
      %v831 = vsel %vm759, %v795, %v591
      %v832 = vsel %vm760, %v796, %v602
      %v833 = vsel %vm761, %v797, %v613
      %v834 = vsel %vm762, %v798, %v624
      %v835 = vsel %vm763, %v799, %v635
      %v836 = vsel %vm764, %v800, %v646
      %v837 = vsel %vm765, %v801, %v657
      %vm838 = vcmp.lt.s32.totalorder %v802, 16
      %vm839 = vcmp.lt.s32.totalorder %v803, 16
      %vm840 = vcmp.lt.s32.totalorder %v804, 16
      %vm841 = vcmp.lt.s32.totalorder %v805, 16
      %vm842 = vcmp.lt.s32.totalorder %v806, 16
      %vm843 = vcmp.lt.s32.totalorder %v807, 16
      %vm844 = vcmp.lt.s32.totalorder %v808, 16
      %vm845 = vcmp.lt.s32.totalorder %v809, 16
      %vm846 = vcmp.lt.s32.totalorder %v810, 16
      %vm847 = vcmp.lt.s32.totalorder %v811, 16
      %vm848 = vcmp.lt.s32.totalorder %v812, 16
      %vm849 = vcmp.lt.s32.totalorder %v813, 16
      %vm850 = vcmp.lt.s32.totalorder %v814, 16
      %vm851 = vcmp.lt.s32.totalorder %v815, 16
      %vm852 = vcmp.lt.s32.totalorder %v816, 16
      %vm853 = vcmp.lt.s32.totalorder %v817, 16
      %vm854 = vcmp.lt.s32.totalorder %v818, 16
      %vm855 = vcmp.lt.s32.totalorder %v819, 16
      %vm856 = vcmp.lt.s32.totalorder %v820, 16
      %vm857 = vcmp.lt.s32.totalorder %v821, 16
      %vm858 = vcmp.lt.s32.totalorder %v822, 16
      %vm859 = vcmp.lt.s32.totalorder %v823, 16
      %vm860 = vcmp.lt.s32.totalorder %v824, 16
      %vm861 = vcmp.lt.s32.totalorder %v825, 16
      %vm862 = vcmp.lt.s32.totalorder %v826, 16
      %vm863 = vcmp.lt.s32.totalorder %v827, 16
      %vm864 = vcmp.lt.s32.totalorder %v828, 16
      %vm865 = vcmp.lt.s32.totalorder %v829, 16
      %vm866 = vcmp.lt.s32.totalorder %v830, 16
      %vm867 = vcmp.lt.s32.totalorder %v831, 16
      %vm868 = vcmp.lt.s32.totalorder %v832, 16
      %vm869 = vcmp.lt.s32.totalorder %v833, 16
      %vm870 = vcmp.lt.s32.totalorder %v834, 16
      %vm871 = vcmp.lt.s32.totalorder %v835, 16
      %vm872 = vcmp.lt.s32.totalorder %v836, 16
      %vm873 = vcmp.lt.s32.totalorder %v837, 16
      %p874 = scmp.eq.s32.totalorder %s16, 0
      // Predicated region
      $region41: #{residual_block_forward.1} parent=39 // pred_check
        %p875 = pneg %p874
      $region42: #{residual_block_forward.1} parent=39 // pred_check_branch
        %877 = sbr.rel (%p875) target = $region44
      $region43: #{residual_block_forward.1} parent=39 // pred_region
        %vm878 = vcmask 31744
        %879 = vst.msk [vmem:[#allocation2 + $0x144] sm:$0xff] %vm878, 0.0
      $region44: #{residual_block_forward.1} parent=39 // pred_fallthru
        _
      %v880 = vld [vmem:[%s219] sm:$0xff]
      %v881 = vld [vmem:[%s219 + $0x8] sm:$0xff]
      %v882 = vld [vmem:[%s219 + $0x10] sm:$0xff]
      %v883 = vld [vmem:[%s219 + $0x18] sm:$0xff]
      %v884 = vld [vmem:[%s219 + $0x20] sm:$0xff]
      %v885 = vld [vmem:[%s219 + $0x28] sm:$0xff]
      %v886 = vld [vmem:[%s219 + $0x30] sm:$0xff]
      %v887 = vld [vmem:[%s219 + $0x38] sm:$0xff]
      %v888 = vld [vmem:[%s219 + $0x40] sm:$0xff]
      %v889 = vld [vmem:[%s219 + $0x48] sm:$0xff]
      %v890 = vld [vmem:[%s219 + $0x50] sm:$0xff]
      %v891 = vld [vmem:[%s219 + $0x58] sm:$0xff]
      %v892 = vld [vmem:[%s219 + $0x60] sm:$0xff]
      %v893 = vld [vmem:[%s219 + $0x68] sm:$0xff]
      %v894 = vld [vmem:[%s219 + $0x70] sm:$0xff]
      %v895 = vld [vmem:[%s219 + $0x78] sm:$0xff]
      %v896 = vld [vmem:[%s219 + $0x80] sm:$0xff]
      %v897 = vld [vmem:[%s219 + $0x88] sm:$0xff]
      %v898 = vld [vmem:[%s219 + $0x90] sm:$0xff]
      %v899 = vld [vmem:[%s219 + $0x98] sm:$0xff]
      %v900 = vld [vmem:[%s219 + $0xa0] sm:$0xff]
      %v901 = vld [vmem:[%s219 + $0xa8] sm:$0xff]
      %v902 = vld [vmem:[%s219 + $0xb0] sm:$0xff]
      %v903 = vld [vmem:[%s219 + $0xb8] sm:$0xff]
      %v904 = vld [vmem:[%s219 + $0xc0] sm:$0xff]
      %v905 = vld [vmem:[%s219 + $0xc8] sm:$0xff]
      %v906 = vld [vmem:[%s219 + $0xd0] sm:$0xff]
      %v907 = vld [vmem:[%s219 + $0xd8] sm:$0xff]
      %v908 = vld [vmem:[%s219 + $0xe0] sm:$0xff]
      %v909 = vld [vmem:[%s219 + $0xe8] sm:$0xff]
      %v910 = vld [vmem:[%s219 + $0xf0] sm:$0xff]
      %v911 = vld [vmem:[%s219 + $0xf8] sm:$0xff]
      %v912 = vld [vmem:[%s219 + $0x100] sm:$0xff]
      %v913 = vld [vmem:[%s219 + $0x108] sm:$0xff]
      %v914 = vld [vmem:[%s219 + $0x110] sm:$0xff]
      %v915 = vld [vmem:[%s219 + $0x118] sm:$0xff]
      %vm916 = vcmask 31744
      %917 = vst.msk [vmem:[#allocation2 + $0x13] sm:$0xff] %vm916, %v880
      %918 = vst.msk [vmem:[#allocation2 + $0x1b] sm:$0xff] %vm916, %v881
      %919 = vst.msk [vmem:[#allocation2 + $0x23] sm:$0xff] %vm916, %v882
      %920 = vst.msk [vmem:[#allocation2 + $0x2b] sm:$0xff] %vm916, %v883
      %921 = vst.msk [vmem:[#allocation2 + $0x33] sm:$0xff] %vm916, %v884
      %922 = vst.msk [vmem:[#allocation2 + $0x3b] sm:$0xff] %vm916, %v885
      %923 = vst.msk [vmem:[#allocation2 + $0x43] sm:$0xff] %vm916, %v886
      %924 = vst.msk [vmem:[#allocation2 + $0x4b] sm:$0xff] %vm916, %v887
      %925 = vst.msk [vmem:[#allocation2 + $0x53] sm:$0xff] %vm916, %v888
      %926 = vst.msk [vmem:[#allocation2 + $0x5b] sm:$0xff] %vm916, %v889
      %927 = vst.msk [vmem:[#allocation2 + $0x63] sm:$0xff] %vm916, %v890
      %928 = vst.msk [vmem:[#allocation2 + $0x6b] sm:$0xff] %vm916, %v891
      %929 = vst.msk [vmem:[#allocation2 + $0x73] sm:$0xff] %vm916, %v892
      %930 = vst.msk [vmem:[#allocation2 + $0x7b] sm:$0xff] %vm916, %v893
      %931 = vst.msk [vmem:[#allocation2 + $0x83] sm:$0xff] %vm916, %v894
      %932 = vst.msk [vmem:[#allocation2 + $0x8b] sm:$0xff] %vm916, %v895
      %933 = vst.msk [vmem:[#allocation2 + $0x93] sm:$0xff] %vm916, %v896
      %934 = vst.msk [vmem:[#allocation2 + $0x9b] sm:$0xff] %vm916, %v897
      %935 = vst.msk [vmem:[#allocation2 + $0xa3] sm:$0xff] %vm916, %v898
      %936 = vst.msk [vmem:[#allocation2 + $0xab] sm:$0xff] %vm916, %v899
      %937 = vst.msk [vmem:[#allocation2 + $0xb3] sm:$0xff] %vm916, %v900
      %938 = vst.msk [vmem:[#allocation2 + $0xbb] sm:$0xff] %vm916, %v901
      %939 = vst.msk [vmem:[#allocation2 + $0xc3] sm:$0xff] %vm916, %v902
      %940 = vst.msk [vmem:[#allocation2 + $0xcb] sm:$0xff] %vm916, %v903
      %941 = vst.msk [vmem:[#allocation2 + $0xd3] sm:$0xff] %vm916, %v904
      %942 = vst.msk [vmem:[#allocation2 + $0xdb] sm:$0xff] %vm916, %v905
      %943 = vst.msk [vmem:[#allocation2 + $0xe3] sm:$0xff] %vm916, %v906
      %944 = vst.msk [vmem:[#allocation2 + $0xeb] sm:$0xff] %vm916, %v907
      %945 = vst.msk [vmem:[#allocation2 + $0xf3] sm:$0xff] %vm916, %v908
      %946 = vst.msk [vmem:[#allocation2 + $0xfb] sm:$0xff] %vm916, %v909
      %947 = vst.msk [vmem:[#allocation2 + $0x103] sm:$0xff] %vm916, %v910
      %948 = vst.msk [vmem:[#allocation2 + $0x10b] sm:$0xff] %vm916, %v911
      %949 = vst.msk [vmem:[#allocation2 + $0x113] sm:$0xff] %vm916, %v912
      %950 = vst.msk [vmem:[#allocation2 + $0x11b] sm:$0xff] %vm916, %v913
      %951 = vst.msk [vmem:[#allocation2 + $0x123] sm:$0xff] %vm916, %v914
      %952 = vst.msk [vmem:[#allocation2 + $0x12b] sm:$0xff] %vm916, %v915
      %v953 = vld [vmem:[#allocation2 + $0x12] sm:$0xff]
      %v954 = vld [vmem:[#allocation2 + $0x1a] sm:$0xff]
      %v955 = vld [vmem:[#allocation2 + $0x22] sm:$0xff]
      %v956 = vld [vmem:[#allocation2 + $0x2a] sm:$0xff]
      %v957 = vld [vmem:[#allocation2 + $0x32] sm:$0xff]
      %v958 = vld [vmem:[#allocation2 + $0x3a] sm:$0xff]
      %v959 = vld [vmem:[#allocation2 + $0x42] sm:$0xff]
      %v960 = vld [vmem:[#allocation2 + $0x4a] sm:$0xff]
      %v961 = vld [vmem:[#allocation2 + $0x52] sm:$0xff]
      %v962 = vld [vmem:[#allocation2 + $0x5a] sm:$0xff]
      %v963 = vld [vmem:[#allocation2 + $0x62] sm:$0xff]
      %v964 = vld [vmem:[#allocation2 + $0x6a] sm:$0xff]
      %v965 = vld [vmem:[#allocation2 + $0x72] sm:$0xff]
      %v966 = vld [vmem:[#allocation2 + $0x7a] sm:$0xff]
      %v967 = vld [vmem:[#allocation2 + $0x82] sm:$0xff]
      %v968 = vld [vmem:[#allocation2 + $0x8a] sm:$0xff]
      %v969 = vld [vmem:[#allocation2 + $0x92] sm:$0xff]
      %v970 = vld [vmem:[#allocation2 + $0x9a] sm:$0xff]
      %v971 = vld [vmem:[#allocation2 + $0xa2] sm:$0xff]
      %v972 = vld [vmem:[#allocation2 + $0xaa] sm:$0xff]
      %v973 = vld [vmem:[#allocation2 + $0xb2] sm:$0xff]
      %v974 = vld [vmem:[#allocation2 + $0xba] sm:$0xff]
      %v975 = vld [vmem:[#allocation2 + $0xc2] sm:$0xff]
      %v976 = vld [vmem:[#allocation2 + $0xca] sm:$0xff]
      %v977 = vld [vmem:[#allocation2 + $0xd2] sm:$0xff]
      %v978 = vld [vmem:[#allocation2 + $0xda] sm:$0xff]
      %v979 = vld [vmem:[#allocation2 + $0xe2] sm:$0xff]
      %v980 = vld [vmem:[#allocation2 + $0xea] sm:$0xff]
      %v981 = vld [vmem:[#allocation2 + $0xf2] sm:$0xff]
      %v982 = vld [vmem:[#allocation2 + $0xfa] sm:$0xff]
      %v983 = vld [vmem:[#allocation2 + $0x102] sm:$0xff]
      %v984 = vld [vmem:[#allocation2 + $0x10a] sm:$0xff]
      %v985 = vld [vmem:[#allocation2 + $0x112] sm:$0xff]
      %v986 = vld [vmem:[#allocation2 + $0x11a] sm:$0xff]
      %v987 = vld [vmem:[#allocation2 + $0x122] sm:$0xff]
      %v988 = vld [vmem:[#allocation2 + $0x12a] sm:$0xff]
      %v989 = vld [vmem:[#allocation2 + $0x14] sm:$0xff]
      %v990 = vld [vmem:[#allocation2 + $0x1c] sm:$0xff]
      %v991 = vld [vmem:[#allocation2 + $0x24] sm:$0xff]
      %v992 = vld [vmem:[#allocation2 + $0x2c] sm:$0xff]
      %v993 = vld [vmem:[#allocation2 + $0x34] sm:$0xff]
      %v994 = vld [vmem:[#allocation2 + $0x3c] sm:$0xff]
      %v995 = vld [vmem:[#allocation2 + $0x44] sm:$0xff]
      %v996 = vld [vmem:[#allocation2 + $0x4c] sm:$0xff]
      %v997 = vld [vmem:[#allocation2 + $0x54] sm:$0xff]
      %v998 = vld [vmem:[#allocation2 + $0x5c] sm:$0xff]
      %v999 = vld [vmem:[#allocation2 + $0x64] sm:$0xff]
      %v1000 = vld [vmem:[#allocation2 + $0x6c] sm:$0xff]
      %v1001 = vld [vmem:[#allocation2 + $0x74] sm:$0xff]
      %v1002 = vld [vmem:[#allocation2 + $0x7c] sm:$0xff]
      %v1003 = vld [vmem:[#allocation2 + $0x84] sm:$0xff]
      %v1004 = vld [vmem:[#allocation2 + $0x8c] sm:$0xff]
      %v1005 = vld [vmem:[#allocation2 + $0x94] sm:$0xff]
      %v1006 = vld [vmem:[#allocation2 + $0x9c] sm:$0xff]
      %v1007 = vld [vmem:[#allocation2 + $0xa4] sm:$0xff]
      %v1008 = vld [vmem:[#allocation2 + $0xac] sm:$0xff]
      %v1009 = vld [vmem:[#allocation2 + $0xb4] sm:$0xff]
      %v1010 = vld [vmem:[#allocation2 + $0xbc] sm:$0xff]
      %v1011 = vld [vmem:[#allocation2 + $0xc4] sm:$0xff]
      %v1012 = vld [vmem:[#allocation2 + $0xcc] sm:$0xff]
      %v1013 = vld [vmem:[#allocation2 + $0xd4] sm:$0xff]
      %v1014 = vld [vmem:[#allocation2 + $0xdc] sm:$0xff]
      %v1015 = vld [vmem:[#allocation2 + $0xe4] sm:$0xff]
      %v1016 = vld [vmem:[#allocation2 + $0xec] sm:$0xff]
      %v1017 = vld [vmem:[#allocation2 + $0xf4] sm:$0xff]
      %v1018 = vld [vmem:[#allocation2 + $0xfc] sm:$0xff]
      %v1019 = vld [vmem:[#allocation2 + $0x104] sm:$0xff]
      %v1020 = vld [vmem:[#allocation2 + $0x10c] sm:$0xff]
      %v1021 = vld [vmem:[#allocation2 + $0x114] sm:$0xff]
      %v1022 = vld [vmem:[#allocation2 + $0x11c] sm:$0xff]
      %v1023 = vld [vmem:[#allocation2 + $0x124] sm:$0xff]
      %v1024 = vld [vmem:[#allocation2 + $0x12c] sm:$0xff]
      %v1025 = vld [vmem:[#allocation2 + $0x10] sm:$0xff]
      %v1026 = vld [vmem:[#allocation2 + $0x18] sm:$0xff]
      %v1027 = vld [vmem:[#allocation2 + $0x20] sm:$0xff]
      %v1028 = vld [vmem:[#allocation2 + $0x28] sm:$0xff]
      %v1029 = vld [vmem:[#allocation2 + $0x30] sm:$0xff]
      %v1030 = vld [vmem:[#allocation2 + $0x38] sm:$0xff]
      %v1031 = vld [vmem:[#allocation2 + $0x40] sm:$0xff]
      %v1032 = vld [vmem:[#allocation2 + $0x48] sm:$0xff]
      %v1033 = vld [vmem:[#allocation2 + $0x50] sm:$0xff]
      %v1034 = vld [vmem:[#allocation2 + $0x58] sm:$0xff]
      %v1035 = vld [vmem:[#allocation2 + $0x60] sm:$0xff]
      %v1036 = vld [vmem:[#allocation2 + $0x68] sm:$0xff]
      %v1037 = vld [vmem:[#allocation2 + $0x70] sm:$0xff]
      %v1038 = vld [vmem:[#allocation2 + $0x78] sm:$0xff]
      %v1039 = vld [vmem:[#allocation2 + $0x80] sm:$0xff]
      %v1040 = vld [vmem:[#allocation2 + $0x88] sm:$0xff]
      %v1041 = vld [vmem:[#allocation2 + $0x90] sm:$0xff]
      %v1042 = vld [vmem:[#allocation2 + $0x98] sm:$0xff]
      %v1043 = vld [vmem:[#allocation2 + $0xa0] sm:$0xff]
      %v1044 = vld [vmem:[#allocation2 + $0xa8] sm:$0xff]
      %v1045 = vld [vmem:[#allocation2 + $0xb0] sm:$0xff]
      %v1046 = vld [vmem:[#allocation2 + $0xb8] sm:$0xff]
      %v1047 = vld [vmem:[#allocation2 + $0xc0] sm:$0xff]
      %v1048 = vld [vmem:[#allocation2 + $0xc8] sm:$0xff]
      %v1049 = vld [vmem:[#allocation2 + $0xd0] sm:$0xff]
      %v1050 = vld [vmem:[#allocation2 + $0xd8] sm:$0xff]
      %v1051 = vld [vmem:[#allocation2 + $0xe0] sm:$0xff]
      %v1052 = vld [vmem:[#allocation2 + $0xe8] sm:$0xff]
      %v1053 = vld [vmem:[#allocation2 + $0xf0] sm:$0xff]
      %v1054 = vld [vmem:[#allocation2 + $0xf8] sm:$0xff]
      %v1055 = vld [vmem:[#allocation2 + $0x100] sm:$0xff]
      %v1056 = vld [vmem:[#allocation2 + $0x108] sm:$0xff]
      %v1057 = vld [vmem:[#allocation2 + $0x110] sm:$0xff]
      %v1058 = vld [vmem:[#allocation2 + $0x118] sm:$0xff]
      %v1059 = vld [vmem:[#allocation2 + $0x120] sm:$0xff]
      %v1060 = vld [vmem:[#allocation2 + $0x128] sm:$0xff]
      %vm1061 = vcmp.eq.s32.totalorder %v802, 0
      %vm1062 = vcmp.eq.s32.totalorder %v803, 0
      %vm1063 = vcmp.eq.s32.totalorder %v804, 0
      %vm1064 = vcmp.eq.s32.totalorder %v805, 0
      %vm1065 = vcmp.eq.s32.totalorder %v806, 0
      %vm1066 = vcmp.eq.s32.totalorder %v807, 0
      %vm1067 = vcmp.eq.s32.totalorder %v808, 0
      %vm1068 = vcmp.eq.s32.totalorder %v809, 0
      %vm1069 = vcmp.eq.s32.totalorder %v810, 0
      %vm1070 = vcmp.eq.s32.totalorder %v811, 0
      %vm1071 = vcmp.eq.s32.totalorder %v812, 0
      %vm1072 = vcmp.eq.s32.totalorder %v813, 0
      %vm1073 = vcmp.eq.s32.totalorder %v814, 0
      %vm1074 = vcmp.eq.s32.totalorder %v815, 0
      %vm1075 = vcmp.eq.s32.totalorder %v816, 0
      %vm1076 = vcmp.eq.s32.totalorder %v817, 0
      %vm1077 = vcmp.eq.s32.totalorder %v818, 0
      %vm1078 = vcmp.eq.s32.totalorder %v819, 0
      %vm1079 = vcmp.eq.s32.totalorder %v820, 0
      %vm1080 = vcmp.eq.s32.totalorder %v821, 0
      %vm1081 = vcmp.eq.s32.totalorder %v822, 0
      %vm1082 = vcmp.eq.s32.totalorder %v823, 0
      %vm1083 = vcmp.eq.s32.totalorder %v824, 0
      %vm1084 = vcmp.eq.s32.totalorder %v825, 0
      %vm1085 = vcmp.eq.s32.totalorder %v826, 0
      %vm1086 = vcmp.eq.s32.totalorder %v827, 0
      %vm1087 = vcmp.eq.s32.totalorder %v828, 0
      %vm1088 = vcmp.eq.s32.totalorder %v829, 0
      %vm1089 = vcmp.eq.s32.totalorder %v830, 0
      %vm1090 = vcmp.eq.s32.totalorder %v831, 0
      %vm1091 = vcmp.eq.s32.totalorder %v832, 0
      %vm1092 = vcmp.eq.s32.totalorder %v833, 0
      %vm1093 = vcmp.eq.s32.totalorder %v834, 0
      %vm1094 = vcmp.eq.s32.totalorder %v835, 0
      %vm1095 = vcmp.eq.s32.totalorder %v836, 0
      %vm1096 = vcmp.eq.s32.totalorder %v837, 0
      %vm1097 = vcmp.eq.s32.totalorder %v802, 17
      %vm1098 = vcmp.eq.s32.totalorder %v803, 17
      %vm1099 = vcmp.eq.s32.totalorder %v804, 17
      %vm1100 = vcmp.eq.s32.totalorder %v805, 17
      %vm1101 = vcmp.eq.s32.totalorder %v806, 17
      %vm1102 = vcmp.eq.s32.totalorder %v807, 17
      %vm1103 = vcmp.eq.s32.totalorder %v808, 17
      %vm1104 = vcmp.eq.s32.totalorder %v809, 17
      %vm1105 = vcmp.eq.s32.totalorder %v810, 17
      %vm1106 = vcmp.eq.s32.totalorder %v811, 17
      %vm1107 = vcmp.eq.s32.totalorder %v812, 17
      %vm1108 = vcmp.eq.s32.totalorder %v813, 17
      %vm1109 = vcmp.eq.s32.totalorder %v814, 17
      %vm1110 = vcmp.eq.s32.totalorder %v815, 17
      %vm1111 = vcmp.eq.s32.totalorder %v816, 17
      %vm1112 = vcmp.eq.s32.totalorder %v817, 17
      %vm1113 = vcmp.eq.s32.totalorder %v818, 17
      %vm1114 = vcmp.eq.s32.totalorder %v819, 17
      %vm1115 = vcmp.eq.s32.totalorder %v820, 17
      %vm1116 = vcmp.eq.s32.totalorder %v821, 17
      %vm1117 = vcmp.eq.s32.totalorder %v822, 17
      %vm1118 = vcmp.eq.s32.totalorder %v823, 17
      %vm1119 = vcmp.eq.s32.totalorder %v824, 17
      %vm1120 = vcmp.eq.s32.totalorder %v825, 17
      %vm1121 = vcmp.eq.s32.totalorder %v826, 17
      %vm1122 = vcmp.eq.s32.totalorder %v827, 17
      %vm1123 = vcmp.eq.s32.totalorder %v828, 17
      %vm1124 = vcmp.eq.s32.totalorder %v829, 17
      %vm1125 = vcmp.eq.s32.totalorder %v830, 17
      %vm1126 = vcmp.eq.s32.totalorder %v831, 17
      %vm1127 = vcmp.eq.s32.totalorder %v832, 17
      %vm1128 = vcmp.eq.s32.totalorder %v833, 17
      %vm1129 = vcmp.eq.s32.totalorder %v834, 17
      %vm1130 = vcmp.eq.s32.totalorder %v835, 17
      %vm1131 = vcmp.eq.s32.totalorder %v836, 17
      %vm1132 = vcmp.eq.s32.totalorder %v837, 17
      %v1133 = vsel %vm1097, 1, 0
      %v1134 = vsel %vm1098, 1, 0
      %v1135 = vsel %vm1099, 1, 0
      %v1136 = vsel %vm1100, 1, 0
      %v1137 = vsel %vm1101, 1, 0
      %v1138 = vsel %vm1102, 1, 0
      %v1139 = vsel %vm1103, 1, 0
      %v1140 = vsel %vm1104, 1, 0
      %v1141 = vsel %vm1105, 1, 0
      %v1142 = vsel %vm1106, 1, 0
      %v1143 = vsel %vm1107, 1, 0
      %v1144 = vsel %vm1108, 1, 0
      %v1145 = vsel %vm1109, 1, 0
      %v1146 = vsel %vm1110, 1, 0
      %v1147 = vsel %vm1111, 1, 0
      %v1148 = vsel %vm1112, 1, 0
      %v1149 = vsel %vm1113, 1, 0
      %v1150 = vsel %vm1114, 1, 0
      %v1151 = vsel %vm1115, 1, 0
      %v1152 = vsel %vm1116, 1, 0
      %v1153 = vsel %vm1117, 1, 0
      %v1154 = vsel %vm1118, 1, 0
      %v1155 = vsel %vm1119, 1, 0
      %v1156 = vsel %vm1120, 1, 0
      %v1157 = vsel %vm1121, 1, 0
      %v1158 = vsel %vm1122, 1, 0
      %v1159 = vsel %vm1123, 1, 0
      %v1160 = vsel %vm1124, 1, 0
      %v1161 = vsel %vm1125, 1, 0
      %v1162 = vsel %vm1126, 1, 0
      %v1163 = vsel %vm1127, 1, 0
      %v1164 = vsel %vm1128, 1, 0
      %v1165 = vsel %vm1129, 1, 0
      %v1166 = vsel %vm1130, 1, 0
      %v1167 = vsel %vm1131, 1, 0
      %v1168 = vsel %vm1132, 1, 0
      %vm1169 = vcmp.eq.s32.totalorder %v1133, 1
      %vm1170 = vcmp.eq.s32.totalorder %v1134, 1
      %vm1171 = vcmp.eq.s32.totalorder %v1135, 1
      %vm1172 = vcmp.eq.s32.totalorder %v1136, 1
      %vm1173 = vcmp.eq.s32.totalorder %v1137, 1
      %vm1174 = vcmp.eq.s32.totalorder %v1138, 1
      %vm1175 = vcmp.eq.s32.totalorder %v1139, 1
      %vm1176 = vcmp.eq.s32.totalorder %v1140, 1
      %vm1177 = vcmp.eq.s32.totalorder %v1141, 1
      %vm1178 = vcmp.eq.s32.totalorder %v1142, 1
      %vm1179 = vcmp.eq.s32.totalorder %v1143, 1
      %vm1180 = vcmp.eq.s32.totalorder %v1144, 1
      %vm1181 = vcmp.eq.s32.totalorder %v1145, 1
      %vm1182 = vcmp.eq.s32.totalorder %v1146, 1
      %vm1183 = vcmp.eq.s32.totalorder %v1147, 1
      %vm1184 = vcmp.eq.s32.totalorder %v1148, 1
      %vm1185 = vcmp.eq.s32.totalorder %v1149, 1
      %vm1186 = vcmp.eq.s32.totalorder %v1150, 1
      %vm1187 = vcmp.eq.s32.totalorder %v1151, 1
      %vm1188 = vcmp.eq.s32.totalorder %v1152, 1
      %vm1189 = vcmp.eq.s32.totalorder %v1153, 1
      %vm1190 = vcmp.eq.s32.totalorder %v1154, 1
      %vm1191 = vcmp.eq.s32.totalorder %v1155, 1
      %vm1192 = vcmp.eq.s32.totalorder %v1156, 1
      %vm1193 = vcmp.eq.s32.totalorder %v1157, 1
      %vm1194 = vcmp.eq.s32.totalorder %v1158, 1
      %vm1195 = vcmp.eq.s32.totalorder %v1159, 1
      %vm1196 = vcmp.eq.s32.totalorder %v1160, 1
      %vm1197 = vcmp.eq.s32.totalorder %v1161, 1
      %vm1198 = vcmp.eq.s32.totalorder %v1162, 1
      %vm1199 = vcmp.eq.s32.totalorder %v1163, 1
      %vm1200 = vcmp.eq.s32.totalorder %v1164, 1
      %vm1201 = vcmp.eq.s32.totalorder %v1165, 1
      %vm1202 = vcmp.eq.s32.totalorder %v1166, 1
      %vm1203 = vcmp.eq.s32.totalorder %v1167, 1
      %vm1204 = vcmp.eq.s32.totalorder %v1168, 1
      %v1205 = vsel %vm1169, %v1025, %v953
      %v1206 = vsel %vm1170, %v1026, %v954
      %v1207 = vsel %vm1171, %v1027, %v955
      %v1208 = vsel %vm1172, %v1028, %v956
      %v1209 = vsel %vm1173, %v1029, %v957
      %v1210 = vsel %vm1174, %v1030, %v958
      %v1211 = vsel %vm1175, %v1031, %v959
      %v1212 = vsel %vm1176, %v1032, %v960
      %v1213 = vsel %vm1177, %v1033, %v961
      %v1214 = vsel %vm1178, %v1034, %v962
      %v1215 = vsel %vm1179, %v1035, %v963
      %v1216 = vsel %vm1180, %v1036, %v964
      %v1217 = vsel %vm1181, %v1037, %v965
      %v1218 = vsel %vm1182, %v1038, %v966
      %v1219 = vsel %vm1183, %v1039, %v967
      %v1220 = vsel %vm1184, %v1040, %v968
      %v1221 = vsel %vm1185, %v1041, %v969
      %v1222 = vsel %vm1186, %v1042, %v970
      %v1223 = vsel %vm1187, %v1043, %v971
      %v1224 = vsel %vm1188, %v1044, %v972
      %v1225 = vsel %vm1189, %v1045, %v973
      %v1226 = vsel %vm1190, %v1046, %v974
      %v1227 = vsel %vm1191, %v1047, %v975
      %v1228 = vsel %vm1192, %v1048, %v976
      %v1229 = vsel %vm1193, %v1049, %v977
      %v1230 = vsel %vm1194, %v1050, %v978
      %v1231 = vsel %vm1195, %v1051, %v979
      %v1232 = vsel %vm1196, %v1052, %v980
      %v1233 = vsel %vm1197, %v1053, %v981
      %v1234 = vsel %vm1198, %v1054, %v982
      %v1235 = vsel %vm1199, %v1055, %v983
      %v1236 = vsel %vm1200, %v1056, %v984
      %v1237 = vsel %vm1201, %v1057, %v985
      %v1238 = vsel %vm1202, %v1058, %v986
      %v1239 = vsel %vm1203, %v1059, %v987
      %v1240 = vsel %vm1204, %v1060, %v988
      %v1241 = vsel %vm1061, 1, 0
      %v1242 = vsel %vm1062, 1, 0
      %v1243 = vsel %vm1063, 1, 0
      %v1244 = vsel %vm1064, 1, 0
      %v1245 = vsel %vm1065, 1, 0
      %v1246 = vsel %vm1066, 1, 0
      %v1247 = vsel %vm1067, 1, 0
      %v1248 = vsel %vm1068, 1, 0
      %v1249 = vsel %vm1069, 1, 0
      %v1250 = vsel %vm1070, 1, 0
      %v1251 = vsel %vm1071, 1, 0
      %v1252 = vsel %vm1072, 1, 0
      %v1253 = vsel %vm1073, 1, 0
      %v1254 = vsel %vm1074, 1, 0
      %v1255 = vsel %vm1075, 1, 0
      %v1256 = vsel %vm1076, 1, 0
      %v1257 = vsel %vm1077, 1, 0
      %v1258 = vsel %vm1078, 1, 0
      %v1259 = vsel %vm1079, 1, 0
      %v1260 = vsel %vm1080, 1, 0
      %v1261 = vsel %vm1081, 1, 0
      %v1262 = vsel %vm1082, 1, 0
      %v1263 = vsel %vm1083, 1, 0
      %v1264 = vsel %vm1084, 1, 0
      %v1265 = vsel %vm1085, 1, 0
      %v1266 = vsel %vm1086, 1, 0
      %v1267 = vsel %vm1087, 1, 0
      %v1268 = vsel %vm1088, 1, 0
      %v1269 = vsel %vm1089, 1, 0
      %v1270 = vsel %vm1090, 1, 0
      %v1271 = vsel %vm1091, 1, 0
      %v1272 = vsel %vm1092, 1, 0
      %v1273 = vsel %vm1093, 1, 0
      %v1274 = vsel %vm1094, 1, 0
      %v1275 = vsel %vm1095, 1, 0
      %v1276 = vsel %vm1096, 1, 0
      %vm1277 = vcmp.eq.s32.totalorder %v1241, 1
      %vm1278 = vcmp.eq.s32.totalorder %v1242, 1
      %vm1279 = vcmp.eq.s32.totalorder %v1243, 1
      %vm1280 = vcmp.eq.s32.totalorder %v1244, 1
      %vm1281 = vcmp.eq.s32.totalorder %v1245, 1
      %vm1282 = vcmp.eq.s32.totalorder %v1246, 1
      %vm1283 = vcmp.eq.s32.totalorder %v1247, 1
      %vm1284 = vcmp.eq.s32.totalorder %v1248, 1
      %vm1285 = vcmp.eq.s32.totalorder %v1249, 1
      %vm1286 = vcmp.eq.s32.totalorder %v1250, 1
      %vm1287 = vcmp.eq.s32.totalorder %v1251, 1
      %vm1288 = vcmp.eq.s32.totalorder %v1252, 1
      %vm1289 = vcmp.eq.s32.totalorder %v1253, 1
      %vm1290 = vcmp.eq.s32.totalorder %v1254, 1
      %vm1291 = vcmp.eq.s32.totalorder %v1255, 1
      %vm1292 = vcmp.eq.s32.totalorder %v1256, 1
      %vm1293 = vcmp.eq.s32.totalorder %v1257, 1
      %vm1294 = vcmp.eq.s32.totalorder %v1258, 1
      %vm1295 = vcmp.eq.s32.totalorder %v1259, 1
      %vm1296 = vcmp.eq.s32.totalorder %v1260, 1
      %vm1297 = vcmp.eq.s32.totalorder %v1261, 1
      %vm1298 = vcmp.eq.s32.totalorder %v1262, 1
      %vm1299 = vcmp.eq.s32.totalorder %v1263, 1
      %vm1300 = vcmp.eq.s32.totalorder %v1264, 1
      %vm1301 = vcmp.eq.s32.totalorder %v1265, 1
      %vm1302 = vcmp.eq.s32.totalorder %v1266, 1
      %vm1303 = vcmp.eq.s32.totalorder %v1267, 1
      %vm1304 = vcmp.eq.s32.totalorder %v1268, 1
      %vm1305 = vcmp.eq.s32.totalorder %v1269, 1
      %vm1306 = vcmp.eq.s32.totalorder %v1270, 1
      %vm1307 = vcmp.eq.s32.totalorder %v1271, 1
      %vm1308 = vcmp.eq.s32.totalorder %v1272, 1
      %vm1309 = vcmp.eq.s32.totalorder %v1273, 1
      %vm1310 = vcmp.eq.s32.totalorder %v1274, 1
      %vm1311 = vcmp.eq.s32.totalorder %v1275, 1
      %vm1312 = vcmp.eq.s32.totalorder %v1276, 1
      %v1313 = vsel %vm1277, %v989, %v1205
      %v1314 = vsel %vm1278, %v990, %v1206
      %v1315 = vsel %vm1279, %v991, %v1207
      %v1316 = vsel %vm1280, %v992, %v1208
      %v1317 = vsel %vm1281, %v993, %v1209
      %v1318 = vsel %vm1282, %v994, %v1210
      %v1319 = vsel %vm1283, %v995, %v1211
      %v1320 = vsel %vm1284, %v996, %v1212
      %v1321 = vsel %vm1285, %v997, %v1213
      %v1322 = vsel %vm1286, %v998, %v1214
      %v1323 = vsel %vm1287, %v999, %v1215
      %v1324 = vsel %vm1288, %v1000, %v1216
      %v1325 = vsel %vm1289, %v1001, %v1217
      %v1326 = vsel %vm1290, %v1002, %v1218
      %v1327 = vsel %vm1291, %v1003, %v1219
      %v1328 = vsel %vm1292, %v1004, %v1220
      %v1329 = vsel %vm1293, %v1005, %v1221
      %v1330 = vsel %vm1294, %v1006, %v1222
      %v1331 = vsel %vm1295, %v1007, %v1223
      %v1332 = vsel %vm1296, %v1008, %v1224
      %v1333 = vsel %vm1297, %v1009, %v1225
      %v1334 = vsel %vm1298, %v1010, %v1226
      %v1335 = vsel %vm1299, %v1011, %v1227
      %v1336 = vsel %vm1300, %v1012, %v1228
      %v1337 = vsel %vm1301, %v1013, %v1229
      %v1338 = vsel %vm1302, %v1014, %v1230
      %v1339 = vsel %vm1303, %v1015, %v1231
      %v1340 = vsel %vm1304, %v1016, %v1232
      %v1341 = vsel %vm1305, %v1017, %v1233
      %v1342 = vsel %vm1306, %v1018, %v1234
      %v1343 = vsel %vm1307, %v1019, %v1235
      %v1344 = vsel %vm1308, %v1020, %v1236
      %v1345 = vsel %vm1309, %v1021, %v1237
      %v1346 = vsel %vm1310, %v1022, %v1238
      %v1347 = vsel %vm1311, %v1023, %v1239
      %v1348 = vsel %vm1312, %v1024, %v1240
      %1349 = vst.msk [vmem:[#allocation2 + $0x12] sm:$0xff] %vm916, %v1313
      %1350 = vst.msk [vmem:[#allocation2 + $0x1a] sm:$0xff] %vm916, %v1314
      %1351 = vst.msk [vmem:[#allocation2 + $0x22] sm:$0xff] %vm916, %v1315
      %1352 = vst.msk [vmem:[#allocation2 + $0x2a] sm:$0xff] %vm916, %v1316
      %1353 = vst.msk [vmem:[#allocation2 + $0x32] sm:$0xff] %vm916, %v1317
      %1354 = vst.msk [vmem:[#allocation2 + $0x3a] sm:$0xff] %vm916, %v1318
      %1355 = vst.msk [vmem:[#allocation2 + $0x42] sm:$0xff] %vm916, %v1319
      %1356 = vst.msk [vmem:[#allocation2 + $0x4a] sm:$0xff] %vm916, %v1320
      %1357 = vst.msk [vmem:[#allocation2 + $0x52] sm:$0xff] %vm916, %v1321
      %1358 = vst.msk [vmem:[#allocation2 + $0x5a] sm:$0xff] %vm916, %v1322
      %1359 = vst.msk [vmem:[#allocation2 + $0x62] sm:$0xff] %vm916, %v1323
      %1360 = vst.msk [vmem:[#allocation2 + $0x6a] sm:$0xff] %vm916, %v1324
      %1361 = vst.msk [vmem:[#allocation2 + $0x72] sm:$0xff] %vm916, %v1325
      %1362 = vst.msk [vmem:[#allocation2 + $0x7a] sm:$0xff] %vm916, %v1326
      %1363 = vst.msk [vmem:[#allocation2 + $0x82] sm:$0xff] %vm916, %v1327
      %1364 = vst.msk [vmem:[#allocation2 + $0x8a] sm:$0xff] %vm916, %v1328
      %1365 = vst.msk [vmem:[#allocation2 + $0x92] sm:$0xff] %vm916, %v1329
      %1366 = vst.msk [vmem:[#allocation2 + $0x9a] sm:$0xff] %vm916, %v1330
      %1367 = vst.msk [vmem:[#allocation2 + $0xa2] sm:$0xff] %vm916, %v1331
      %1368 = vst.msk [vmem:[#allocation2 + $0xaa] sm:$0xff] %vm916, %v1332
      %1369 = vst.msk [vmem:[#allocation2 + $0xb2] sm:$0xff] %vm916, %v1333
      %1370 = vst.msk [vmem:[#allocation2 + $0xba] sm:$0xff] %vm916, %v1334
      %1371 = vst.msk [vmem:[#allocation2 + $0xc2] sm:$0xff] %vm916, %v1335
      %1372 = vst.msk [vmem:[#allocation2 + $0xca] sm:$0xff] %vm916, %v1336
      %1373 = vst.msk [vmem:[#allocation2 + $0xd2] sm:$0xff] %vm916, %v1337
      %1374 = vst.msk [vmem:[#allocation2 + $0xda] sm:$0xff] %vm916, %v1338
      %1375 = vst.msk [vmem:[#allocation2 + $0xe2] sm:$0xff] %vm916, %v1339
      %1376 = vst.msk [vmem:[#allocation2 + $0xea] sm:$0xff] %vm916, %v1340
      %1377 = vst.msk [vmem:[#allocation2 + $0xf2] sm:$0xff] %vm916, %v1341
      %1378 = vst.msk [vmem:[#allocation2 + $0xfa] sm:$0xff] %vm916, %v1342
      %1379 = vst.msk [vmem:[#allocation2 + $0x102] sm:$0xff] %vm916, %v1343
      %1380 = vst.msk [vmem:[#allocation2 + $0x10a] sm:$0xff] %vm916, %v1344
      %1381 = vst.msk [vmem:[#allocation2 + $0x112] sm:$0xff] %vm916, %v1345
      %1382 = vst.msk [vmem:[#allocation2 + $0x11a] sm:$0xff] %vm916, %v1346
      %1383 = vst.msk [vmem:[#allocation2 + $0x122] sm:$0xff] %vm916, %v1347
      %1384 = vst.msk [vmem:[#allocation2 + $0x12a] sm:$0xff] %vm916, %v1348
      %v1385 = vld [vmem:[#allocation2 + $0x24] sm:$0xff]
      %v1386 = vld [vmem:[#allocation2 + $0x2c] sm:$0xff]
      %v1387 = vld [vmem:[#allocation2 + $0x34] sm:$0x3]
      %1388 = vst.msk [vmem:[#allocation2] sm:$0xff] %vm916, %v1385
      %1389 = vst.msk [vmem:[#allocation2 + $0x8] sm:$0xff] %vm916, %v1386
      %vm1390 = vcmask 25600
      %1391 = vst.msk [vmem:[#allocation2 + $0x10] sm:$0x3] %vm1390, %v1387
      %v1392 = vld [vmem:[#allocation2 + $0x10e] sm:$0xff]
      %v1393 = vld [vmem:[#allocation2 + $0x116] sm:$0xff]
      %v1394 = vld [vmem:[#allocation2 + $0x11e] sm:$0x3]
      %1395 = vst.msk [vmem:[#allocation2 + $0x132] sm:$0xff] %vm916, %v1392
      %1396 = vst.msk [vmem:[#allocation2 + $0x13a] sm:$0xff] %vm916, %v1393
      %1397 = vst.msk [vmem:[#allocation2 + $0x142] sm:$0x3] %vm1390, %v1394
      %v1398 = vld [vmem:[#allocation2] sm:$0xff]
      %v1399 = vld [vmem:[#allocation2 + $0x8] sm:$0xff]
      %v1400 = vld [vmem:[#allocation2 + $0x10] sm:$0xff]
      %v1401 = vld [vmem:[#allocation2 + $0x18] sm:$0xff]
      %v1402 = vld [vmem:[#allocation2 + $0x20] sm:$0xff]
      %v1403 = vld [vmem:[#allocation2 + $0x28] sm:$0xff]
      %v1404 = vld [vmem:[#allocation2 + $0x30] sm:$0xff]
      %v1405 = vld [vmem:[#allocation2 + $0x38] sm:$0xff]
      %v1406 = vld [vmem:[#allocation2 + $0x40] sm:$0xff]
      %v1407 = vld [vmem:[#allocation2 + $0x48] sm:$0xff]
      %v1408 = vld [vmem:[#allocation2 + $0x50] sm:$0xff]
      %v1409 = vld [vmem:[#allocation2 + $0x58] sm:$0xff]
      %v1410 = vld [vmem:[#allocation2 + $0x60] sm:$0xff]
      %v1411 = vld [vmem:[#allocation2 + $0x68] sm:$0xff]
      %v1412 = vld [vmem:[#allocation2 + $0x70] sm:$0xff]
      %v1413 = vld [vmem:[#allocation2 + $0x78] sm:$0xff]
      %v1414 = vld [vmem:[#allocation2 + $0x80] sm:$0xff]
      %v1415 = vld [vmem:[#allocation2 + $0x88] sm:$0xff]
      %v1416 = vld [vmem:[#allocation2 + $0x90] sm:$0xff]
      %v1417 = vld [vmem:[#allocation2 + $0x98] sm:$0xff]
      %v1418 = vld [vmem:[#allocation2 + $0xa0] sm:$0xff]
      %v1419 = vld [vmem:[#allocation2 + $0xa8] sm:$0xff]
      %v1420 = vld [vmem:[#allocation2 + $0xb0] sm:$0xff]
      %v1421 = vld [vmem:[#allocation2 + $0xb8] sm:$0xff]
      %v1422 = vld [vmem:[#allocation2 + $0xc0] sm:$0xff]
      %v1423 = vld [vmem:[#allocation2 + $0xc8] sm:$0xff]
      %v1424 = vld [vmem:[#allocation2 + $0xd0] sm:$0xff]
      %v1425 = vld [vmem:[#allocation2 + $0xd8] sm:$0xff]
      %v1426 = vld [vmem:[#allocation2 + $0xe0] sm:$0xff]
      %v1427 = vld [vmem:[#allocation2 + $0xe8] sm:$0xff]
      %v1428 = vld [vmem:[#allocation2 + $0xf0] sm:$0xff]
      %v1429 = vld [vmem:[#allocation2 + $0xf8] sm:$0xff]
      %v1430 = vld [vmem:[#allocation2 + $0x100] sm:$0xff]
      %v1431 = vld [vmem:[#allocation2 + $0x108] sm:$0xff]
      %v1432 = vld [vmem:[#allocation2 + $0x110] sm:$0xff]
      %v1433 = vld [vmem:[#allocation2 + $0x118] sm:$0xff]
      %v1434 = vld [vmem:[%s1] sm:$0xf]
      %v1435 = vld [vmem:[#allocation2 + $0x1] sm:$0xff]
      %v1436 = vld [vmem:[#allocation2 + $0x9] sm:$0xff]
      %v1437 = vld [vmem:[#allocation2 + $0x11] sm:$0xff]
      %v1438 = vld [vmem:[#allocation2 + $0x19] sm:$0xff]
      %v1439 = vld [vmem:[#allocation2 + $0x21] sm:$0xff]
      %v1440 = vld [vmem:[#allocation2 + $0x29] sm:$0xff]
      %v1441 = vld [vmem:[#allocation2 + $0x31] sm:$0xff]
      %v1442 = vld [vmem:[#allocation2 + $0x39] sm:$0xff]
      %v1443 = vld [vmem:[#allocation2 + $0x41] sm:$0xff]
      %v1444 = vld [vmem:[#allocation2 + $0x49] sm:$0xff]
      %v1445 = vld [vmem:[#allocation2 + $0x51] sm:$0xff]
      %v1446 = vld [vmem:[#allocation2 + $0x59] sm:$0xff]
      %v1447 = vld [vmem:[#allocation2 + $0x61] sm:$0xff]
      %v1448 = vld [vmem:[#allocation2 + $0x69] sm:$0xff]
      %v1449 = vld [vmem:[#allocation2 + $0x71] sm:$0xff]
      %v1450 = vld [vmem:[#allocation2 + $0x79] sm:$0xff]
      %v1451 = vld [vmem:[#allocation2 + $0x81] sm:$0xff]
      %v1452 = vld [vmem:[#allocation2 + $0x89] sm:$0xff]
      %v1453 = vld [vmem:[#allocation2 + $0x91] sm:$0xff]
      %v1454 = vld [vmem:[#allocation2 + $0x99] sm:$0xff]
      %v1455 = vld [vmem:[#allocation2 + $0xa1] sm:$0xff]
      %v1456 = vld [vmem:[#allocation2 + $0xa9] sm:$0xff]
      %v1457 = vld [vmem:[#allocation2 + $0xb1] sm:$0xff]
      %v1458 = vld [vmem:[#allocation2 + $0xb9] sm:$0xff]
      %v1459 = vld [vmem:[#allocation2 + $0xc1] sm:$0xff]
      %v1460 = vld [vmem:[#allocation2 + $0xc9] sm:$0xff]
      %v1461 = vld [vmem:[#allocation2 + $0xd1] sm:$0xff]
      %v1462 = vld [vmem:[#allocation2 + $0xd9] sm:$0xff]
      %v1463 = vld [vmem:[#allocation2 + $0xe1] sm:$0xff]
      %v1464 = vld [vmem:[#allocation2 + $0xe9] sm:$0xff]
      %v1465 = vld [vmem:[#allocation2 + $0xf1] sm:$0xff]
      %v1466 = vld [vmem:[#allocation2 + $0xf9] sm:$0xff]
      %v1467 = vld [vmem:[#allocation2 + $0x101] sm:$0xff]
      %v1468 = vld [vmem:[#allocation2 + $0x109] sm:$0xff]
      %v1469 = vld [vmem:[#allocation2 + $0x111] sm:$0xff]
      %v1470 = vld [vmem:[#allocation2 + $0x119] sm:$0xff]
      %s1471 = scalar_lea.vmem %s1, 4
      %v1472 = vld [vmem:[%s1471] sm:$0xf]
      %v1474 = vsel %vm916, %v1435, 0
      %v1477 = vsel %vm916, %v1436, 0
      %v1480 = vsel %vm916, %v1437, 0
      %v1483 = vsel %vm916, %v1438, 0
      %v1486 = vsel %vm916, %v1439, 0
      %v1489 = vsel %vm916, %v1440, 0
      %v1492 = vsel %vm916, %v1441, 0
      %v1495 = vsel %vm916, %v1442, 0
      %v1498 = vsel %vm916, %v1443, 0
      %v1501 = vsel %vm916, %v1444, 0
      %v1504 = vsel %vm916, %v1445, 0
      %v1507 = vsel %vm916, %v1446, 0
      %v1510 = vsel %vm916, %v1447, 0
      %v1513 = vsel %vm916, %v1448, 0
      %v1516 = vsel %vm916, %v1449, 0
      %v1519 = vsel %vm916, %v1450, 0
      %v1522 = vsel %vm916, %v1451, 0
      %v1525 = vsel %vm916, %v1452, 0
      %v1528 = vsel %vm916, %v1453, 0
      %v1531 = vsel %vm916, %v1454, 0
      %v1534 = vsel %vm916, %v1455, 0
      %v1537 = vsel %vm916, %v1456, 0
      %v1540 = vsel %vm916, %v1457, 0
      %v1543 = vsel %vm916, %v1458, 0
      %v1546 = vsel %vm916, %v1459, 0
      %v1549 = vsel %vm916, %v1460, 0
      %v1552 = vsel %vm916, %v1461, 0
      %v1555 = vsel %vm916, %v1462, 0
      %v1558 = vsel %vm916, %v1463, 0
      %v1561 = vsel %vm916, %v1464, 0
      %v1564 = vsel %vm916, %v1465, 0
      %v1567 = vsel %vm916, %v1466, 0
      %v1570 = vsel %vm916, %v1467, 0
      %v1573 = vsel %vm916, %v1468, 0
      %v1576 = vsel %vm916, %v1469, 0
      %v1579 = vsel %vm916, %v1470, 0
      %vm1581 = vcmask 1043456
      %v1583 = vsel %vm1581, %v1472, 0
      %1585 = vmatprep.subr.mxu0 0.0
      %1586 = vmatpush1.msra.mxu0 %v1583
      %1587 = vmatprep.subr.mxu0 0.0
      %1588 = vmatpush1.msra.mxu0 0.0
      %1589 = vmatprep.subr.mxu0 0.0
      %1590 = vmatpush1.msra.mxu0 0.0
      %1591 = vmatprep.subr.mxu0 0.0
      %1592 = vmatpush1.msra.mxu0 0.0
      %1593 = vmatprep.subr.mxu0 0.0
      %1594 = vmatpush1.msra.mxu0 0.0
      %1595 = vmatprep.subr.mxu0 0.0
      %1596 = vmatpush1.msra.mxu0 0.0
      %1597 = vmatprep.subr.mxu0 0.0
      %1598 = vmatpush1.msra.mxu0 0.0
      %1599 = vmatprep.subr.mxu0 0.0
      %1600 = vmatpush1.msra.mxu0 0.0
      %1601 = vmatprep.subr.mxu0 0.0
      %1602 = vmatpush1.msra.mxu0 0.0
      %1603 = vmatprep.subr.mxu0 0.0
      %1604 = vmatpush1.msra.mxu0 0.0
      %1605 = vmatprep.subr.mxu0 0.0
      %1606 = vmatpush1.msra.mxu0 0.0
      %1607 = vmatprep.subr.mxu0 0.0
      %1608 = vmatpush1.msra.mxu0 0.0
      %1609 = vmatprep.subr.mxu0 0.0
      %1610 = vmatpush1.msra.mxu0 0.0
      %1611 = vmatprep.subr.mxu0 0.0
      %1612 = vmatpush1.msra.mxu0 0.0
      %1613 = vmatprep.subr.mxu0 0.0
      %1614 = vmatpush1.msra.mxu0 0.0
      %1615 = vmatprep.subr.mxu0 0.0
      %1616 = vmatpush1.msra.mxu0 0.0
      %1617 = vmatprep.subr.mxu0 0.0
      %1618 = vmatpush1.msra.mxu0 0.0
      %1619 = vmatprep.subr.mxu0 0.0
      %1620 = vmatpush1.msra.mxu0 0.0
      %1621 = vmatprep.subr.mxu0 0.0
      %1622 = vmatpush1.msra.mxu0 0.0
      %1623 = vmatprep.subr.mxu0 0.0
      %1624 = vmatpush1.msra.mxu0 0.0
      %1625 = vmatprep.subr.mxu0 0.0
      %1626 = vmatpush1.msra.mxu0 0.0
      %1627 = vmatprep.subr.mxu0 0.0
      %1628 = vmatpush1.msra.mxu0 0.0
      %1629 = vmatprep.subr.mxu0 0.0
      %1630 = vmatpush1.msra.mxu0 0.0
      %1631 = vmatprep.subr.mxu0 0.0
      %1632 = vmatpush1.msra.mxu0 0.0
      %1633 = vmatprep.subr.mxu0 0.0
      %1634 = vmatpush1.msra.mxu0 0.0
      %1635 = vmatprep.subr.mxu0 0.0
      %1636 = vmatpush1.msra.mxu0 0.0
      %1637 = vmatprep.subr.mxu0 0.0
      %1638 = vmatpush1.msra.mxu0 0.0
      %1639 = vmatprep.subr.mxu0 0.0
      %1640 = vmatpush1.msra.mxu0 0.0
      %1641 = vmatprep.subr.mxu0 0.0
      %1642 = vmatpush1.msra.mxu0 0.0
      %1643 = vmatprep.subr.mxu0 0.0
      %1644 = vmatpush1.msra.mxu0 0.0
      %1645 = vmatprep.subr.mxu0 0.0
      %1646 = vmatpush1.msra.mxu0 0.0
      %1647 = vmatprep.subr.mxu0 0.0
      %1648 = vmatpush1.msra.mxu0 0.0
      %1649 = vmatprep.mubr.f32.mxu0 0.0
      %1650 = vmatmul.mubr.f32.gmra.mrb[0].mxu0 %v1474
      %v1651 = vpop.f32.mrb[0].mxu0
      %v1652 = vadd.f32 0.0, %v1651
      %v1653 = vpop.f32.mrb[0].mxu0
      %1654 = vmatprep.mubr.f32.mxu0 0.0
      %1655 = vmatmul.mubr.f32.gmra.mrb[0].mxu0 %v1477
      %v1656 = vpop.f32.mrb[0].mxu0
      %v1657 = vadd.f32 0.0, %v1656
      %v1658 = vpop.f32.mrb[0].mxu0
      %1659 = vmatprep.mubr.f32.mxu0 0.0
      %1660 = vmatmul.mubr.f32.gmra.mrb[0].mxu0 %v1480
      %v1661 = vpop.f32.mrb[0].mxu0
      %v1662 = vadd.f32 0.0, %v1661
      %v1663 = vpop.f32.mrb[0].mxu0
      %1664 = vmatprep.mubr.f32.mxu0 0.0
      %1665 = vmatmul.mubr.f32.gmra.mrb[0].mxu0 %v1483
      %v1666 = vpop.f32.mrb[0].mxu0
      %v1667 = vadd.f32 0.0, %v1666
      %v1668 = vpop.f32.mrb[0].mxu0
      %1669 = vmatprep.mubr.f32.mxu0 0.0
      %1670 = vmatmul.mubr.f32.gmra.mrb[0].mxu0 %v1486
      %v1671 = vpop.f32.mrb[0].mxu0
      %v1672 = vadd.f32 0.0, %v1671
      %v1673 = vpop.f32.mrb[0].mxu0
      %1674 = vmatprep.mubr.f32.mxu0 0.0
      %1675 = vmatmul.mubr.f32.gmra.mrb[0].mxu0 %v1489
      %v1676 = vpop.f32.mrb[0].mxu0
      %v1677 = vadd.f32 0.0, %v1676
      %v1678 = vpop.f32.mrb[0].mxu0
      %1679 = vmatprep.mubr.f32.mxu0 0.0
      %1680 = vmatmul.mubr.f32.gmra.mrb[0].mxu0 %v1492
      %v1681 = vpop.f32.mrb[0].mxu0
      %v1682 = vadd.f32 0.0, %v1681
      %v1683 = vpop.f32.mrb[0].mxu0
      %1684 = vmatprep.mubr.f32.mxu0 0.0
      %1685 = vmatmul.mubr.f32.gmra.mrb[0].mxu0 %v1495
      %v1686 = vpop.f32.mrb[0].mxu0
      %v1687 = vadd.f32 0.0, %v1686
      %v1688 = vpop.f32.mrb[0].mxu0
      %1689 = vmatprep.mubr.f32.mxu0 0.0
      %1690 = vmatmul.mubr.f32.gmra.mrb[0].mxu0 %v1498
      %v1691 = vpop.f32.mrb[0].mxu0
      %v1692 = vadd.f32 0.0, %v1691
      %v1693 = vpop.f32.mrb[0].mxu0
      %1694 = vmatprep.mubr.f32.mxu0 0.0
      %1695 = vmatmul.mubr.f32.gmra.mrb[0].mxu0 %v1501
      %v1696 = vpop.f32.mrb[0].mxu0
      %v1697 = vadd.f32 0.0, %v1696
      %v1698 = vpop.f32.mrb[0].mxu0
      %1699 = vmatprep.mubr.f32.mxu0 0.0
      %1700 = vmatmul.mubr.f32.gmra.mrb[0].mxu0 %v1504
      %v1701 = vpop.f32.mrb[0].mxu0
      %v1702 = vadd.f32 0.0, %v1701
      %v1703 = vpop.f32.mrb[0].mxu0
      %1704 = vmatprep.mubr.f32.mxu0 0.0
      %1705 = vmatmul.mubr.f32.gmra.mrb[0].mxu0 %v1507
      %v1706 = vpop.f32.mrb[0].mxu0
      %v1707 = vadd.f32 0.0, %v1706
      %v1708 = vpop.f32.mrb[0].mxu0
      %1709 = vmatprep.mubr.f32.mxu0 0.0
      %1710 = vmatmul.mubr.f32.gmra.mrb[0].mxu0 %v1510
      %v1711 = vpop.f32.mrb[0].mxu0
      %v1712 = vadd.f32 0.0, %v1711
      %v1713 = vpop.f32.mrb[0].mxu0
      %1714 = vmatprep.mubr.f32.mxu0 0.0
      %1715 = vmatmul.mubr.f32.gmra.mrb[0].mxu0 %v1513
      %v1716 = vpop.f32.mrb[0].mxu0
      %v1717 = vadd.f32 0.0, %v1716
      %v1718 = vpop.f32.mrb[0].mxu0
      %1719 = vmatprep.mubr.f32.mxu0 0.0
      %1720 = vmatmul.mubr.f32.gmra.mrb[0].mxu0 %v1516
      %v1721 = vpop.f32.mrb[0].mxu0
      %v1722 = vadd.f32 0.0, %v1721
      %v1723 = vpop.f32.mrb[0].mxu0
      %1724 = vmatprep.mubr.f32.mxu0 0.0
      %1725 = vmatmul.mubr.f32.gmra.mrb[0].mxu0 %v1519
      %v1726 = vpop.f32.mrb[0].mxu0
      %v1727 = vadd.f32 0.0, %v1726
      %v1728 = vpop.f32.mrb[0].mxu0
      %1729 = vmatprep.mubr.f32.mxu0 0.0
      %1730 = vmatmul.mubr.f32.gmra.mrb[0].mxu0 %v1522
      %v1731 = vpop.f32.mrb[0].mxu0
      %v1732 = vadd.f32 0.0, %v1731
      %v1733 = vpop.f32.mrb[0].mxu0
      %1734 = vmatprep.mubr.f32.mxu0 0.0
      %1735 = vmatmul.mubr.f32.gmra.mrb[0].mxu0 %v1525
      %v1736 = vpop.f32.mrb[0].mxu0
      %v1737 = vadd.f32 0.0, %v1736
      %v1738 = vpop.f32.mrb[0].mxu0
      %1739 = vmatprep.mubr.f32.mxu0 0.0
      %1740 = vmatmul.mubr.f32.gmra.mrb[0].mxu0 %v1528
      %v1741 = vpop.f32.mrb[0].mxu0
      %v1742 = vadd.f32 0.0, %v1741
      %v1743 = vpop.f32.mrb[0].mxu0
      %1744 = vmatprep.mubr.f32.mxu0 0.0
      %1745 = vmatmul.mubr.f32.gmra.mrb[0].mxu0 %v1531
      %v1746 = vpop.f32.mrb[0].mxu0
      %v1747 = vadd.f32 0.0, %v1746
      %v1748 = vpop.f32.mrb[0].mxu0
      %1749 = vmatprep.mubr.f32.mxu0 0.0
      %1750 = vmatmul.mubr.f32.gmra.mrb[0].mxu0 %v1534
      %v1751 = vpop.f32.mrb[0].mxu0
      %v1752 = vadd.f32 0.0, %v1751
      %v1753 = vpop.f32.mrb[0].mxu0
      %1754 = vmatprep.mubr.f32.mxu0 0.0
      %1755 = vmatmul.mubr.f32.gmra.mrb[0].mxu0 %v1537
      %v1756 = vpop.f32.mrb[0].mxu0
      %v1757 = vadd.f32 0.0, %v1756
      %v1758 = vpop.f32.mrb[0].mxu0
      %1759 = vmatprep.mubr.f32.mxu0 0.0
      %1760 = vmatmul.mubr.f32.gmra.mrb[0].mxu0 %v1540
      %v1761 = vpop.f32.mrb[0].mxu0
      %v1762 = vadd.f32 0.0, %v1761
      %v1763 = vpop.f32.mrb[0].mxu0
      %1764 = vmatprep.mubr.f32.mxu0 0.0
      %1765 = vmatmul.mubr.f32.gmra.mrb[0].mxu0 %v1543
      %v1766 = vpop.f32.mrb[0].mxu0
      %v1767 = vadd.f32 0.0, %v1766
      %v1768 = vpop.f32.mrb[0].mxu0
      %1769 = vmatprep.mubr.f32.mxu0 0.0
      %1770 = vmatmul.mubr.f32.gmra.mrb[0].mxu0 %v1546
      %v1771 = vpop.f32.mrb[0].mxu0
      %v1772 = vadd.f32 0.0, %v1771
      %v1773 = vpop.f32.mrb[0].mxu0
      %1774 = vmatprep.mubr.f32.mxu0 0.0
      %1775 = vmatmul.mubr.f32.gmra.mrb[0].mxu0 %v1549
      %v1776 = vpop.f32.mrb[0].mxu0
      %v1777 = vadd.f32 0.0, %v1776
      %v1778 = vpop.f32.mrb[0].mxu0
      %1779 = vmatprep.mubr.f32.mxu0 0.0
      %1780 = vmatmul.mubr.f32.gmra.mrb[0].mxu0 %v1552
      %v1781 = vpop.f32.mrb[0].mxu0
      %v1782 = vadd.f32 0.0, %v1781
      %v1783 = vpop.f32.mrb[0].mxu0
      %1784 = vmatprep.mubr.f32.mxu0 0.0
      %1785 = vmatmul.mubr.f32.gmra.mrb[0].mxu0 %v1555
      %v1786 = vpop.f32.mrb[0].mxu0
      %v1787 = vadd.f32 0.0, %v1786
      %v1788 = vpop.f32.mrb[0].mxu0
      %1789 = vmatprep.mubr.f32.mxu0 0.0
      %1790 = vmatmul.mubr.f32.gmra.mrb[0].mxu0 %v1558
      %v1791 = vpop.f32.mrb[0].mxu0
      %v1792 = vadd.f32 0.0, %v1791
      %v1793 = vpop.f32.mrb[0].mxu0
      %1794 = vmatprep.mubr.f32.mxu0 0.0
      %1795 = vmatmul.mubr.f32.gmra.mrb[0].mxu0 %v1561
      %v1796 = vpop.f32.mrb[0].mxu0
      %v1797 = vadd.f32 0.0, %v1796
      %v1798 = vpop.f32.mrb[0].mxu0
      %1799 = vmatprep.mubr.f32.mxu0 0.0
      %1800 = vmatmul.mubr.f32.gmra.mrb[0].mxu0 %v1564
      %v1801 = vpop.f32.mrb[0].mxu0
      %v1802 = vadd.f32 0.0, %v1801
      %v1803 = vpop.f32.mrb[0].mxu0
      %1804 = vmatprep.mubr.f32.mxu0 0.0
      %1805 = vmatmul.mubr.f32.gmra.mrb[0].mxu0 %v1567
      %v1806 = vpop.f32.mrb[0].mxu0
      %v1807 = vadd.f32 0.0, %v1806
      %v1808 = vpop.f32.mrb[0].mxu0
      %1809 = vmatprep.mubr.f32.mxu0 0.0
      %1810 = vmatmul.mubr.f32.gmra.mrb[0].mxu0 %v1570
      %v1811 = vpop.f32.mrb[0].mxu0
      %v1812 = vadd.f32 0.0, %v1811
      %v1813 = vpop.f32.mrb[0].mxu0
      %1814 = vmatprep.mubr.f32.mxu0 0.0
      %1815 = vmatmul.mubr.f32.gmra.mrb[0].mxu0 %v1573
      %v1816 = vpop.f32.mrb[0].mxu0
      %v1817 = vadd.f32 0.0, %v1816
      %v1818 = vpop.f32.mrb[0].mxu0
      %1819 = vmatprep.mubr.f32.mxu0 0.0
      %1820 = vmatmul.mubr.f32.gmra.mrb[0].mxu0 %v1576
      %v1821 = vpop.f32.mrb[0].mxu0
      %v1822 = vadd.f32 0.0, %v1821
      %v1823 = vpop.f32.mrb[0].mxu0
      %1824 = vmatprep.mubr.f32.mxu0 0.0
      %1825 = vmatmul.mubr.f32.gmra.mrb[0].mxu0 %v1579
      %v1826 = vpop.f32.mrb[0].mxu0
      %v1827 = vadd.f32 0.0, %v1826
      %v1828 = vpop.f32.mrb[0].mxu0
      %1829 = vdwg.mxu0
      %v1831 = vsel %vm916, %v1398, 0
      %v1834 = vsel %vm916, %v1399, 0
      %v1837 = vsel %vm916, %v1400, 0
      %v1840 = vsel %vm916, %v1401, 0
      %v1843 = vsel %vm916, %v1402, 0
      %v1846 = vsel %vm916, %v1403, 0
      %v1849 = vsel %vm916, %v1404, 0
      %v1852 = vsel %vm916, %v1405, 0
      %v1855 = vsel %vm916, %v1406, 0
      %v1858 = vsel %vm916, %v1407, 0
      %v1861 = vsel %vm916, %v1408, 0
      %v1864 = vsel %vm916, %v1409, 0
      %v1867 = vsel %vm916, %v1410, 0
      %v1870 = vsel %vm916, %v1411, 0
      %v1873 = vsel %vm916, %v1412, 0
      %v1876 = vsel %vm916, %v1413, 0
      %v1879 = vsel %vm916, %v1414, 0
      %v1882 = vsel %vm916, %v1415, 0
      %v1885 = vsel %vm916, %v1416, 0
      %v1888 = vsel %vm916, %v1417, 0
      %v1891 = vsel %vm916, %v1418, 0
      %v1894 = vsel %vm916, %v1419, 0
      %v1897 = vsel %vm916, %v1420, 0
      %v1900 = vsel %vm916, %v1421, 0
      %v1903 = vsel %vm916, %v1422, 0
      %v1906 = vsel %vm916, %v1423, 0
      %v1909 = vsel %vm916, %v1424, 0
      %v1912 = vsel %vm916, %v1425, 0
      %v1915 = vsel %vm916, %v1426, 0
      %v1918 = vsel %vm916, %v1427, 0
      %v1921 = vsel %vm916, %v1428, 0
      %v1924 = vsel %vm916, %v1429, 0
      %v1927 = vsel %vm916, %v1430, 0
      %v1930 = vsel %vm916, %v1431, 0
      %v1933 = vsel %vm916, %v1432, 0
      %v1936 = vsel %vm916, %v1433, 0
      %v1939 = vsel %vm1581, %v1434, 0
      %1941 = vmatprep.subr.mxu0 0.0
      %1942 = vmatpush1.msra.mxu0 %v1939
      %1943 = vmatprep.subr.mxu0 0.0
      %1944 = vmatpush1.msra.mxu0 0.0
      %1945 = vmatprep.subr.mxu0 0.0
      %1946 = vmatpush1.msra.mxu0 0.0
      %1947 = vmatprep.subr.mxu0 0.0
      %1948 = vmatpush1.msra.mxu0 0.0
      %1949 = vmatprep.subr.mxu0 0.0
      %1950 = vmatpush1.msra.mxu0 0.0
      %1951 = vmatprep.subr.mxu0 0.0
      %1952 = vmatpush1.msra.mxu0 0.0
      %1953 = vmatprep.subr.mxu0 0.0
      %1954 = vmatpush1.msra.mxu0 0.0
      %1955 = vmatprep.subr.mxu0 0.0
      %1956 = vmatpush1.msra.mxu0 0.0
      %1957 = vmatprep.subr.mxu0 0.0
      %1958 = vmatpush1.msra.mxu0 0.0
      %1959 = vmatprep.subr.mxu0 0.0
      %1960 = vmatpush1.msra.mxu0 0.0
      %1961 = vmatprep.subr.mxu0 0.0
      %1962 = vmatpush1.msra.mxu0 0.0
      %1963 = vmatprep.subr.mxu0 0.0
      %1964 = vmatpush1.msra.mxu0 0.0
      %1965 = vmatprep.subr.mxu0 0.0
      %1966 = vmatpush1.msra.mxu0 0.0
      %1967 = vmatprep.subr.mxu0 0.0
      %1968 = vmatpush1.msra.mxu0 0.0
      %1969 = vmatprep.subr.mxu0 0.0
      %1970 = vmatpush1.msra.mxu0 0.0
      %1971 = vmatprep.subr.mxu0 0.0
      %1972 = vmatpush1.msra.mxu0 0.0
      %1973 = vmatprep.subr.mxu0 0.0
      %1974 = vmatpush1.msra.mxu0 0.0
      %1975 = vmatprep.subr.mxu0 0.0
      %1976 = vmatpush1.msra.mxu0 0.0
      %1977 = vmatprep.subr.mxu0 0.0
      %1978 = vmatpush1.msra.mxu0 0.0
      %1979 = vmatprep.subr.mxu0 0.0
      %1980 = vmatpush1.msra.mxu0 0.0
      %1981 = vmatprep.subr.mxu0 0.0
      %1982 = vmatpush1.msra.mxu0 0.0
      %1983 = vmatprep.subr.mxu0 0.0
      %1984 = vmatpush1.msra.mxu0 0.0
      %1985 = vmatprep.subr.mxu0 0.0
      %1986 = vmatpush1.msra.mxu0 0.0
      %1987 = vmatprep.subr.mxu0 0.0
      %1988 = vmatpush1.msra.mxu0 0.0
      %1989 = vmatprep.subr.mxu0 0.0
      %1990 = vmatpush1.msra.mxu0 0.0
      %1991 = vmatprep.subr.mxu0 0.0
      %1992 = vmatpush1.msra.mxu0 0.0
      %1993 = vmatprep.subr.mxu0 0.0
      %1994 = vmatpush1.msra.mxu0 0.0
      %1995 = vmatprep.subr.mxu0 0.0
      %1996 = vmatpush1.msra.mxu0 0.0
      %1997 = vmatprep.subr.mxu0 0.0
      %1998 = vmatpush1.msra.mxu0 0.0
      %1999 = vmatprep.subr.mxu0 0.0
      %2000 = vmatpush1.msra.mxu0 0.0
      %2001 = vmatprep.subr.mxu0 0.0
      %2002 = vmatpush1.msra.mxu0 0.0
      %2003 = vmatprep.subr.mxu0 0.0
      %2004 = vmatpush1.msra.mxu0 0.0
      %2005 = vmatprep.mubr.f32.mxu0 0.0
      %2006 = vmatmul.mubr.f32.gmra.mrb[0].mxu0 %v1831
      %v2007 = vpop.f32.mrb[0].mxu0
      %v2008 = vadd.f32 %v1652, %v2007
      %v2009 = vpop.f32.mrb[0].mxu0
      %2010 = vmatprep.mubr.f32.mxu0 0.0
      %2011 = vmatmul.mubr.f32.gmra.mrb[0].mxu0 %v1834
      %v2012 = vpop.f32.mrb[0].mxu0
      %v2013 = vadd.f32 %v1657, %v2012
      %v2014 = vpop.f32.mrb[0].mxu0
      %2015 = vmatprep.mubr.f32.mxu0 0.0
      %2016 = vmatmul.mubr.f32.gmra.mrb[0].mxu0 %v1837
      %v2017 = vpop.f32.mrb[0].mxu0
      %v2018 = vadd.f32 %v1662, %v2017
      %v2019 = vpop.f32.mrb[0].mxu0
      %2020 = vmatprep.mubr.f32.mxu0 0.0
      %2021 = vmatmul.mubr.f32.gmra.mrb[0].mxu0 %v1840
      %v2022 = vpop.f32.mrb[0].mxu0
      %v2023 = vadd.f32 %v1667, %v2022
      %v2024 = vpop.f32.mrb[0].mxu0
      %2025 = vmatprep.mubr.f32.mxu0 0.0
      %2026 = vmatmul.mubr.f32.gmra.mrb[0].mxu0 %v1843
      %v2027 = vpop.f32.mrb[0].mxu0
      %v2028 = vadd.f32 %v1672, %v2027
      %v2029 = vpop.f32.mrb[0].mxu0
      %2030 = vmatprep.mubr.f32.mxu0 0.0
      %2031 = vmatmul.mubr.f32.gmra.mrb[0].mxu0 %v1846
      %v2032 = vpop.f32.mrb[0].mxu0
      %v2033 = vadd.f32 %v1677, %v2032
      %v2034 = vpop.f32.mrb[0].mxu0
      %2035 = vmatprep.mubr.f32.mxu0 0.0
      %2036 = vmatmul.mubr.f32.gmra.mrb[0].mxu0 %v1849
      %v2037 = vpop.f32.mrb[0].mxu0
      %v2038 = vadd.f32 %v1682, %v2037
      %v2039 = vpop.f32.mrb[0].mxu0
      %2040 = vmatprep.mubr.f32.mxu0 0.0
      %2041 = vmatmul.mubr.f32.gmra.mrb[0].mxu0 %v1852
      %v2042 = vpop.f32.mrb[0].mxu0
      %v2043 = vadd.f32 %v1687, %v2042
      %v2044 = vpop.f32.mrb[0].mxu0
      %2045 = vmatprep.mubr.f32.mxu0 0.0
      %2046 = vmatmul.mubr.f32.gmra.mrb[0].mxu0 %v1855
      %v2047 = vpop.f32.mrb[0].mxu0
      %v2048 = vadd.f32 %v1692, %v2047
      %v2049 = vpop.f32.mrb[0].mxu0
      %2050 = vmatprep.mubr.f32.mxu0 0.0
      %2051 = vmatmul.mubr.f32.gmra.mrb[0].mxu0 %v1858
      %v2052 = vpop.f32.mrb[0].mxu0
      %v2053 = vadd.f32 %v1697, %v2052
      %v2054 = vpop.f32.mrb[0].mxu0
      %2055 = vmatprep.mubr.f32.mxu0 0.0
      %2056 = vmatmul.mubr.f32.gmra.mrb[0].mxu0 %v1861
      %v2057 = vpop.f32.mrb[0].mxu0
      %v2058 = vadd.f32 %v1702, %v2057
      %v2059 = vpop.f32.mrb[0].mxu0
      %2060 = vmatprep.mubr.f32.mxu0 0.0
      %2061 = vmatmul.mubr.f32.gmra.mrb[0].mxu0 %v1864
      %v2062 = vpop.f32.mrb[0].mxu0
      %v2063 = vadd.f32 %v1707, %v2062
      %v2064 = vpop.f32.mrb[0].mxu0
      %2065 = vmatprep.mubr.f32.mxu0 0.0
      %2066 = vmatmul.mubr.f32.gmra.mrb[0].mxu0 %v1867
      %v2067 = vpop.f32.mrb[0].mxu0
      %v2068 = vadd.f32 %v1712, %v2067
      %v2069 = vpop.f32.mrb[0].mxu0
      %2070 = vmatprep.mubr.f32.mxu0 0.0
      %2071 = vmatmul.mubr.f32.gmra.mrb[0].mxu0 %v1870
      %v2072 = vpop.f32.mrb[0].mxu0
      %v2073 = vadd.f32 %v1717, %v2072
      %v2074 = vpop.f32.mrb[0].mxu0
      %2075 = vmatprep.mubr.f32.mxu0 0.0
      %2076 = vmatmul.mubr.f32.gmra.mrb[0].mxu0 %v1873
      %v2077 = vpop.f32.mrb[0].mxu0
      %v2078 = vadd.f32 %v1722, %v2077
      %v2079 = vpop.f32.mrb[0].mxu0
      %2080 = vmatprep.mubr.f32.mxu0 0.0
      %2081 = vmatmul.mubr.f32.gmra.mrb[0].mxu0 %v1876
      %v2082 = vpop.f32.mrb[0].mxu0
      %v2083 = vadd.f32 %v1727, %v2082
      %v2084 = vpop.f32.mrb[0].mxu0
      %2085 = vmatprep.mubr.f32.mxu0 0.0
      %2086 = vmatmul.mubr.f32.gmra.mrb[0].mxu0 %v1879
      %v2087 = vpop.f32.mrb[0].mxu0
      %v2088 = vadd.f32 %v1732, %v2087
      %v2089 = vpop.f32.mrb[0].mxu0
      %2090 = vmatprep.mubr.f32.mxu0 0.0
      %2091 = vmatmul.mubr.f32.gmra.mrb[0].mxu0 %v1882
      %v2092 = vpop.f32.mrb[0].mxu0
      %v2093 = vadd.f32 %v1737, %v2092
      %v2094 = vpop.f32.mrb[0].mxu0
      %2095 = vmatprep.mubr.f32.mxu0 0.0
      %2096 = vmatmul.mubr.f32.gmra.mrb[0].mxu0 %v1885
      %v2097 = vpop.f32.mrb[0].mxu0
      %v2098 = vadd.f32 %v1742, %v2097
      %v2099 = vpop.f32.mrb[0].mxu0
      %2100 = vmatprep.mubr.f32.mxu0 0.0
      %2101 = vmatmul.mubr.f32.gmra.mrb[0].mxu0 %v1888
      %v2102 = vpop.f32.mrb[0].mxu0
      %v2103 = vadd.f32 %v1747, %v2102
      %v2104 = vpop.f32.mrb[0].mxu0
      %2105 = vmatprep.mubr.f32.mxu0 0.0
      %2106 = vmatmul.mubr.f32.gmra.mrb[0].mxu0 %v1891
      %v2107 = vpop.f32.mrb[0].mxu0
      %v2108 = vadd.f32 %v1752, %v2107
      %v2109 = vpop.f32.mrb[0].mxu0
      %2110 = vmatprep.mubr.f32.mxu0 0.0
      %2111 = vmatmul.mubr.f32.gmra.mrb[0].mxu0 %v1894
      %v2112 = vpop.f32.mrb[0].mxu0
      %v2113 = vadd.f32 %v1757, %v2112
      %v2114 = vpop.f32.mrb[0].mxu0
      %2115 = vmatprep.mubr.f32.mxu0 0.0
      %2116 = vmatmul.mubr.f32.gmra.mrb[0].mxu0 %v1897
      %v2117 = vpop.f32.mrb[0].mxu0
      %v2118 = vadd.f32 %v1762, %v2117
      %v2119 = vpop.f32.mrb[0].mxu0
      %2120 = vmatprep.mubr.f32.mxu0 0.0
      %2121 = vmatmul.mubr.f32.gmra.mrb[0].mxu0 %v1900
      %v2122 = vpop.f32.mrb[0].mxu0
      %v2123 = vadd.f32 %v1767, %v2122
      %v2124 = vpop.f32.mrb[0].mxu0
      %2125 = vmatprep.mubr.f32.mxu0 0.0
      %2126 = vmatmul.mubr.f32.gmra.mrb[0].mxu0 %v1903
      %v2127 = vpop.f32.mrb[0].mxu0
      %v2128 = vadd.f32 %v1772, %v2127
      %v2129 = vpop.f32.mrb[0].mxu0
      %2130 = vmatprep.mubr.f32.mxu0 0.0
      %2131 = vmatmul.mubr.f32.gmra.mrb[0].mxu0 %v1906
      %v2132 = vpop.f32.mrb[0].mxu0
      %v2133 = vadd.f32 %v1777, %v2132
      %v2134 = vpop.f32.mrb[0].mxu0
      %2135 = vmatprep.mubr.f32.mxu0 0.0
      %2136 = vmatmul.mubr.f32.gmra.mrb[0].mxu0 %v1909
      %v2137 = vpop.f32.mrb[0].mxu0
      %v2138 = vadd.f32 %v1782, %v2137
      %v2139 = vpop.f32.mrb[0].mxu0
      %2140 = vmatprep.mubr.f32.mxu0 0.0
      %2141 = vmatmul.mubr.f32.gmra.mrb[0].mxu0 %v1912
      %v2142 = vpop.f32.mrb[0].mxu0
      %v2143 = vadd.f32 %v1787, %v2142
      %v2144 = vpop.f32.mrb[0].mxu0
      %2145 = vmatprep.mubr.f32.mxu0 0.0
      %2146 = vmatmul.mubr.f32.gmra.mrb[0].mxu0 %v1915
      %v2147 = vpop.f32.mrb[0].mxu0
      %v2148 = vadd.f32 %v1792, %v2147
      %v2149 = vpop.f32.mrb[0].mxu0
      %2150 = vmatprep.mubr.f32.mxu0 0.0
      %2151 = vmatmul.mubr.f32.gmra.mrb[0].mxu0 %v1918
      %v2152 = vpop.f32.mrb[0].mxu0
      %v2153 = vadd.f32 %v1797, %v2152
      %v2154 = vpop.f32.mrb[0].mxu0
      %2155 = vmatprep.mubr.f32.mxu0 0.0
      %2156 = vmatmul.mubr.f32.gmra.mrb[0].mxu0 %v1921
      %v2157 = vpop.f32.mrb[0].mxu0
      %v2158 = vadd.f32 %v1802, %v2157
      %v2159 = vpop.f32.mrb[0].mxu0
      %2160 = vmatprep.mubr.f32.mxu0 0.0
      %2161 = vmatmul.mubr.f32.gmra.mrb[0].mxu0 %v1924
      %v2162 = vpop.f32.mrb[0].mxu0
      %v2163 = vadd.f32 %v1807, %v2162
      %v2164 = vpop.f32.mrb[0].mxu0
      %2165 = vmatprep.mubr.f32.mxu0 0.0
      %2166 = vmatmul.mubr.f32.gmra.mrb[0].mxu0 %v1927
      %v2167 = vpop.f32.mrb[0].mxu0
      %v2168 = vadd.f32 %v1812, %v2167
      %v2169 = vpop.f32.mrb[0].mxu0
      %2170 = vmatprep.mubr.f32.mxu0 0.0
      %2171 = vmatmul.mubr.f32.gmra.mrb[0].mxu0 %v1930
      %v2172 = vpop.f32.mrb[0].mxu0
      %v2173 = vadd.f32 %v1817, %v2172
      %v2174 = vpop.f32.mrb[0].mxu0
      %2175 = vmatprep.mubr.f32.mxu0 0.0
      %2176 = vmatmul.mubr.f32.gmra.mrb[0].mxu0 %v1933
      %v2177 = vpop.f32.mrb[0].mxu0
      %v2178 = vadd.f32 %v1822, %v2177
      %v2179 = vpop.f32.mrb[0].mxu0
      %2180 = vmatprep.mubr.f32.mxu0 0.0
      %2181 = vmatmul.mubr.f32.gmra.mrb[0].mxu0 %v1936
      %v2182 = vpop.f32.mrb[0].mxu0
      %v2183 = vadd.f32 %v1827, %v2182
      %v2184 = vpop.f32.mrb[0].mxu0
      %2185 = vdwg.mxu0
      %v2186 = vld [vmem:[#allocation2 + $0x2] sm:$0xff]
      %v2187 = vld [vmem:[#allocation2 + $0xa] sm:$0xff]
      %v2188 = vld [vmem:[#allocation2 + $0x12] sm:$0xff]
      %v2189 = vld [vmem:[#allocation2 + $0x1a] sm:$0xff]
      %v2190 = vld [vmem:[#allocation2 + $0x22] sm:$0xff]
      %v2191 = vld [vmem:[#allocation2 + $0x2a] sm:$0xff]
      %v2192 = vld [vmem:[#allocation2 + $0x32] sm:$0xff]
      %v2193 = vld [vmem:[#allocation2 + $0x3a] sm:$0xff]
      %v2194 = vld [vmem:[#allocation2 + $0x42] sm:$0xff]
      %v2195 = vld [vmem:[#allocation2 + $0x4a] sm:$0xff]
      %v2196 = vld [vmem:[#allocation2 + $0x52] sm:$0xff]
      %v2197 = vld [vmem:[#allocation2 + $0x5a] sm:$0xff]
      %v2198 = vld [vmem:[#allocation2 + $0x62] sm:$0xff]
      %v2199 = vld [vmem:[#allocation2 + $0x6a] sm:$0xff]
      %v2200 = vld [vmem:[#allocation2 + $0x72] sm:$0xff]
      %v2201 = vld [vmem:[#allocation2 + $0x7a] sm:$0xff]
      %v2202 = vld [vmem:[#allocation2 + $0x82] sm:$0xff]
      %v2203 = vld [vmem:[#allocation2 + $0x8a] sm:$0xff]
      %v2204 = vld [vmem:[#allocation2 + $0x92] sm:$0xff]
      %v2205 = vld [vmem:[#allocation2 + $0x9a] sm:$0xff]
      %v2206 = vld [vmem:[#allocation2 + $0xa2] sm:$0xff]
      %v2207 = vld [vmem:[#allocation2 + $0xaa] sm:$0xff]
      %v2208 = vld [vmem:[#allocation2 + $0xb2] sm:$0xff]
      %v2209 = vld [vmem:[#allocation2 + $0xba] sm:$0xff]
      %v2210 = vld [vmem:[#allocation2 + $0xc2] sm:$0xff]
      %v2211 = vld [vmem:[#allocation2 + $0xca] sm:$0xff]
      %v2212 = vld [vmem:[#allocation2 + $0xd2] sm:$0xff]
      %v2213 = vld [vmem:[#allocation2 + $0xda] sm:$0xff]
      %v2214 = vld [vmem:[#allocation2 + $0xe2] sm:$0xff]
      %v2215 = vld [vmem:[#allocation2 + $0xea] sm:$0xff]
      %v2216 = vld [vmem:[#allocation2 + $0xf2] sm:$0xff]
      %v2217 = vld [vmem:[#allocation2 + $0xfa] sm:$0xff]
      %v2218 = vld [vmem:[#allocation2 + $0x102] sm:$0xff]
      %v2219 = vld [vmem:[#allocation2 + $0x10a] sm:$0xff]
      %v2220 = vld [vmem:[#allocation2 + $0x112] sm:$0xff]
      %v2221 = vld [vmem:[#allocation2 + $0x11a] sm:$0xff]
      %s2222 = scalar_lea.vmem %s1, 8
      %v2223 = vld [vmem:[%s2222] sm:$0xf]
      %v2225 = vsel %vm916, %v2186, 0
      %v2228 = vsel %vm916, %v2187, 0
      %v2231 = vsel %vm916, %v2188, 0
      %v2234 = vsel %vm916, %v2189, 0
      %v2237 = vsel %vm916, %v2190, 0
      %v2240 = vsel %vm916, %v2191, 0
      %v2243 = vsel %vm916, %v2192, 0
      %v2246 = vsel %vm916, %v2193, 0
      %v2249 = vsel %vm916, %v2194, 0
      %v2252 = vsel %vm916, %v2195, 0
      %v2255 = vsel %vm916, %v2196, 0
      %v2258 = vsel %vm916, %v2197, 0
      %v2261 = vsel %vm916, %v2198, 0
      %v2264 = vsel %vm916, %v2199, 0
      %v2267 = vsel %vm916, %v2200, 0
      %v2270 = vsel %vm916, %v2201, 0
      %v2273 = vsel %vm916, %v2202, 0
      %v2276 = vsel %vm916, %v2203, 0
      %v2279 = vsel %vm916, %v2204, 0
      %v2282 = vsel %vm916, %v2205, 0
      %v2285 = vsel %vm916, %v2206, 0
      %v2288 = vsel %vm916, %v2207, 0
      %v2291 = vsel %vm916, %v2208, 0
      %v2294 = vsel %vm916, %v2209, 0
      %v2297 = vsel %vm916, %v2210, 0
      %v2300 = vsel %vm916, %v2211, 0
      %v2303 = vsel %vm916, %v2212, 0
      %v2306 = vsel %vm916, %v2213, 0
      %v2309 = vsel %vm916, %v2214, 0
      %v2312 = vsel %vm916, %v2215, 0
      %v2315 = vsel %vm916, %v2216, 0
      %v2318 = vsel %vm916, %v2217, 0
      %v2321 = vsel %vm916, %v2218, 0
      %v2324 = vsel %vm916, %v2219, 0
      %v2327 = vsel %vm916, %v2220, 0
      %v2330 = vsel %vm916, %v2221, 0
      %v2333 = vsel %vm1581, %v2223, 0
      %2335 = vmatprep.subr.mxu0 0.0
      %2336 = vmatpush1.msra.mxu0 %v2333
      %2337 = vmatprep.subr.mxu0 0.0
      %2338 = vmatpush1.msra.mxu0 0.0
      %2339 = vmatprep.subr.mxu0 0.0
      %2340 = vmatpush1.msra.mxu0 0.0
      %2341 = vmatprep.subr.mxu0 0.0
      %2342 = vmatpush1.msra.mxu0 0.0
      %2343 = vmatprep.subr.mxu0 0.0
      %2344 = vmatpush1.msra.mxu0 0.0
      %2345 = vmatprep.subr.mxu0 0.0
      %2346 = vmatpush1.msra.mxu0 0.0
      %2347 = vmatprep.subr.mxu0 0.0
      %2348 = vmatpush1.msra.mxu0 0.0
      %2349 = vmatprep.subr.mxu0 0.0
      %2350 = vmatpush1.msra.mxu0 0.0
      %2351 = vmatprep.subr.mxu0 0.0
      %2352 = vmatpush1.msra.mxu0 0.0
      %2353 = vmatprep.subr.mxu0 0.0
      %2354 = vmatpush1.msra.mxu0 0.0
      %2355 = vmatprep.subr.mxu0 0.0
      %2356 = vmatpush1.msra.mxu0 0.0
      %2357 = vmatprep.subr.mxu0 0.0
      %2358 = vmatpush1.msra.mxu0 0.0
      %2359 = vmatprep.subr.mxu0 0.0
      %2360 = vmatpush1.msra.mxu0 0.0
      %2361 = vmatprep.subr.mxu0 0.0
      %2362 = vmatpush1.msra.mxu0 0.0
      %2363 = vmatprep.subr.mxu0 0.0
      %2364 = vmatpush1.msra.mxu0 0.0
      %2365 = vmatprep.subr.mxu0 0.0
      %2366 = vmatpush1.msra.mxu0 0.0
      %2367 = vmatprep.subr.mxu0 0.0
      %2368 = vmatpush1.msra.mxu0 0.0
      %2369 = vmatprep.subr.mxu0 0.0
      %2370 = vmatpush1.msra.mxu0 0.0
      %2371 = vmatprep.subr.mxu0 0.0
      %2372 = vmatpush1.msra.mxu0 0.0
      %2373 = vmatprep.subr.mxu0 0.0
      %2374 = vmatpush1.msra.mxu0 0.0
      %2375 = vmatprep.subr.mxu0 0.0
      %2376 = vmatpush1.msra.mxu0 0.0
      %2377 = vmatprep.subr.mxu0 0.0
      %2378 = vmatpush1.msra.mxu0 0.0
      %2379 = vmatprep.subr.mxu0 0.0
      %2380 = vmatpush1.msra.mxu0 0.0
      %2381 = vmatprep.subr.mxu0 0.0
      %2382 = vmatpush1.msra.mxu0 0.0
      %2383 = vmatprep.subr.mxu0 0.0
      %2384 = vmatpush1.msra.mxu0 0.0
      %2385 = vmatprep.subr.mxu0 0.0
      %2386 = vmatpush1.msra.mxu0 0.0
      %2387 = vmatprep.subr.mxu0 0.0
      %2388 = vmatpush1.msra.mxu0 0.0
      %2389 = vmatprep.subr.mxu0 0.0
      %2390 = vmatpush1.msra.mxu0 0.0
      %2391 = vmatprep.subr.mxu0 0.0
      %2392 = vmatpush1.msra.mxu0 0.0
      %2393 = vmatprep.subr.mxu0 0.0
      %2394 = vmatpush1.msra.mxu0 0.0
      %2395 = vmatprep.subr.mxu0 0.0
      %2396 = vmatpush1.msra.mxu0 0.0
      %2397 = vmatprep.subr.mxu0 0.0
      %2398 = vmatpush1.msra.mxu0 0.0
      %2399 = vmatprep.mubr.f32.mxu0 0.0
      %2400 = vmatmul.mubr.f32.gmra.mrb[0].mxu0 %v2225
      %v2401 = vpop.f32.mrb[0].mxu0
      %v2402 = vadd.f32 0.0, %v2401
      %v2403 = vpop.f32.mrb[0].mxu0
      %2404 = vmatprep.mubr.f32.mxu0 0.0
      %2405 = vmatmul.mubr.f32.gmra.mrb[0].mxu0 %v2228
      %v2406 = vpop.f32.mrb[0].mxu0
      %v2407 = vadd.f32 0.0, %v2406
      %v2408 = vpop.f32.mrb[0].mxu0
      %2409 = vmatprep.mubr.f32.mxu0 0.0
      %2410 = vmatmul.mubr.f32.gmra.mrb[0].mxu0 %v2231
      %v2411 = vpop.f32.mrb[0].mxu0
      %v2412 = vadd.f32 0.0, %v2411
      %v2413 = vpop.f32.mrb[0].mxu0
      %2414 = vmatprep.mubr.f32.mxu0 0.0
      %2415 = vmatmul.mubr.f32.gmra.mrb[0].mxu0 %v2234
      %v2416 = vpop.f32.mrb[0].mxu0
      %v2417 = vadd.f32 0.0, %v2416
      %v2418 = vpop.f32.mrb[0].mxu0
      %2419 = vmatprep.mubr.f32.mxu0 0.0
      %2420 = vmatmul.mubr.f32.gmra.mrb[0].mxu0 %v2237
      %v2421 = vpop.f32.mrb[0].mxu0
      %v2422 = vadd.f32 0.0, %v2421
      %v2423 = vpop.f32.mrb[0].mxu0
      %2424 = vmatprep.mubr.f32.mxu0 0.0
      %2425 = vmatmul.mubr.f32.gmra.mrb[0].mxu0 %v2240
      %v2426 = vpop.f32.mrb[0].mxu0
      %v2427 = vadd.f32 0.0, %v2426
      %v2428 = vpop.f32.mrb[0].mxu0
      %2429 = vmatprep.mubr.f32.mxu0 0.0
      %2430 = vmatmul.mubr.f32.gmra.mrb[0].mxu0 %v2243
      %v2431 = vpop.f32.mrb[0].mxu0
      %v2432 = vadd.f32 0.0, %v2431
      %v2433 = vpop.f32.mrb[0].mxu0
      %2434 = vmatprep.mubr.f32.mxu0 0.0
      %2435 = vmatmul.mubr.f32.gmra.mrb[0].mxu0 %v2246
      %v2436 = vpop.f32.mrb[0].mxu0
      %v2437 = vadd.f32 0.0, %v2436
      %v2438 = vpop.f32.mrb[0].mxu0
      %2439 = vmatprep.mubr.f32.mxu0 0.0
      %2440 = vmatmul.mubr.f32.gmra.mrb[0].mxu0 %v2249
      %v2441 = vpop.f32.mrb[0].mxu0
      %v2442 = vadd.f32 0.0, %v2441
      %v2443 = vpop.f32.mrb[0].mxu0
      %2444 = vmatprep.mubr.f32.mxu0 0.0
      %2445 = vmatmul.mubr.f32.gmra.mrb[0].mxu0 %v2252
      %v2446 = vpop.f32.mrb[0].mxu0
      %v2447 = vadd.f32 0.0, %v2446
      %v2448 = vpop.f32.mrb[0].mxu0
      %2449 = vmatprep.mubr.f32.mxu0 0.0
      %2450 = vmatmul.mubr.f32.gmra.mrb[0].mxu0 %v2255
      %v2451 = vpop.f32.mrb[0].mxu0
      %v2452 = vadd.f32 0.0, %v2451
      %v2453 = vpop.f32.mrb[0].mxu0
      %2454 = vmatprep.mubr.f32.mxu0 0.0
      %2455 = vmatmul.mubr.f32.gmra.mrb[0].mxu0 %v2258
      %v2456 = vpop.f32.mrb[0].mxu0
      %v2457 = vadd.f32 0.0, %v2456
      %v2458 = vpop.f32.mrb[0].mxu0
      %2459 = vmatprep.mubr.f32.mxu0 0.0
      %2460 = vmatmul.mubr.f32.gmra.mrb[0].mxu0 %v2261
      %v2461 = vpop.f32.mrb[0].mxu0
      %v2462 = vadd.f32 0.0, %v2461
      %v2463 = vpop.f32.mrb[0].mxu0
      %2464 = vmatprep.mubr.f32.mxu0 0.0
      %2465 = vmatmul.mubr.f32.gmra.mrb[0].mxu0 %v2264
      %v2466 = vpop.f32.mrb[0].mxu0
      %v2467 = vadd.f32 0.0, %v2466
      %v2468 = vpop.f32.mrb[0].mxu0
      %2469 = vmatprep.mubr.f32.mxu0 0.0
      %2470 = vmatmul.mubr.f32.gmra.mrb[0].mxu0 %v2267
      %v2471 = vpop.f32.mrb[0].mxu0
      %v2472 = vadd.f32 0.0, %v2471
      %v2473 = vpop.f32.mrb[0].mxu0
      %2474 = vmatprep.mubr.f32.mxu0 0.0
      %2475 = vmatmul.mubr.f32.gmra.mrb[0].mxu0 %v2270
      %v2476 = vpop.f32.mrb[0].mxu0
      %v2477 = vadd.f32 0.0, %v2476
      %v2478 = vpop.f32.mrb[0].mxu0
      %2479 = vmatprep.mubr.f32.mxu0 0.0
      %2480 = vmatmul.mubr.f32.gmra.mrb[0].mxu0 %v2273
      %v2481 = vpop.f32.mrb[0].mxu0
      %v2482 = vadd.f32 0.0, %v2481
      %v2483 = vpop.f32.mrb[0].mxu0
      %2484 = vmatprep.mubr.f32.mxu0 0.0
      %2485 = vmatmul.mubr.f32.gmra.mrb[0].mxu0 %v2276
      %v2486 = vpop.f32.mrb[0].mxu0
      %v2487 = vadd.f32 0.0, %v2486
      %v2488 = vpop.f32.mrb[0].mxu0
      %2489 = vmatprep.mubr.f32.mxu0 0.0
      %2490 = vmatmul.mubr.f32.gmra.mrb[0].mxu0 %v2279
      %v2491 = vpop.f32.mrb[0].mxu0
      %v2492 = vadd.f32 0.0, %v2491
      %v2493 = vpop.f32.mrb[0].mxu0
      %2494 = vmatprep.mubr.f32.mxu0 0.0
      %2495 = vmatmul.mubr.f32.gmra.mrb[0].mxu0 %v2282
      %v2496 = vpop.f32.mrb[0].mxu0
      %v2497 = vadd.f32 0.0, %v2496
      %v2498 = vpop.f32.mrb[0].mxu0
      %2499 = vmatprep.mubr.f32.mxu0 0.0
      %2500 = vmatmul.mubr.f32.gmra.mrb[0].mxu0 %v2285
      %v2501 = vpop.f32.mrb[0].mxu0
      %v2502 = vadd.f32 0.0, %v2501
      %v2503 = vpop.f32.mrb[0].mxu0
      %2504 = vmatprep.mubr.f32.mxu0 0.0
      %2505 = vmatmul.mubr.f32.gmra.mrb[0].mxu0 %v2288
      %v2506 = vpop.f32.mrb[0].mxu0
      %v2507 = vadd.f32 0.0, %v2506
      %v2508 = vpop.f32.mrb[0].mxu0
      %2509 = vmatprep.mubr.f32.mxu0 0.0
      %2510 = vmatmul.mubr.f32.gmra.mrb[0].mxu0 %v2291
      %v2511 = vpop.f32.mrb[0].mxu0
      %v2512 = vadd.f32 0.0, %v2511
      %v2513 = vpop.f32.mrb[0].mxu0
      %2514 = vmatprep.mubr.f32.mxu0 0.0
      %2515 = vmatmul.mubr.f32.gmra.mrb[0].mxu0 %v2294
      %v2516 = vpop.f32.mrb[0].mxu0
      %v2517 = vadd.f32 0.0, %v2516
      %v2518 = vpop.f32.mrb[0].mxu0
      %2519 = vmatprep.mubr.f32.mxu0 0.0
      %2520 = vmatmul.mubr.f32.gmra.mrb[0].mxu0 %v2297
      %v2521 = vpop.f32.mrb[0].mxu0
      %v2522 = vadd.f32 0.0, %v2521
      %v2523 = vpop.f32.mrb[0].mxu0
      %2524 = vmatprep.mubr.f32.mxu0 0.0
      %2525 = vmatmul.mubr.f32.gmra.mrb[0].mxu0 %v2300
      %v2526 = vpop.f32.mrb[0].mxu0
      %v2527 = vadd.f32 0.0, %v2526
      %v2528 = vpop.f32.mrb[0].mxu0
      %2529 = vmatprep.mubr.f32.mxu0 0.0
      %2530 = vmatmul.mubr.f32.gmra.mrb[0].mxu0 %v2303
      %v2531 = vpop.f32.mrb[0].mxu0
      %v2532 = vadd.f32 0.0, %v2531
      %v2533 = vpop.f32.mrb[0].mxu0
      %2534 = vmatprep.mubr.f32.mxu0 0.0
      %2535 = vmatmul.mubr.f32.gmra.mrb[0].mxu0 %v2306
      %v2536 = vpop.f32.mrb[0].mxu0
      %v2537 = vadd.f32 0.0, %v2536
      %v2538 = vpop.f32.mrb[0].mxu0
      %2539 = vmatprep.mubr.f32.mxu0 0.0
      %2540 = vmatmul.mubr.f32.gmra.mrb[0].mxu0 %v2309
      %v2541 = vpop.f32.mrb[0].mxu0
      %v2542 = vadd.f32 0.0, %v2541
      %v2543 = vpop.f32.mrb[0].mxu0
      %2544 = vmatprep.mubr.f32.mxu0 0.0
      %2545 = vmatmul.mubr.f32.gmra.mrb[0].mxu0 %v2312
      %v2546 = vpop.f32.mrb[0].mxu0
      %v2547 = vadd.f32 0.0, %v2546
      %v2548 = vpop.f32.mrb[0].mxu0
      %2549 = vmatprep.mubr.f32.mxu0 0.0
      %2550 = vmatmul.mubr.f32.gmra.mrb[0].mxu0 %v2315
      %v2551 = vpop.f32.mrb[0].mxu0
      %v2552 = vadd.f32 0.0, %v2551
      %v2553 = vpop.f32.mrb[0].mxu0
      %2554 = vmatprep.mubr.f32.mxu0 0.0
      %2555 = vmatmul.mubr.f32.gmra.mrb[0].mxu0 %v2318
      %v2556 = vpop.f32.mrb[0].mxu0
      %v2557 = vadd.f32 0.0, %v2556
      %v2558 = vpop.f32.mrb[0].mxu0
      %2559 = vmatprep.mubr.f32.mxu0 0.0
      %2560 = vmatmul.mubr.f32.gmra.mrb[0].mxu0 %v2321
      %v2561 = vpop.f32.mrb[0].mxu0
      %v2562 = vadd.f32 0.0, %v2561
      %v2563 = vpop.f32.mrb[0].mxu0
      %2564 = vmatprep.mubr.f32.mxu0 0.0
      %2565 = vmatmul.mubr.f32.gmra.mrb[0].mxu0 %v2324
      %v2566 = vpop.f32.mrb[0].mxu0
      %v2567 = vadd.f32 0.0, %v2566
      %v2568 = vpop.f32.mrb[0].mxu0
      %2569 = vmatprep.mubr.f32.mxu0 0.0
      %2570 = vmatmul.mubr.f32.gmra.mrb[0].mxu0 %v2327
      %v2571 = vpop.f32.mrb[0].mxu0
      %v2572 = vadd.f32 0.0, %v2571
      %v2573 = vpop.f32.mrb[0].mxu0
      %2574 = vmatprep.mubr.f32.mxu0 0.0
      %2575 = vmatmul.mubr.f32.gmra.mrb[0].mxu0 %v2330
      %v2576 = vpop.f32.mrb[0].mxu0
      %v2577 = vadd.f32 0.0, %v2576
      %v2578 = vpop.f32.mrb[0].mxu0
      %2579 = vdwg.mxu0
      %v2580 = vadd.f32 %v2008, %v2402
      %v2581 = vadd.f32 %v2013, %v2407
      %v2582 = vadd.f32 %v2018, %v2412
      %v2583 = vadd.f32 %v2023, %v2417
      %v2584 = vadd.f32 %v2028, %v2422
      %v2585 = vadd.f32 %v2033, %v2427
      %v2586 = vadd.f32 %v2038, %v2432
      %v2587 = vadd.f32 %v2043, %v2437
      %v2588 = vadd.f32 %v2048, %v2442
      %v2589 = vadd.f32 %v2053, %v2447
      %v2590 = vadd.f32 %v2058, %v2452
      %v2591 = vadd.f32 %v2063, %v2457
      %v2592 = vadd.f32 %v2068, %v2462
      %v2593 = vadd.f32 %v2073, %v2467
      %v2594 = vadd.f32 %v2078, %v2472
      %v2595 = vadd.f32 %v2083, %v2477
      %v2596 = vadd.f32 %v2088, %v2482
      %v2597 = vadd.f32 %v2093, %v2487
      %v2598 = vadd.f32 %v2098, %v2492
      %v2599 = vadd.f32 %v2103, %v2497
      %v2600 = vadd.f32 %v2108, %v2502
      %v2601 = vadd.f32 %v2113, %v2507
      %v2602 = vadd.f32 %v2118, %v2512
      %v2603 = vadd.f32 %v2123, %v2517
      %v2604 = vadd.f32 %v2128, %v2522
      %v2605 = vadd.f32 %v2133, %v2527
      %v2606 = vadd.f32 %v2138, %v2532
      %v2607 = vadd.f32 %v2143, %v2537
      %v2608 = vadd.f32 %v2148, %v2542
      %v2609 = vadd.f32 %v2153, %v2547
      %v2610 = vadd.f32 %v2158, %v2552
      %v2611 = vadd.f32 %v2163, %v2557
      %v2612 = vadd.f32 %v2168, %v2562
      %v2613 = vadd.f32 %v2173, %v2567
      %v2614 = vadd.f32 %v2178, %v2572
      %v2615 = vadd.f32 %v2183, %v2577
      %v2616 = vld [vmem:[#allocation2 + $0x12] sm:$0xff]
      %v2617 = vld [vmem:[#allocation2 + $0x1a] sm:$0xff]
      %v2618 = vld [vmem:[#allocation2 + $0x22] sm:$0xff]
      %v2619 = vld [vmem:[#allocation2 + $0x2a] sm:$0xff]
      %v2620 = vld [vmem:[#allocation2 + $0x32] sm:$0xff]
      %v2621 = vld [vmem:[#allocation2 + $0x3a] sm:$0xff]
      %v2622 = vld [vmem:[#allocation2 + $0x42] sm:$0xff]
      %v2623 = vld [vmem:[#allocation2 + $0x4a] sm:$0xff]
      %v2624 = vld [vmem:[#allocation2 + $0x52] sm:$0xff]
      %v2625 = vld [vmem:[#allocation2 + $0x5a] sm:$0xff]
      %v2626 = vld [vmem:[#allocation2 + $0x62] sm:$0xff]
      %v2627 = vld [vmem:[#allocation2 + $0x6a] sm:$0xff]
      %v2628 = vld [vmem:[#allocation2 + $0x72] sm:$0xff]
      %v2629 = vld [vmem:[#allocation2 + $0x7a] sm:$0xff]
      %v2630 = vld [vmem:[#allocation2 + $0x82] sm:$0xff]
      %v2631 = vld [vmem:[#allocation2 + $0x8a] sm:$0xff]
      %v2632 = vld [vmem:[#allocation2 + $0x92] sm:$0xff]
      %v2633 = vld [vmem:[#allocation2 + $0x9a] sm:$0xff]
      %v2634 = vld [vmem:[#allocation2 + $0xa2] sm:$0xff]
      %v2635 = vld [vmem:[#allocation2 + $0xaa] sm:$0xff]
      %v2636 = vld [vmem:[#allocation2 + $0xb2] sm:$0xff]
      %v2637 = vld [vmem:[#allocation2 + $0xba] sm:$0xff]
      %v2638 = vld [vmem:[#allocation2 + $0xc2] sm:$0xff]
      %v2639 = vld [vmem:[#allocation2 + $0xca] sm:$0xff]
      %v2640 = vld [vmem:[#allocation2 + $0xd2] sm:$0xff]
      %v2641 = vld [vmem:[#allocation2 + $0xda] sm:$0xff]
      %v2642 = vld [vmem:[#allocation2 + $0xe2] sm:$0xff]
      %v2643 = vld [vmem:[#allocation2 + $0xea] sm:$0xff]
      %v2644 = vld [vmem:[#allocation2 + $0xf2] sm:$0xff]
      %v2645 = vld [vmem:[#allocation2 + $0xfa] sm:$0xff]
      %v2646 = vld [vmem:[#allocation2 + $0x102] sm:$0xff]
      %v2647 = vld [vmem:[#allocation2 + $0x10a] sm:$0xff]
      %v2648 = vld [vmem:[#allocation2 + $0x112] sm:$0xff]
      %v2649 = vld [vmem:[#allocation2 + $0x11a] sm:$0xff]
      %v2650 = vld [vmem:[#allocation2 + $0x122] sm:$0xff]
      %v2651 = vld [vmem:[#allocation2 + $0x12a] sm:$0xff]
      %s2652 = scalar_lea.vmem %s1, 12
      %v2653 = vld [vmem:[%s2652] sm:$0xf]
      %v2655 = vsel %vm916, %v2616, 0
      %v2658 = vsel %vm916, %v2617, 0
      %v2661 = vsel %vm916, %v2618, 0
      %v2664 = vsel %vm916, %v2619, 0
      %v2667 = vsel %vm916, %v2620, 0
      %v2670 = vsel %vm916, %v2621, 0
      %v2673 = vsel %vm916, %v2622, 0
      %v2676 = vsel %vm916, %v2623, 0
      %v2679 = vsel %vm916, %v2624, 0
      %v2682 = vsel %vm916, %v2625, 0
      %v2685 = vsel %vm916, %v2626, 0
      %v2688 = vsel %vm916, %v2627, 0
      %v2691 = vsel %vm916, %v2628, 0
      %v2694 = vsel %vm916, %v2629, 0
      %v2697 = vsel %vm916, %v2630, 0
      %v2700 = vsel %vm916, %v2631, 0
      %v2703 = vsel %vm916, %v2632, 0
      %v2706 = vsel %vm916, %v2633, 0
      %v2709 = vsel %vm916, %v2634, 0
      %v2712 = vsel %vm916, %v2635, 0
      %v2715 = vsel %vm916, %v2636, 0
      %v2718 = vsel %vm916, %v2637, 0
      %v2721 = vsel %vm916, %v2638, 0
      %v2724 = vsel %vm916, %v2639, 0
      %v2727 = vsel %vm916, %v2640, 0
      %v2730 = vsel %vm916, %v2641, 0
      %v2733 = vsel %vm916, %v2642, 0
      %v2736 = vsel %vm916, %v2643, 0
      %v2739 = vsel %vm916, %v2644, 0
      %v2742 = vsel %vm916, %v2645, 0
      %v2745 = vsel %vm916, %v2646, 0
      %v2748 = vsel %vm916, %v2647, 0
      %v2751 = vsel %vm916, %v2648, 0
      %v2754 = vsel %vm916, %v2649, 0
      %v2757 = vsel %vm916, %v2650, 0
      %v2760 = vsel %vm916, %v2651, 0
      %v2763 = vsel %vm1581, %v2653, 0
      %2765 = vmatprep.subr.mxu0 0.0
      %2766 = vmatpush1.msra.mxu0 %v2763
      %2767 = vmatprep.subr.mxu0 0.0
      %2768 = vmatpush1.msra.mxu0 0.0
      %2769 = vmatprep.subr.mxu0 0.0
      %2770 = vmatpush1.msra.mxu0 0.0
      %2771 = vmatprep.subr.mxu0 0.0
      %2772 = vmatpush1.msra.mxu0 0.0
      %2773 = vmatprep.subr.mxu0 0.0
      %2774 = vmatpush1.msra.mxu0 0.0
      %2775 = vmatprep.subr.mxu0 0.0
      %2776 = vmatpush1.msra.mxu0 0.0
      %2777 = vmatprep.subr.mxu0 0.0
      %2778 = vmatpush1.msra.mxu0 0.0
      %2779 = vmatprep.subr.mxu0 0.0
      %2780 = vmatpush1.msra.mxu0 0.0
      %2781 = vmatprep.subr.mxu0 0.0
      %2782 = vmatpush1.msra.mxu0 0.0
      %2783 = vmatprep.subr.mxu0 0.0
      %2784 = vmatpush1.msra.mxu0 0.0
      %2785 = vmatprep.subr.mxu0 0.0
      %2786 = vmatpush1.msra.mxu0 0.0
      %2787 = vmatprep.subr.mxu0 0.0
      %2788 = vmatpush1.msra.mxu0 0.0
      %2789 = vmatprep.subr.mxu0 0.0
      %2790 = vmatpush1.msra.mxu0 0.0
      %2791 = vmatprep.subr.mxu0 0.0
      %2792 = vmatpush1.msra.mxu0 0.0
      %2793 = vmatprep.subr.mxu0 0.0
      %2794 = vmatpush1.msra.mxu0 0.0
      %2795 = vmatprep.subr.mxu0 0.0
      %2796 = vmatpush1.msra.mxu0 0.0
      %2797 = vmatprep.subr.mxu0 0.0
      %2798 = vmatpush1.msra.mxu0 0.0
      %2799 = vmatprep.subr.mxu0 0.0
      %2800 = vmatpush1.msra.mxu0 0.0
      %2801 = vmatprep.subr.mxu0 0.0
      %2802 = vmatpush1.msra.mxu0 0.0
      %2803 = vmatprep.subr.mxu0 0.0
      %2804 = vmatpush1.msra.mxu0 0.0
      %2805 = vmatprep.subr.mxu0 0.0
      %2806 = vmatpush1.msra.mxu0 0.0
      %2807 = vmatprep.subr.mxu0 0.0
      %2808 = vmatpush1.msra.mxu0 0.0
      %2809 = vmatprep.subr.mxu0 0.0
      %2810 = vmatpush1.msra.mxu0 0.0
      %2811 = vmatprep.subr.mxu0 0.0
      %2812 = vmatpush1.msra.mxu0 0.0
      %2813 = vmatprep.subr.mxu0 0.0
      %2814 = vmatpush1.msra.mxu0 0.0
      %2815 = vmatprep.subr.mxu0 0.0
      %2816 = vmatpush1.msra.mxu0 0.0
      %2817 = vmatprep.subr.mxu0 0.0
      %2818 = vmatpush1.msra.mxu0 0.0
      %2819 = vmatprep.subr.mxu0 0.0
      %2820 = vmatpush1.msra.mxu0 0.0
      %2821 = vmatprep.subr.mxu0 0.0
      %2822 = vmatpush1.msra.mxu0 0.0
      %2823 = vmatprep.subr.mxu0 0.0
      %2824 = vmatpush1.msra.mxu0 0.0
      %2825 = vmatprep.subr.mxu0 0.0
      %2826 = vmatpush1.msra.mxu0 0.0
      %2827 = vmatprep.subr.mxu0 0.0
      %2828 = vmatpush1.msra.mxu0 0.0
      %2829 = vmatprep.mubr.f32.mxu0 0.0
      %2830 = vmatmul.mubr.f32.gmra.mrb[0].mxu0 %v2655
      %v2831 = vpop.f32.mrb[0].mxu0
      %v2832 = vadd.f32 0.0, %v2831
      %v2833 = vpop.f32.mrb[0].mxu0
      %2834 = vmatprep.mubr.f32.mxu0 0.0
      %2835 = vmatmul.mubr.f32.gmra.mrb[0].mxu0 %v2658
      %v2836 = vpop.f32.mrb[0].mxu0
      %v2837 = vadd.f32 0.0, %v2836
      %v2838 = vpop.f32.mrb[0].mxu0
      %2839 = vmatprep.mubr.f32.mxu0 0.0
      %2840 = vmatmul.mubr.f32.gmra.mrb[0].mxu0 %v2661
      %v2841 = vpop.f32.mrb[0].mxu0
      %v2842 = vadd.f32 0.0, %v2841
      %v2843 = vpop.f32.mrb[0].mxu0
      %2844 = vmatprep.mubr.f32.mxu0 0.0
      %2845 = vmatmul.mubr.f32.gmra.mrb[0].mxu0 %v2664
      %v2846 = vpop.f32.mrb[0].mxu0
      %v2847 = vadd.f32 0.0, %v2846
      %v2848 = vpop.f32.mrb[0].mxu0
      %2849 = vmatprep.mubr.f32.mxu0 0.0
      %2850 = vmatmul.mubr.f32.gmra.mrb[0].mxu0 %v2667
      %v2851 = vpop.f32.mrb[0].mxu0
      %v2852 = vadd.f32 0.0, %v2851
      %v2853 = vpop.f32.mrb[0].mxu0
      %2854 = vmatprep.mubr.f32.mxu0 0.0
      %2855 = vmatmul.mubr.f32.gmra.mrb[0].mxu0 %v2670
      %v2856 = vpop.f32.mrb[0].mxu0
      %v2857 = vadd.f32 0.0, %v2856
      %v2858 = vpop.f32.mrb[0].mxu0
      %2859 = vmatprep.mubr.f32.mxu0 0.0
      %2860 = vmatmul.mubr.f32.gmra.mrb[0].mxu0 %v2673
      %v2861 = vpop.f32.mrb[0].mxu0
      %v2862 = vadd.f32 0.0, %v2861
      %v2863 = vpop.f32.mrb[0].mxu0
      %2864 = vmatprep.mubr.f32.mxu0 0.0
      %2865 = vmatmul.mubr.f32.gmra.mrb[0].mxu0 %v2676
      %v2866 = vpop.f32.mrb[0].mxu0
      %v2867 = vadd.f32 0.0, %v2866
      %v2868 = vpop.f32.mrb[0].mxu0
      %2869 = vmatprep.mubr.f32.mxu0 0.0
      %2870 = vmatmul.mubr.f32.gmra.mrb[0].mxu0 %v2679
      %v2871 = vpop.f32.mrb[0].mxu0
      %v2872 = vadd.f32 0.0, %v2871
      %v2873 = vpop.f32.mrb[0].mxu0
      %2874 = vmatprep.mubr.f32.mxu0 0.0
      %2875 = vmatmul.mubr.f32.gmra.mrb[0].mxu0 %v2682
      %v2876 = vpop.f32.mrb[0].mxu0
      %v2877 = vadd.f32 0.0, %v2876
      %v2878 = vpop.f32.mrb[0].mxu0
      %2879 = vmatprep.mubr.f32.mxu0 0.0
      %2880 = vmatmul.mubr.f32.gmra.mrb[0].mxu0 %v2685
      %v2881 = vpop.f32.mrb[0].mxu0
      %v2882 = vadd.f32 0.0, %v2881
      %v2883 = vpop.f32.mrb[0].mxu0
      %2884 = vmatprep.mubr.f32.mxu0 0.0
      %2885 = vmatmul.mubr.f32.gmra.mrb[0].mxu0 %v2688
      %v2886 = vpop.f32.mrb[0].mxu0
      %v2887 = vadd.f32 0.0, %v2886
      %v2888 = vpop.f32.mrb[0].mxu0
      %2889 = vmatprep.mubr.f32.mxu0 0.0
      %2890 = vmatmul.mubr.f32.gmra.mrb[0].mxu0 %v2691
      %v2891 = vpop.f32.mrb[0].mxu0
      %v2892 = vadd.f32 0.0, %v2891
      %v2893 = vpop.f32.mrb[0].mxu0
      %2894 = vmatprep.mubr.f32.mxu0 0.0
      %2895 = vmatmul.mubr.f32.gmra.mrb[0].mxu0 %v2694
      %v2896 = vpop.f32.mrb[0].mxu0
      %v2897 = vadd.f32 0.0, %v2896
      %v2898 = vpop.f32.mrb[0].mxu0
      %2899 = vmatprep.mubr.f32.mxu0 0.0
      %2900 = vmatmul.mubr.f32.gmra.mrb[0].mxu0 %v2697
      %v2901 = vpop.f32.mrb[0].mxu0
      %v2902 = vadd.f32 0.0, %v2901
      %v2903 = vpop.f32.mrb[0].mxu0
      %2904 = vmatprep.mubr.f32.mxu0 0.0
      %2905 = vmatmul.mubr.f32.gmra.mrb[0].mxu0 %v2700
      %v2906 = vpop.f32.mrb[0].mxu0
      %v2907 = vadd.f32 0.0, %v2906
      %v2908 = vpop.f32.mrb[0].mxu0
      %2909 = vmatprep.mubr.f32.mxu0 0.0
      %2910 = vmatmul.mubr.f32.gmra.mrb[0].mxu0 %v2703
      %v2911 = vpop.f32.mrb[0].mxu0
      %v2912 = vadd.f32 0.0, %v2911
      %v2913 = vpop.f32.mrb[0].mxu0
      %2914 = vmatprep.mubr.f32.mxu0 0.0
      %2915 = vmatmul.mubr.f32.gmra.mrb[0].mxu0 %v2706
      %v2916 = vpop.f32.mrb[0].mxu0
      %v2917 = vadd.f32 0.0, %v2916
      %v2918 = vpop.f32.mrb[0].mxu0
      %2919 = vmatprep.mubr.f32.mxu0 0.0
      %2920 = vmatmul.mubr.f32.gmra.mrb[0].mxu0 %v2709
      %v2921 = vpop.f32.mrb[0].mxu0
      %v2922 = vadd.f32 0.0, %v2921
      %v2923 = vpop.f32.mrb[0].mxu0
      %2924 = vmatprep.mubr.f32.mxu0 0.0
      %2925 = vmatmul.mubr.f32.gmra.mrb[0].mxu0 %v2712
      %v2926 = vpop.f32.mrb[0].mxu0
      %v2927 = vadd.f32 0.0, %v2926
      %v2928 = vpop.f32.mrb[0].mxu0
      %2929 = vmatprep.mubr.f32.mxu0 0.0
      %2930 = vmatmul.mubr.f32.gmra.mrb[0].mxu0 %v2715
      %v2931 = vpop.f32.mrb[0].mxu0
      %v2932 = vadd.f32 0.0, %v2931
      %v2933 = vpop.f32.mrb[0].mxu0
      %2934 = vmatprep.mubr.f32.mxu0 0.0
      %2935 = vmatmul.mubr.f32.gmra.mrb[0].mxu0 %v2718
      %v2936 = vpop.f32.mrb[0].mxu0
      %v2937 = vadd.f32 0.0, %v2936
      %v2938 = vpop.f32.mrb[0].mxu0
      %2939 = vmatprep.mubr.f32.mxu0 0.0
      %2940 = vmatmul.mubr.f32.gmra.mrb[0].mxu0 %v2721
      %v2941 = vpop.f32.mrb[0].mxu0
      %v2942 = vadd.f32 0.0, %v2941
      %v2943 = vpop.f32.mrb[0].mxu0
      %2944 = vmatprep.mubr.f32.mxu0 0.0
      %2945 = vmatmul.mubr.f32.gmra.mrb[0].mxu0 %v2724
      %v2946 = vpop.f32.mrb[0].mxu0
      %v2947 = vadd.f32 0.0, %v2946
      %v2948 = vpop.f32.mrb[0].mxu0
      %2949 = vmatprep.mubr.f32.mxu0 0.0
      %2950 = vmatmul.mubr.f32.gmra.mrb[0].mxu0 %v2727
      %v2951 = vpop.f32.mrb[0].mxu0
      %v2952 = vadd.f32 0.0, %v2951
      %v2953 = vpop.f32.mrb[0].mxu0
      %2954 = vmatprep.mubr.f32.mxu0 0.0
      %2955 = vmatmul.mubr.f32.gmra.mrb[0].mxu0 %v2730
      %v2956 = vpop.f32.mrb[0].mxu0
      %v2957 = vadd.f32 0.0, %v2956
      %v2958 = vpop.f32.mrb[0].mxu0
      %2959 = vmatprep.mubr.f32.mxu0 0.0
      %2960 = vmatmul.mubr.f32.gmra.mrb[0].mxu0 %v2733
      %v2961 = vpop.f32.mrb[0].mxu0
      %v2962 = vadd.f32 0.0, %v2961
      %v2963 = vpop.f32.mrb[0].mxu0
      %2964 = vmatprep.mubr.f32.mxu0 0.0
      %2965 = vmatmul.mubr.f32.gmra.mrb[0].mxu0 %v2736
      %v2966 = vpop.f32.mrb[0].mxu0
      %v2967 = vadd.f32 0.0, %v2966
      %v2968 = vpop.f32.mrb[0].mxu0
      %2969 = vmatprep.mubr.f32.mxu0 0.0
      %2970 = vmatmul.mubr.f32.gmra.mrb[0].mxu0 %v2739
      %v2971 = vpop.f32.mrb[0].mxu0
      %v2972 = vadd.f32 0.0, %v2971
      %v2973 = vpop.f32.mrb[0].mxu0
      %2974 = vmatprep.mubr.f32.mxu0 0.0
      %2975 = vmatmul.mubr.f32.gmra.mrb[0].mxu0 %v2742
      %v2976 = vpop.f32.mrb[0].mxu0
      %v2977 = vadd.f32 0.0, %v2976
      %v2978 = vpop.f32.mrb[0].mxu0
      %2979 = vmatprep.mubr.f32.mxu0 0.0
      %2980 = vmatmul.mubr.f32.gmra.mrb[0].mxu0 %v2745
      %v2981 = vpop.f32.mrb[0].mxu0
      %v2982 = vadd.f32 0.0, %v2981
      %v2983 = vpop.f32.mrb[0].mxu0
      %2984 = vmatprep.mubr.f32.mxu0 0.0
      %2985 = vmatmul.mubr.f32.gmra.mrb[0].mxu0 %v2748
      %v2986 = vpop.f32.mrb[0].mxu0
      %v2987 = vadd.f32 0.0, %v2986
      %v2988 = vpop.f32.mrb[0].mxu0
      %2989 = vmatprep.mubr.f32.mxu0 0.0
      %2990 = vmatmul.mubr.f32.gmra.mrb[0].mxu0 %v2751
      %v2991 = vpop.f32.mrb[0].mxu0
      %v2992 = vadd.f32 0.0, %v2991
      %v2993 = vpop.f32.mrb[0].mxu0
      %2994 = vmatprep.mubr.f32.mxu0 0.0
      %2995 = vmatmul.mubr.f32.gmra.mrb[0].mxu0 %v2754
      %v2996 = vpop.f32.mrb[0].mxu0
      %v2997 = vadd.f32 0.0, %v2996
      %v2998 = vpop.f32.mrb[0].mxu0
      %2999 = vmatprep.mubr.f32.mxu0 0.0
      %3000 = vmatmul.mubr.f32.gmra.mrb[0].mxu0 %v2757
      %v3001 = vpop.f32.mrb[0].mxu0
      %v3002 = vadd.f32 0.0, %v3001
      %v3003 = vpop.f32.mrb[0].mxu0
      %3004 = vmatprep.mubr.f32.mxu0 0.0
      %3005 = vmatmul.mubr.f32.gmra.mrb[0].mxu0 %v2760
      %v3006 = vpop.f32.mrb[0].mxu0
      %v3007 = vadd.f32 0.0, %v3006
      %v3008 = vpop.f32.mrb[0].mxu0
      %3009 = vdwg.mxu0
      %v3010 = vadd.f32 %v2580, %v2832
      %v3011 = vadd.f32 %v2581, %v2837
      %v3012 = vadd.f32 %v2582, %v2842
      %v3013 = vadd.f32 %v2583, %v2847
      %v3014 = vadd.f32 %v2584, %v2852
      %v3015 = vadd.f32 %v2585, %v2857
      %v3016 = vadd.f32 %v2586, %v2862
      %v3017 = vadd.f32 %v2587, %v2867
      %v3018 = vadd.f32 %v2588, %v2872
      %v3019 = vadd.f32 %v2589, %v2877
      %v3020 = vadd.f32 %v2590, %v2882
      %v3021 = vadd.f32 %v2591, %v2887
      %v3022 = vadd.f32 %v2592, %v2892
      %v3023 = vadd.f32 %v2593, %v2897
      %v3024 = vadd.f32 %v2594, %v2902
      %v3025 = vadd.f32 %v2595, %v2907
      %v3026 = vadd.f32 %v2596, %v2912
      %v3027 = vadd.f32 %v2597, %v2917
      %v3028 = vadd.f32 %v2598, %v2922
      %v3029 = vadd.f32 %v2599, %v2927
      %v3030 = vadd.f32 %v2600, %v2932
      %v3031 = vadd.f32 %v2601, %v2937
      %v3032 = vadd.f32 %v2602, %v2942
      %v3033 = vadd.f32 %v2603, %v2947
      %v3034 = vadd.f32 %v2604, %v2952
      %v3035 = vadd.f32 %v2605, %v2957
      %v3036 = vadd.f32 %v2606, %v2962
      %v3037 = vadd.f32 %v2607, %v2967
      %v3038 = vadd.f32 %v2608, %v2972
      %v3039 = vadd.f32 %v2609, %v2977
      %v3040 = vadd.f32 %v2610, %v2982
      %v3041 = vadd.f32 %v2611, %v2987
      %v3042 = vadd.f32 %v2612, %v2992
      %v3043 = vadd.f32 %v2613, %v2997
      %v3044 = vadd.f32 %v2614, %v3002
      %v3045 = vadd.f32 %v2615, %v3007
      %v3046 = vld [vmem:[#allocation2 + $0x13] sm:$0xff]
      %v3047 = vld [vmem:[#allocation2 + $0x1b] sm:$0xff]
      %v3048 = vld [vmem:[#allocation2 + $0x23] sm:$0xff]
      %v3049 = vld [vmem:[#allocation2 + $0x2b] sm:$0xff]
      %v3050 = vld [vmem:[#allocation2 + $0x33] sm:$0xff]
      %v3051 = vld [vmem:[#allocation2 + $0x3b] sm:$0xff]
      %v3052 = vld [vmem:[#allocation2 + $0x43] sm:$0xff]
      %v3053 = vld [vmem:[#allocation2 + $0x4b] sm:$0xff]
      %v3054 = vld [vmem:[#allocation2 + $0x53] sm:$0xff]
      %v3055 = vld [vmem:[#allocation2 + $0x5b] sm:$0xff]
      %v3056 = vld [vmem:[#allocation2 + $0x63] sm:$0xff]
      %v3057 = vld [vmem:[#allocation2 + $0x6b] sm:$0xff]
      %v3058 = vld [vmem:[#allocation2 + $0x73] sm:$0xff]
      %v3059 = vld [vmem:[#allocation2 + $0x7b] sm:$0xff]
      %v3060 = vld [vmem:[#allocation2 + $0x83] sm:$0xff]
      %v3061 = vld [vmem:[#allocation2 + $0x8b] sm:$0xff]
      %v3062 = vld [vmem:[#allocation2 + $0x93] sm:$0xff]
      %v3063 = vld [vmem:[#allocation2 + $0x9b] sm:$0xff]
      %v3064 = vld [vmem:[#allocation2 + $0xa3] sm:$0xff]
      %v3065 = vld [vmem:[#allocation2 + $0xab] sm:$0xff]
      %v3066 = vld [vmem:[#allocation2 + $0xb3] sm:$0xff]
      %v3067 = vld [vmem:[#allocation2 + $0xbb] sm:$0xff]
      %v3068 = vld [vmem:[#allocation2 + $0xc3] sm:$0xff]
      %v3069 = vld [vmem:[#allocation2 + $0xcb] sm:$0xff]
      %v3070 = vld [vmem:[#allocation2 + $0xd3] sm:$0xff]
      %v3071 = vld [vmem:[#allocation2 + $0xdb] sm:$0xff]
      %v3072 = vld [vmem:[#allocation2 + $0xe3] sm:$0xff]
      %v3073 = vld [vmem:[#allocation2 + $0xeb] sm:$0xff]
      %v3074 = vld [vmem:[#allocation2 + $0xf3] sm:$0xff]
      %v3075 = vld [vmem:[#allocation2 + $0xfb] sm:$0xff]
      %v3076 = vld [vmem:[#allocation2 + $0x103] sm:$0xff]
      %v3077 = vld [vmem:[#allocation2 + $0x10b] sm:$0xff]
      %v3078 = vld [vmem:[#allocation2 + $0x113] sm:$0xff]
      %v3079 = vld [vmem:[#allocation2 + $0x11b] sm:$0xff]
      %v3080 = vld [vmem:[#allocation2 + $0x123] sm:$0xff]
      %v3081 = vld [vmem:[#allocation2 + $0x12b] sm:$0xff]
      %s3082 = scalar_lea.vmem %s1, 16
      %v3083 = vld [vmem:[%s3082] sm:$0xf]
      %v3085 = vsel %vm916, %v3046, 0
      %v3088 = vsel %vm916, %v3047, 0
      %v3091 = vsel %vm916, %v3048, 0
      %v3094 = vsel %vm916, %v3049, 0
      %v3097 = vsel %vm916, %v3050, 0
      %v3100 = vsel %vm916, %v3051, 0
      %v3103 = vsel %vm916, %v3052, 0
      %v3106 = vsel %vm916, %v3053, 0
      %v3109 = vsel %vm916, %v3054, 0
      %v3112 = vsel %vm916, %v3055, 0
      %v3115 = vsel %vm916, %v3056, 0
      %v3118 = vsel %vm916, %v3057, 0
      %v3121 = vsel %vm916, %v3058, 0
      %v3124 = vsel %vm916, %v3059, 0
      %v3127 = vsel %vm916, %v3060, 0
      %v3130 = vsel %vm916, %v3061, 0
      %v3133 = vsel %vm916, %v3062, 0
      %v3136 = vsel %vm916, %v3063, 0
      %v3139 = vsel %vm916, %v3064, 0
      %v3142 = vsel %vm916, %v3065, 0
      %v3145 = vsel %vm916, %v3066, 0
      %v3148 = vsel %vm916, %v3067, 0
      %v3151 = vsel %vm916, %v3068, 0
      %v3154 = vsel %vm916, %v3069, 0
      %v3157 = vsel %vm916, %v3070, 0
      %v3160 = vsel %vm916, %v3071, 0
      %v3163 = vsel %vm916, %v3072, 0
      %v3166 = vsel %vm916, %v3073, 0
      %v3169 = vsel %vm916, %v3074, 0
      %v3172 = vsel %vm916, %v3075, 0
      %v3175 = vsel %vm916, %v3076, 0
      %v3178 = vsel %vm916, %v3077, 0
      %v3181 = vsel %vm916, %v3078, 0
      %v3184 = vsel %vm916, %v3079, 0
      %v3187 = vsel %vm916, %v3080, 0
      %v3190 = vsel %vm916, %v3081, 0
      %v3193 = vsel %vm1581, %v3083, 0
      %3195 = vmatprep.subr.mxu0 0.0
      %3196 = vmatpush1.msra.mxu0 %v3193
      %3197 = vmatprep.subr.mxu0 0.0
      %3198 = vmatpush1.msra.mxu0 0.0
      %3199 = vmatprep.subr.mxu0 0.0
      %3200 = vmatpush1.msra.mxu0 0.0
      %3201 = vmatprep.subr.mxu0 0.0
      %3202 = vmatpush1.msra.mxu0 0.0
      %3203 = vmatprep.subr.mxu0 0.0
      %3204 = vmatpush1.msra.mxu0 0.0
      %3205 = vmatprep.subr.mxu0 0.0
      %3206 = vmatpush1.msra.mxu0 0.0
      %3207 = vmatprep.subr.mxu0 0.0
      %3208 = vmatpush1.msra.mxu0 0.0
      %3209 = vmatprep.subr.mxu0 0.0
      %3210 = vmatpush1.msra.mxu0 0.0
      %3211 = vmatprep.subr.mxu0 0.0
      %3212 = vmatpush1.msra.mxu0 0.0
      %3213 = vmatprep.subr.mxu0 0.0
      %3214 = vmatpush1.msra.mxu0 0.0
      %3215 = vmatprep.subr.mxu0 0.0
      %3216 = vmatpush1.msra.mxu0 0.0
      %3217 = vmatprep.subr.mxu0 0.0
      %3218 = vmatpush1.msra.mxu0 0.0
      %3219 = vmatprep.subr.mxu0 0.0
      %3220 = vmatpush1.msra.mxu0 0.0
      %3221 = vmatprep.subr.mxu0 0.0
      %3222 = vmatpush1.msra.mxu0 0.0
      %3223 = vmatprep.subr.mxu0 0.0
      %3224 = vmatpush1.msra.mxu0 0.0
      %3225 = vmatprep.subr.mxu0 0.0
      %3226 = vmatpush1.msra.mxu0 0.0
      %3227 = vmatprep.subr.mxu0 0.0
      %3228 = vmatpush1.msra.mxu0 0.0
      %3229 = vmatprep.subr.mxu0 0.0
      %3230 = vmatpush1.msra.mxu0 0.0
      %3231 = vmatprep.subr.mxu0 0.0
      %3232 = vmatpush1.msra.mxu0 0.0
      %3233 = vmatprep.subr.mxu0 0.0
      %3234 = vmatpush1.msra.mxu0 0.0
      %3235 = vmatprep.subr.mxu0 0.0
      %3236 = vmatpush1.msra.mxu0 0.0
      %3237 = vmatprep.subr.mxu0 0.0
      %3238 = vmatpush1.msra.mxu0 0.0
      %3239 = vmatprep.subr.mxu0 0.0
      %3240 = vmatpush1.msra.mxu0 0.0
      %3241 = vmatprep.subr.mxu0 0.0
      %3242 = vmatpush1.msra.mxu0 0.0
      %3243 = vmatprep.subr.mxu0 0.0
      %3244 = vmatpush1.msra.mxu0 0.0
      %3245 = vmatprep.subr.mxu0 0.0
      %3246 = vmatpush1.msra.mxu0 0.0
      %3247 = vmatprep.subr.mxu0 0.0
      %3248 = vmatpush1.msra.mxu0 0.0
      %3249 = vmatprep.subr.mxu0 0.0
      %3250 = vmatpush1.msra.mxu0 0.0
      %3251 = vmatprep.subr.mxu0 0.0
      %3252 = vmatpush1.msra.mxu0 0.0
      %3253 = vmatprep.subr.mxu0 0.0
      %3254 = vmatpush1.msra.mxu0 0.0
      %3255 = vmatprep.subr.mxu0 0.0
      %3256 = vmatpush1.msra.mxu0 0.0
      %3257 = vmatprep.subr.mxu0 0.0
      %3258 = vmatpush1.msra.mxu0 0.0
      %3259 = vmatprep.mubr.f32.mxu0 0.0
      %3260 = vmatmul.mubr.f32.gmra.mrb[0].mxu0 %v3085
      %v3261 = vpop.f32.mrb[0].mxu0
      %v3262 = vadd.f32 0.0, %v3261
      %v3263 = vpop.f32.mrb[0].mxu0
      %3264 = vmatprep.mubr.f32.mxu0 0.0
      %3265 = vmatmul.mubr.f32.gmra.mrb[0].mxu0 %v3088
      %v3266 = vpop.f32.mrb[0].mxu0
      %v3267 = vadd.f32 0.0, %v3266
      %v3268 = vpop.f32.mrb[0].mxu0
      %3269 = vmatprep.mubr.f32.mxu0 0.0
      %3270 = vmatmul.mubr.f32.gmra.mrb[0].mxu0 %v3091
      %v3271 = vpop.f32.mrb[0].mxu0
      %v3272 = vadd.f32 0.0, %v3271
      %v3273 = vpop.f32.mrb[0].mxu0
      %3274 = vmatprep.mubr.f32.mxu0 0.0
      %3275 = vmatmul.mubr.f32.gmra.mrb[0].mxu0 %v3094
      %v3276 = vpop.f32.mrb[0].mxu0
      %v3277 = vadd.f32 0.0, %v3276
      %v3278 = vpop.f32.mrb[0].mxu0
      %3279 = vmatprep.mubr.f32.mxu0 0.0
      %3280 = vmatmul.mubr.f32.gmra.mrb[0].mxu0 %v3097
      %v3281 = vpop.f32.mrb[0].mxu0
      %v3282 = vadd.f32 0.0, %v3281
      %v3283 = vpop.f32.mrb[0].mxu0
      %3284 = vmatprep.mubr.f32.mxu0 0.0
      %3285 = vmatmul.mubr.f32.gmra.mrb[0].mxu0 %v3100
      %v3286 = vpop.f32.mrb[0].mxu0
      %v3287 = vadd.f32 0.0, %v3286
      %v3288 = vpop.f32.mrb[0].mxu0
      %3289 = vmatprep.mubr.f32.mxu0 0.0
      %3290 = vmatmul.mubr.f32.gmra.mrb[0].mxu0 %v3103
      %v3291 = vpop.f32.mrb[0].mxu0
      %v3292 = vadd.f32 0.0, %v3291
      %v3293 = vpop.f32.mrb[0].mxu0
      %3294 = vmatprep.mubr.f32.mxu0 0.0
      %3295 = vmatmul.mubr.f32.gmra.mrb[0].mxu0 %v3106
      %v3296 = vpop.f32.mrb[0].mxu0
      %v3297 = vadd.f32 0.0, %v3296
      %v3298 = vpop.f32.mrb[0].mxu0
      %3299 = vmatprep.mubr.f32.mxu0 0.0
      %3300 = vmatmul.mubr.f32.gmra.mrb[0].mxu0 %v3109
      %v3301 = vpop.f32.mrb[0].mxu0
      %v3302 = vadd.f32 0.0, %v3301
      %v3303 = vpop.f32.mrb[0].mxu0
      %3304 = vmatprep.mubr.f32.mxu0 0.0
      %3305 = vmatmul.mubr.f32.gmra.mrb[0].mxu0 %v3112
      %v3306 = vpop.f32.mrb[0].mxu0
      %v3307 = vadd.f32 0.0, %v3306
      %v3308 = vpop.f32.mrb[0].mxu0
      %3309 = vmatprep.mubr.f32.mxu0 0.0
      %3310 = vmatmul.mubr.f32.gmra.mrb[0].mxu0 %v3115
      %v3311 = vpop.f32.mrb[0].mxu0
      %v3312 = vadd.f32 0.0, %v3311
      %v3313 = vpop.f32.mrb[0].mxu0
      %3314 = vmatprep.mubr.f32.mxu0 0.0
      %3315 = vmatmul.mubr.f32.gmra.mrb[0].mxu0 %v3118
      %v3316 = vpop.f32.mrb[0].mxu0
      %v3317 = vadd.f32 0.0, %v3316
      %v3318 = vpop.f32.mrb[0].mxu0
      %3319 = vmatprep.mubr.f32.mxu0 0.0
      %3320 = vmatmul.mubr.f32.gmra.mrb[0].mxu0 %v3121
      %v3321 = vpop.f32.mrb[0].mxu0
      %v3322 = vadd.f32 0.0, %v3321
      %v3323 = vpop.f32.mrb[0].mxu0
      %3324 = vmatprep.mubr.f32.mxu0 0.0
      %3325 = vmatmul.mubr.f32.gmra.mrb[0].mxu0 %v3124
      %v3326 = vpop.f32.mrb[0].mxu0
      %v3327 = vadd.f32 0.0, %v3326
      %v3328 = vpop.f32.mrb[0].mxu0
      %3329 = vmatprep.mubr.f32.mxu0 0.0
      %3330 = vmatmul.mubr.f32.gmra.mrb[0].mxu0 %v3127
      %v3331 = vpop.f32.mrb[0].mxu0
      %v3332 = vadd.f32 0.0, %v3331
      %v3333 = vpop.f32.mrb[0].mxu0
      %3334 = vmatprep.mubr.f32.mxu0 0.0
      %3335 = vmatmul.mubr.f32.gmra.mrb[0].mxu0 %v3130
      %v3336 = vpop.f32.mrb[0].mxu0
      %v3337 = vadd.f32 0.0, %v3336
      %v3338 = vpop.f32.mrb[0].mxu0
      %3339 = vmatprep.mubr.f32.mxu0 0.0
      %3340 = vmatmul.mubr.f32.gmra.mrb[0].mxu0 %v3133
      %v3341 = vpop.f32.mrb[0].mxu0
      %v3342 = vadd.f32 0.0, %v3341
      %v3343 = vpop.f32.mrb[0].mxu0
      %3344 = vmatprep.mubr.f32.mxu0 0.0
      %3345 = vmatmul.mubr.f32.gmra.mrb[0].mxu0 %v3136
      %v3346 = vpop.f32.mrb[0].mxu0
      %v3347 = vadd.f32 0.0, %v3346
      %v3348 = vpop.f32.mrb[0].mxu0
      %3349 = vmatprep.mubr.f32.mxu0 0.0
      %3350 = vmatmul.mubr.f32.gmra.mrb[0].mxu0 %v3139
      %v3351 = vpop.f32.mrb[0].mxu0
      %v3352 = vadd.f32 0.0, %v3351
      %v3353 = vpop.f32.mrb[0].mxu0
      %3354 = vmatprep.mubr.f32.mxu0 0.0
      %3355 = vmatmul.mubr.f32.gmra.mrb[0].mxu0 %v3142
      %v3356 = vpop.f32.mrb[0].mxu0
      %v3357 = vadd.f32 0.0, %v3356
      %v3358 = vpop.f32.mrb[0].mxu0
      %3359 = vmatprep.mubr.f32.mxu0 0.0
      %3360 = vmatmul.mubr.f32.gmra.mrb[0].mxu0 %v3145
      %v3361 = vpop.f32.mrb[0].mxu0
      %v3362 = vadd.f32 0.0, %v3361
      %v3363 = vpop.f32.mrb[0].mxu0
      %3364 = vmatprep.mubr.f32.mxu0 0.0
      %3365 = vmatmul.mubr.f32.gmra.mrb[0].mxu0 %v3148
      %v3366 = vpop.f32.mrb[0].mxu0
      %v3367 = vadd.f32 0.0, %v3366
      %v3368 = vpop.f32.mrb[0].mxu0
      %3369 = vmatprep.mubr.f32.mxu0 0.0
      %3370 = vmatmul.mubr.f32.gmra.mrb[0].mxu0 %v3151
      %v3371 = vpop.f32.mrb[0].mxu0
      %v3372 = vadd.f32 0.0, %v3371
      %v3373 = vpop.f32.mrb[0].mxu0
      %3374 = vmatprep.mubr.f32.mxu0 0.0
      %3375 = vmatmul.mubr.f32.gmra.mrb[0].mxu0 %v3154
      %v3376 = vpop.f32.mrb[0].mxu0
      %v3377 = vadd.f32 0.0, %v3376
      %v3378 = vpop.f32.mrb[0].mxu0
      %3379 = vmatprep.mubr.f32.mxu0 0.0
      %3380 = vmatmul.mubr.f32.gmra.mrb[0].mxu0 %v3157
      %v3381 = vpop.f32.mrb[0].mxu0
      %v3382 = vadd.f32 0.0, %v3381
      %v3383 = vpop.f32.mrb[0].mxu0
      %3384 = vmatprep.mubr.f32.mxu0 0.0
      %3385 = vmatmul.mubr.f32.gmra.mrb[0].mxu0 %v3160
      %v3386 = vpop.f32.mrb[0].mxu0
      %v3387 = vadd.f32 0.0, %v3386
      %v3388 = vpop.f32.mrb[0].mxu0
      %3389 = vmatprep.mubr.f32.mxu0 0.0
      %3390 = vmatmul.mubr.f32.gmra.mrb[0].mxu0 %v3163
      %v3391 = vpop.f32.mrb[0].mxu0
      %v3392 = vadd.f32 0.0, %v3391
      %v3393 = vpop.f32.mrb[0].mxu0
      %3394 = vmatprep.mubr.f32.mxu0 0.0
      %3395 = vmatmul.mubr.f32.gmra.mrb[0].mxu0 %v3166
      %v3396 = vpop.f32.mrb[0].mxu0
      %v3397 = vadd.f32 0.0, %v3396
      %v3398 = vpop.f32.mrb[0].mxu0
      %3399 = vmatprep.mubr.f32.mxu0 0.0
      %3400 = vmatmul.mubr.f32.gmra.mrb[0].mxu0 %v3169
      %v3401 = vpop.f32.mrb[0].mxu0
      %v3402 = vadd.f32 0.0, %v3401
      %v3403 = vpop.f32.mrb[0].mxu0
      %3404 = vmatprep.mubr.f32.mxu0 0.0
      %3405 = vmatmul.mubr.f32.gmra.mrb[0].mxu0 %v3172
      %v3406 = vpop.f32.mrb[0].mxu0
      %v3407 = vadd.f32 0.0, %v3406
      %v3408 = vpop.f32.mrb[0].mxu0
      %3409 = vmatprep.mubr.f32.mxu0 0.0
      %3410 = vmatmul.mubr.f32.gmra.mrb[0].mxu0 %v3175
      %v3411 = vpop.f32.mrb[0].mxu0
      %v3412 = vadd.f32 0.0, %v3411
      %v3413 = vpop.f32.mrb[0].mxu0
      %3414 = vmatprep.mubr.f32.mxu0 0.0
      %3415 = vmatmul.mubr.f32.gmra.mrb[0].mxu0 %v3178
      %v3416 = vpop.f32.mrb[0].mxu0
      %v3417 = vadd.f32 0.0, %v3416
      %v3418 = vpop.f32.mrb[0].mxu0
      %3419 = vmatprep.mubr.f32.mxu0 0.0
      %3420 = vmatmul.mubr.f32.gmra.mrb[0].mxu0 %v3181
      %v3421 = vpop.f32.mrb[0].mxu0
      %v3422 = vadd.f32 0.0, %v3421
      %v3423 = vpop.f32.mrb[0].mxu0
      %3424 = vmatprep.mubr.f32.mxu0 0.0
      %3425 = vmatmul.mubr.f32.gmra.mrb[0].mxu0 %v3184
      %v3426 = vpop.f32.mrb[0].mxu0
      %v3427 = vadd.f32 0.0, %v3426
      %v3428 = vpop.f32.mrb[0].mxu0
      %3429 = vmatprep.mubr.f32.mxu0 0.0
      %3430 = vmatmul.mubr.f32.gmra.mrb[0].mxu0 %v3187
      %v3431 = vpop.f32.mrb[0].mxu0
      %v3432 = vadd.f32 0.0, %v3431
      %v3433 = vpop.f32.mrb[0].mxu0
      %3434 = vmatprep.mubr.f32.mxu0 0.0
      %3435 = vmatmul.mubr.f32.gmra.mrb[0].mxu0 %v3190
      %v3436 = vpop.f32.mrb[0].mxu0
      %v3437 = vadd.f32 0.0, %v3436
      %v3438 = vpop.f32.mrb[0].mxu0
      %3439 = vdwg.mxu0
      %v3440 = vadd.f32 %v3010, %v3262
      %v3441 = vadd.f32 %v3011, %v3267
      %v3442 = vadd.f32 %v3012, %v3272
      %v3443 = vadd.f32 %v3013, %v3277
      %v3444 = vadd.f32 %v3014, %v3282
      %v3445 = vadd.f32 %v3015, %v3287
      %v3446 = vadd.f32 %v3016, %v3292
      %v3447 = vadd.f32 %v3017, %v3297
      %v3448 = vadd.f32 %v3018, %v3302
      %v3449 = vadd.f32 %v3019, %v3307
      %v3450 = vadd.f32 %v3020, %v3312
      %v3451 = vadd.f32 %v3021, %v3317
      %v3452 = vadd.f32 %v3022, %v3322
      %v3453 = vadd.f32 %v3023, %v3327
      %v3454 = vadd.f32 %v3024, %v3332
      %v3455 = vadd.f32 %v3025, %v3337
      %v3456 = vadd.f32 %v3026, %v3342
      %v3457 = vadd.f32 %v3027, %v3347
      %v3458 = vadd.f32 %v3028, %v3352
      %v3459 = vadd.f32 %v3029, %v3357
      %v3460 = vadd.f32 %v3030, %v3362
      %v3461 = vadd.f32 %v3031, %v3367
      %v3462 = vadd.f32 %v3032, %v3372
      %v3463 = vadd.f32 %v3033, %v3377
      %v3464 = vadd.f32 %v3034, %v3382
      %v3465 = vadd.f32 %v3035, %v3387
      %v3466 = vadd.f32 %v3036, %v3392
      %v3467 = vadd.f32 %v3037, %v3397
      %v3468 = vadd.f32 %v3038, %v3402
      %v3469 = vadd.f32 %v3039, %v3407
      %v3470 = vadd.f32 %v3040, %v3412
      %v3471 = vadd.f32 %v3041, %v3417
      %v3472 = vadd.f32 %v3042, %v3422
      %v3473 = vadd.f32 %v3043, %v3427
      %v3474 = vadd.f32 %v3044, %v3432
      %v3475 = vadd.f32 %v3045, %v3437
      %v3476 = vld [vmem:[#allocation2 + $0x14] sm:$0xff]
      %v3477 = vld [vmem:[#allocation2 + $0x1c] sm:$0xff]
      %v3478 = vld [vmem:[#allocation2 + $0x24] sm:$0xff]
      %v3479 = vld [vmem:[#allocation2 + $0x2c] sm:$0xff]
      %v3480 = vld [vmem:[#allocation2 + $0x34] sm:$0xff]
      %v3481 = vld [vmem:[#allocation2 + $0x3c] sm:$0xff]
      %v3482 = vld [vmem:[#allocation2 + $0x44] sm:$0xff]
      %v3483 = vld [vmem:[#allocation2 + $0x4c] sm:$0xff]
      %v3484 = vld [vmem:[#allocation2 + $0x54] sm:$0xff]
      %v3485 = vld [vmem:[#allocation2 + $0x5c] sm:$0xff]
      %v3486 = vld [vmem:[#allocation2 + $0x64] sm:$0xff]
      %v3487 = vld [vmem:[#allocation2 + $0x6c] sm:$0xff]
      %v3488 = vld [vmem:[#allocation2 + $0x74] sm:$0xff]
      %v3489 = vld [vmem:[#allocation2 + $0x7c] sm:$0xff]
      %v3490 = vld [vmem:[#allocation2 + $0x84] sm:$0xff]
      %v3491 = vld [vmem:[#allocation2 + $0x8c] sm:$0xff]
      %v3492 = vld [vmem:[#allocation2 + $0x94] sm:$0xff]
      %v3493 = vld [vmem:[#allocation2 + $0x9c] sm:$0xff]
      %v3494 = vld [vmem:[#allocation2 + $0xa4] sm:$0xff]
      %v3495 = vld [vmem:[#allocation2 + $0xac] sm:$0xff]
      %v3496 = vld [vmem:[#allocation2 + $0xb4] sm:$0xff]
      %v3497 = vld [vmem:[#allocation2 + $0xbc] sm:$0xff]
      %v3498 = vld [vmem:[#allocation2 + $0xc4] sm:$0xff]
      %v3499 = vld [vmem:[#allocation2 + $0xcc] sm:$0xff]
      %v3500 = vld [vmem:[#allocation2 + $0xd4] sm:$0xff]
      %v3501 = vld [vmem:[#allocation2 + $0xdc] sm:$0xff]
      %v3502 = vld [vmem:[#allocation2 + $0xe4] sm:$0xff]
      %v3503 = vld [vmem:[#allocation2 + $0xec] sm:$0xff]
      %v3504 = vld [vmem:[#allocation2 + $0xf4] sm:$0xff]
      %v3505 = vld [vmem:[#allocation2 + $0xfc] sm:$0xff]
      %v3506 = vld [vmem:[#allocation2 + $0x104] sm:$0xff]
      %v3507 = vld [vmem:[#allocation2 + $0x10c] sm:$0xff]
      %v3508 = vld [vmem:[#allocation2 + $0x114] sm:$0xff]
      %v3509 = vld [vmem:[#allocation2 + $0x11c] sm:$0xff]
      %v3510 = vld [vmem:[#allocation2 + $0x124] sm:$0xff]
      %v3511 = vld [vmem:[#allocation2 + $0x12c] sm:$0xff]
      %s3512 = scalar_lea.vmem %s1, 20
      %v3513 = vld [vmem:[%s3512] sm:$0xf]
      %v3515 = vsel %vm916, %v3476, 0
      %v3518 = vsel %vm916, %v3477, 0
      %v3521 = vsel %vm916, %v3478, 0
      %v3524 = vsel %vm916, %v3479, 0
      %v3527 = vsel %vm916, %v3480, 0
      %v3530 = vsel %vm916, %v3481, 0
      %v3533 = vsel %vm916, %v3482, 0
      %v3536 = vsel %vm916, %v3483, 0
      %v3539 = vsel %vm916, %v3484, 0
      %v3542 = vsel %vm916, %v3485, 0
      %v3545 = vsel %vm916, %v3486, 0
      %v3548 = vsel %vm916, %v3487, 0
      %v3551 = vsel %vm916, %v3488, 0
      %v3554 = vsel %vm916, %v3489, 0
      %v3557 = vsel %vm916, %v3490, 0
      %v3560 = vsel %vm916, %v3491, 0
      %v3563 = vsel %vm916, %v3492, 0
      %v3566 = vsel %vm916, %v3493, 0
      %v3569 = vsel %vm916, %v3494, 0
      %v3572 = vsel %vm916, %v3495, 0
      %v3575 = vsel %vm916, %v3496, 0
      %v3578 = vsel %vm916, %v3497, 0
      %v3581 = vsel %vm916, %v3498, 0
      %v3584 = vsel %vm916, %v3499, 0
      %v3587 = vsel %vm916, %v3500, 0
      %v3590 = vsel %vm916, %v3501, 0
      %v3593 = vsel %vm916, %v3502, 0
      %v3596 = vsel %vm916, %v3503, 0
      %v3599 = vsel %vm916, %v3504, 0
      %v3602 = vsel %vm916, %v3505, 0
      %v3605 = vsel %vm916, %v3506, 0
      %v3608 = vsel %vm916, %v3507, 0
      %v3611 = vsel %vm916, %v3508, 0
      %v3614 = vsel %vm916, %v3509, 0
      %v3617 = vsel %vm916, %v3510, 0
      %v3620 = vsel %vm916, %v3511, 0
      %v3623 = vsel %vm1581, %v3513, 0
      %3625 = vmatprep.subr.mxu0 0.0
      %3626 = vmatpush1.msra.mxu0 %v3623
      %3627 = vmatprep.subr.mxu0 0.0
      %3628 = vmatpush1.msra.mxu0 0.0
      %3629 = vmatprep.subr.mxu0 0.0
      %3630 = vmatpush1.msra.mxu0 0.0
      %3631 = vmatprep.subr.mxu0 0.0
      %3632 = vmatpush1.msra.mxu0 0.0
      %3633 = vmatprep.subr.mxu0 0.0
      %3634 = vmatpush1.msra.mxu0 0.0
      %3635 = vmatprep.subr.mxu0 0.0
      %3636 = vmatpush1.msra.mxu0 0.0
      %3637 = vmatprep.subr.mxu0 0.0
      %3638 = vmatpush1.msra.mxu0 0.0
      %3639 = vmatprep.subr.mxu0 0.0
      %3640 = vmatpush1.msra.mxu0 0.0
      %3641 = vmatprep.subr.mxu0 0.0
      %3642 = vmatpush1.msra.mxu0 0.0
      %3643 = vmatprep.subr.mxu0 0.0
      %3644 = vmatpush1.msra.mxu0 0.0
      %3645 = vmatprep.subr.mxu0 0.0
      %3646 = vmatpush1.msra.mxu0 0.0
      %3647 = vmatprep.subr.mxu0 0.0
      %3648 = vmatpush1.msra.mxu0 0.0
      %3649 = vmatprep.subr.mxu0 0.0
      %3650 = vmatpush1.msra.mxu0 0.0
      %3651 = vmatprep.subr.mxu0 0.0
      %3652 = vmatpush1.msra.mxu0 0.0
      %3653 = vmatprep.subr.mxu0 0.0
      %3654 = vmatpush1.msra.mxu0 0.0
      %3655 = vmatprep.subr.mxu0 0.0
      %3656 = vmatpush1.msra.mxu0 0.0
      %3657 = vmatprep.subr.mxu0 0.0
      %3658 = vmatpush1.msra.mxu0 0.0
      %3659 = vmatprep.subr.mxu0 0.0
      %3660 = vmatpush1.msra.mxu0 0.0
      %3661 = vmatprep.subr.mxu0 0.0
      %3662 = vmatpush1.msra.mxu0 0.0
      %3663 = vmatprep.subr.mxu0 0.0
      %3664 = vmatpush1.msra.mxu0 0.0
      %3665 = vmatprep.subr.mxu0 0.0
      %3666 = vmatpush1.msra.mxu0 0.0
      %3667 = vmatprep.subr.mxu0 0.0
      %3668 = vmatpush1.msra.mxu0 0.0
      %3669 = vmatprep.subr.mxu0 0.0
      %3670 = vmatpush1.msra.mxu0 0.0
      %3671 = vmatprep.subr.mxu0 0.0
      %3672 = vmatpush1.msra.mxu0 0.0
      %3673 = vmatprep.subr.mxu0 0.0
      %3674 = vmatpush1.msra.mxu0 0.0
      %3675 = vmatprep.subr.mxu0 0.0
      %3676 = vmatpush1.msra.mxu0 0.0
      %3677 = vmatprep.subr.mxu0 0.0
      %3678 = vmatpush1.msra.mxu0 0.0
      %3679 = vmatprep.subr.mxu0 0.0
      %3680 = vmatpush1.msra.mxu0 0.0
      %3681 = vmatprep.subr.mxu0 0.0
      %3682 = vmatpush1.msra.mxu0 0.0
      %3683 = vmatprep.subr.mxu0 0.0
      %3684 = vmatpush1.msra.mxu0 0.0
      %3685 = vmatprep.subr.mxu0 0.0
      %3686 = vmatpush1.msra.mxu0 0.0
      %3687 = vmatprep.subr.mxu0 0.0
      %3688 = vmatpush1.msra.mxu0 0.0
      %3689 = vmatprep.mubr.f32.mxu0 0.0
      %3690 = vmatmul.mubr.f32.gmra.mrb[0].mxu0 %v3515
      %v3691 = vpop.f32.mrb[0].mxu0
      %v3692 = vadd.f32 0.0, %v3691
      %v3693 = vpop.f32.mrb[0].mxu0
      %3694 = vmatprep.mubr.f32.mxu0 0.0
      %3695 = vmatmul.mubr.f32.gmra.mrb[0].mxu0 %v3518
      %v3696 = vpop.f32.mrb[0].mxu0
      %v3697 = vadd.f32 0.0, %v3696
      %v3698 = vpop.f32.mrb[0].mxu0
      %3699 = vmatprep.mubr.f32.mxu0 0.0
      %3700 = vmatmul.mubr.f32.gmra.mrb[0].mxu0 %v3521
      %v3701 = vpop.f32.mrb[0].mxu0
      %v3702 = vadd.f32 0.0, %v3701
      %v3703 = vpop.f32.mrb[0].mxu0
      %3704 = vmatprep.mubr.f32.mxu0 0.0
      %3705 = vmatmul.mubr.f32.gmra.mrb[0].mxu0 %v3524
      %v3706 = vpop.f32.mrb[0].mxu0
      %v3707 = vadd.f32 0.0, %v3706
      %v3708 = vpop.f32.mrb[0].mxu0
      %3709 = vmatprep.mubr.f32.mxu0 0.0
      %3710 = vmatmul.mubr.f32.gmra.mrb[0].mxu0 %v3527
      %v3711 = vpop.f32.mrb[0].mxu0
      %v3712 = vadd.f32 0.0, %v3711
      %v3713 = vpop.f32.mrb[0].mxu0
      %3714 = vmatprep.mubr.f32.mxu0 0.0
      %3715 = vmatmul.mubr.f32.gmra.mrb[0].mxu0 %v3530
      %v3716 = vpop.f32.mrb[0].mxu0
      %v3717 = vadd.f32 0.0, %v3716
      %v3718 = vpop.f32.mrb[0].mxu0
      %3719 = vmatprep.mubr.f32.mxu0 0.0
      %3720 = vmatmul.mubr.f32.gmra.mrb[0].mxu0 %v3533
      %v3721 = vpop.f32.mrb[0].mxu0
      %v3722 = vadd.f32 0.0, %v3721
      %v3723 = vpop.f32.mrb[0].mxu0
      %3724 = vmatprep.mubr.f32.mxu0 0.0
      %3725 = vmatmul.mubr.f32.gmra.mrb[0].mxu0 %v3536
      %v3726 = vpop.f32.mrb[0].mxu0
      %v3727 = vadd.f32 0.0, %v3726
      %v3728 = vpop.f32.mrb[0].mxu0
      %3729 = vmatprep.mubr.f32.mxu0 0.0
      %3730 = vmatmul.mubr.f32.gmra.mrb[0].mxu0 %v3539
      %v3731 = vpop.f32.mrb[0].mxu0
      %v3732 = vadd.f32 0.0, %v3731
      %v3733 = vpop.f32.mrb[0].mxu0
      %3734 = vmatprep.mubr.f32.mxu0 0.0
      %3735 = vmatmul.mubr.f32.gmra.mrb[0].mxu0 %v3542
      %v3736 = vpop.f32.mrb[0].mxu0
      %v3737 = vadd.f32 0.0, %v3736
      %v3738 = vpop.f32.mrb[0].mxu0
      %3739 = vmatprep.mubr.f32.mxu0 0.0
      %3740 = vmatmul.mubr.f32.gmra.mrb[0].mxu0 %v3545
      %v3741 = vpop.f32.mrb[0].mxu0
      %v3742 = vadd.f32 0.0, %v3741
      %v3743 = vpop.f32.mrb[0].mxu0
      %3744 = vmatprep.mubr.f32.mxu0 0.0
      %3745 = vmatmul.mubr.f32.gmra.mrb[0].mxu0 %v3548
      %v3746 = vpop.f32.mrb[0].mxu0
      %v3747 = vadd.f32 0.0, %v3746
      %v3748 = vpop.f32.mrb[0].mxu0
      %3749 = vmatprep.mubr.f32.mxu0 0.0
      %3750 = vmatmul.mubr.f32.gmra.mrb[0].mxu0 %v3551
      %v3751 = vpop.f32.mrb[0].mxu0
      %v3752 = vadd.f32 0.0, %v3751
      %v3753 = vpop.f32.mrb[0].mxu0
      %3754 = vmatprep.mubr.f32.mxu0 0.0
      %3755 = vmatmul.mubr.f32.gmra.mrb[0].mxu0 %v3554
      %v3756 = vpop.f32.mrb[0].mxu0
      %v3757 = vadd.f32 0.0, %v3756
      %v3758 = vpop.f32.mrb[0].mxu0
      %3759 = vmatprep.mubr.f32.mxu0 0.0
      %3760 = vmatmul.mubr.f32.gmra.mrb[0].mxu0 %v3557
      %v3761 = vpop.f32.mrb[0].mxu0
      %v3762 = vadd.f32 0.0, %v3761
      %v3763 = vpop.f32.mrb[0].mxu0
      %3764 = vmatprep.mubr.f32.mxu0 0.0
      %3765 = vmatmul.mubr.f32.gmra.mrb[0].mxu0 %v3560
      %v3766 = vpop.f32.mrb[0].mxu0
      %v3767 = vadd.f32 0.0, %v3766
      %v3768 = vpop.f32.mrb[0].mxu0
      %3769 = vmatprep.mubr.f32.mxu0 0.0
      %3770 = vmatmul.mubr.f32.gmra.mrb[0].mxu0 %v3563
      %v3771 = vpop.f32.mrb[0].mxu0
      %v3772 = vadd.f32 0.0, %v3771
      %v3773 = vpop.f32.mrb[0].mxu0
      %3774 = vmatprep.mubr.f32.mxu0 0.0
      %3775 = vmatmul.mubr.f32.gmra.mrb[0].mxu0 %v3566
      %v3776 = vpop.f32.mrb[0].mxu0
      %v3777 = vadd.f32 0.0, %v3776
      %v3778 = vpop.f32.mrb[0].mxu0
      %3779 = vmatprep.mubr.f32.mxu0 0.0
      %3780 = vmatmul.mubr.f32.gmra.mrb[0].mxu0 %v3569
      %v3781 = vpop.f32.mrb[0].mxu0
      %v3782 = vadd.f32 0.0, %v3781
      %v3783 = vpop.f32.mrb[0].mxu0
      %3784 = vmatprep.mubr.f32.mxu0 0.0
      %3785 = vmatmul.mubr.f32.gmra.mrb[0].mxu0 %v3572
      %v3786 = vpop.f32.mrb[0].mxu0
      %v3787 = vadd.f32 0.0, %v3786
      %v3788 = vpop.f32.mrb[0].mxu0
      %3789 = vmatprep.mubr.f32.mxu0 0.0
      %3790 = vmatmul.mubr.f32.gmra.mrb[0].mxu0 %v3575
      %v3791 = vpop.f32.mrb[0].mxu0
      %v3792 = vadd.f32 0.0, %v3791
      %v3793 = vpop.f32.mrb[0].mxu0
      %3794 = vmatprep.mubr.f32.mxu0 0.0
      %3795 = vmatmul.mubr.f32.gmra.mrb[0].mxu0 %v3578
      %v3796 = vpop.f32.mrb[0].mxu0
      %v3797 = vadd.f32 0.0, %v3796
      %v3798 = vpop.f32.mrb[0].mxu0
      %3799 = vmatprep.mubr.f32.mxu0 0.0
      %3800 = vmatmul.mubr.f32.gmra.mrb[0].mxu0 %v3581
      %v3801 = vpop.f32.mrb[0].mxu0
      %v3802 = vadd.f32 0.0, %v3801
      %v3803 = vpop.f32.mrb[0].mxu0
      %3804 = vmatprep.mubr.f32.mxu0 0.0
      %3805 = vmatmul.mubr.f32.gmra.mrb[0].mxu0 %v3584
      %v3806 = vpop.f32.mrb[0].mxu0
      %v3807 = vadd.f32 0.0, %v3806
      %v3808 = vpop.f32.mrb[0].mxu0
      %3809 = vmatprep.mubr.f32.mxu0 0.0
      %3810 = vmatmul.mubr.f32.gmra.mrb[0].mxu0 %v3587
      %v3811 = vpop.f32.mrb[0].mxu0
      %v3812 = vadd.f32 0.0, %v3811
      %v3813 = vpop.f32.mrb[0].mxu0
      %3814 = vmatprep.mubr.f32.mxu0 0.0
      %3815 = vmatmul.mubr.f32.gmra.mrb[0].mxu0 %v3590
      %v3816 = vpop.f32.mrb[0].mxu0
      %v3817 = vadd.f32 0.0, %v3816
      %v3818 = vpop.f32.mrb[0].mxu0
      %3819 = vmatprep.mubr.f32.mxu0 0.0
      %3820 = vmatmul.mubr.f32.gmra.mrb[0].mxu0 %v3593
      %v3821 = vpop.f32.mrb[0].mxu0
      %v3822 = vadd.f32 0.0, %v3821
      %v3823 = vpop.f32.mrb[0].mxu0
      %3824 = vmatprep.mubr.f32.mxu0 0.0
      %3825 = vmatmul.mubr.f32.gmra.mrb[0].mxu0 %v3596
      %v3826 = vpop.f32.mrb[0].mxu0
      %v3827 = vadd.f32 0.0, %v3826
      %v3828 = vpop.f32.mrb[0].mxu0
      %3829 = vmatprep.mubr.f32.mxu0 0.0
      %3830 = vmatmul.mubr.f32.gmra.mrb[0].mxu0 %v3599
      %v3831 = vpop.f32.mrb[0].mxu0
      %v3832 = vadd.f32 0.0, %v3831
      %v3833 = vpop.f32.mrb[0].mxu0
      %3834 = vmatprep.mubr.f32.mxu0 0.0
      %3835 = vmatmul.mubr.f32.gmra.mrb[0].mxu0 %v3602
      %v3836 = vpop.f32.mrb[0].mxu0
      %v3837 = vadd.f32 0.0, %v3836
      %v3838 = vpop.f32.mrb[0].mxu0
      %3839 = vmatprep.mubr.f32.mxu0 0.0
      %3840 = vmatmul.mubr.f32.gmra.mrb[0].mxu0 %v3605
      %v3841 = vpop.f32.mrb[0].mxu0
      %v3842 = vadd.f32 0.0, %v3841
      %v3843 = vpop.f32.mrb[0].mxu0
      %3844 = vmatprep.mubr.f32.mxu0 0.0
      %3845 = vmatmul.mubr.f32.gmra.mrb[0].mxu0 %v3608
      %v3846 = vpop.f32.mrb[0].mxu0
      %v3847 = vadd.f32 0.0, %v3846
      %v3848 = vpop.f32.mrb[0].mxu0
      %3849 = vmatprep.mubr.f32.mxu0 0.0
      %3850 = vmatmul.mubr.f32.gmra.mrb[0].mxu0 %v3611
      %v3851 = vpop.f32.mrb[0].mxu0
      %v3852 = vadd.f32 0.0, %v3851
      %v3853 = vpop.f32.mrb[0].mxu0
      %3854 = vmatprep.mubr.f32.mxu0 0.0
      %3855 = vmatmul.mubr.f32.gmra.mrb[0].mxu0 %v3614
      %v3856 = vpop.f32.mrb[0].mxu0
      %v3857 = vadd.f32 0.0, %v3856
      %v3858 = vpop.f32.mrb[0].mxu0
      %3859 = vmatprep.mubr.f32.mxu0 0.0
      %3860 = vmatmul.mubr.f32.gmra.mrb[0].mxu0 %v3617
      %v3861 = vpop.f32.mrb[0].mxu0
      %v3862 = vadd.f32 0.0, %v3861
      %v3863 = vpop.f32.mrb[0].mxu0
      %3864 = vmatprep.mubr.f32.mxu0 0.0
      %3865 = vmatmul.mubr.f32.gmra.mrb[0].mxu0 %v3620
      %v3866 = vpop.f32.mrb[0].mxu0
      %v3867 = vadd.f32 0.0, %v3866
      %v3868 = vpop.f32.mrb[0].mxu0
      %3869 = vdwg.mxu0
      %v3870 = vadd.f32 %v3440, %v3692
      %v3871 = vadd.f32 %v3441, %v3697
      %v3872 = vadd.f32 %v3442, %v3702
      %v3873 = vadd.f32 %v3443, %v3707
      %v3874 = vadd.f32 %v3444, %v3712
      %v3875 = vadd.f32 %v3445, %v3717
      %v3876 = vadd.f32 %v3446, %v3722
      %v3877 = vadd.f32 %v3447, %v3727
      %v3878 = vadd.f32 %v3448, %v3732
      %v3879 = vadd.f32 %v3449, %v3737
      %v3880 = vadd.f32 %v3450, %v3742
      %v3881 = vadd.f32 %v3451, %v3747
      %v3882 = vadd.f32 %v3452, %v3752
      %v3883 = vadd.f32 %v3453, %v3757
      %v3884 = vadd.f32 %v3454, %v3762
      %v3885 = vadd.f32 %v3455, %v3767
      %v3886 = vadd.f32 %v3456, %v3772
      %v3887 = vadd.f32 %v3457, %v3777
      %v3888 = vadd.f32 %v3458, %v3782
      %v3889 = vadd.f32 %v3459, %v3787
      %v3890 = vadd.f32 %v3460, %v3792
      %v3891 = vadd.f32 %v3461, %v3797
      %v3892 = vadd.f32 %v3462, %v3802
      %v3893 = vadd.f32 %v3463, %v3807
      %v3894 = vadd.f32 %v3464, %v3812
      %v3895 = vadd.f32 %v3465, %v3817
      %v3896 = vadd.f32 %v3466, %v3822
      %v3897 = vadd.f32 %v3467, %v3827
      %v3898 = vadd.f32 %v3468, %v3832
      %v3899 = vadd.f32 %v3469, %v3837
      %v3900 = vadd.f32 %v3470, %v3842
      %v3901 = vadd.f32 %v3471, %v3847
      %v3902 = vadd.f32 %v3472, %v3852
      %v3903 = vadd.f32 %v3473, %v3857
      %v3904 = vadd.f32 %v3474, %v3862
      %v3905 = vadd.f32 %v3475, %v3867
      %v3906 = vld [vmem:[#allocation2 + $0x24] sm:$0xff]
      %v3907 = vld [vmem:[#allocation2 + $0x2c] sm:$0xff]
      %v3908 = vld [vmem:[#allocation2 + $0x34] sm:$0xff]
      %v3909 = vld [vmem:[#allocation2 + $0x3c] sm:$0xff]
      %v3910 = vld [vmem:[#allocation2 + $0x44] sm:$0xff]
      %v3911 = vld [vmem:[#allocation2 + $0x4c] sm:$0xff]
      %v3912 = vld [vmem:[#allocation2 + $0x54] sm:$0xff]
      %v3913 = vld [vmem:[#allocation2 + $0x5c] sm:$0xff]
      %v3914 = vld [vmem:[#allocation2 + $0x64] sm:$0xff]
      %v3915 = vld [vmem:[#allocation2 + $0x6c] sm:$0xff]
      %v3916 = vld [vmem:[#allocation2 + $0x74] sm:$0xff]
      %v3917 = vld [vmem:[#allocation2 + $0x7c] sm:$0xff]
      %v3918 = vld [vmem:[#allocation2 + $0x84] sm:$0xff]
      %v3919 = vld [vmem:[#allocation2 + $0x8c] sm:$0xff]
      %v3920 = vld [vmem:[#allocation2 + $0x94] sm:$0xff]
      %v3921 = vld [vmem:[#allocation2 + $0x9c] sm:$0xff]
      %v3922 = vld [vmem:[#allocation2 + $0xa4] sm:$0xff]
      %v3923 = vld [vmem:[#allocation2 + $0xac] sm:$0xff]
      %v3924 = vld [vmem:[#allocation2 + $0xb4] sm:$0xff]
      %v3925 = vld [vmem:[#allocation2 + $0xbc] sm:$0xff]
      %v3926 = vld [vmem:[#allocation2 + $0xc4] sm:$0xff]
      %v3927 = vld [vmem:[#allocation2 + $0xcc] sm:$0xff]
      %v3928 = vld [vmem:[#allocation2 + $0xd4] sm:$0xff]
      %v3929 = vld [vmem:[#allocation2 + $0xdc] sm:$0xff]
      %v3930 = vld [vmem:[#allocation2 + $0xe4] sm:$0xff]
      %v3931 = vld [vmem:[#allocation2 + $0xec] sm:$0xff]
      %v3932 = vld [vmem:[#allocation2 + $0xf4] sm:$0xff]
      %v3933 = vld [vmem:[#allocation2 + $0xfc] sm:$0xff]
      %v3934 = vld [vmem:[#allocation2 + $0x104] sm:$0xff]
      %v3935 = vld [vmem:[#allocation2 + $0x10c] sm:$0xff]
      %v3936 = vld [vmem:[#allocation2 + $0x114] sm:$0xff]
      %v3937 = vld [vmem:[#allocation2 + $0x11c] sm:$0xff]
      %v3938 = vld [vmem:[#allocation2 + $0x124] sm:$0xff]
      %v3939 = vld [vmem:[#allocation2 + $0x12c] sm:$0xff]
      %v3940 = vld [vmem:[#allocation2 + $0x134] sm:$0xff]
      %v3941 = vld [vmem:[#allocation2 + $0x13c] sm:$0xff]
      %s3942 = scalar_lea.vmem %s1, 24
      %v3943 = vld [vmem:[%s3942] sm:$0xf]
      %v3945 = vsel %vm916, %v3906, 0
      %v3948 = vsel %vm916, %v3907, 0
      %v3951 = vsel %vm916, %v3908, 0
      %v3954 = vsel %vm916, %v3909, 0
      %v3957 = vsel %vm916, %v3910, 0
      %v3960 = vsel %vm916, %v3911, 0
      %v3963 = vsel %vm916, %v3912, 0
      %v3966 = vsel %vm916, %v3913, 0
      %v3969 = vsel %vm916, %v3914, 0
      %v3972 = vsel %vm916, %v3915, 0
      %v3975 = vsel %vm916, %v3916, 0
      %v3978 = vsel %vm916, %v3917, 0
      %v3981 = vsel %vm916, %v3918, 0
      %v3984 = vsel %vm916, %v3919, 0
      %v3987 = vsel %vm916, %v3920, 0
      %v3990 = vsel %vm916, %v3921, 0
      %v3993 = vsel %vm916, %v3922, 0
      %v3996 = vsel %vm916, %v3923, 0
      %v3999 = vsel %vm916, %v3924, 0
      %v4002 = vsel %vm916, %v3925, 0
      %v4005 = vsel %vm916, %v3926, 0
      %v4008 = vsel %vm916, %v3927, 0
      %v4011 = vsel %vm916, %v3928, 0
      %v4014 = vsel %vm916, %v3929, 0
      %v4017 = vsel %vm916, %v3930, 0
      %v4020 = vsel %vm916, %v3931, 0
      %v4023 = vsel %vm916, %v3932, 0
      %v4026 = vsel %vm916, %v3933, 0
      %v4029 = vsel %vm916, %v3934, 0
      %v4032 = vsel %vm916, %v3935, 0
      %v4035 = vsel %vm916, %v3936, 0
      %v4038 = vsel %vm916, %v3937, 0
      %v4041 = vsel %vm916, %v3938, 0
      %v4044 = vsel %vm916, %v3939, 0
      %v4047 = vsel %vm916, %v3940, 0
      %v4050 = vsel %vm916, %v3941, 0
      %v4053 = vsel %vm1581, %v3943, 0
      %4055 = vmatprep.subr.mxu0 0.0
      %4056 = vmatpush1.msra.mxu0 %v4053
      %4057 = vmatprep.subr.mxu0 0.0
      %4058 = vmatpush1.msra.mxu0 0.0
      %4059 = vmatprep.subr.mxu0 0.0
      %4060 = vmatpush1.msra.mxu0 0.0
      %4061 = vmatprep.subr.mxu0 0.0
      %4062 = vmatpush1.msra.mxu0 0.0
      %4063 = vmatprep.subr.mxu0 0.0
      %4064 = vmatpush1.msra.mxu0 0.0
      %4065 = vmatprep.subr.mxu0 0.0
      %4066 = vmatpush1.msra.mxu0 0.0
      %4067 = vmatprep.subr.mxu0 0.0
      %4068 = vmatpush1.msra.mxu0 0.0
      %4069 = vmatprep.subr.mxu0 0.0
      %4070 = vmatpush1.msra.mxu0 0.0
      %4071 = vmatprep.subr.mxu0 0.0
      %4072 = vmatpush1.msra.mxu0 0.0
      %4073 = vmatprep.subr.mxu0 0.0
      %4074 = vmatpush1.msra.mxu0 0.0
      %4075 = vmatprep.subr.mxu0 0.0
      %4076 = vmatpush1.msra.mxu0 0.0
      %4077 = vmatprep.subr.mxu0 0.0
      %4078 = vmatpush1.msra.mxu0 0.0
      %4079 = vmatprep.subr.mxu0 0.0
      %4080 = vmatpush1.msra.mxu0 0.0
      %4081 = vmatprep.subr.mxu0 0.0
      %4082 = vmatpush1.msra.mxu0 0.0
      %4083 = vmatprep.subr.mxu0 0.0
      %4084 = vmatpush1.msra.mxu0 0.0
      %4085 = vmatprep.subr.mxu0 0.0
      %4086 = vmatpush1.msra.mxu0 0.0
      %4087 = vmatprep.subr.mxu0 0.0
      %4088 = vmatpush1.msra.mxu0 0.0
      %4089 = vmatprep.subr.mxu0 0.0
      %4090 = vmatpush1.msra.mxu0 0.0
      %4091 = vmatprep.subr.mxu0 0.0
      %4092 = vmatpush1.msra.mxu0 0.0
      %4093 = vmatprep.subr.mxu0 0.0
      %4094 = vmatpush1.msra.mxu0 0.0
      %4095 = vmatprep.subr.mxu0 0.0
      %4096 = vmatpush1.msra.mxu0 0.0
      %4097 = vmatprep.subr.mxu0 0.0
      %4098 = vmatpush1.msra.mxu0 0.0
      %4099 = vmatprep.subr.mxu0 0.0
      %4100 = vmatpush1.msra.mxu0 0.0
      %4101 = vmatprep.subr.mxu0 0.0
      %4102 = vmatpush1.msra.mxu0 0.0
      %4103 = vmatprep.subr.mxu0 0.0
      %4104 = vmatpush1.msra.mxu0 0.0
      %4105 = vmatprep.subr.mxu0 0.0
      %4106 = vmatpush1.msra.mxu0 0.0
      %4107 = vmatprep.subr.mxu0 0.0
      %4108 = vmatpush1.msra.mxu0 0.0
      %4109 = vmatprep.subr.mxu0 0.0
      %4110 = vmatpush1.msra.mxu0 0.0
      %4111 = vmatprep.subr.mxu0 0.0
      %4112 = vmatpush1.msra.mxu0 0.0
      %4113 = vmatprep.subr.mxu0 0.0
      %4114 = vmatpush1.msra.mxu0 0.0
      %4115 = vmatprep.subr.mxu0 0.0
      %4116 = vmatpush1.msra.mxu0 0.0
      %4117 = vmatprep.subr.mxu0 0.0
      %4118 = vmatpush1.msra.mxu0 0.0
      %4119 = vmatprep.mubr.f32.mxu0 0.0
      %4120 = vmatmul.mubr.f32.gmra.mrb[0].mxu0 %v3945
      %v4121 = vpop.f32.mrb[0].mxu0
      %v4122 = vadd.f32 0.0, %v4121
      %v4123 = vpop.f32.mrb[0].mxu0
      %4124 = vmatprep.mubr.f32.mxu0 0.0
      %4125 = vmatmul.mubr.f32.gmra.mrb[0].mxu0 %v3948
      %v4126 = vpop.f32.mrb[0].mxu0
      %v4127 = vadd.f32 0.0, %v4126
      %v4128 = vpop.f32.mrb[0].mxu0
      %4129 = vmatprep.mubr.f32.mxu0 0.0
      %4130 = vmatmul.mubr.f32.gmra.mrb[0].mxu0 %v3951
      %v4131 = vpop.f32.mrb[0].mxu0
      %v4132 = vadd.f32 0.0, %v4131
      %v4133 = vpop.f32.mrb[0].mxu0
      %4134 = vmatprep.mubr.f32.mxu0 0.0
      %4135 = vmatmul.mubr.f32.gmra.mrb[0].mxu0 %v3954
      %v4136 = vpop.f32.mrb[0].mxu0
      %v4137 = vadd.f32 0.0, %v4136
      %v4138 = vpop.f32.mrb[0].mxu0
      %4139 = vmatprep.mubr.f32.mxu0 0.0
      %4140 = vmatmul.mubr.f32.gmra.mrb[0].mxu0 %v3957
      %v4141 = vpop.f32.mrb[0].mxu0
      %v4142 = vadd.f32 0.0, %v4141
      %v4143 = vpop.f32.mrb[0].mxu0
      %4144 = vmatprep.mubr.f32.mxu0 0.0
      %4145 = vmatmul.mubr.f32.gmra.mrb[0].mxu0 %v3960
      %v4146 = vpop.f32.mrb[0].mxu0
      %v4147 = vadd.f32 0.0, %v4146
      %v4148 = vpop.f32.mrb[0].mxu0
      %4149 = vmatprep.mubr.f32.mxu0 0.0
      %4150 = vmatmul.mubr.f32.gmra.mrb[0].mxu0 %v3963
      %v4151 = vpop.f32.mrb[0].mxu0
      %v4152 = vadd.f32 0.0, %v4151
      %v4153 = vpop.f32.mrb[0].mxu0
      %4154 = vmatprep.mubr.f32.mxu0 0.0
      %4155 = vmatmul.mubr.f32.gmra.mrb[0].mxu0 %v3966
      %v4156 = vpop.f32.mrb[0].mxu0
      %v4157 = vadd.f32 0.0, %v4156
      %v4158 = vpop.f32.mrb[0].mxu0
      %4159 = vmatprep.mubr.f32.mxu0 0.0
      %4160 = vmatmul.mubr.f32.gmra.mrb[0].mxu0 %v3969
      %v4161 = vpop.f32.mrb[0].mxu0
      %v4162 = vadd.f32 0.0, %v4161
      %v4163 = vpop.f32.mrb[0].mxu0
      %4164 = vmatprep.mubr.f32.mxu0 0.0
      %4165 = vmatmul.mubr.f32.gmra.mrb[0].mxu0 %v3972
      %v4166 = vpop.f32.mrb[0].mxu0
      %v4167 = vadd.f32 0.0, %v4166
      %v4168 = vpop.f32.mrb[0].mxu0
      %4169 = vmatprep.mubr.f32.mxu0 0.0
      %4170 = vmatmul.mubr.f32.gmra.mrb[0].mxu0 %v3975
      %v4171 = vpop.f32.mrb[0].mxu0
      %v4172 = vadd.f32 0.0, %v4171
      %v4173 = vpop.f32.mrb[0].mxu0
      %4174 = vmatprep.mubr.f32.mxu0 0.0
      %4175 = vmatmul.mubr.f32.gmra.mrb[0].mxu0 %v3978
      %v4176 = vpop.f32.mrb[0].mxu0
      %v4177 = vadd.f32 0.0, %v4176
      %v4178 = vpop.f32.mrb[0].mxu0
      %4179 = vmatprep.mubr.f32.mxu0 0.0
      %4180 = vmatmul.mubr.f32.gmra.mrb[0].mxu0 %v3981
      %v4181 = vpop.f32.mrb[0].mxu0
      %v4182 = vadd.f32 0.0, %v4181
      %v4183 = vpop.f32.mrb[0].mxu0
      %4184 = vmatprep.mubr.f32.mxu0 0.0
      %4185 = vmatmul.mubr.f32.gmra.mrb[0].mxu0 %v3984
      %v4186 = vpop.f32.mrb[0].mxu0
      %v4187 = vadd.f32 0.0, %v4186
      %v4188 = vpop.f32.mrb[0].mxu0
      %4189 = vmatprep.mubr.f32.mxu0 0.0
      %4190 = vmatmul.mubr.f32.gmra.mrb[0].mxu0 %v3987
      %v4191 = vpop.f32.mrb[0].mxu0
      %v4192 = vadd.f32 0.0, %v4191
      %v4193 = vpop.f32.mrb[0].mxu0
      %4194 = vmatprep.mubr.f32.mxu0 0.0
      %4195 = vmatmul.mubr.f32.gmra.mrb[0].mxu0 %v3990
      %v4196 = vpop.f32.mrb[0].mxu0
      %v4197 = vadd.f32 0.0, %v4196
      %v4198 = vpop.f32.mrb[0].mxu0
      %4199 = vmatprep.mubr.f32.mxu0 0.0
      %4200 = vmatmul.mubr.f32.gmra.mrb[0].mxu0 %v3993
      %v4201 = vpop.f32.mrb[0].mxu0
      %v4202 = vadd.f32 0.0, %v4201
      %v4203 = vpop.f32.mrb[0].mxu0
      %4204 = vmatprep.mubr.f32.mxu0 0.0
      %4205 = vmatmul.mubr.f32.gmra.mrb[0].mxu0 %v3996
      %v4206 = vpop.f32.mrb[0].mxu0
      %v4207 = vadd.f32 0.0, %v4206
      %v4208 = vpop.f32.mrb[0].mxu0
      %4209 = vmatprep.mubr.f32.mxu0 0.0
      %4210 = vmatmul.mubr.f32.gmra.mrb[0].mxu0 %v3999
      %v4211 = vpop.f32.mrb[0].mxu0
      %v4212 = vadd.f32 0.0, %v4211
      %v4213 = vpop.f32.mrb[0].mxu0
      %4214 = vmatprep.mubr.f32.mxu0 0.0
      %4215 = vmatmul.mubr.f32.gmra.mrb[0].mxu0 %v4002
      %v4216 = vpop.f32.mrb[0].mxu0
      %v4217 = vadd.f32 0.0, %v4216
      %v4218 = vpop.f32.mrb[0].mxu0
      %4219 = vmatprep.mubr.f32.mxu0 0.0
      %4220 = vmatmul.mubr.f32.gmra.mrb[0].mxu0 %v4005
      %v4221 = vpop.f32.mrb[0].mxu0
      %v4222 = vadd.f32 0.0, %v4221
      %v4223 = vpop.f32.mrb[0].mxu0
      %4224 = vmatprep.mubr.f32.mxu0 0.0
      %4225 = vmatmul.mubr.f32.gmra.mrb[0].mxu0 %v4008
      %v4226 = vpop.f32.mrb[0].mxu0
      %v4227 = vadd.f32 0.0, %v4226
      %v4228 = vpop.f32.mrb[0].mxu0
      %4229 = vmatprep.mubr.f32.mxu0 0.0
      %4230 = vmatmul.mubr.f32.gmra.mrb[0].mxu0 %v4011
      %v4231 = vpop.f32.mrb[0].mxu0
      %v4232 = vadd.f32 0.0, %v4231
      %v4233 = vpop.f32.mrb[0].mxu0
      %4234 = vmatprep.mubr.f32.mxu0 0.0
      %4235 = vmatmul.mubr.f32.gmra.mrb[0].mxu0 %v4014
      %v4236 = vpop.f32.mrb[0].mxu0
      %v4237 = vadd.f32 0.0, %v4236
      %v4238 = vpop.f32.mrb[0].mxu0
      %4239 = vmatprep.mubr.f32.mxu0 0.0
      %4240 = vmatmul.mubr.f32.gmra.mrb[0].mxu0 %v4017
      %v4241 = vpop.f32.mrb[0].mxu0
      %v4242 = vadd.f32 0.0, %v4241
      %v4243 = vpop.f32.mrb[0].mxu0
      %4244 = vmatprep.mubr.f32.mxu0 0.0
      %4245 = vmatmul.mubr.f32.gmra.mrb[0].mxu0 %v4020
      %v4246 = vpop.f32.mrb[0].mxu0
      %v4247 = vadd.f32 0.0, %v4246
      %v4248 = vpop.f32.mrb[0].mxu0
      %4249 = vmatprep.mubr.f32.mxu0 0.0
      %4250 = vmatmul.mubr.f32.gmra.mrb[0].mxu0 %v4023
      %v4251 = vpop.f32.mrb[0].mxu0
      %v4252 = vadd.f32 0.0, %v4251
      %v4253 = vpop.f32.mrb[0].mxu0
      %4254 = vmatprep.mubr.f32.mxu0 0.0
      %4255 = vmatmul.mubr.f32.gmra.mrb[0].mxu0 %v4026
      %v4256 = vpop.f32.mrb[0].mxu0
      %v4257 = vadd.f32 0.0, %v4256
      %v4258 = vpop.f32.mrb[0].mxu0
      %4259 = vmatprep.mubr.f32.mxu0 0.0
      %4260 = vmatmul.mubr.f32.gmra.mrb[0].mxu0 %v4029
      %v4261 = vpop.f32.mrb[0].mxu0
      %v4262 = vadd.f32 0.0, %v4261
      %v4263 = vpop.f32.mrb[0].mxu0
      %4264 = vmatprep.mubr.f32.mxu0 0.0
      %4265 = vmatmul.mubr.f32.gmra.mrb[0].mxu0 %v4032
      %v4266 = vpop.f32.mrb[0].mxu0
      %v4267 = vadd.f32 0.0, %v4266
      %v4268 = vpop.f32.mrb[0].mxu0
      %4269 = vmatprep.mubr.f32.mxu0 0.0
      %4270 = vmatmul.mubr.f32.gmra.mrb[0].mxu0 %v4035
      %v4271 = vpop.f32.mrb[0].mxu0
      %v4272 = vadd.f32 0.0, %v4271
      %v4273 = vpop.f32.mrb[0].mxu0
      %4274 = vmatprep.mubr.f32.mxu0 0.0
      %4275 = vmatmul.mubr.f32.gmra.mrb[0].mxu0 %v4038
      %v4276 = vpop.f32.mrb[0].mxu0
      %v4277 = vadd.f32 0.0, %v4276
      %v4278 = vpop.f32.mrb[0].mxu0
      %4279 = vmatprep.mubr.f32.mxu0 0.0
      %4280 = vmatmul.mubr.f32.gmra.mrb[0].mxu0 %v4041
      %v4281 = vpop.f32.mrb[0].mxu0
      %v4282 = vadd.f32 0.0, %v4281
      %v4283 = vpop.f32.mrb[0].mxu0
      %4284 = vmatprep.mubr.f32.mxu0 0.0
      %4285 = vmatmul.mubr.f32.gmra.mrb[0].mxu0 %v4044
      %v4286 = vpop.f32.mrb[0].mxu0
      %v4287 = vadd.f32 0.0, %v4286
      %v4288 = vpop.f32.mrb[0].mxu0
      %4289 = vmatprep.mubr.f32.mxu0 0.0
      %4290 = vmatmul.mubr.f32.gmra.mrb[0].mxu0 %v4047
      %v4291 = vpop.f32.mrb[0].mxu0
      %v4292 = vadd.f32 0.0, %v4291
      %v4293 = vpop.f32.mrb[0].mxu0
      %4294 = vmatprep.mubr.f32.mxu0 0.0
      %4295 = vmatmul.mubr.f32.gmra.mrb[0].mxu0 %v4050
      %v4296 = vpop.f32.mrb[0].mxu0
      %v4297 = vadd.f32 0.0, %v4296
      %v4298 = vpop.f32.mrb[0].mxu0
      %4299 = vdwg.mxu0
      %v4300 = vadd.f32 %v3870, %v4122
      %v4301 = vadd.f32 %v3871, %v4127
      %v4302 = vadd.f32 %v3872, %v4132
      %v4303 = vadd.f32 %v3873, %v4137
      %v4304 = vadd.f32 %v3874, %v4142
      %v4305 = vadd.f32 %v3875, %v4147
      %v4306 = vadd.f32 %v3876, %v4152
      %v4307 = vadd.f32 %v3877, %v4157
      %v4308 = vadd.f32 %v3878, %v4162
      %v4309 = vadd.f32 %v3879, %v4167
      %v4310 = vadd.f32 %v3880, %v4172
      %v4311 = vadd.f32 %v3881, %v4177
      %v4312 = vadd.f32 %v3882, %v4182
      %v4313 = vadd.f32 %v3883, %v4187
      %v4314 = vadd.f32 %v3884, %v4192
      %v4315 = vadd.f32 %v3885, %v4197
      %v4316 = vadd.f32 %v3886, %v4202
      %v4317 = vadd.f32 %v3887, %v4207
      %v4318 = vadd.f32 %v3888, %v4212
      %v4319 = vadd.f32 %v3889, %v4217
      %v4320 = vadd.f32 %v3890, %v4222
      %v4321 = vadd.f32 %v3891, %v4227
      %v4322 = vadd.f32 %v3892, %v4232
      %v4323 = vadd.f32 %v3893, %v4237
      %v4324 = vadd.f32 %v3894, %v4242
      %v4325 = vadd.f32 %v3895, %v4247
      %v4326 = vadd.f32 %v3896, %v4252
      %v4327 = vadd.f32 %v3897, %v4257
      %v4328 = vadd.f32 %v3898, %v4262
      %v4329 = vadd.f32 %v3899, %v4267
      %v4330 = vadd.f32 %v3900, %v4272
      %v4331 = vadd.f32 %v3901, %v4277
      %v4332 = vadd.f32 %v3902, %v4282
      %v4333 = vadd.f32 %v3903, %v4287
      %v4334 = vadd.f32 %v3904, %v4292
      %v4335 = vadd.f32 %v3905, %v4297
      %v4336 = vld [vmem:[#allocation2 + $0x25] sm:$0xff]
      %v4337 = vld [vmem:[#allocation2 + $0x2d] sm:$0xff]
      %v4338 = vld [vmem:[#allocation2 + $0x35] sm:$0xff]
      %v4339 = vld [vmem:[#allocation2 + $0x3d] sm:$0xff]
      %v4340 = vld [vmem:[#allocation2 + $0x45] sm:$0xff]
      %v4341 = vld [vmem:[#allocation2 + $0x4d] sm:$0xff]
      %v4342 = vld [vmem:[#allocation2 + $0x55] sm:$0xff]
      %v4343 = vld [vmem:[#allocation2 + $0x5d] sm:$0xff]
      %v4344 = vld [vmem:[#allocation2 + $0x65] sm:$0xff]
      %v4345 = vld [vmem:[#allocation2 + $0x6d] sm:$0xff]
      %v4346 = vld [vmem:[#allocation2 + $0x75] sm:$0xff]
      %v4347 = vld [vmem:[#allocation2 + $0x7d] sm:$0xff]
      %v4348 = vld [vmem:[#allocation2 + $0x85] sm:$0xff]
      %v4349 = vld [vmem:[#allocation2 + $0x8d] sm:$0xff]
      %v4350 = vld [vmem:[#allocation2 + $0x95] sm:$0xff]
      %v4351 = vld [vmem:[#allocation2 + $0x9d] sm:$0xff]
      %v4352 = vld [vmem:[#allocation2 + $0xa5] sm:$0xff]
      %v4353 = vld [vmem:[#allocation2 + $0xad] sm:$0xff]
      %v4354 = vld [vmem:[#allocation2 + $0xb5] sm:$0xff]
      %v4355 = vld [vmem:[#allocation2 + $0xbd] sm:$0xff]
      %v4356 = vld [vmem:[#allocation2 + $0xc5] sm:$0xff]
      %v4357 = vld [vmem:[#allocation2 + $0xcd] sm:$0xff]
      %v4358 = vld [vmem:[#allocation2 + $0xd5] sm:$0xff]
      %v4359 = vld [vmem:[#allocation2 + $0xdd] sm:$0xff]
      %v4360 = vld [vmem:[#allocation2 + $0xe5] sm:$0xff]
      %v4361 = vld [vmem:[#allocation2 + $0xed] sm:$0xff]
      %v4362 = vld [vmem:[#allocation2 + $0xf5] sm:$0xff]
      %v4363 = vld [vmem:[#allocation2 + $0xfd] sm:$0xff]
      %v4364 = vld [vmem:[#allocation2 + $0x105] sm:$0xff]
      %v4365 = vld [vmem:[#allocation2 + $0x10d] sm:$0xff]
      %v4366 = vld [vmem:[#allocation2 + $0x115] sm:$0xff]
      %v4367 = vld [vmem:[#allocation2 + $0x11d] sm:$0xff]
      %v4368 = vld [vmem:[#allocation2 + $0x125] sm:$0xff]
      %v4369 = vld [vmem:[#allocation2 + $0x12d] sm:$0xff]
      %v4370 = vld [vmem:[#allocation2 + $0x135] sm:$0xff]
      %v4371 = vld [vmem:[#allocation2 + $0x13d] sm:$0xff]
      %s4372 = scalar_lea.vmem %s1, 28
      %v4373 = vld [vmem:[%s4372] sm:$0xf]
      %v4375 = vsel %vm916, %v4336, 0
      %v4378 = vsel %vm916, %v4337, 0
      %v4381 = vsel %vm916, %v4338, 0
      %v4384 = vsel %vm916, %v4339, 0
      %v4387 = vsel %vm916, %v4340, 0
      %v4390 = vsel %vm916, %v4341, 0
      %v4393 = vsel %vm916, %v4342, 0
      %v4396 = vsel %vm916, %v4343, 0
      %v4399 = vsel %vm916, %v4344, 0
      %v4402 = vsel %vm916, %v4345, 0
      %v4405 = vsel %vm916, %v4346, 0
      %v4408 = vsel %vm916, %v4347, 0
      %v4411 = vsel %vm916, %v4348, 0
      %v4414 = vsel %vm916, %v4349, 0
      %v4417 = vsel %vm916, %v4350, 0
      %v4420 = vsel %vm916, %v4351, 0
      %v4423 = vsel %vm916, %v4352, 0
      %v4426 = vsel %vm916, %v4353, 0
      %v4429 = vsel %vm916, %v4354, 0
      %v4432 = vsel %vm916, %v4355, 0
      %v4435 = vsel %vm916, %v4356, 0
      %v4438 = vsel %vm916, %v4357, 0
      %v4441 = vsel %vm916, %v4358, 0
      %v4444 = vsel %vm916, %v4359, 0
      %v4447 = vsel %vm916, %v4360, 0
      %v4450 = vsel %vm916, %v4361, 0
      %v4453 = vsel %vm916, %v4362, 0
      %v4456 = vsel %vm916, %v4363, 0
      %v4459 = vsel %vm916, %v4364, 0
      %v4462 = vsel %vm916, %v4365, 0
      %v4465 = vsel %vm916, %v4366, 0
      %v4468 = vsel %vm916, %v4367, 0
      %v4471 = vsel %vm916, %v4368, 0
      %v4474 = vsel %vm916, %v4369, 0
      %v4477 = vsel %vm916, %v4370, 0
      %v4480 = vsel %vm916, %v4371, 0
      %v4483 = vsel %vm1581, %v4373, 0
      %4485 = vmatprep.subr.mxu0 0.0
      %4486 = vmatpush1.msra.mxu0 %v4483
      %4487 = vmatprep.subr.mxu0 0.0
      %4488 = vmatpush1.msra.mxu0 0.0
      %4489 = vmatprep.subr.mxu0 0.0
      %4490 = vmatpush1.msra.mxu0 0.0
      %4491 = vmatprep.subr.mxu0 0.0
      %4492 = vmatpush1.msra.mxu0 0.0
      %4493 = vmatprep.subr.mxu0 0.0
      %4494 = vmatpush1.msra.mxu0 0.0
      %4495 = vmatprep.subr.mxu0 0.0
      %4496 = vmatpush1.msra.mxu0 0.0
      %4497 = vmatprep.subr.mxu0 0.0
      %4498 = vmatpush1.msra.mxu0 0.0
      %4499 = vmatprep.subr.mxu0 0.0
      %4500 = vmatpush1.msra.mxu0 0.0
      %4501 = vmatprep.subr.mxu0 0.0
      %4502 = vmatpush1.msra.mxu0 0.0
      %4503 = vmatprep.subr.mxu0 0.0
      %4504 = vmatpush1.msra.mxu0 0.0
      %4505 = vmatprep.subr.mxu0 0.0
      %4506 = vmatpush1.msra.mxu0 0.0
      %4507 = vmatprep.subr.mxu0 0.0
      %4508 = vmatpush1.msra.mxu0 0.0
      %4509 = vmatprep.subr.mxu0 0.0
      %4510 = vmatpush1.msra.mxu0 0.0
      %4511 = vmatprep.subr.mxu0 0.0
      %4512 = vmatpush1.msra.mxu0 0.0
      %4513 = vmatprep.subr.mxu0 0.0
      %4514 = vmatpush1.msra.mxu0 0.0
      %4515 = vmatprep.subr.mxu0 0.0
      %4516 = vmatpush1.msra.mxu0 0.0
      %4517 = vmatprep.subr.mxu0 0.0
      %4518 = vmatpush1.msra.mxu0 0.0
      %4519 = vmatprep.subr.mxu0 0.0
      %4520 = vmatpush1.msra.mxu0 0.0
      %4521 = vmatprep.subr.mxu0 0.0
      %4522 = vmatpush1.msra.mxu0 0.0
      %4523 = vmatprep.subr.mxu0 0.0
      %4524 = vmatpush1.msra.mxu0 0.0
      %4525 = vmatprep.subr.mxu0 0.0
      %4526 = vmatpush1.msra.mxu0 0.0
      %4527 = vmatprep.subr.mxu0 0.0
      %4528 = vmatpush1.msra.mxu0 0.0
      %4529 = vmatprep.subr.mxu0 0.0
      %4530 = vmatpush1.msra.mxu0 0.0
      %4531 = vmatprep.subr.mxu0 0.0
      %4532 = vmatpush1.msra.mxu0 0.0
      %4533 = vmatprep.subr.mxu0 0.0
      %4534 = vmatpush1.msra.mxu0 0.0
      %4535 = vmatprep.subr.mxu0 0.0
      %4536 = vmatpush1.msra.mxu0 0.0
      %4537 = vmatprep.subr.mxu0 0.0
      %4538 = vmatpush1.msra.mxu0 0.0
      %4539 = vmatprep.subr.mxu0 0.0
      %4540 = vmatpush1.msra.mxu0 0.0
      %4541 = vmatprep.subr.mxu0 0.0
      %4542 = vmatpush1.msra.mxu0 0.0
      %4543 = vmatprep.subr.mxu0 0.0
      %4544 = vmatpush1.msra.mxu0 0.0
      %4545 = vmatprep.subr.mxu0 0.0
      %4546 = vmatpush1.msra.mxu0 0.0
      %4547 = vmatprep.subr.mxu0 0.0
      %4548 = vmatpush1.msra.mxu0 0.0
      %4549 = vmatprep.mubr.f32.mxu0 0.0
      %4550 = vmatmul.mubr.f32.gmra.mrb[0].mxu0 %v4375
      %v4551 = vpop.f32.mrb[0].mxu0
      %v4552 = vadd.f32 0.0, %v4551
      %v4553 = vpop.f32.mrb[0].mxu0
      %4554 = vmatprep.mubr.f32.mxu0 0.0
      %4555 = vmatmul.mubr.f32.gmra.mrb[0].mxu0 %v4378
      %v4556 = vpop.f32.mrb[0].mxu0
      %v4557 = vadd.f32 0.0, %v4556
      %v4558 = vpop.f32.mrb[0].mxu0
      %4559 = vmatprep.mubr.f32.mxu0 0.0
      %4560 = vmatmul.mubr.f32.gmra.mrb[0].mxu0 %v4381
      %v4561 = vpop.f32.mrb[0].mxu0
      %v4562 = vadd.f32 0.0, %v4561
      %v4563 = vpop.f32.mrb[0].mxu0
      %4564 = vmatprep.mubr.f32.mxu0 0.0
      %4565 = vmatmul.mubr.f32.gmra.mrb[0].mxu0 %v4384
      %v4566 = vpop.f32.mrb[0].mxu0
      %v4567 = vadd.f32 0.0, %v4566
      %v4568 = vpop.f32.mrb[0].mxu0
      %4569 = vmatprep.mubr.f32.mxu0 0.0
      %4570 = vmatmul.mubr.f32.gmra.mrb[0].mxu0 %v4387
      %v4571 = vpop.f32.mrb[0].mxu0
      %v4572 = vadd.f32 0.0, %v4571
      %v4573 = vpop.f32.mrb[0].mxu0
      %4574 = vmatprep.mubr.f32.mxu0 0.0
      %4575 = vmatmul.mubr.f32.gmra.mrb[0].mxu0 %v4390
      %v4576 = vpop.f32.mrb[0].mxu0
      %v4577 = vadd.f32 0.0, %v4576
      %v4578 = vpop.f32.mrb[0].mxu0
      %4579 = vmatprep.mubr.f32.mxu0 0.0
      %4580 = vmatmul.mubr.f32.gmra.mrb[0].mxu0 %v4393
      %v4581 = vpop.f32.mrb[0].mxu0
      %v4582 = vadd.f32 0.0, %v4581
      %v4583 = vpop.f32.mrb[0].mxu0
      %4584 = vmatprep.mubr.f32.mxu0 0.0
      %4585 = vmatmul.mubr.f32.gmra.mrb[0].mxu0 %v4396
      %v4586 = vpop.f32.mrb[0].mxu0
      %v4587 = vadd.f32 0.0, %v4586
      %v4588 = vpop.f32.mrb[0].mxu0
      %4589 = vmatprep.mubr.f32.mxu0 0.0
      %4590 = vmatmul.mubr.f32.gmra.mrb[0].mxu0 %v4399
      %v4591 = vpop.f32.mrb[0].mxu0
      %v4592 = vadd.f32 0.0, %v4591
      %v4593 = vpop.f32.mrb[0].mxu0
      %4594 = vmatprep.mubr.f32.mxu0 0.0
      %4595 = vmatmul.mubr.f32.gmra.mrb[0].mxu0 %v4402
      %v4596 = vpop.f32.mrb[0].mxu0
      %v4597 = vadd.f32 0.0, %v4596
      %v4598 = vpop.f32.mrb[0].mxu0
      %4599 = vmatprep.mubr.f32.mxu0 0.0
      %4600 = vmatmul.mubr.f32.gmra.mrb[0].mxu0 %v4405
      %v4601 = vpop.f32.mrb[0].mxu0
      %v4602 = vadd.f32 0.0, %v4601
      %v4603 = vpop.f32.mrb[0].mxu0
      %4604 = vmatprep.mubr.f32.mxu0 0.0
      %4605 = vmatmul.mubr.f32.gmra.mrb[0].mxu0 %v4408
      %v4606 = vpop.f32.mrb[0].mxu0
      %v4607 = vadd.f32 0.0, %v4606
      %v4608 = vpop.f32.mrb[0].mxu0
      %4609 = vmatprep.mubr.f32.mxu0 0.0
      %4610 = vmatmul.mubr.f32.gmra.mrb[0].mxu0 %v4411
      %v4611 = vpop.f32.mrb[0].mxu0
      %v4612 = vadd.f32 0.0, %v4611
      %v4613 = vpop.f32.mrb[0].mxu0
      %4614 = vmatprep.mubr.f32.mxu0 0.0
      %4615 = vmatmul.mubr.f32.gmra.mrb[0].mxu0 %v4414
      %v4616 = vpop.f32.mrb[0].mxu0
      %v4617 = vadd.f32 0.0, %v4616
      %v4618 = vpop.f32.mrb[0].mxu0
      %4619 = vmatprep.mubr.f32.mxu0 0.0
      %4620 = vmatmul.mubr.f32.gmra.mrb[0].mxu0 %v4417
      %v4621 = vpop.f32.mrb[0].mxu0
      %v4622 = vadd.f32 0.0, %v4621
      %v4623 = vpop.f32.mrb[0].mxu0
      %4624 = vmatprep.mubr.f32.mxu0 0.0
      %4625 = vmatmul.mubr.f32.gmra.mrb[0].mxu0 %v4420
      %v4626 = vpop.f32.mrb[0].mxu0
      %v4627 = vadd.f32 0.0, %v4626
      %v4628 = vpop.f32.mrb[0].mxu0
      %4629 = vmatprep.mubr.f32.mxu0 0.0
      %4630 = vmatmul.mubr.f32.gmra.mrb[0].mxu0 %v4423
      %v4631 = vpop.f32.mrb[0].mxu0
      %v4632 = vadd.f32 0.0, %v4631
      %v4633 = vpop.f32.mrb[0].mxu0
      %4634 = vmatprep.mubr.f32.mxu0 0.0
      %4635 = vmatmul.mubr.f32.gmra.mrb[0].mxu0 %v4426
      %v4636 = vpop.f32.mrb[0].mxu0
      %v4637 = vadd.f32 0.0, %v4636
      %v4638 = vpop.f32.mrb[0].mxu0
      %4639 = vmatprep.mubr.f32.mxu0 0.0
      %4640 = vmatmul.mubr.f32.gmra.mrb[0].mxu0 %v4429
      %v4641 = vpop.f32.mrb[0].mxu0
      %v4642 = vadd.f32 0.0, %v4641
      %v4643 = vpop.f32.mrb[0].mxu0
      %4644 = vmatprep.mubr.f32.mxu0 0.0
      %4645 = vmatmul.mubr.f32.gmra.mrb[0].mxu0 %v4432
      %v4646 = vpop.f32.mrb[0].mxu0
      %v4647 = vadd.f32 0.0, %v4646
      %v4648 = vpop.f32.mrb[0].mxu0
      %4649 = vmatprep.mubr.f32.mxu0 0.0
      %4650 = vmatmul.mubr.f32.gmra.mrb[0].mxu0 %v4435
      %v4651 = vpop.f32.mrb[0].mxu0
      %v4652 = vadd.f32 0.0, %v4651
      %v4653 = vpop.f32.mrb[0].mxu0
      %4654 = vmatprep.mubr.f32.mxu0 0.0
      %4655 = vmatmul.mubr.f32.gmra.mrb[0].mxu0 %v4438
      %v4656 = vpop.f32.mrb[0].mxu0
      %v4657 = vadd.f32 0.0, %v4656
      %v4658 = vpop.f32.mrb[0].mxu0
      %4659 = vmatprep.mubr.f32.mxu0 0.0
      %4660 = vmatmul.mubr.f32.gmra.mrb[0].mxu0 %v4441
      %v4661 = vpop.f32.mrb[0].mxu0
      %v4662 = vadd.f32 0.0, %v4661
      %v4663 = vpop.f32.mrb[0].mxu0
      %4664 = vmatprep.mubr.f32.mxu0 0.0
      %4665 = vmatmul.mubr.f32.gmra.mrb[0].mxu0 %v4444
      %v4666 = vpop.f32.mrb[0].mxu0
      %v4667 = vadd.f32 0.0, %v4666
      %v4668 = vpop.f32.mrb[0].mxu0
      %4669 = vmatprep.mubr.f32.mxu0 0.0
      %4670 = vmatmul.mubr.f32.gmra.mrb[0].mxu0 %v4447
      %v4671 = vpop.f32.mrb[0].mxu0
      %v4672 = vadd.f32 0.0, %v4671
      %v4673 = vpop.f32.mrb[0].mxu0
      %4674 = vmatprep.mubr.f32.mxu0 0.0
      %4675 = vmatmul.mubr.f32.gmra.mrb[0].mxu0 %v4450
      %v4676 = vpop.f32.mrb[0].mxu0
      %v4677 = vadd.f32 0.0, %v4676
      %v4678 = vpop.f32.mrb[0].mxu0
      %4679 = vmatprep.mubr.f32.mxu0 0.0
      %4680 = vmatmul.mubr.f32.gmra.mrb[0].mxu0 %v4453
      %v4681 = vpop.f32.mrb[0].mxu0
      %v4682 = vadd.f32 0.0, %v4681
      %v4683 = vpop.f32.mrb[0].mxu0
      %4684 = vmatprep.mubr.f32.mxu0 0.0
      %4685 = vmatmul.mubr.f32.gmra.mrb[0].mxu0 %v4456
      %v4686 = vpop.f32.mrb[0].mxu0
      %v4687 = vadd.f32 0.0, %v4686
      %v4688 = vpop.f32.mrb[0].mxu0
      %4689 = vmatprep.mubr.f32.mxu0 0.0
      %4690 = vmatmul.mubr.f32.gmra.mrb[0].mxu0 %v4459
      %v4691 = vpop.f32.mrb[0].mxu0
      %v4692 = vadd.f32 0.0, %v4691
      %v4693 = vpop.f32.mrb[0].mxu0
      %4694 = vmatprep.mubr.f32.mxu0 0.0
      %4695 = vmatmul.mubr.f32.gmra.mrb[0].mxu0 %v4462
      %v4696 = vpop.f32.mrb[0].mxu0
      %v4697 = vadd.f32 0.0, %v4696
      %v4698 = vpop.f32.mrb[0].mxu0
      %4699 = vmatprep.mubr.f32.mxu0 0.0
      %4700 = vmatmul.mubr.f32.gmra.mrb[0].mxu0 %v4465
      %v4701 = vpop.f32.mrb[0].mxu0
      %v4702 = vadd.f32 0.0, %v4701
      %v4703 = vpop.f32.mrb[0].mxu0
      %4704 = vmatprep.mubr.f32.mxu0 0.0
      %4705 = vmatmul.mubr.f32.gmra.mrb[0].mxu0 %v4468
      %v4706 = vpop.f32.mrb[0].mxu0
      %v4707 = vadd.f32 0.0, %v4706
      %v4708 = vpop.f32.mrb[0].mxu0
      %4709 = vmatprep.mubr.f32.mxu0 0.0
      %4710 = vmatmul.mubr.f32.gmra.mrb[0].mxu0 %v4471
      %v4711 = vpop.f32.mrb[0].mxu0
      %v4712 = vadd.f32 0.0, %v4711
      %v4713 = vpop.f32.mrb[0].mxu0
      %4714 = vmatprep.mubr.f32.mxu0 0.0
      %4715 = vmatmul.mubr.f32.gmra.mrb[0].mxu0 %v4474
      %v4716 = vpop.f32.mrb[0].mxu0
      %v4717 = vadd.f32 0.0, %v4716
      %v4718 = vpop.f32.mrb[0].mxu0
      %4719 = vmatprep.mubr.f32.mxu0 0.0
      %4720 = vmatmul.mubr.f32.gmra.mrb[0].mxu0 %v4477
      %v4721 = vpop.f32.mrb[0].mxu0
      %v4722 = vadd.f32 0.0, %v4721
      %v4723 = vpop.f32.mrb[0].mxu0
      %4724 = vmatprep.mubr.f32.mxu0 0.0
      %4725 = vmatmul.mubr.f32.gmra.mrb[0].mxu0 %v4480
      %v4726 = vpop.f32.mrb[0].mxu0
      %v4727 = vadd.f32 0.0, %v4726
      %v4728 = vpop.f32.mrb[0].mxu0
      %4729 = vdwg.mxu0
      %v4730 = vadd.f32 %v4300, %v4552
      %v4731 = vadd.f32 %v4301, %v4557
      %v4732 = vadd.f32 %v4302, %v4562
      %v4733 = vadd.f32 %v4303, %v4567
      %v4734 = vadd.f32 %v4304, %v4572
      %v4735 = vadd.f32 %v4305, %v4577
      %v4736 = vadd.f32 %v4306, %v4582
      %v4737 = vadd.f32 %v4307, %v4587
      %v4738 = vadd.f32 %v4308, %v4592
      %v4739 = vadd.f32 %v4309, %v4597
      %v4740 = vadd.f32 %v4310, %v4602
      %v4741 = vadd.f32 %v4311, %v4607
      %v4742 = vadd.f32 %v4312, %v4612
      %v4743 = vadd.f32 %v4313, %v4617
      %v4744 = vadd.f32 %v4314, %v4622
      %v4745 = vadd.f32 %v4315, %v4627
      %v4746 = vadd.f32 %v4316, %v4632
      %v4747 = vadd.f32 %v4317, %v4637
      %v4748 = vadd.f32 %v4318, %v4642
      %v4749 = vadd.f32 %v4319, %v4647
      %v4750 = vadd.f32 %v4320, %v4652
      %v4751 = vadd.f32 %v4321, %v4657
      %v4752 = vadd.f32 %v4322, %v4662
      %v4753 = vadd.f32 %v4323, %v4667
      %v4754 = vadd.f32 %v4324, %v4672
      %v4755 = vadd.f32 %v4325, %v4677
      %v4756 = vadd.f32 %v4326, %v4682
      %v4757 = vadd.f32 %v4327, %v4687
      %v4758 = vadd.f32 %v4328, %v4692
      %v4759 = vadd.f32 %v4329, %v4697
      %v4760 = vadd.f32 %v4330, %v4702
      %v4761 = vadd.f32 %v4331, %v4707
      %v4762 = vadd.f32 %v4332, %v4712
      %v4763 = vadd.f32 %v4333, %v4717
      %v4764 = vadd.f32 %v4334, %v4722
      %v4765 = vadd.f32 %v4335, %v4727
      %v4766 = vld [vmem:[#allocation2 + $0x26] sm:$0xff]
      %v4767 = vld [vmem:[#allocation2 + $0x2e] sm:$0xff]
      %v4768 = vld [vmem:[#allocation2 + $0x36] sm:$0xff]
      %v4769 = vld [vmem:[#allocation2 + $0x3e] sm:$0xff]
      %v4770 = vld [vmem:[#allocation2 + $0x46] sm:$0xff]
      %v4771 = vld [vmem:[#allocation2 + $0x4e] sm:$0xff]
      %v4772 = vld [vmem:[#allocation2 + $0x56] sm:$0xff]
      %v4773 = vld [vmem:[#allocation2 + $0x5e] sm:$0xff]
      %v4774 = vld [vmem:[#allocation2 + $0x66] sm:$0xff]
      %v4775 = vld [vmem:[#allocation2 + $0x6e] sm:$0xff]
      %v4776 = vld [vmem:[#allocation2 + $0x76] sm:$0xff]
      %v4777 = vld [vmem:[#allocation2 + $0x7e] sm:$0xff]
      %v4778 = vld [vmem:[#allocation2 + $0x86] sm:$0xff]
      %v4779 = vld [vmem:[#allocation2 + $0x8e] sm:$0xff]
      %v4780 = vld [vmem:[#allocation2 + $0x96] sm:$0xff]
      %v4781 = vld [vmem:[#allocation2 + $0x9e] sm:$0xff]
      %v4782 = vld [vmem:[#allocation2 + $0xa6] sm:$0xff]
      %v4783 = vld [vmem:[#allocation2 + $0xae] sm:$0xff]
      %v4784 = vld [vmem:[#allocation2 + $0xb6] sm:$0xff]
      %v4785 = vld [vmem:[#allocation2 + $0xbe] sm:$0xff]
      %v4786 = vld [vmem:[#allocation2 + $0xc6] sm:$0xff]
      %v4787 = vld [vmem:[#allocation2 + $0xce] sm:$0xff]
      %v4788 = vld [vmem:[#allocation2 + $0xd6] sm:$0xff]
      %v4789 = vld [vmem:[#allocation2 + $0xde] sm:$0xff]
      %v4790 = vld [vmem:[#allocation2 + $0xe6] sm:$0xff]
      %v4791 = vld [vmem:[#allocation2 + $0xee] sm:$0xff]
      %v4792 = vld [vmem:[#allocation2 + $0xf6] sm:$0xff]
      %v4793 = vld [vmem:[#allocation2 + $0xfe] sm:$0xff]
      %v4794 = vld [vmem:[#allocation2 + $0x106] sm:$0xff]
      %v4795 = vld [vmem:[#allocation2 + $0x10e] sm:$0xff]
      %v4796 = vld [vmem:[#allocation2 + $0x116] sm:$0xff]
      %v4797 = vld [vmem:[#allocation2 + $0x11e] sm:$0xff]
      %v4798 = vld [vmem:[#allocation2 + $0x126] sm:$0xff]
      %v4799 = vld [vmem:[#allocation2 + $0x12e] sm:$0xff]
      %v4800 = vld [vmem:[#allocation2 + $0x136] sm:$0xff]
      %v4801 = vld [vmem:[#allocation2 + $0x13e] sm:$0xff]
      %s4802 = scalar_lea.vmem %s1, 32
      %v4803 = vld [vmem:[%s4802] sm:$0xf]
      %v4805 = vsel %vm916, %v4766, 0
      %v4808 = vsel %vm916, %v4767, 0
      %v4811 = vsel %vm916, %v4768, 0
      %v4814 = vsel %vm916, %v4769, 0
      %v4817 = vsel %vm916, %v4770, 0
      %v4820 = vsel %vm916, %v4771, 0
      %v4823 = vsel %vm916, %v4772, 0
      %v4826 = vsel %vm916, %v4773, 0
      %v4829 = vsel %vm916, %v4774, 0
      %v4832 = vsel %vm916, %v4775, 0
      %v4835 = vsel %vm916, %v4776, 0
      %v4838 = vsel %vm916, %v4777, 0
      %v4841 = vsel %vm916, %v4778, 0
      %v4844 = vsel %vm916, %v4779, 0
      %v4847 = vsel %vm916, %v4780, 0
      %v4850 = vsel %vm916, %v4781, 0
      %v4853 = vsel %vm916, %v4782, 0
      %v4856 = vsel %vm916, %v4783, 0
      %v4859 = vsel %vm916, %v4784, 0
      %v4862 = vsel %vm916, %v4785, 0
      %v4865 = vsel %vm916, %v4786, 0
      %v4868 = vsel %vm916, %v4787, 0
      %v4871 = vsel %vm916, %v4788, 0
      %v4874 = vsel %vm916, %v4789, 0
      %v4877 = vsel %vm916, %v4790, 0
      %v4880 = vsel %vm916, %v4791, 0
      %v4883 = vsel %vm916, %v4792, 0
      %v4886 = vsel %vm916, %v4793, 0
      %v4889 = vsel %vm916, %v4794, 0
      %v4892 = vsel %vm916, %v4795, 0
      %v4895 = vsel %vm916, %v4796, 0
      %v4898 = vsel %vm916, %v4797, 0
      %v4901 = vsel %vm916, %v4798, 0
      %v4904 = vsel %vm916, %v4799, 0
      %v4907 = vsel %vm916, %v4800, 0
      %v4910 = vsel %vm916, %v4801, 0
      %v4913 = vsel %vm1581, %v4803, 0
      %4915 = vmatprep.subr.mxu0 0.0
      %4916 = vmatpush1.msra.mxu0 %v4913
      %4917 = vmatprep.subr.mxu0 0.0
      %4918 = vmatpush1.msra.mxu0 0.0
      %4919 = vmatprep.subr.mxu0 0.0
      %4920 = vmatpush1.msra.mxu0 0.0
      %4921 = vmatprep.subr.mxu0 0.0
      %4922 = vmatpush1.msra.mxu0 0.0
      %4923 = vmatprep.subr.mxu0 0.0
      %4924 = vmatpush1.msra.mxu0 0.0
      %4925 = vmatprep.subr.mxu0 0.0
      %4926 = vmatpush1.msra.mxu0 0.0
      %4927 = vmatprep.subr.mxu0 0.0
      %4928 = vmatpush1.msra.mxu0 0.0
      %4929 = vmatprep.subr.mxu0 0.0
      %4930 = vmatpush1.msra.mxu0 0.0
      %4931 = vmatprep.subr.mxu0 0.0
      %4932 = vmatpush1.msra.mxu0 0.0
      %4933 = vmatprep.subr.mxu0 0.0
      %4934 = vmatpush1.msra.mxu0 0.0
      %4935 = vmatprep.subr.mxu0 0.0
      %4936 = vmatpush1.msra.mxu0 0.0
      %4937 = vmatprep.subr.mxu0 0.0
      %4938 = vmatpush1.msra.mxu0 0.0
      %4939 = vmatprep.subr.mxu0 0.0
      %4940 = vmatpush1.msra.mxu0 0.0
      %4941 = vmatprep.subr.mxu0 0.0
      %4942 = vmatpush1.msra.mxu0 0.0
      %4943 = vmatprep.subr.mxu0 0.0
      %4944 = vmatpush1.msra.mxu0 0.0
      %4945 = vmatprep.subr.mxu0 0.0
      %4946 = vmatpush1.msra.mxu0 0.0
      %4947 = vmatprep.subr.mxu0 0.0
      %4948 = vmatpush1.msra.mxu0 0.0
      %4949 = vmatprep.subr.mxu0 0.0
      %4950 = vmatpush1.msra.mxu0 0.0
      %4951 = vmatprep.subr.mxu0 0.0
      %4952 = vmatpush1.msra.mxu0 0.0
      %4953 = vmatprep.subr.mxu0 0.0
      %4954 = vmatpush1.msra.mxu0 0.0
      %4955 = vmatprep.subr.mxu0 0.0
      %4956 = vmatpush1.msra.mxu0 0.0
      %4957 = vmatprep.subr.mxu0 0.0
      %4958 = vmatpush1.msra.mxu0 0.0
      %4959 = vmatprep.subr.mxu0 0.0
      %4960 = vmatpush1.msra.mxu0 0.0
      %4961 = vmatprep.subr.mxu0 0.0
      %4962 = vmatpush1.msra.mxu0 0.0
      %4963 = vmatprep.subr.mxu0 0.0
      %4964 = vmatpush1.msra.mxu0 0.0
      %4965 = vmatprep.subr.mxu0 0.0
      %4966 = vmatpush1.msra.mxu0 0.0
      %4967 = vmatprep.subr.mxu0 0.0
      %4968 = vmatpush1.msra.mxu0 0.0
      %4969 = vmatprep.subr.mxu0 0.0
      %4970 = vmatpush1.msra.mxu0 0.0
      %4971 = vmatprep.subr.mxu0 0.0
      %4972 = vmatpush1.msra.mxu0 0.0
      %4973 = vmatprep.subr.mxu0 0.0
      %4974 = vmatpush1.msra.mxu0 0.0
      %4975 = vmatprep.subr.mxu0 0.0
      %4976 = vmatpush1.msra.mxu0 0.0
      %4977 = vmatprep.subr.mxu0 0.0
      %4978 = vmatpush1.msra.mxu0 0.0
      %4979 = vmatprep.mubr.f32.mxu0 0.0
      %4980 = vmatmul.mubr.f32.gmra.mrb[0].mxu0 %v4805
      %v4981 = vpop.f32.mrb[0].mxu0
      %v4982 = vadd.f32 0.0, %v4981
      %v4983 = vpop.f32.mrb[0].mxu0
      %4984 = vmatprep.mubr.f32.mxu0 0.0
      %4985 = vmatmul.mubr.f32.gmra.mrb[0].mxu0 %v4808
      %v4986 = vpop.f32.mrb[0].mxu0
      %v4987 = vadd.f32 0.0, %v4986
      %v4988 = vpop.f32.mrb[0].mxu0
      %4989 = vmatprep.mubr.f32.mxu0 0.0
      %4990 = vmatmul.mubr.f32.gmra.mrb[0].mxu0 %v4811
      %v4991 = vpop.f32.mrb[0].mxu0
      %v4992 = vadd.f32 0.0, %v4991
      %v4993 = vpop.f32.mrb[0].mxu0
      %4994 = vmatprep.mubr.f32.mxu0 0.0
      %4995 = vmatmul.mubr.f32.gmra.mrb[0].mxu0 %v4814
      %v4996 = vpop.f32.mrb[0].mxu0
      %v4997 = vadd.f32 0.0, %v4996
      %v4998 = vpop.f32.mrb[0].mxu0
      %4999 = vmatprep.mubr.f32.mxu0 0.0
      %5000 = vmatmul.mubr.f32.gmra.mrb[0].mxu0 %v4817
      %v5001 = vpop.f32.mrb[0].mxu0
      %v5002 = vadd.f32 0.0, %v5001
      %v5003 = vpop.f32.mrb[0].mxu0
      %5004 = vmatprep.mubr.f32.mxu0 0.0
      %5005 = vmatmul.mubr.f32.gmra.mrb[0].mxu0 %v4820
      %v5006 = vpop.f32.mrb[0].mxu0
      %v5007 = vadd.f32 0.0, %v5006
      %v5008 = vpop.f32.mrb[0].mxu0
      %5009 = vmatprep.mubr.f32.mxu0 0.0
      %5010 = vmatmul.mubr.f32.gmra.mrb[0].mxu0 %v4823
      %v5011 = vpop.f32.mrb[0].mxu0
      %v5012 = vadd.f32 0.0, %v5011
      %v5013 = vpop.f32.mrb[0].mxu0
      %5014 = vmatprep.mubr.f32.mxu0 0.0
      %5015 = vmatmul.mubr.f32.gmra.mrb[0].mxu0 %v4826
      %v5016 = vpop.f32.mrb[0].mxu0
      %v5017 = vadd.f32 0.0, %v5016
      %v5018 = vpop.f32.mrb[0].mxu0
      %5019 = vmatprep.mubr.f32.mxu0 0.0
      %5020 = vmatmul.mubr.f32.gmra.mrb[0].mxu0 %v4829
      %v5021 = vpop.f32.mrb[0].mxu0
      %v5022 = vadd.f32 0.0, %v5021
      %v5023 = vpop.f32.mrb[0].mxu0
      %5024 = vmatprep.mubr.f32.mxu0 0.0
      %5025 = vmatmul.mubr.f32.gmra.mrb[0].mxu0 %v4832
      %v5026 = vpop.f32.mrb[0].mxu0
      %v5027 = vadd.f32 0.0, %v5026
      %v5028 = vpop.f32.mrb[0].mxu0
      %5029 = vmatprep.mubr.f32.mxu0 0.0
      %5030 = vmatmul.mubr.f32.gmra.mrb[0].mxu0 %v4835
      %v5031 = vpop.f32.mrb[0].mxu0
      %v5032 = vadd.f32 0.0, %v5031
      %v5033 = vpop.f32.mrb[0].mxu0
      %5034 = vmatprep.mubr.f32.mxu0 0.0
      %5035 = vmatmul.mubr.f32.gmra.mrb[0].mxu0 %v4838
      %v5036 = vpop.f32.mrb[0].mxu0
      %v5037 = vadd.f32 0.0, %v5036
      %v5038 = vpop.f32.mrb[0].mxu0
      %5039 = vmatprep.mubr.f32.mxu0 0.0
      %5040 = vmatmul.mubr.f32.gmra.mrb[0].mxu0 %v4841
      %v5041 = vpop.f32.mrb[0].mxu0
      %v5042 = vadd.f32 0.0, %v5041
      %v5043 = vpop.f32.mrb[0].mxu0
      %5044 = vmatprep.mubr.f32.mxu0 0.0
      %5045 = vmatmul.mubr.f32.gmra.mrb[0].mxu0 %v4844
      %v5046 = vpop.f32.mrb[0].mxu0
      %v5047 = vadd.f32 0.0, %v5046
      %v5048 = vpop.f32.mrb[0].mxu0
      %5049 = vmatprep.mubr.f32.mxu0 0.0
      %5050 = vmatmul.mubr.f32.gmra.mrb[0].mxu0 %v4847
      %v5051 = vpop.f32.mrb[0].mxu0
      %v5052 = vadd.f32 0.0, %v5051
      %v5053 = vpop.f32.mrb[0].mxu0
      %5054 = vmatprep.mubr.f32.mxu0 0.0
      %5055 = vmatmul.mubr.f32.gmra.mrb[0].mxu0 %v4850
      %v5056 = vpop.f32.mrb[0].mxu0
      %v5057 = vadd.f32 0.0, %v5056
      %v5058 = vpop.f32.mrb[0].mxu0
      %5059 = vmatprep.mubr.f32.mxu0 0.0
      %5060 = vmatmul.mubr.f32.gmra.mrb[0].mxu0 %v4853
      %v5061 = vpop.f32.mrb[0].mxu0
      %v5062 = vadd.f32 0.0, %v5061
      %v5063 = vpop.f32.mrb[0].mxu0
      %5064 = vmatprep.mubr.f32.mxu0 0.0
      %5065 = vmatmul.mubr.f32.gmra.mrb[0].mxu0 %v4856
      %v5066 = vpop.f32.mrb[0].mxu0
      %v5067 = vadd.f32 0.0, %v5066
      %v5068 = vpop.f32.mrb[0].mxu0
      %5069 = vmatprep.mubr.f32.mxu0 0.0
      %5070 = vmatmul.mubr.f32.gmra.mrb[0].mxu0 %v4859
      %v5071 = vpop.f32.mrb[0].mxu0
      %v5072 = vadd.f32 0.0, %v5071
      %v5073 = vpop.f32.mrb[0].mxu0
      %5074 = vmatprep.mubr.f32.mxu0 0.0
      %5075 = vmatmul.mubr.f32.gmra.mrb[0].mxu0 %v4862
      %v5076 = vpop.f32.mrb[0].mxu0
      %v5077 = vadd.f32 0.0, %v5076
      %v5078 = vpop.f32.mrb[0].mxu0
      %5079 = vmatprep.mubr.f32.mxu0 0.0
      %5080 = vmatmul.mubr.f32.gmra.mrb[0].mxu0 %v4865
      %v5081 = vpop.f32.mrb[0].mxu0
      %v5082 = vadd.f32 0.0, %v5081
      %v5083 = vpop.f32.mrb[0].mxu0
      %5084 = vmatprep.mubr.f32.mxu0 0.0
      %5085 = vmatmul.mubr.f32.gmra.mrb[0].mxu0 %v4868
      %v5086 = vpop.f32.mrb[0].mxu0
      %v5087 = vadd.f32 0.0, %v5086
      %v5088 = vpop.f32.mrb[0].mxu0
      %5089 = vmatprep.mubr.f32.mxu0 0.0
      %5090 = vmatmul.mubr.f32.gmra.mrb[0].mxu0 %v4871
      %v5091 = vpop.f32.mrb[0].mxu0
      %v5092 = vadd.f32 0.0, %v5091
      %v5093 = vpop.f32.mrb[0].mxu0
      %5094 = vmatprep.mubr.f32.mxu0 0.0
      %5095 = vmatmul.mubr.f32.gmra.mrb[0].mxu0 %v4874
      %v5096 = vpop.f32.mrb[0].mxu0
      %v5097 = vadd.f32 0.0, %v5096
      %v5098 = vpop.f32.mrb[0].mxu0
      %5099 = vmatprep.mubr.f32.mxu0 0.0
      %5100 = vmatmul.mubr.f32.gmra.mrb[0].mxu0 %v4877
      %v5101 = vpop.f32.mrb[0].mxu0
      %v5102 = vadd.f32 0.0, %v5101
      %v5103 = vpop.f32.mrb[0].mxu0
      %5104 = vmatprep.mubr.f32.mxu0 0.0
      %5105 = vmatmul.mubr.f32.gmra.mrb[0].mxu0 %v4880
      %v5106 = vpop.f32.mrb[0].mxu0
      %v5107 = vadd.f32 0.0, %v5106
      %v5108 = vpop.f32.mrb[0].mxu0
      %5109 = vmatprep.mubr.f32.mxu0 0.0
      %5110 = vmatmul.mubr.f32.gmra.mrb[0].mxu0 %v4883
      %v5111 = vpop.f32.mrb[0].mxu0
      %v5112 = vadd.f32 0.0, %v5111
      %v5113 = vpop.f32.mrb[0].mxu0
      %5114 = vmatprep.mubr.f32.mxu0 0.0
      %5115 = vmatmul.mubr.f32.gmra.mrb[0].mxu0 %v4886
      %v5116 = vpop.f32.mrb[0].mxu0
      %v5117 = vadd.f32 0.0, %v5116
      %v5118 = vpop.f32.mrb[0].mxu0
      %5119 = vmatprep.mubr.f32.mxu0 0.0
      %5120 = vmatmul.mubr.f32.gmra.mrb[0].mxu0 %v4889
      %v5121 = vpop.f32.mrb[0].mxu0
      %v5122 = vadd.f32 0.0, %v5121
      %v5123 = vpop.f32.mrb[0].mxu0
      %5124 = vmatprep.mubr.f32.mxu0 0.0
      %5125 = vmatmul.mubr.f32.gmra.mrb[0].mxu0 %v4892
      %v5126 = vpop.f32.mrb[0].mxu0
      %v5127 = vadd.f32 0.0, %v5126
      %v5128 = vpop.f32.mrb[0].mxu0
      %5129 = vmatprep.mubr.f32.mxu0 0.0
      %5130 = vmatmul.mubr.f32.gmra.mrb[0].mxu0 %v4895
      %v5131 = vpop.f32.mrb[0].mxu0
      %v5132 = vadd.f32 0.0, %v5131
      %v5133 = vpop.f32.mrb[0].mxu0
      %5134 = vmatprep.mubr.f32.mxu0 0.0
      %5135 = vmatmul.mubr.f32.gmra.mrb[0].mxu0 %v4898
      %v5136 = vpop.f32.mrb[0].mxu0
      %v5137 = vadd.f32 0.0, %v5136
      %v5138 = vpop.f32.mrb[0].mxu0
      %5139 = vmatprep.mubr.f32.mxu0 0.0
      %5140 = vmatmul.mubr.f32.gmra.mrb[0].mxu0 %v4901
      %v5141 = vpop.f32.mrb[0].mxu0
      %v5142 = vadd.f32 0.0, %v5141
      %v5143 = vpop.f32.mrb[0].mxu0
      %5144 = vmatprep.mubr.f32.mxu0 0.0
      %5145 = vmatmul.mubr.f32.gmra.mrb[0].mxu0 %v4904
      %v5146 = vpop.f32.mrb[0].mxu0
      %v5147 = vadd.f32 0.0, %v5146
      %v5148 = vpop.f32.mrb[0].mxu0
      %5149 = vmatprep.mubr.f32.mxu0 0.0
      %5150 = vmatmul.mubr.f32.gmra.mrb[0].mxu0 %v4907
      %v5151 = vpop.f32.mrb[0].mxu0
      %v5152 = vadd.f32 0.0, %v5151
      %v5153 = vpop.f32.mrb[0].mxu0
      %5154 = vmatprep.mubr.f32.mxu0 0.0
      %5155 = vmatmul.mubr.f32.gmra.mrb[0].mxu0 %v4910
      %v5156 = vpop.f32.mrb[0].mxu0
      %v5157 = vadd.f32 0.0, %v5156
      %v5158 = vpop.f32.mrb[0].mxu0
      %5159 = vdwg.mxu0
      %v5160 = vadd.f32 %v4730, %v4982
      %v5161 = vadd.f32 %v4731, %v4987
      %v5162 = vadd.f32 %v4732, %v4992
      %v5163 = vadd.f32 %v4733, %v4997
      %v5164 = vadd.f32 %v4734, %v5002
      %v5165 = vadd.f32 %v4735, %v5007
      %v5166 = vadd.f32 %v4736, %v5012
      %v5167 = vadd.f32 %v4737, %v5017
      %v5168 = vadd.f32 %v4738, %v5022
      %v5169 = vadd.f32 %v4739, %v5027
      %v5170 = vadd.f32 %v4740, %v5032
      %v5171 = vadd.f32 %v4741, %v5037
      %v5172 = vadd.f32 %v4742, %v5042
      %v5173 = vadd.f32 %v4743, %v5047
      %v5174 = vadd.f32 %v4744, %v5052
      %v5175 = vadd.f32 %v4745, %v5057
      %v5176 = vadd.f32 %v4746, %v5062
      %v5177 = vadd.f32 %v4747, %v5067
      %v5178 = vadd.f32 %v4748, %v5072
      %v5179 = vadd.f32 %v4749, %v5077
      %v5180 = vadd.f32 %v4750, %v5082
      %v5181 = vadd.f32 %v4751, %v5087
      %v5182 = vadd.f32 %v4752, %v5092
      %v5183 = vadd.f32 %v4753, %v5097
      %v5184 = vadd.f32 %v4754, %v5102
      %v5185 = vadd.f32 %v4755, %v5107
      %v5186 = vadd.f32 %v4756, %v5112
      %v5187 = vadd.f32 %v4757, %v5117
      %v5188 = vadd.f32 %v4758, %v5122
      %v5189 = vadd.f32 %v4759, %v5127
      %v5190 = vadd.f32 %v4760, %v5132
      %v5191 = vadd.f32 %v4761, %v5137
      %v5192 = vadd.f32 %v4762, %v5142
      %v5193 = vadd.f32 %v4763, %v5147
      %v5194 = vadd.f32 %v4764, %v5152
      %v5195 = vadd.f32 %v4765, %v5157
      %v5196 = vld [vmem:[%s2] sm:$0x1]
      %v5198 = vlaneseq
      %v5199 = vshrl.u32 %v5198, 7
      %v5200 = vsub.s32 0, %v5199
      %v5201 = vrot.slane %v5196, %v5200
      %v5203 = vadd.f32 %v5160, %v5201
      %v5204 = vadd.f32 %v5161, %v5201
      %v5205 = vadd.f32 %v5162, %v5201
      %v5206 = vadd.f32 %v5163, %v5201
      %v5207 = vadd.f32 %v5164, %v5201
      %v5208 = vadd.f32 %v5165, %v5201
      %v5209 = vadd.f32 %v5166, %v5201
      %v5210 = vadd.f32 %v5167, %v5201
      %v5211 = vadd.f32 %v5168, %v5201
      %v5212 = vadd.f32 %v5169, %v5201
      %v5213 = vadd.f32 %v5170, %v5201
      %v5214 = vadd.f32 %v5171, %v5201
      %v5215 = vadd.f32 %v5172, %v5201
      %v5216 = vadd.f32 %v5173, %v5201
      %v5217 = vadd.f32 %v5174, %v5201
      %v5218 = vadd.f32 %v5175, %v5201
      %v5219 = vadd.f32 %v5176, %v5201
      %v5220 = vadd.f32 %v5177, %v5201
      %v5221 = vadd.f32 %v5178, %v5201
      %v5222 = vadd.f32 %v5179, %v5201
      %v5223 = vadd.f32 %v5180, %v5201
      %v5224 = vadd.f32 %v5181, %v5201
      %v5225 = vadd.f32 %v5182, %v5201
      %v5226 = vadd.f32 %v5183, %v5201
      %v5227 = vadd.f32 %v5184, %v5201
      %v5228 = vadd.f32 %v5185, %v5201
      %v5229 = vadd.f32 %v5186, %v5201
      %v5230 = vadd.f32 %v5187, %v5201
      %v5231 = vadd.f32 %v5188, %v5201
      %v5232 = vadd.f32 %v5189, %v5201
      %v5233 = vadd.f32 %v5190, %v5201
      %v5234 = vadd.f32 %v5191, %v5201
      %v5235 = vadd.f32 %v5192, %v5201
      %v5236 = vadd.f32 %v5193, %v5201
      %v5237 = vadd.f32 %v5194, %v5201
      %v5238 = vadd.f32 %v5195, %v5201
      %v5239 = vsel %vm838, 1, 0
      %v5240 = vsel %vm839, 1, 0
      %v5241 = vsel %vm840, 1, 0
      %v5242 = vsel %vm841, 1, 0
      %v5243 = vsel %vm842, 1, 0
      %v5244 = vsel %vm843, 1, 0
      %v5245 = vsel %vm844, 1, 0
      %v5246 = vsel %vm845, 1, 0
      %v5247 = vsel %vm846, 1, 0
      %v5248 = vsel %vm847, 1, 0
      %v5249 = vsel %vm848, 1, 0
      %v5250 = vsel %vm849, 1, 0
      %v5251 = vsel %vm850, 1, 0
      %v5252 = vsel %vm851, 1, 0
      %v5253 = vsel %vm852, 1, 0
      %v5254 = vsel %vm853, 1, 0
      %v5255 = vsel %vm854, 1, 0
      %v5256 = vsel %vm855, 1, 0
      %v5257 = vsel %vm856, 1, 0
      %v5258 = vsel %vm857, 1, 0
      %v5259 = vsel %vm858, 1, 0
      %v5260 = vsel %vm859, 1, 0
      %v5261 = vsel %vm860, 1, 0
      %v5262 = vsel %vm861, 1, 0
      %v5263 = vsel %vm862, 1, 0
      %v5264 = vsel %vm863, 1, 0
      %v5265 = vsel %vm864, 1, 0
      %v5266 = vsel %vm865, 1, 0
      %v5267 = vsel %vm866, 1, 0
      %v5268 = vsel %vm867, 1, 0
      %v5269 = vsel %vm868, 1, 0
      %v5270 = vsel %vm869, 1, 0
      %v5271 = vsel %vm870, 1, 0
      %v5272 = vsel %vm871, 1, 0
      %v5273 = vsel %vm872, 1, 0
      %v5274 = vsel %vm873, 1, 0
      %vm5275 = vcmp.eq.s32.totalorder %v5239, 1
      %vm5276 = vcmp.eq.s32.totalorder %v5240, 1
      %vm5277 = vcmp.eq.s32.totalorder %v5241, 1
      %vm5278 = vcmp.eq.s32.totalorder %v5242, 1
      %vm5279 = vcmp.eq.s32.totalorder %v5243, 1
      %vm5280 = vcmp.eq.s32.totalorder %v5244, 1
      %vm5281 = vcmp.eq.s32.totalorder %v5245, 1
      %vm5282 = vcmp.eq.s32.totalorder %v5246, 1
      %vm5283 = vcmp.eq.s32.totalorder %v5247, 1
      %vm5284 = vcmp.eq.s32.totalorder %v5248, 1
      %vm5285 = vcmp.eq.s32.totalorder %v5249, 1
      %vm5286 = vcmp.eq.s32.totalorder %v5250, 1
      %vm5287 = vcmp.eq.s32.totalorder %v5251, 1
      %vm5288 = vcmp.eq.s32.totalorder %v5252, 1
      %vm5289 = vcmp.eq.s32.totalorder %v5253, 1
      %vm5290 = vcmp.eq.s32.totalorder %v5254, 1
      %vm5291 = vcmp.eq.s32.totalorder %v5255, 1
      %vm5292 = vcmp.eq.s32.totalorder %v5256, 1
      %vm5293 = vcmp.eq.s32.totalorder %v5257, 1
      %vm5294 = vcmp.eq.s32.totalorder %v5258, 1
      %vm5295 = vcmp.eq.s32.totalorder %v5259, 1
      %vm5296 = vcmp.eq.s32.totalorder %v5260, 1
      %vm5297 = vcmp.eq.s32.totalorder %v5261, 1
      %vm5298 = vcmp.eq.s32.totalorder %v5262, 1
      %vm5299 = vcmp.eq.s32.totalorder %v5263, 1
      %vm5300 = vcmp.eq.s32.totalorder %v5264, 1
      %vm5301 = vcmp.eq.s32.totalorder %v5265, 1
      %vm5302 = vcmp.eq.s32.totalorder %v5266, 1
      %vm5303 = vcmp.eq.s32.totalorder %v5267, 1
      %vm5304 = vcmp.eq.s32.totalorder %v5268, 1
      %vm5305 = vcmp.eq.s32.totalorder %v5269, 1
      %vm5306 = vcmp.eq.s32.totalorder %v5270, 1
      %vm5307 = vcmp.eq.s32.totalorder %v5271, 1
      %vm5308 = vcmp.eq.s32.totalorder %v5272, 1
      %vm5309 = vcmp.eq.s32.totalorder %v5273, 1
      %vm5310 = vcmp.eq.s32.totalorder %v5274, 1
      %v5311 = vsel %vm5275, %v5203, 0.0
      %v5312 = vsel %vm5276, %v5204, 0.0
      %v5313 = vsel %vm5277, %v5205, 0.0
      %v5314 = vsel %vm5278, %v5206, 0.0
      %v5315 = vsel %vm5279, %v5207, 0.0
      %v5316 = vsel %vm5280, %v5208, 0.0
      %v5317 = vsel %vm5281, %v5209, 0.0
      %v5318 = vsel %vm5282, %v5210, 0.0
      %v5319 = vsel %vm5283, %v5211, 0.0
      %v5320 = vsel %vm5284, %v5212, 0.0
      %v5321 = vsel %vm5285, %v5213, 0.0
      %v5322 = vsel %vm5286, %v5214, 0.0
      %v5323 = vsel %vm5287, %v5215, 0.0
      %v5324 = vsel %vm5288, %v5216, 0.0
      %v5325 = vsel %vm5289, %v5217, 0.0
      %v5326 = vsel %vm5290, %v5218, 0.0
      %v5327 = vsel %vm5291, %v5219, 0.0
      %v5328 = vsel %vm5292, %v5220, 0.0
      %v5329 = vsel %vm5293, %v5221, 0.0
      %v5330 = vsel %vm5294, %v5222, 0.0
      %v5331 = vsel %vm5295, %v5223, 0.0
      %v5332 = vsel %vm5296, %v5224, 0.0
      %v5333 = vsel %vm5297, %v5225, 0.0
      %v5334 = vsel %vm5298, %v5226, 0.0
      %v5335 = vsel %vm5299, %v5227, 0.0
      %v5336 = vsel %vm5300, %v5228, 0.0
      %v5337 = vsel %vm5301, %v5229, 0.0
      %v5338 = vsel %vm5302, %v5230, 0.0
      %v5339 = vsel %vm5303, %v5231, 0.0
      %v5340 = vsel %vm5304, %v5232, 0.0
      %v5341 = vsel %vm5305, %v5233, 0.0
      %v5342 = vsel %vm5306, %v5234, 0.0
      %v5343 = vsel %vm5307, %v5235, 0.0
      %v5344 = vsel %vm5308, %v5236, 0.0
      %v5345 = vsel %vm5309, %v5237, 0.0
      %v5346 = vsel %vm5310, %v5238, 0.0
      %v5347 = vsel %vm916, %v5311, 0.0
      %v5348 = vsel %vm916, %v5312, 0.0
      %v5349 = vadd.f32 %v5347, %v5348
      %v5350 = vsel %vm916, %v5313, 0.0
      %v5351 = vadd.f32 %v5349, %v5350
      %v5352 = vsel %vm916, %v5314, 0.0
      %v5353 = vadd.f32 %v5351, %v5352
      %v5354 = vsel %vm916, %v5315, 0.0
      %v5355 = vadd.f32 %v5353, %v5354
      %v5356 = vsel %vm916, %v5316, 0.0
      %v5357 = vadd.f32 %v5355, %v5356
      %v5358 = vsel %vm916, %v5317, 0.0
      %v5359 = vadd.f32 %v5357, %v5358
      %v5360 = vsel %vm916, %v5318, 0.0
      %v5361 = vadd.f32 %v5359, %v5360
      %v5362 = vsel %vm916, %v5319, 0.0
      %v5363 = vadd.f32 %v5361, %v5362
      %v5364 = vsel %vm916, %v5320, 0.0
      %v5365 = vadd.f32 %v5363, %v5364
      %v5366 = vsel %vm916, %v5321, 0.0
      %v5367 = vadd.f32 %v5365, %v5366
      %v5368 = vsel %vm916, %v5322, 0.0
      %v5369 = vadd.f32 %v5367, %v5368
      %v5370 = vsel %vm916, %v5323, 0.0
      %v5371 = vadd.f32 %v5369, %v5370
      %v5372 = vsel %vm916, %v5324, 0.0
      %v5373 = vadd.f32 %v5371, %v5372
      %v5374 = vsel %vm916, %v5325, 0.0
      %v5375 = vadd.f32 %v5373, %v5374
      %v5376 = vsel %vm916, %v5326, 0.0
      %v5377 = vadd.f32 %v5375, %v5376
      %v5378 = vsel %vm916, %v5327, 0.0
      %v5379 = vadd.f32 %v5377, %v5378
      %v5380 = vsel %vm916, %v5328, 0.0
      %v5381 = vadd.f32 %v5379, %v5380
      %v5382 = vsel %vm916, %v5329, 0.0
      %v5383 = vadd.f32 %v5381, %v5382
      %v5384 = vsel %vm916, %v5330, 0.0
      %v5385 = vadd.f32 %v5383, %v5384
      %v5386 = vsel %vm916, %v5331, 0.0
      %v5387 = vadd.f32 %v5385, %v5386
      %v5388 = vsel %vm916, %v5332, 0.0
      %v5389 = vadd.f32 %v5387, %v5388
      %v5390 = vsel %vm916, %v5333, 0.0
      %v5391 = vadd.f32 %v5389, %v5390
      %v5392 = vsel %vm916, %v5334, 0.0
      %v5393 = vadd.f32 %v5391, %v5392
      %v5394 = vsel %vm916, %v5335, 0.0
      %v5395 = vadd.f32 %v5393, %v5394
      %v5396 = vsel %vm916, %v5336, 0.0
      %v5397 = vadd.f32 %v5395, %v5396
      %v5398 = vsel %vm916, %v5337, 0.0
      %v5399 = vadd.f32 %v5397, %v5398
      %v5400 = vsel %vm916, %v5338, 0.0
      %v5401 = vadd.f32 %v5399, %v5400
      %v5402 = vsel %vm916, %v5339, 0.0
      %v5403 = vadd.f32 %v5401, %v5402
      %v5404 = vsel %vm916, %v5340, 0.0
      %v5405 = vadd.f32 %v5403, %v5404
      %v5406 = vsel %vm916, %v5341, 0.0
      %v5407 = vadd.f32 %v5405, %v5406
      %v5408 = vsel %vm916, %v5342, 0.0
      %v5409 = vadd.f32 %v5407, %v5408
      %v5410 = vsel %vm916, %v5343, 0.0
      %v5411 = vadd.f32 %v5409, %v5410
      %v5412 = vsel %vm916, %v5344, 0.0
      %v5413 = vadd.f32 %v5411, %v5412
      %v5414 = vsel %vm916, %v5345, 0.0
      %v5415 = vadd.f32 %v5413, %v5414
      %v5416 = vsel %vm916, %v5346, 0.0
      %v5417 = vadd.f32 %v5415, %v5416
      %v5418 = vrot.slane %v5417, 4
      %v5419 = vadd.f32 %v5417, %v5418
      %v5420 = vrot.slane %v5419, 2
      %v5421 = vadd.f32 %v5419, %v5420
      %v5422 = vrot.slane %v5421, 1
      %v5423 = vadd.f32 %v5421, %v5422
      %v5424 = vmul.f32 %v5423, 0.00390625
      %v5425 = vsub.f32 %v5203, %v5424
      %v5426 = vsub.f32 %v5204, %v5424
      %v5427 = vsub.f32 %v5205, %v5424
      %v5428 = vsub.f32 %v5206, %v5424
      %v5429 = vsub.f32 %v5207, %v5424
      %v5430 = vsub.f32 %v5208, %v5424
      %v5431 = vsub.f32 %v5209, %v5424
      %v5432 = vsub.f32 %v5210, %v5424
      %v5433 = vsub.f32 %v5211, %v5424
      %v5434 = vsub.f32 %v5212, %v5424
      %v5435 = vsub.f32 %v5213, %v5424
      %v5436 = vsub.f32 %v5214, %v5424
      %v5437 = vsub.f32 %v5215, %v5424
      %v5438 = vsub.f32 %v5216, %v5424
      %v5439 = vsub.f32 %v5217, %v5424
      %v5440 = vsub.f32 %v5218, %v5424
      %v5441 = vsub.f32 %v5219, %v5424
      %v5442 = vsub.f32 %v5220, %v5424
      %v5443 = vsub.f32 %v5221, %v5424
      %v5444 = vsub.f32 %v5222, %v5424
      %v5445 = vsub.f32 %v5223, %v5424
      %v5446 = vsub.f32 %v5224, %v5424
      %v5447 = vsub.f32 %v5225, %v5424
      %v5448 = vsub.f32 %v5226, %v5424
      %v5449 = vsub.f32 %v5227, %v5424
      %v5450 = vsub.f32 %v5228, %v5424
      %v5451 = vsub.f32 %v5229, %v5424
      %v5452 = vsub.f32 %v5230, %v5424
      %v5453 = vsub.f32 %v5231, %v5424
      %v5454 = vsub.f32 %v5232, %v5424
      %v5455 = vsub.f32 %v5233, %v5424
      %v5456 = vsub.f32 %v5234, %v5424
      %v5457 = vsub.f32 %v5235, %v5424
      %v5458 = vsub.f32 %v5236, %v5424
      %v5459 = vsub.f32 %v5237, %v5424
      %v5460 = vsub.f32 %v5238, %v5424
      %v5461 = vsel %vm5275, %v5425, 0.0
      %v5462 = vsel %vm5276, %v5426, 0.0
      %v5463 = vsel %vm5277, %v5427, 0.0
      %v5464 = vsel %vm5278, %v5428, 0.0
      %v5465 = vsel %vm5279, %v5429, 0.0
      %v5466 = vsel %vm5280, %v5430, 0.0
      %v5467 = vsel %vm5281, %v5431, 0.0
      %v5468 = vsel %vm5282, %v5432, 0.0
      %v5469 = vsel %vm5283, %v5433, 0.0
      %v5470 = vsel %vm5284, %v5434, 0.0
      %v5471 = vsel %vm5285, %v5435, 0.0
      %v5472 = vsel %vm5286, %v5436, 0.0
      %v5473 = vsel %vm5287, %v5437, 0.0
      %v5474 = vsel %vm5288, %v5438, 0.0
      %v5475 = vsel %vm5289, %v5439, 0.0
      %v5476 = vsel %vm5290, %v5440, 0.0
      %v5477 = vsel %vm5291, %v5441, 0.0
      %v5478 = vsel %vm5292, %v5442, 0.0
      %v5479 = vsel %vm5293, %v5443, 0.0
      %v5480 = vsel %vm5294, %v5444, 0.0
      %v5481 = vsel %vm5295, %v5445, 0.0
      %v5482 = vsel %vm5296, %v5446, 0.0
      %v5483 = vsel %vm5297, %v5447, 0.0
      %v5484 = vsel %vm5298, %v5448, 0.0
      %v5485 = vsel %vm5299, %v5449, 0.0
      %v5486 = vsel %vm5300, %v5450, 0.0
      %v5487 = vsel %vm5301, %v5451, 0.0
      %v5488 = vsel %vm5302, %v5452, 0.0
      %v5489 = vsel %vm5303, %v5453, 0.0
      %v5490 = vsel %vm5304, %v5454, 0.0
      %v5491 = vsel %vm5305, %v5455, 0.0
      %v5492 = vsel %vm5306, %v5456, 0.0
      %v5493 = vsel %vm5307, %v5457, 0.0
      %v5494 = vsel %vm5308, %v5458, 0.0
      %v5495 = vsel %vm5309, %v5459, 0.0
      %v5496 = vsel %vm5310, %v5460, 0.0
      %v5497 = vmul.f32 %v5461, %v5461
      %v5498 = vmul.f32 %v5462, %v5462
      %v5499 = vmul.f32 %v5463, %v5463
      %v5500 = vmul.f32 %v5464, %v5464
      %v5501 = vmul.f32 %v5465, %v5465
      %v5502 = vmul.f32 %v5466, %v5466
      %v5503 = vmul.f32 %v5467, %v5467
      %v5504 = vmul.f32 %v5468, %v5468
      %v5505 = vmul.f32 %v5469, %v5469
      %v5506 = vmul.f32 %v5470, %v5470
      %v5507 = vmul.f32 %v5471, %v5471
      %v5508 = vmul.f32 %v5472, %v5472
      %v5509 = vmul.f32 %v5473, %v5473
      %v5510 = vmul.f32 %v5474, %v5474
      %v5511 = vmul.f32 %v5475, %v5475
      %v5512 = vmul.f32 %v5476, %v5476
      %v5513 = vmul.f32 %v5477, %v5477
      %v5514 = vmul.f32 %v5478, %v5478
      %v5515 = vmul.f32 %v5479, %v5479
      %v5516 = vmul.f32 %v5480, %v5480
      %v5517 = vmul.f32 %v5481, %v5481
      %v5518 = vmul.f32 %v5482, %v5482
      %v5519 = vmul.f32 %v5483, %v5483
      %v5520 = vmul.f32 %v5484, %v5484
      %v5521 = vmul.f32 %v5485, %v5485
      %v5522 = vmul.f32 %v5486, %v5486
      %v5523 = vmul.f32 %v5487, %v5487
      %v5524 = vmul.f32 %v5488, %v5488
      %v5525 = vmul.f32 %v5489, %v5489
      %v5526 = vmul.f32 %v5490, %v5490
      %v5527 = vmul.f32 %v5491, %v5491
      %v5528 = vmul.f32 %v5492, %v5492
      %v5529 = vmul.f32 %v5493, %v5493
      %v5530 = vmul.f32 %v5494, %v5494
      %v5531 = vmul.f32 %v5495, %v5495
      %v5532 = vmul.f32 %v5496, %v5496
      %v5533 = vsel %vm916, %v5497, 0.0
      %v5534 = vsel %vm916, %v5498, 0.0
      %v5535 = vadd.f32 %v5533, %v5534
      %v5536 = vsel %vm916, %v5499, 0.0
      %v5537 = vadd.f32 %v5535, %v5536
      %v5538 = vsel %vm916, %v5500, 0.0
      %v5539 = vadd.f32 %v5537, %v5538
      %v5540 = vsel %vm916, %v5501, 0.0
      %v5541 = vadd.f32 %v5539, %v5540
      %v5542 = vsel %vm916, %v5502, 0.0
      %v5543 = vadd.f32 %v5541, %v5542
      %v5544 = vsel %vm916, %v5503, 0.0
      %v5545 = vadd.f32 %v5543, %v5544
      %v5546 = vsel %vm916, %v5504, 0.0
      %v5547 = vadd.f32 %v5545, %v5546
      %v5548 = vsel %vm916, %v5505, 0.0
      %v5549 = vadd.f32 %v5547, %v5548
      %v5550 = vsel %vm916, %v5506, 0.0
      %v5551 = vadd.f32 %v5549, %v5550
      %v5552 = vsel %vm916, %v5507, 0.0
      %v5553 = vadd.f32 %v5551, %v5552
      %v5554 = vsel %vm916, %v5508, 0.0
      %v5555 = vadd.f32 %v5553, %v5554
      %v5556 = vsel %vm916, %v5509, 0.0
      %v5557 = vadd.f32 %v5555, %v5556
      %v5558 = vsel %vm916, %v5510, 0.0
      %v5559 = vadd.f32 %v5557, %v5558
      %v5560 = vsel %vm916, %v5511, 0.0
      %v5561 = vadd.f32 %v5559, %v5560
      %v5562 = vsel %vm916, %v5512, 0.0
      %v5563 = vadd.f32 %v5561, %v5562
      %v5564 = vsel %vm916, %v5513, 0.0
      %v5565 = vadd.f32 %v5563, %v5564
      %v5566 = vsel %vm916, %v5514, 0.0
      %v5567 = vadd.f32 %v5565, %v5566
      %v5568 = vsel %vm916, %v5515, 0.0
      %v5569 = vadd.f32 %v5567, %v5568
      %v5570 = vsel %vm916, %v5516, 0.0
      %v5571 = vadd.f32 %v5569, %v5570
      %v5572 = vsel %vm916, %v5517, 0.0
      %v5573 = vadd.f32 %v5571, %v5572
      %v5574 = vsel %vm916, %v5518, 0.0
      %v5575 = vadd.f32 %v5573, %v5574
      %v5576 = vsel %vm916, %v5519, 0.0
      %v5577 = vadd.f32 %v5575, %v5576
      %v5578 = vsel %vm916, %v5520, 0.0
      %v5579 = vadd.f32 %v5577, %v5578
      %v5580 = vsel %vm916, %v5521, 0.0
      %v5581 = vadd.f32 %v5579, %v5580
      %v5582 = vsel %vm916, %v5522, 0.0
      %v5583 = vadd.f32 %v5581, %v5582
      %v5584 = vsel %vm916, %v5523, 0.0
      %v5585 = vadd.f32 %v5583, %v5584
      %v5586 = vsel %vm916, %v5524, 0.0
      %v5587 = vadd.f32 %v5585, %v5586
      %v5588 = vsel %vm916, %v5525, 0.0
      %v5589 = vadd.f32 %v5587, %v5588
      %v5590 = vsel %vm916, %v5526, 0.0
      %v5591 = vadd.f32 %v5589, %v5590
      %v5592 = vsel %vm916, %v5527, 0.0
      %v5593 = vadd.f32 %v5591, %v5592
      %v5594 = vsel %vm916, %v5528, 0.0
      %v5595 = vadd.f32 %v5593, %v5594
      %v5596 = vsel %vm916, %v5529, 0.0
      %v5597 = vadd.f32 %v5595, %v5596
      %v5598 = vsel %vm916, %v5530, 0.0
      %v5599 = vadd.f32 %v5597, %v5598
      %v5600 = vsel %vm916, %v5531, 0.0
      %v5601 = vadd.f32 %v5599, %v5600
      %v5602 = vsel %vm916, %v5532, 0.0
      %v5603 = vadd.f32 %v5601, %v5602
      %v5604 = vrot.slane %v5603, 4
      %v5605 = vadd.f32 %v5603, %v5604
      %v5606 = vrot.slane %v5605, 2
      %v5607 = vadd.f32 %v5605, %v5606
      %v5608 = vrot.slane %v5607, 1
      %v5609 = vadd.f32 %v5607, %v5608
      %v5610 = vmul.f32 %v5609, 0.00390625
      %v5611 = vadd.f32 %v5610, 1e-05
      %v5612 = vrsqrt.pop %v5611
      %v5613 = vmul.f32 %v5425, %v5612
      %v5614 = vmul.f32 %v5426, %v5612
      %v5615 = vmul.f32 %v5427, %v5612
      %v5616 = vmul.f32 %v5428, %v5612
      %v5617 = vmul.f32 %v5429, %v5612
      %v5618 = vmul.f32 %v5430, %v5612
      %v5619 = vmul.f32 %v5431, %v5612
      %v5620 = vmul.f32 %v5432, %v5612
      %v5621 = vmul.f32 %v5433, %v5612
      %v5622 = vmul.f32 %v5434, %v5612
      %v5623 = vmul.f32 %v5435, %v5612
      %v5624 = vmul.f32 %v5436, %v5612
      %v5625 = vmul.f32 %v5437, %v5612
      %v5626 = vmul.f32 %v5438, %v5612
      %v5627 = vmul.f32 %v5439, %v5612
      %v5628 = vmul.f32 %v5440, %v5612
      %v5629 = vmul.f32 %v5441, %v5612
      %v5630 = vmul.f32 %v5442, %v5612
      %v5631 = vmul.f32 %v5443, %v5612
      %v5632 = vmul.f32 %v5444, %v5612
      %v5633 = vmul.f32 %v5445, %v5612
      %v5634 = vmul.f32 %v5446, %v5612
      %v5635 = vmul.f32 %v5447, %v5612
      %v5636 = vmul.f32 %v5448, %v5612
      %v5637 = vmul.f32 %v5449, %v5612
      %v5638 = vmul.f32 %v5450, %v5612
      %v5639 = vmul.f32 %v5451, %v5612
      %v5640 = vmul.f32 %v5452, %v5612
      %v5641 = vmul.f32 %v5453, %v5612
      %v5642 = vmul.f32 %v5454, %v5612
      %v5643 = vmul.f32 %v5455, %v5612
      %v5644 = vmul.f32 %v5456, %v5612
      %v5645 = vmul.f32 %v5457, %v5612
      %v5646 = vmul.f32 %v5458, %v5612
      %v5647 = vmul.f32 %v5459, %v5612
      %v5648 = vmul.f32 %v5460, %v5612
      %v5649 = vmax.f32 %v5613, 0.0
      %v5650 = vmax.f32 %v5614, 0.0
      %v5651 = vmax.f32 %v5615, 0.0
      %v5652 = vmax.f32 %v5616, 0.0
      %v5653 = vmax.f32 %v5617, 0.0
      %v5654 = vmax.f32 %v5618, 0.0
      %v5655 = vmax.f32 %v5619, 0.0
      %v5656 = vmax.f32 %v5620, 0.0
      %v5657 = vmax.f32 %v5621, 0.0
      %v5658 = vmax.f32 %v5622, 0.0
      %v5659 = vmax.f32 %v5623, 0.0
      %v5660 = vmax.f32 %v5624, 0.0
      %v5661 = vmax.f32 %v5625, 0.0
      %v5662 = vmax.f32 %v5626, 0.0
      %v5663 = vmax.f32 %v5627, 0.0
      %v5664 = vmax.f32 %v5628, 0.0
      %v5665 = vmax.f32 %v5629, 0.0
      %v5666 = vmax.f32 %v5630, 0.0
      %v5667 = vmax.f32 %v5631, 0.0
      %v5668 = vmax.f32 %v5632, 0.0
      %v5669 = vmax.f32 %v5633, 0.0
      %v5670 = vmax.f32 %v5634, 0.0
      %v5671 = vmax.f32 %v5635, 0.0
      %v5672 = vmax.f32 %v5636, 0.0
      %v5673 = vmax.f32 %v5637, 0.0
      %v5674 = vmax.f32 %v5638, 0.0
      %v5675 = vmax.f32 %v5639, 0.0
      %v5676 = vmax.f32 %v5640, 0.0
      %v5677 = vmax.f32 %v5641, 0.0
      %v5678 = vmax.f32 %v5642, 0.0
      %v5679 = vmax.f32 %v5643, 0.0
      %v5680 = vmax.f32 %v5644, 0.0
      %v5681 = vmax.f32 %v5645, 0.0
      %v5682 = vmax.f32 %v5646, 0.0
      %v5683 = vmax.f32 %v5647, 0.0
      %v5684 = vmax.f32 %v5648, 0.0
      %5685 = vst.msk [vmem:[#allocation2 + $0x13] sm:$0xff] %vm916, %v5649
      %5686 = vst.msk [vmem:[#allocation2 + $0x1b] sm:$0xff] %vm916, %v5650
      %5687 = vst.msk [vmem:[#allocation2 + $0x23] sm:$0xff] %vm916, %v5651
      %5688 = vst.msk [vmem:[#allocation2 + $0x2b] sm:$0xff] %vm916, %v5652
      %5689 = vst.msk [vmem:[#allocation2 + $0x33] sm:$0xff] %vm916, %v5653
      %5690 = vst.msk [vmem:[#allocation2 + $0x3b] sm:$0xff] %vm916, %v5654
      %5691 = vst.msk [vmem:[#allocation2 + $0x43] sm:$0xff] %vm916, %v5655
      %5692 = vst.msk [vmem:[#allocation2 + $0x4b] sm:$0xff] %vm916, %v5656
      %5693 = vst.msk [vmem:[#allocation2 + $0x53] sm:$0xff] %vm916, %v5657
      %5694 = vst.msk [vmem:[#allocation2 + $0x5b] sm:$0xff] %vm916, %v5658
      %5695 = vst.msk [vmem:[#allocation2 + $0x63] sm:$0xff] %vm916, %v5659
      %5696 = vst.msk [vmem:[#allocation2 + $0x6b] sm:$0xff] %vm916, %v5660
      %5697 = vst.msk [vmem:[#allocation2 + $0x73] sm:$0xff] %vm916, %v5661
      %5698 = vst.msk [vmem:[#allocation2 + $0x7b] sm:$0xff] %vm916, %v5662
      %5699 = vst.msk [vmem:[#allocation2 + $0x83] sm:$0xff] %vm916, %v5663
      %5700 = vst.msk [vmem:[#allocation2 + $0x8b] sm:$0xff] %vm916, %v5664
      %5701 = vst.msk [vmem:[#allocation2 + $0x93] sm:$0xff] %vm916, %v5665
      %5702 = vst.msk [vmem:[#allocation2 + $0x9b] sm:$0xff] %vm916, %v5666
      %5703 = vst.msk [vmem:[#allocation2 + $0xa3] sm:$0xff] %vm916, %v5667
      %5704 = vst.msk [vmem:[#allocation2 + $0xab] sm:$0xff] %vm916, %v5668
      %5705 = vst.msk [vmem:[#allocation2 + $0xb3] sm:$0xff] %vm916, %v5669
      %5706 = vst.msk [vmem:[#allocation2 + $0xbb] sm:$0xff] %vm916, %v5670
      %5707 = vst.msk [vmem:[#allocation2 + $0xc3] sm:$0xff] %vm916, %v5671
      %5708 = vst.msk [vmem:[#allocation2 + $0xcb] sm:$0xff] %vm916, %v5672
      %5709 = vst.msk [vmem:[#allocation2 + $0xd3] sm:$0xff] %vm916, %v5673
      %5710 = vst.msk [vmem:[#allocation2 + $0xdb] sm:$0xff] %vm916, %v5674
      %5711 = vst.msk [vmem:[#allocation2 + $0xe3] sm:$0xff] %vm916, %v5675
      %5712 = vst.msk [vmem:[#allocation2 + $0xeb] sm:$0xff] %vm916, %v5676
      %5713 = vst.msk [vmem:[#allocation2 + $0xf3] sm:$0xff] %vm916, %v5677
      %5714 = vst.msk [vmem:[#allocation2 + $0xfb] sm:$0xff] %vm916, %v5678
      %5715 = vst.msk [vmem:[#allocation2 + $0x103] sm:$0xff] %vm916, %v5679
      %5716 = vst.msk [vmem:[#allocation2 + $0x10b] sm:$0xff] %vm916, %v5680
      %5717 = vst.msk [vmem:[#allocation2 + $0x113] sm:$0xff] %vm916, %v5681
      %5718 = vst.msk [vmem:[#allocation2 + $0x11b] sm:$0xff] %vm916, %v5682
      %5719 = vst.msk [vmem:[#allocation2 + $0x123] sm:$0xff] %vm916, %v5683
      %5720 = vst.msk [vmem:[#allocation2 + $0x12b] sm:$0xff] %vm916, %v5684
      %v5721 = vld [vmem:[#allocation2 + $0x12] sm:$0xff]
      %v5722 = vld [vmem:[#allocation2 + $0x1a] sm:$0xff]
      %v5723 = vld [vmem:[#allocation2 + $0x22] sm:$0xff]
      %v5724 = vld [vmem:[#allocation2 + $0x2a] sm:$0xff]
      %v5725 = vld [vmem:[#allocation2 + $0x32] sm:$0xff]
      %v5726 = vld [vmem:[#allocation2 + $0x3a] sm:$0xff]
      %v5727 = vld [vmem:[#allocation2 + $0x42] sm:$0xff]
      %v5728 = vld [vmem:[#allocation2 + $0x4a] sm:$0xff]
      %v5729 = vld [vmem:[#allocation2 + $0x52] sm:$0xff]
      %v5730 = vld [vmem:[#allocation2 + $0x5a] sm:$0xff]
      %v5731 = vld [vmem:[#allocation2 + $0x62] sm:$0xff]
      %v5732 = vld [vmem:[#allocation2 + $0x6a] sm:$0xff]
      %v5733 = vld [vmem:[#allocation2 + $0x72] sm:$0xff]
      %v5734 = vld [vmem:[#allocation2 + $0x7a] sm:$0xff]
      %v5735 = vld [vmem:[#allocation2 + $0x82] sm:$0xff]
      %v5736 = vld [vmem:[#allocation2 + $0x8a] sm:$0xff]
      %v5737 = vld [vmem:[#allocation2 + $0x92] sm:$0xff]
      %v5738 = vld [vmem:[#allocation2 + $0x9a] sm:$0xff]
      %v5739 = vld [vmem:[#allocation2 + $0xa2] sm:$0xff]
      %v5740 = vld [vmem:[#allocation2 + $0xaa] sm:$0xff]
      %v5741 = vld [vmem:[#allocation2 + $0xb2] sm:$0xff]
      %v5742 = vld [vmem:[#allocation2 + $0xba] sm:$0xff]
      %v5743 = vld [vmem:[#allocation2 + $0xc2] sm:$0xff]
      %v5744 = vld [vmem:[#allocation2 + $0xca] sm:$0xff]
      %v5745 = vld [vmem:[#allocation2 + $0xd2] sm:$0xff]
      %v5746 = vld [vmem:[#allocation2 + $0xda] sm:$0xff]
      %v5747 = vld [vmem:[#allocation2 + $0xe2] sm:$0xff]
      %v5748 = vld [vmem:[#allocation2 + $0xea] sm:$0xff]
      %v5749 = vld [vmem:[#allocation2 + $0xf2] sm:$0xff]
      %v5750 = vld [vmem:[#allocation2 + $0xfa] sm:$0xff]
      %v5751 = vld [vmem:[#allocation2 + $0x102] sm:$0xff]
      %v5752 = vld [vmem:[#allocation2 + $0x10a] sm:$0xff]
      %v5753 = vld [vmem:[#allocation2 + $0x112] sm:$0xff]
      %v5754 = vld [vmem:[#allocation2 + $0x11a] sm:$0xff]
      %v5755 = vld [vmem:[#allocation2 + $0x122] sm:$0xff]
      %v5756 = vld [vmem:[#allocation2 + $0x12a] sm:$0xff]
      %v5757 = vld [vmem:[#allocation2 + $0x14] sm:$0xff]
      %v5758 = vld [vmem:[#allocation2 + $0x1c] sm:$0xff]
      %v5759 = vld [vmem:[#allocation2 + $0x24] sm:$0xff]
      %v5760 = vld [vmem:[#allocation2 + $0x2c] sm:$0xff]
      %v5761 = vld [vmem:[#allocation2 + $0x34] sm:$0xff]
      %v5762 = vld [vmem:[#allocation2 + $0x3c] sm:$0xff]
      %v5763 = vld [vmem:[#allocation2 + $0x44] sm:$0xff]
      %v5764 = vld [vmem:[#allocation2 + $0x4c] sm:$0xff]
      %v5765 = vld [vmem:[#allocation2 + $0x54] sm:$0xff]
      %v5766 = vld [vmem:[#allocation2 + $0x5c] sm:$0xff]
      %v5767 = vld [vmem:[#allocation2 + $0x64] sm:$0xff]
      %v5768 = vld [vmem:[#allocation2 + $0x6c] sm:$0xff]
      %v5769 = vld [vmem:[#allocation2 + $0x74] sm:$0xff]
      %v5770 = vld [vmem:[#allocation2 + $0x7c] sm:$0xff]
      %v5771 = vld [vmem:[#allocation2 + $0x84] sm:$0xff]
      %v5772 = vld [vmem:[#allocation2 + $0x8c] sm:$0xff]
      %v5773 = vld [vmem:[#allocation2 + $0x94] sm:$0xff]
      %v5774 = vld [vmem:[#allocation2 + $0x9c] sm:$0xff]
      %v5775 = vld [vmem:[#allocation2 + $0xa4] sm:$0xff]
      %v5776 = vld [vmem:[#allocation2 + $0xac] sm:$0xff]
      %v5777 = vld [vmem:[#allocation2 + $0xb4] sm:$0xff]
      %v5778 = vld [vmem:[#allocation2 + $0xbc] sm:$0xff]
      %v5779 = vld [vmem:[#allocation2 + $0xc4] sm:$0xff]
      %v5780 = vld [vmem:[#allocation2 + $0xcc] sm:$0xff]
      %v5781 = vld [vmem:[#allocation2 + $0xd4] sm:$0xff]
      %v5782 = vld [vmem:[#allocation2 + $0xdc] sm:$0xff]
      %v5783 = vld [vmem:[#allocation2 + $0xe4] sm:$0xff]
      %v5784 = vld [vmem:[#allocation2 + $0xec] sm:$0xff]
      %v5785 = vld [vmem:[#allocation2 + $0xf4] sm:$0xff]
      %v5786 = vld [vmem:[#allocation2 + $0xfc] sm:$0xff]
      %v5787 = vld [vmem:[#allocation2 + $0x104] sm:$0xff]
      %v5788 = vld [vmem:[#allocation2 + $0x10c] sm:$0xff]
      %v5789 = vld [vmem:[#allocation2 + $0x114] sm:$0xff]
      %v5790 = vld [vmem:[#allocation2 + $0x11c] sm:$0xff]
      %v5791 = vld [vmem:[#allocation2 + $0x124] sm:$0xff]
      %v5792 = vld [vmem:[#allocation2 + $0x12c] sm:$0xff]
      %v5793 = vld [vmem:[#allocation2 + $0x10] sm:$0xff]
      %v5794 = vld [vmem:[#allocation2 + $0x18] sm:$0xff]
      %v5795 = vld [vmem:[#allocation2 + $0x20] sm:$0xff]
      %v5796 = vld [vmem:[#allocation2 + $0x28] sm:$0xff]
      %v5797 = vld [vmem:[#allocation2 + $0x30] sm:$0xff]
      %v5798 = vld [vmem:[#allocation2 + $0x38] sm:$0xff]
      %v5799 = vld [vmem:[#allocation2 + $0x40] sm:$0xff]
      %v5800 = vld [vmem:[#allocation2 + $0x48] sm:$0xff]
      %v5801 = vld [vmem:[#allocation2 + $0x50] sm:$0xff]
      %v5802 = vld [vmem:[#allocation2 + $0x58] sm:$0xff]
      %v5803 = vld [vmem:[#allocation2 + $0x60] sm:$0xff]
      %v5804 = vld [vmem:[#allocation2 + $0x68] sm:$0xff]
      %v5805 = vld [vmem:[#allocation2 + $0x70] sm:$0xff]
      %v5806 = vld [vmem:[#allocation2 + $0x78] sm:$0xff]
      %v5807 = vld [vmem:[#allocation2 + $0x80] sm:$0xff]
      %v5808 = vld [vmem:[#allocation2 + $0x88] sm:$0xff]
      %v5809 = vld [vmem:[#allocation2 + $0x90] sm:$0xff]
      %v5810 = vld [vmem:[#allocation2 + $0x98] sm:$0xff]
      %v5811 = vld [vmem:[#allocation2 + $0xa0] sm:$0xff]
      %v5812 = vld [vmem:[#allocation2 + $0xa8] sm:$0xff]
      %v5813 = vld [vmem:[#allocation2 + $0xb0] sm:$0xff]
      %v5814 = vld [vmem:[#allocation2 + $0xb8] sm:$0xff]
      %v5815 = vld [vmem:[#allocation2 + $0xc0] sm:$0xff]
      %v5816 = vld [vmem:[#allocation2 + $0xc8] sm:$0xff]
      %v5817 = vld [vmem:[#allocation2 + $0xd0] sm:$0xff]
      %v5818 = vld [vmem:[#allocation2 + $0xd8] sm:$0xff]
      %v5819 = vld [vmem:[#allocation2 + $0xe0] sm:$0xff]
      %v5820 = vld [vmem:[#allocation2 + $0xe8] sm:$0xff]
      %v5821 = vld [vmem:[#allocation2 + $0xf0] sm:$0xff]
      %v5822 = vld [vmem:[#allocation2 + $0xf8] sm:$0xff]
      %v5823 = vld [vmem:[#allocation2 + $0x100] sm:$0xff]
      %v5824 = vld [vmem:[#allocation2 + $0x108] sm:$0xff]
      %v5825 = vld [vmem:[#allocation2 + $0x110] sm:$0xff]
      %v5826 = vld [vmem:[#allocation2 + $0x118] sm:$0xff]
      %v5827 = vld [vmem:[#allocation2 + $0x120] sm:$0xff]
      %v5828 = vld [vmem:[#allocation2 + $0x128] sm:$0xff]
      %v5829 = vsel %vm1169, %v5793, %v5721
      %v5830 = vsel %vm1170, %v5794, %v5722
      %v5831 = vsel %vm1171, %v5795, %v5723
      %v5832 = vsel %vm1172, %v5796, %v5724
      %v5833 = vsel %vm1173, %v5797, %v5725
      %v5834 = vsel %vm1174, %v5798, %v5726
      %v5835 = vsel %vm1175, %v5799, %v5727
      %v5836 = vsel %vm1176, %v5800, %v5728
      %v5837 = vsel %vm1177, %v5801, %v5729
      %v5838 = vsel %vm1178, %v5802, %v5730
      %v5839 = vsel %vm1179, %v5803, %v5731
      %v5840 = vsel %vm1180, %v5804, %v5732
      %v5841 = vsel %vm1181, %v5805, %v5733
      %v5842 = vsel %vm1182, %v5806, %v5734
      %v5843 = vsel %vm1183, %v5807, %v5735
      %v5844 = vsel %vm1184, %v5808, %v5736
      %v5845 = vsel %vm1185, %v5809, %v5737
      %v5846 = vsel %vm1186, %v5810, %v5738
      %v5847 = vsel %vm1187, %v5811, %v5739
      %v5848 = vsel %vm1188, %v5812, %v5740
      %v5849 = vsel %vm1189, %v5813, %v5741
      %v5850 = vsel %vm1190, %v5814, %v5742
      %v5851 = vsel %vm1191, %v5815, %v5743
      %v5852 = vsel %vm1192, %v5816, %v5744
      %v5853 = vsel %vm1193, %v5817, %v5745
      %v5854 = vsel %vm1194, %v5818, %v5746
      %v5855 = vsel %vm1195, %v5819, %v5747
      %v5856 = vsel %vm1196, %v5820, %v5748
      %v5857 = vsel %vm1197, %v5821, %v5749
      %v5858 = vsel %vm1198, %v5822, %v5750
      %v5859 = vsel %vm1199, %v5823, %v5751
      %v5860 = vsel %vm1200, %v5824, %v5752
      %v5861 = vsel %vm1201, %v5825, %v5753
      %v5862 = vsel %vm1202, %v5826, %v5754
      %v5863 = vsel %vm1203, %v5827, %v5755
      %v5864 = vsel %vm1204, %v5828, %v5756
      %v5865 = vsel %vm1277, %v5757, %v5829
      %v5866 = vsel %vm1278, %v5758, %v5830
      %v5867 = vsel %vm1279, %v5759, %v5831
      %v5868 = vsel %vm1280, %v5760, %v5832
      %v5869 = vsel %vm1281, %v5761, %v5833
      %v5870 = vsel %vm1282, %v5762, %v5834
      %v5871 = vsel %vm1283, %v5763, %v5835
      %v5872 = vsel %vm1284, %v5764, %v5836
      %v5873 = vsel %vm1285, %v5765, %v5837
      %v5874 = vsel %vm1286, %v5766, %v5838
      %v5875 = vsel %vm1287, %v5767, %v5839
      %v5876 = vsel %vm1288, %v5768, %v5840
      %v5877 = vsel %vm1289, %v5769, %v5841
      %v5878 = vsel %vm1290, %v5770, %v5842
      %v5879 = vsel %vm1291, %v5771, %v5843
      %v5880 = vsel %vm1292, %v5772, %v5844
      %v5881 = vsel %vm1293, %v5773, %v5845
      %v5882 = vsel %vm1294, %v5774, %v5846
      %v5883 = vsel %vm1295, %v5775, %v5847
      %v5884 = vsel %vm1296, %v5776, %v5848
      %v5885 = vsel %vm1297, %v5777, %v5849
      %v5886 = vsel %vm1298, %v5778, %v5850
      %v5887 = vsel %vm1299, %v5779, %v5851
      %v5888 = vsel %vm1300, %v5780, %v5852
      %v5889 = vsel %vm1301, %v5781, %v5853
      %v5890 = vsel %vm1302, %v5782, %v5854
      %v5891 = vsel %vm1303, %v5783, %v5855
      %v5892 = vsel %vm1304, %v5784, %v5856
      %v5893 = vsel %vm1305, %v5785, %v5857
      %v5894 = vsel %vm1306, %v5786, %v5858
      %v5895 = vsel %vm1307, %v5787, %v5859
      %v5896 = vsel %vm1308, %v5788, %v5860
      %v5897 = vsel %vm1309, %v5789, %v5861
      %v5898 = vsel %vm1310, %v5790, %v5862
      %v5899 = vsel %vm1311, %v5791, %v5863
      %v5900 = vsel %vm1312, %v5792, %v5864
      %5901 = vst.msk [vmem:[#allocation2 + $0x12] sm:$0xff] %vm916, %v5865
      %5902 = vst.msk [vmem:[#allocation2 + $0x1a] sm:$0xff] %vm916, %v5866
      %5903 = vst.msk [vmem:[#allocation2 + $0x22] sm:$0xff] %vm916, %v5867
      %5904 = vst.msk [vmem:[#allocation2 + $0x2a] sm:$0xff] %vm916, %v5868
      %5905 = vst.msk [vmem:[#allocation2 + $0x32] sm:$0xff] %vm916, %v5869
      %5906 = vst.msk [vmem:[#allocation2 + $0x3a] sm:$0xff] %vm916, %v5870
      %5907 = vst.msk [vmem:[#allocation2 + $0x42] sm:$0xff] %vm916, %v5871
      %5908 = vst.msk [vmem:[#allocation2 + $0x4a] sm:$0xff] %vm916, %v5872
      %5909 = vst.msk [vmem:[#allocation2 + $0x52] sm:$0xff] %vm916, %v5873
      %5910 = vst.msk [vmem:[#allocation2 + $0x5a] sm:$0xff] %vm916, %v5874
      %5911 = vst.msk [vmem:[#allocation2 + $0x62] sm:$0xff] %vm916, %v5875
      %5912 = vst.msk [vmem:[#allocation2 + $0x6a] sm:$0xff] %vm916, %v5876
      %5913 = vst.msk [vmem:[#allocation2 + $0x72] sm:$0xff] %vm916, %v5877
      %5914 = vst.msk [vmem:[#allocation2 + $0x7a] sm:$0xff] %vm916, %v5878
      %5915 = vst.msk [vmem:[#allocation2 + $0x82] sm:$0xff] %vm916, %v5879
      %5916 = vst.msk [vmem:[#allocation2 + $0x8a] sm:$0xff] %vm916, %v5880
      %5917 = vst.msk [vmem:[#allocation2 + $0x92] sm:$0xff] %vm916, %v5881
      %5918 = vst.msk [vmem:[#allocation2 + $0x9a] sm:$0xff] %vm916, %v5882
      %5919 = vst.msk [vmem:[#allocation2 + $0xa2] sm:$0xff] %vm916, %v5883
      %5920 = vst.msk [vmem:[#allocation2 + $0xaa] sm:$0xff] %vm916, %v5884
      %5921 = vst.msk [vmem:[#allocation2 + $0xb2] sm:$0xff] %vm916, %v5885
      %5922 = vst.msk [vmem:[#allocation2 + $0xba] sm:$0xff] %vm916, %v5886
      %5923 = vst.msk [vmem:[#allocation2 + $0xc2] sm:$0xff] %vm916, %v5887
      %5924 = vst.msk [vmem:[#allocation2 + $0xca] sm:$0xff] %vm916, %v5888
      %5925 = vst.msk [vmem:[#allocation2 + $0xd2] sm:$0xff] %vm916, %v5889
      %5926 = vst.msk [vmem:[#allocation2 + $0xda] sm:$0xff] %vm916, %v5890
      %5927 = vst.msk [vmem:[#allocation2 + $0xe2] sm:$0xff] %vm916, %v5891
      %5928 = vst.msk [vmem:[#allocation2 + $0xea] sm:$0xff] %vm916, %v5892
      %5929 = vst.msk [vmem:[#allocation2 + $0xf2] sm:$0xff] %vm916, %v5893
      %5930 = vst.msk [vmem:[#allocation2 + $0xfa] sm:$0xff] %vm916, %v5894
      %5931 = vst.msk [vmem:[#allocation2 + $0x102] sm:$0xff] %vm916, %v5895
      %5932 = vst.msk [vmem:[#allocation2 + $0x10a] sm:$0xff] %vm916, %v5896
      %5933 = vst.msk [vmem:[#allocation2 + $0x112] sm:$0xff] %vm916, %v5897
      %5934 = vst.msk [vmem:[#allocation2 + $0x11a] sm:$0xff] %vm916, %v5898
      %5935 = vst.msk [vmem:[#allocation2 + $0x122] sm:$0xff] %vm916, %v5899
      %5936 = vst.msk [vmem:[#allocation2 + $0x12a] sm:$0xff] %vm916, %v5900
      %v5937 = vld [vmem:[#allocation2 + $0x24] sm:$0xff]
      %v5938 = vld [vmem:[#allocation2 + $0x2c] sm:$0xff]
      %v5939 = vld [vmem:[#allocation2 + $0x34] sm:$0x3]
      %5940 = vst.msk [vmem:[#allocation2] sm:$0xff] %vm916, %v5937
      %5941 = vst.msk [vmem:[#allocation2 + $0x8] sm:$0xff] %vm916, %v5938
      %5942 = vst.msk [vmem:[#allocation2 + $0x10] sm:$0x3] %vm1390, %v5939
      %v5943 = vld [vmem:[#allocation2 + $0x10e] sm:$0xff]
      %v5944 = vld [vmem:[#allocation2 + $0x116] sm:$0xff]
      %v5945 = vld [vmem:[#allocation2 + $0x11e] sm:$0x3]
      %5946 = vst.msk [vmem:[#allocation2 + $0x132] sm:$0xff] %vm916, %v5943
      %5947 = vst.msk [vmem:[#allocation2 + $0x13a] sm:$0xff] %vm916, %v5944
      %5948 = vst.msk [vmem:[#allocation2 + $0x142] sm:$0x3] %vm1390, %v5945
      %v5949 = vld [vmem:[#allocation2] sm:$0xff]
      %v5950 = vld [vmem:[#allocation2 + $0x8] sm:$0xff]
      %v5951 = vld [vmem:[#allocation2 + $0x10] sm:$0xff]
      %v5952 = vld [vmem:[#allocation2 + $0x18] sm:$0xff]
      %v5953 = vld [vmem:[#allocation2 + $0x20] sm:$0xff]
      %v5954 = vld [vmem:[#allocation2 + $0x28] sm:$0xff]
      %v5955 = vld [vmem:[#allocation2 + $0x30] sm:$0xff]
      %v5956 = vld [vmem:[#allocation2 + $0x38] sm:$0xff]
      %v5957 = vld [vmem:[#allocation2 + $0x40] sm:$0xff]
      %v5958 = vld [vmem:[#allocation2 + $0x48] sm:$0xff]
      %v5959 = vld [vmem:[#allocation2 + $0x50] sm:$0xff]
      %v5960 = vld [vmem:[#allocation2 + $0x58] sm:$0xff]
      %v5961 = vld [vmem:[#allocation2 + $0x60] sm:$0xff]
      %v5962 = vld [vmem:[#allocation2 + $0x68] sm:$0xff]
      %v5963 = vld [vmem:[#allocation2 + $0x70] sm:$0xff]
      %v5964 = vld [vmem:[#allocation2 + $0x78] sm:$0xff]
      %v5965 = vld [vmem:[#allocation2 + $0x80] sm:$0xff]
      %v5966 = vld [vmem:[#allocation2 + $0x88] sm:$0xff]
      %v5967 = vld [vmem:[#allocation2 + $0x90] sm:$0xff]
      %v5968 = vld [vmem:[#allocation2 + $0x98] sm:$0xff]
      %v5969 = vld [vmem:[#allocation2 + $0xa0] sm:$0xff]
      %v5970 = vld [vmem:[#allocation2 + $0xa8] sm:$0xff]
      %v5971 = vld [vmem:[#allocation2 + $0xb0] sm:$0xff]
      %v5972 = vld [vmem:[#allocation2 + $0xb8] sm:$0xff]
      %v5973 = vld [vmem:[#allocation2 + $0xc0] sm:$0xff]
      %v5974 = vld [vmem:[#allocation2 + $0xc8] sm:$0xff]
      %v5975 = vld [vmem:[#allocation2 + $0xd0] sm:$0xff]
      %v5976 = vld [vmem:[#allocation2 + $0xd8] sm:$0xff]
      %v5977 = vld [vmem:[#allocation2 + $0xe0] sm:$0xff]
      %v5978 = vld [vmem:[#allocation2 + $0xe8] sm:$0xff]
      %v5979 = vld [vmem:[#allocation2 + $0xf0] sm:$0xff]
      %v5980 = vld [vmem:[#allocation2 + $0xf8] sm:$0xff]
      %v5981 = vld [vmem:[#allocation2 + $0x100] sm:$0xff]
      %v5982 = vld [vmem:[#allocation2 + $0x108] sm:$0xff]
      %v5983 = vld [vmem:[#allocation2 + $0x110] sm:$0xff]
      %v5984 = vld [vmem:[#allocation2 + $0x118] sm:$0xff]
      %v5985 = vld [vmem:[%s3] sm:$0xf]
      %v5986 = vld [vmem:[#allocation2 + $0x1] sm:$0xff]
      %v5987 = vld [vmem:[#allocation2 + $0x9] sm:$0xff]
      %v5988 = vld [vmem:[#allocation2 + $0x11] sm:$0xff]
      %v5989 = vld [vmem:[#allocation2 + $0x19] sm:$0xff]
      %v5990 = vld [vmem:[#allocation2 + $0x21] sm:$0xff]
      %v5991 = vld [vmem:[#allocation2 + $0x29] sm:$0xff]
      %v5992 = vld [vmem:[#allocation2 + $0x31] sm:$0xff]
      %v5993 = vld [vmem:[#allocation2 + $0x39] sm:$0xff]
      %v5994 = vld [vmem:[#allocation2 + $0x41] sm:$0xff]
      %v5995 = vld [vmem:[#allocation2 + $0x49] sm:$0xff]
      %v5996 = vld [vmem:[#allocation2 + $0x51] sm:$0xff]
      %v5997 = vld [vmem:[#allocation2 + $0x59] sm:$0xff]
      %v5998 = vld [vmem:[#allocation2 + $0x61] sm:$0xff]
      %v5999 = vld [vmem:[#allocation2 + $0x69] sm:$0xff]
      %v6000 = vld [vmem:[#allocation2 + $0x71] sm:$0xff]
      %v6001 = vld [vmem:[#allocation2 + $0x79] sm:$0xff]
      %v6002 = vld [vmem:[#allocation2 + $0x81] sm:$0xff]
      %v6003 = vld [vmem:[#allocation2 + $0x89] sm:$0xff]
      %v6004 = vld [vmem:[#allocation2 + $0x91] sm:$0xff]
      %v6005 = vld [vmem:[#allocation2 + $0x99] sm:$0xff]
      %v6006 = vld [vmem:[#allocation2 + $0xa1] sm:$0xff]
      %v6007 = vld [vmem:[#allocation2 + $0xa9] sm:$0xff]
      %v6008 = vld [vmem:[#allocation2 + $0xb1] sm:$0xff]
      %v6009 = vld [vmem:[#allocation2 + $0xb9] sm:$0xff]
      %v6010 = vld [vmem:[#allocation2 + $0xc1] sm:$0xff]
      %v6011 = vld [vmem:[#allocation2 + $0xc9] sm:$0xff]
      %v6012 = vld [vmem:[#allocation2 + $0xd1] sm:$0xff]
      %v6013 = vld [vmem:[#allocation2 + $0xd9] sm:$0xff]
      %v6014 = vld [vmem:[#allocation2 + $0xe1] sm:$0xff]
      %v6015 = vld [vmem:[#allocation2 + $0xe9] sm:$0xff]
      %v6016 = vld [vmem:[#allocation2 + $0xf1] sm:$0xff]
      %v6017 = vld [vmem:[#allocation2 + $0xf9] sm:$0xff]
      %v6018 = vld [vmem:[#allocation2 + $0x101] sm:$0xff]
      %v6019 = vld [vmem:[#allocation2 + $0x109] sm:$0xff]
      %v6020 = vld [vmem:[#allocation2 + $0x111] sm:$0xff]
      %v6021 = vld [vmem:[#allocation2 + $0x119] sm:$0xff]
      %s6022 = scalar_lea.vmem %s3, 4
      %v6023 = vld [vmem:[%s6022] sm:$0xf]
      %v6025 = vsel %vm916, %v5986, 0
      %v6028 = vsel %vm916, %v5987, 0
      %v6031 = vsel %vm916, %v5988, 0
      %v6034 = vsel %vm916, %v5989, 0
      %v6037 = vsel %vm916, %v5990, 0
      %v6040 = vsel %vm916, %v5991, 0
      %v6043 = vsel %vm916, %v5992, 0
      %v6046 = vsel %vm916, %v5993, 0
      %v6049 = vsel %vm916, %v5994, 0
      %v6052 = vsel %vm916, %v5995, 0
      %v6055 = vsel %vm916, %v5996, 0
      %v6058 = vsel %vm916, %v5997, 0
      %v6061 = vsel %vm916, %v5998, 0
      %v6064 = vsel %vm916, %v5999, 0
      %v6067 = vsel %vm916, %v6000, 0
      %v6070 = vsel %vm916, %v6001, 0
      %v6073 = vsel %vm916, %v6002, 0
      %v6076 = vsel %vm916, %v6003, 0
      %v6079 = vsel %vm916, %v6004, 0
      %v6082 = vsel %vm916, %v6005, 0
      %v6085 = vsel %vm916, %v6006, 0
      %v6088 = vsel %vm916, %v6007, 0
      %v6091 = vsel %vm916, %v6008, 0
      %v6094 = vsel %vm916, %v6009, 0
      %v6097 = vsel %vm916, %v6010, 0
      %v6100 = vsel %vm916, %v6011, 0
      %v6103 = vsel %vm916, %v6012, 0
      %v6106 = vsel %vm916, %v6013, 0
      %v6109 = vsel %vm916, %v6014, 0
      %v6112 = vsel %vm916, %v6015, 0
      %v6115 = vsel %vm916, %v6016, 0
      %v6118 = vsel %vm916, %v6017, 0
      %v6121 = vsel %vm916, %v6018, 0
      %v6124 = vsel %vm916, %v6019, 0
      %v6127 = vsel %vm916, %v6020, 0
      %v6130 = vsel %vm916, %v6021, 0
      %v6133 = vsel %vm1581, %v6023, 0
      %6135 = vmatprep.subr.mxu0 0.0
      %6136 = vmatpush1.msra.mxu0 %v6133
      %6137 = vmatprep.subr.mxu0 0.0
      %6138 = vmatpush1.msra.mxu0 0.0
      %6139 = vmatprep.subr.mxu0 0.0
      %6140 = vmatpush1.msra.mxu0 0.0
      %6141 = vmatprep.subr.mxu0 0.0
      %6142 = vmatpush1.msra.mxu0 0.0
      %6143 = vmatprep.subr.mxu0 0.0
      %6144 = vmatpush1.msra.mxu0 0.0
      %6145 = vmatprep.subr.mxu0 0.0
      %6146 = vmatpush1.msra.mxu0 0.0
      %6147 = vmatprep.subr.mxu0 0.0
      %6148 = vmatpush1.msra.mxu0 0.0
      %6149 = vmatprep.subr.mxu0 0.0
      %6150 = vmatpush1.msra.mxu0 0.0
      %6151 = vmatprep.subr.mxu0 0.0
      %6152 = vmatpush1.msra.mxu0 0.0
      %6153 = vmatprep.subr.mxu0 0.0
      %6154 = vmatpush1.msra.mxu0 0.0
      %6155 = vmatprep.subr.mxu0 0.0
      %6156 = vmatpush1.msra.mxu0 0.0
      %6157 = vmatprep.subr.mxu0 0.0
      %6158 = vmatpush1.msra.mxu0 0.0
      %6159 = vmatprep.subr.mxu0 0.0
      %6160 = vmatpush1.msra.mxu0 0.0
      %6161 = vmatprep.subr.mxu0 0.0
      %6162 = vmatpush1.msra.mxu0 0.0
      %6163 = vmatprep.subr.mxu0 0.0
      %6164 = vmatpush1.msra.mxu0 0.0
      %6165 = vmatprep.subr.mxu0 0.0
      %6166 = vmatpush1.msra.mxu0 0.0
      %6167 = vmatprep.subr.mxu0 0.0
      %6168 = vmatpush1.msra.mxu0 0.0
      %6169 = vmatprep.subr.mxu0 0.0
      %6170 = vmatpush1.msra.mxu0 0.0
      %6171 = vmatprep.subr.mxu0 0.0
      %6172 = vmatpush1.msra.mxu0 0.0
      %6173 = vmatprep.subr.mxu0 0.0
      %6174 = vmatpush1.msra.mxu0 0.0
      %6175 = vmatprep.subr.mxu0 0.0
      %6176 = vmatpush1.msra.mxu0 0.0
      %6177 = vmatprep.subr.mxu0 0.0
      %6178 = vmatpush1.msra.mxu0 0.0
      %6179 = vmatprep.subr.mxu0 0.0
      %6180 = vmatpush1.msra.mxu0 0.0
      %6181 = vmatprep.subr.mxu0 0.0
      %6182 = vmatpush1.msra.mxu0 0.0
      %6183 = vmatprep.subr.mxu0 0.0
      %6184 = vmatpush1.msra.mxu0 0.0
      %6185 = vmatprep.subr.mxu0 0.0
      %6186 = vmatpush1.msra.mxu0 0.0
      %6187 = vmatprep.subr.mxu0 0.0
      %6188 = vmatpush1.msra.mxu0 0.0
      %6189 = vmatprep.subr.mxu0 0.0
      %6190 = vmatpush1.msra.mxu0 0.0
      %6191 = vmatprep.subr.mxu0 0.0
      %6192 = vmatpush1.msra.mxu0 0.0
      %6193 = vmatprep.subr.mxu0 0.0
      %6194 = vmatpush1.msra.mxu0 0.0
      %6195 = vmatprep.subr.mxu0 0.0
      %6196 = vmatpush1.msra.mxu0 0.0
      %6197 = vmatprep.subr.mxu0 0.0
      %6198 = vmatpush1.msra.mxu0 0.0
      %6199 = vmatprep.mubr.f32.mxu0 0.0
      %6200 = vmatmul.mubr.f32.gmra.mrb[0].mxu0 %v6025
      %v6201 = vpop.f32.mrb[0].mxu0
      %v6202 = vadd.f32 0.0, %v6201
      %v6203 = vpop.f32.mrb[0].mxu0
      %6204 = vmatprep.mubr.f32.mxu0 0.0
      %6205 = vmatmul.mubr.f32.gmra.mrb[0].mxu0 %v6028
      %v6206 = vpop.f32.mrb[0].mxu0
      %v6207 = vadd.f32 0.0, %v6206
      %v6208 = vpop.f32.mrb[0].mxu0
      %6209 = vmatprep.mubr.f32.mxu0 0.0
      %6210 = vmatmul.mubr.f32.gmra.mrb[0].mxu0 %v6031
      %v6211 = vpop.f32.mrb[0].mxu0
      %v6212 = vadd.f32 0.0, %v6211
      %v6213 = vpop.f32.mrb[0].mxu0
      %6214 = vmatprep.mubr.f32.mxu0 0.0
      %6215 = vmatmul.mubr.f32.gmra.mrb[0].mxu0 %v6034
      %v6216 = vpop.f32.mrb[0].mxu0
      %v6217 = vadd.f32 0.0, %v6216
      %v6218 = vpop.f32.mrb[0].mxu0
      %6219 = vmatprep.mubr.f32.mxu0 0.0
      %6220 = vmatmul.mubr.f32.gmra.mrb[0].mxu0 %v6037
      %v6221 = vpop.f32.mrb[0].mxu0
      %v6222 = vadd.f32 0.0, %v6221
      %v6223 = vpop.f32.mrb[0].mxu0
      %6224 = vmatprep.mubr.f32.mxu0 0.0
      %6225 = vmatmul.mubr.f32.gmra.mrb[0].mxu0 %v6040
      %v6226 = vpop.f32.mrb[0].mxu0
      %v6227 = vadd.f32 0.0, %v6226
      %v6228 = vpop.f32.mrb[0].mxu0
      %6229 = vmatprep.mubr.f32.mxu0 0.0
      %6230 = vmatmul.mubr.f32.gmra.mrb[0].mxu0 %v6043
      %v6231 = vpop.f32.mrb[0].mxu0
      %v6232 = vadd.f32 0.0, %v6231
      %v6233 = vpop.f32.mrb[0].mxu0
      %6234 = vmatprep.mubr.f32.mxu0 0.0
      %6235 = vmatmul.mubr.f32.gmra.mrb[0].mxu0 %v6046
      %v6236 = vpop.f32.mrb[0].mxu0
      %v6237 = vadd.f32 0.0, %v6236
      %v6238 = vpop.f32.mrb[0].mxu0
      %6239 = vmatprep.mubr.f32.mxu0 0.0
      %6240 = vmatmul.mubr.f32.gmra.mrb[0].mxu0 %v6049
      %v6241 = vpop.f32.mrb[0].mxu0
      %v6242 = vadd.f32 0.0, %v6241
      %v6243 = vpop.f32.mrb[0].mxu0
      %6244 = vmatprep.mubr.f32.mxu0 0.0
      %6245 = vmatmul.mubr.f32.gmra.mrb[0].mxu0 %v6052
      %v6246 = vpop.f32.mrb[0].mxu0
      %v6247 = vadd.f32 0.0, %v6246
      %v6248 = vpop.f32.mrb[0].mxu0
      %6249 = vmatprep.mubr.f32.mxu0 0.0
      %6250 = vmatmul.mubr.f32.gmra.mrb[0].mxu0 %v6055
      %v6251 = vpop.f32.mrb[0].mxu0
      %v6252 = vadd.f32 0.0, %v6251
      %v6253 = vpop.f32.mrb[0].mxu0
      %6254 = vmatprep.mubr.f32.mxu0 0.0
      %6255 = vmatmul.mubr.f32.gmra.mrb[0].mxu0 %v6058
      %v6256 = vpop.f32.mrb[0].mxu0
      %v6257 = vadd.f32 0.0, %v6256
      %v6258 = vpop.f32.mrb[0].mxu0
      %6259 = vmatprep.mubr.f32.mxu0 0.0
      %6260 = vmatmul.mubr.f32.gmra.mrb[0].mxu0 %v6061
      %v6261 = vpop.f32.mrb[0].mxu0
      %v6262 = vadd.f32 0.0, %v6261
      %v6263 = vpop.f32.mrb[0].mxu0
      %6264 = vmatprep.mubr.f32.mxu0 0.0
      %6265 = vmatmul.mubr.f32.gmra.mrb[0].mxu0 %v6064
      %v6266 = vpop.f32.mrb[0].mxu0
      %v6267 = vadd.f32 0.0, %v6266
      %v6268 = vpop.f32.mrb[0].mxu0
      %6269 = vmatprep.mubr.f32.mxu0 0.0
      %6270 = vmatmul.mubr.f32.gmra.mrb[0].mxu0 %v6067
      %v6271 = vpop.f32.mrb[0].mxu0
      %v6272 = vadd.f32 0.0, %v6271
      %v6273 = vpop.f32.mrb[0].mxu0
      %6274 = vmatprep.mubr.f32.mxu0 0.0
      %6275 = vmatmul.mubr.f32.gmra.mrb[0].mxu0 %v6070
      %v6276 = vpop.f32.mrb[0].mxu0
      %v6277 = vadd.f32 0.0, %v6276
      %v6278 = vpop.f32.mrb[0].mxu0
      %6279 = vmatprep.mubr.f32.mxu0 0.0
      %6280 = vmatmul.mubr.f32.gmra.mrb[0].mxu0 %v6073
      %v6281 = vpop.f32.mrb[0].mxu0
      %v6282 = vadd.f32 0.0, %v6281
      %v6283 = vpop.f32.mrb[0].mxu0
      %6284 = vmatprep.mubr.f32.mxu0 0.0
      %6285 = vmatmul.mubr.f32.gmra.mrb[0].mxu0 %v6076
      %v6286 = vpop.f32.mrb[0].mxu0
      %v6287 = vadd.f32 0.0, %v6286
      %v6288 = vpop.f32.mrb[0].mxu0
      %6289 = vmatprep.mubr.f32.mxu0 0.0
      %6290 = vmatmul.mubr.f32.gmra.mrb[0].mxu0 %v6079
      %v6291 = vpop.f32.mrb[0].mxu0
      %v6292 = vadd.f32 0.0, %v6291
      %v6293 = vpop.f32.mrb[0].mxu0
      %6294 = vmatprep.mubr.f32.mxu0 0.0
      %6295 = vmatmul.mubr.f32.gmra.mrb[0].mxu0 %v6082
      %v6296 = vpop.f32.mrb[0].mxu0
      %v6297 = vadd.f32 0.0, %v6296
      %v6298 = vpop.f32.mrb[0].mxu0
      %6299 = vmatprep.mubr.f32.mxu0 0.0
      %6300 = vmatmul.mubr.f32.gmra.mrb[0].mxu0 %v6085
      %v6301 = vpop.f32.mrb[0].mxu0
      %v6302 = vadd.f32 0.0, %v6301
      %v6303 = vpop.f32.mrb[0].mxu0
      %6304 = vmatprep.mubr.f32.mxu0 0.0
      %6305 = vmatmul.mubr.f32.gmra.mrb[0].mxu0 %v6088
      %v6306 = vpop.f32.mrb[0].mxu0
      %v6307 = vadd.f32 0.0, %v6306
      %v6308 = vpop.f32.mrb[0].mxu0
      %6309 = vmatprep.mubr.f32.mxu0 0.0
      %6310 = vmatmul.mubr.f32.gmra.mrb[0].mxu0 %v6091
      %v6311 = vpop.f32.mrb[0].mxu0
      %v6312 = vadd.f32 0.0, %v6311
      %v6313 = vpop.f32.mrb[0].mxu0
      %6314 = vmatprep.mubr.f32.mxu0 0.0
      %6315 = vmatmul.mubr.f32.gmra.mrb[0].mxu0 %v6094
      %v6316 = vpop.f32.mrb[0].mxu0
      %v6317 = vadd.f32 0.0, %v6316
      %v6318 = vpop.f32.mrb[0].mxu0
      %6319 = vmatprep.mubr.f32.mxu0 0.0
      %6320 = vmatmul.mubr.f32.gmra.mrb[0].mxu0 %v6097
      %v6321 = vpop.f32.mrb[0].mxu0
      %v6322 = vadd.f32 0.0, %v6321
      %v6323 = vpop.f32.mrb[0].mxu0
      %6324 = vmatprep.mubr.f32.mxu0 0.0
      %6325 = vmatmul.mubr.f32.gmra.mrb[0].mxu0 %v6100
      %v6326 = vpop.f32.mrb[0].mxu0
      %v6327 = vadd.f32 0.0, %v6326
      %v6328 = vpop.f32.mrb[0].mxu0
      %6329 = vmatprep.mubr.f32.mxu0 0.0
      %6330 = vmatmul.mubr.f32.gmra.mrb[0].mxu0 %v6103
      %v6331 = vpop.f32.mrb[0].mxu0
      %v6332 = vadd.f32 0.0, %v6331
      %v6333 = vpop.f32.mrb[0].mxu0
      %6334 = vmatprep.mubr.f32.mxu0 0.0
      %6335 = vmatmul.mubr.f32.gmra.mrb[0].mxu0 %v6106
      %v6336 = vpop.f32.mrb[0].mxu0
      %v6337 = vadd.f32 0.0, %v6336
      %v6338 = vpop.f32.mrb[0].mxu0
      %6339 = vmatprep.mubr.f32.mxu0 0.0
      %6340 = vmatmul.mubr.f32.gmra.mrb[0].mxu0 %v6109
      %v6341 = vpop.f32.mrb[0].mxu0
      %v6342 = vadd.f32 0.0, %v6341
      %v6343 = vpop.f32.mrb[0].mxu0
      %6344 = vmatprep.mubr.f32.mxu0 0.0
      %6345 = vmatmul.mubr.f32.gmra.mrb[0].mxu0 %v6112
      %v6346 = vpop.f32.mrb[0].mxu0
      %v6347 = vadd.f32 0.0, %v6346
      %v6348 = vpop.f32.mrb[0].mxu0
      %6349 = vmatprep.mubr.f32.mxu0 0.0
      %6350 = vmatmul.mubr.f32.gmra.mrb[0].mxu0 %v6115
      %v6351 = vpop.f32.mrb[0].mxu0
      %v6352 = vadd.f32 0.0, %v6351
      %v6353 = vpop.f32.mrb[0].mxu0
      %6354 = vmatprep.mubr.f32.mxu0 0.0
      %6355 = vmatmul.mubr.f32.gmra.mrb[0].mxu0 %v6118
      %v6356 = vpop.f32.mrb[0].mxu0
      %v6357 = vadd.f32 0.0, %v6356
      %v6358 = vpop.f32.mrb[0].mxu0
      %6359 = vmatprep.mubr.f32.mxu0 0.0
      %6360 = vmatmul.mubr.f32.gmra.mrb[0].mxu0 %v6121
      %v6361 = vpop.f32.mrb[0].mxu0
      %v6362 = vadd.f32 0.0, %v6361
      %v6363 = vpop.f32.mrb[0].mxu0
      %6364 = vmatprep.mubr.f32.mxu0 0.0
      %6365 = vmatmul.mubr.f32.gmra.mrb[0].mxu0 %v6124
      %v6366 = vpop.f32.mrb[0].mxu0
      %v6367 = vadd.f32 0.0, %v6366
      %v6368 = vpop.f32.mrb[0].mxu0
      %6369 = vmatprep.mubr.f32.mxu0 0.0
      %6370 = vmatmul.mubr.f32.gmra.mrb[0].mxu0 %v6127
      %v6371 = vpop.f32.mrb[0].mxu0
      %v6372 = vadd.f32 0.0, %v6371
      %v6373 = vpop.f32.mrb[0].mxu0
      %6374 = vmatprep.mubr.f32.mxu0 0.0
      %6375 = vmatmul.mubr.f32.gmra.mrb[0].mxu0 %v6130
      %v6376 = vpop.f32.mrb[0].mxu0
      %v6377 = vadd.f32 0.0, %v6376
      %v6378 = vpop.f32.mrb[0].mxu0
      %6379 = vdwg.mxu0
      %v6381 = vsel %vm916, %v5949, 0
      %v6384 = vsel %vm916, %v5950, 0
      %v6387 = vsel %vm916, %v5951, 0
      %v6390 = vsel %vm916, %v5952, 0
      %v6393 = vsel %vm916, %v5953, 0
      %v6396 = vsel %vm916, %v5954, 0
      %v6399 = vsel %vm916, %v5955, 0
      %v6402 = vsel %vm916, %v5956, 0
      %v6405 = vsel %vm916, %v5957, 0
      %v6408 = vsel %vm916, %v5958, 0
      %v6411 = vsel %vm916, %v5959, 0
      %v6414 = vsel %vm916, %v5960, 0
      %v6417 = vsel %vm916, %v5961, 0
      %v6420 = vsel %vm916, %v5962, 0
      %v6423 = vsel %vm916, %v5963, 0
      %v6426 = vsel %vm916, %v5964, 0
      %v6429 = vsel %vm916, %v5965, 0
      %v6432 = vsel %vm916, %v5966, 0
      %v6435 = vsel %vm916, %v5967, 0
      %v6438 = vsel %vm916, %v5968, 0
      %v6441 = vsel %vm916, %v5969, 0
      %v6444 = vsel %vm916, %v5970, 0
      %v6447 = vsel %vm916, %v5971, 0
      %v6450 = vsel %vm916, %v5972, 0
      %v6453 = vsel %vm916, %v5973, 0
      %v6456 = vsel %vm916, %v5974, 0
      %v6459 = vsel %vm916, %v5975, 0
      %v6462 = vsel %vm916, %v5976, 0
      %v6465 = vsel %vm916, %v5977, 0
      %v6468 = vsel %vm916, %v5978, 0
      %v6471 = vsel %vm916, %v5979, 0
      %v6474 = vsel %vm916, %v5980, 0
      %v6477 = vsel %vm916, %v5981, 0
      %v6480 = vsel %vm916, %v5982, 0
      %v6483 = vsel %vm916, %v5983, 0
      %v6486 = vsel %vm916, %v5984, 0
      %v6489 = vsel %vm1581, %v5985, 0
      %6491 = vmatprep.subr.mxu0 0.0
      %6492 = vmatpush1.msra.mxu0 %v6489
      %6493 = vmatprep.subr.mxu0 0.0
      %6494 = vmatpush1.msra.mxu0 0.0
      %6495 = vmatprep.subr.mxu0 0.0
      %6496 = vmatpush1.msra.mxu0 0.0
      %6497 = vmatprep.subr.mxu0 0.0
      %6498 = vmatpush1.msra.mxu0 0.0
      %6499 = vmatprep.subr.mxu0 0.0
      %6500 = vmatpush1.msra.mxu0 0.0
      %6501 = vmatprep.subr.mxu0 0.0
      %6502 = vmatpush1.msra.mxu0 0.0
      %6503 = vmatprep.subr.mxu0 0.0
      %6504 = vmatpush1.msra.mxu0 0.0
      %6505 = vmatprep.subr.mxu0 0.0
      %6506 = vmatpush1.msra.mxu0 0.0
      %6507 = vmatprep.subr.mxu0 0.0
      %6508 = vmatpush1.msra.mxu0 0.0
      %6509 = vmatprep.subr.mxu0 0.0
      %6510 = vmatpush1.msra.mxu0 0.0
      %6511 = vmatprep.subr.mxu0 0.0
      %6512 = vmatpush1.msra.mxu0 0.0
      %6513 = vmatprep.subr.mxu0 0.0
      %6514 = vmatpush1.msra.mxu0 0.0
      %6515 = vmatprep.subr.mxu0 0.0
      %6516 = vmatpush1.msra.mxu0 0.0
      %6517 = vmatprep.subr.mxu0 0.0
      %6518 = vmatpush1.msra.mxu0 0.0
      %6519 = vmatprep.subr.mxu0 0.0
      %6520 = vmatpush1.msra.mxu0 0.0
      %6521 = vmatprep.subr.mxu0 0.0
      %6522 = vmatpush1.msra.mxu0 0.0
      %6523 = vmatprep.subr.mxu0 0.0
      %6524 = vmatpush1.msra.mxu0 0.0
      %6525 = vmatprep.subr.mxu0 0.0
      %6526 = vmatpush1.msra.mxu0 0.0
      %6527 = vmatprep.subr.mxu0 0.0
      %6528 = vmatpush1.msra.mxu0 0.0
      %6529 = vmatprep.subr.mxu0 0.0
      %6530 = vmatpush1.msra.mxu0 0.0
      %6531 = vmatprep.subr.mxu0 0.0
      %6532 = vmatpush1.msra.mxu0 0.0
      %6533 = vmatprep.subr.mxu0 0.0
      %6534 = vmatpush1.msra.mxu0 0.0
      %6535 = vmatprep.subr.mxu0 0.0
      %6536 = vmatpush1.msra.mxu0 0.0
      %6537 = vmatprep.subr.mxu0 0.0
      %6538 = vmatpush1.msra.mxu0 0.0
      %6539 = vmatprep.subr.mxu0 0.0
      %6540 = vmatpush1.msra.mxu0 0.0
      %6541 = vmatprep.subr.mxu0 0.0
      %6542 = vmatpush1.msra.mxu0 0.0
      %6543 = vmatprep.subr.mxu0 0.0
      %6544 = vmatpush1.msra.mxu0 0.0
      %6545 = vmatprep.subr.mxu0 0.0
      %6546 = vmatpush1.msra.mxu0 0.0
      %6547 = vmatprep.subr.mxu0 0.0
      %6548 = vmatpush1.msra.mxu0 0.0
      %6549 = vmatprep.subr.mxu0 0.0
      %6550 = vmatpush1.msra.mxu0 0.0
      %6551 = vmatprep.subr.mxu0 0.0
      %6552 = vmatpush1.msra.mxu0 0.0
      %6553 = vmatprep.subr.mxu0 0.0
      %6554 = vmatpush1.msra.mxu0 0.0
      %6555 = vmatprep.mubr.f32.mxu0 0.0
      %6556 = vmatmul.mubr.f32.gmra.mrb[0].mxu0 %v6381
      %v6557 = vpop.f32.mrb[0].mxu0
      %v6558 = vadd.f32 %v6202, %v6557
      %v6559 = vpop.f32.mrb[0].mxu0
      %6560 = vmatprep.mubr.f32.mxu0 0.0
      %6561 = vmatmul.mubr.f32.gmra.mrb[0].mxu0 %v6384
      %v6562 = vpop.f32.mrb[0].mxu0
      %v6563 = vadd.f32 %v6207, %v6562
      %v6564 = vpop.f32.mrb[0].mxu0
      %6565 = vmatprep.mubr.f32.mxu0 0.0
      %6566 = vmatmul.mubr.f32.gmra.mrb[0].mxu0 %v6387
      %v6567 = vpop.f32.mrb[0].mxu0
      %v6568 = vadd.f32 %v6212, %v6567
      %v6569 = vpop.f32.mrb[0].mxu0
      %6570 = vmatprep.mubr.f32.mxu0 0.0
      %6571 = vmatmul.mubr.f32.gmra.mrb[0].mxu0 %v6390
      %v6572 = vpop.f32.mrb[0].mxu0
      %v6573 = vadd.f32 %v6217, %v6572
      %v6574 = vpop.f32.mrb[0].mxu0
      %6575 = vmatprep.mubr.f32.mxu0 0.0
      %6576 = vmatmul.mubr.f32.gmra.mrb[0].mxu0 %v6393
      %v6577 = vpop.f32.mrb[0].mxu0
      %v6578 = vadd.f32 %v6222, %v6577
      %v6579 = vpop.f32.mrb[0].mxu0
      %6580 = vmatprep.mubr.f32.mxu0 0.0
      %6581 = vmatmul.mubr.f32.gmra.mrb[0].mxu0 %v6396
      %v6582 = vpop.f32.mrb[0].mxu0
      %v6583 = vadd.f32 %v6227, %v6582
      %v6584 = vpop.f32.mrb[0].mxu0
      %6585 = vmatprep.mubr.f32.mxu0 0.0
      %6586 = vmatmul.mubr.f32.gmra.mrb[0].mxu0 %v6399
      %v6587 = vpop.f32.mrb[0].mxu0
      %v6588 = vadd.f32 %v6232, %v6587
      %v6589 = vpop.f32.mrb[0].mxu0
      %6590 = vmatprep.mubr.f32.mxu0 0.0
      %6591 = vmatmul.mubr.f32.gmra.mrb[0].mxu0 %v6402
      %v6592 = vpop.f32.mrb[0].mxu0
      %v6593 = vadd.f32 %v6237, %v6592
      %v6594 = vpop.f32.mrb[0].mxu0
      %6595 = vmatprep.mubr.f32.mxu0 0.0
      %6596 = vmatmul.mubr.f32.gmra.mrb[0].mxu0 %v6405
      %v6597 = vpop.f32.mrb[0].mxu0
      %v6598 = vadd.f32 %v6242, %v6597
      %v6599 = vpop.f32.mrb[0].mxu0
      %6600 = vmatprep.mubr.f32.mxu0 0.0
      %6601 = vmatmul.mubr.f32.gmra.mrb[0].mxu0 %v6408
      %v6602 = vpop.f32.mrb[0].mxu0
      %v6603 = vadd.f32 %v6247, %v6602
      %v6604 = vpop.f32.mrb[0].mxu0
      %6605 = vmatprep.mubr.f32.mxu0 0.0
      %6606 = vmatmul.mubr.f32.gmra.mrb[0].mxu0 %v6411
      %v6607 = vpop.f32.mrb[0].mxu0
      %v6608 = vadd.f32 %v6252, %v6607
      %v6609 = vpop.f32.mrb[0].mxu0
      %6610 = vmatprep.mubr.f32.mxu0 0.0
      %6611 = vmatmul.mubr.f32.gmra.mrb[0].mxu0 %v6414
      %v6612 = vpop.f32.mrb[0].mxu0
      %v6613 = vadd.f32 %v6257, %v6612
      %v6614 = vpop.f32.mrb[0].mxu0
      %6615 = vmatprep.mubr.f32.mxu0 0.0
      %6616 = vmatmul.mubr.f32.gmra.mrb[0].mxu0 %v6417
      %v6617 = vpop.f32.mrb[0].mxu0
      %v6618 = vadd.f32 %v6262, %v6617
      %v6619 = vpop.f32.mrb[0].mxu0
      %6620 = vmatprep.mubr.f32.mxu0 0.0
      %6621 = vmatmul.mubr.f32.gmra.mrb[0].mxu0 %v6420
      %v6622 = vpop.f32.mrb[0].mxu0
      %v6623 = vadd.f32 %v6267, %v6622
      %v6624 = vpop.f32.mrb[0].mxu0
      %6625 = vmatprep.mubr.f32.mxu0 0.0
      %6626 = vmatmul.mubr.f32.gmra.mrb[0].mxu0 %v6423
      %v6627 = vpop.f32.mrb[0].mxu0
      %v6628 = vadd.f32 %v6272, %v6627
      %v6629 = vpop.f32.mrb[0].mxu0
      %6630 = vmatprep.mubr.f32.mxu0 0.0
      %6631 = vmatmul.mubr.f32.gmra.mrb[0].mxu0 %v6426
      %v6632 = vpop.f32.mrb[0].mxu0
      %v6633 = vadd.f32 %v6277, %v6632
      %v6634 = vpop.f32.mrb[0].mxu0
      %6635 = vmatprep.mubr.f32.mxu0 0.0
      %6636 = vmatmul.mubr.f32.gmra.mrb[0].mxu0 %v6429
      %v6637 = vpop.f32.mrb[0].mxu0
      %v6638 = vadd.f32 %v6282, %v6637
      %v6639 = vpop.f32.mrb[0].mxu0
      %6640 = vmatprep.mubr.f32.mxu0 0.0
      %6641 = vmatmul.mubr.f32.gmra.mrb[0].mxu0 %v6432
      %v6642 = vpop.f32.mrb[0].mxu0
      %v6643 = vadd.f32 %v6287, %v6642
      %v6644 = vpop.f32.mrb[0].mxu0
      %6645 = vmatprep.mubr.f32.mxu0 0.0
      %6646 = vmatmul.mubr.f32.gmra.mrb[0].mxu0 %v6435
      %v6647 = vpop.f32.mrb[0].mxu0
      %v6648 = vadd.f32 %v6292, %v6647
      %v6649 = vpop.f32.mrb[0].mxu0
      %6650 = vmatprep.mubr.f32.mxu0 0.0
      %6651 = vmatmul.mubr.f32.gmra.mrb[0].mxu0 %v6438
      %v6652 = vpop.f32.mrb[0].mxu0
      %v6653 = vadd.f32 %v6297, %v6652
      %v6654 = vpop.f32.mrb[0].mxu0
      %6655 = vmatprep.mubr.f32.mxu0 0.0
      %6656 = vmatmul.mubr.f32.gmra.mrb[0].mxu0 %v6441
      %v6657 = vpop.f32.mrb[0].mxu0
      %v6658 = vadd.f32 %v6302, %v6657
      %v6659 = vpop.f32.mrb[0].mxu0
      %6660 = vmatprep.mubr.f32.mxu0 0.0
      %6661 = vmatmul.mubr.f32.gmra.mrb[0].mxu0 %v6444
      %v6662 = vpop.f32.mrb[0].mxu0
      %v6663 = vadd.f32 %v6307, %v6662
      %v6664 = vpop.f32.mrb[0].mxu0
      %6665 = vmatprep.mubr.f32.mxu0 0.0
      %6666 = vmatmul.mubr.f32.gmra.mrb[0].mxu0 %v6447
      %v6667 = vpop.f32.mrb[0].mxu0
      %v6668 = vadd.f32 %v6312, %v6667
      %v6669 = vpop.f32.mrb[0].mxu0
      %6670 = vmatprep.mubr.f32.mxu0 0.0
      %6671 = vmatmul.mubr.f32.gmra.mrb[0].mxu0 %v6450
      %v6672 = vpop.f32.mrb[0].mxu0
      %v6673 = vadd.f32 %v6317, %v6672
      %v6674 = vpop.f32.mrb[0].mxu0
      %6675 = vmatprep.mubr.f32.mxu0 0.0
      %6676 = vmatmul.mubr.f32.gmra.mrb[0].mxu0 %v6453
      %v6677 = vpop.f32.mrb[0].mxu0
      %v6678 = vadd.f32 %v6322, %v6677
      %v6679 = vpop.f32.mrb[0].mxu0
      %6680 = vmatprep.mubr.f32.mxu0 0.0
      %6681 = vmatmul.mubr.f32.gmra.mrb[0].mxu0 %v6456
      %v6682 = vpop.f32.mrb[0].mxu0
      %v6683 = vadd.f32 %v6327, %v6682
      %v6684 = vpop.f32.mrb[0].mxu0
      %6685 = vmatprep.mubr.f32.mxu0 0.0
      %6686 = vmatmul.mubr.f32.gmra.mrb[0].mxu0 %v6459
      %v6687 = vpop.f32.mrb[0].mxu0
      %v6688 = vadd.f32 %v6332, %v6687
      %v6689 = vpop.f32.mrb[0].mxu0
      %6690 = vmatprep.mubr.f32.mxu0 0.0
      %6691 = vmatmul.mubr.f32.gmra.mrb[0].mxu0 %v6462
      %v6692 = vpop.f32.mrb[0].mxu0
      %v6693 = vadd.f32 %v6337, %v6692
      %v6694 = vpop.f32.mrb[0].mxu0
      %6695 = vmatprep.mubr.f32.mxu0 0.0
      %6696 = vmatmul.mubr.f32.gmra.mrb[0].mxu0 %v6465
      %v6697 = vpop.f32.mrb[0].mxu0
      %v6698 = vadd.f32 %v6342, %v6697
      %v6699 = vpop.f32.mrb[0].mxu0
      %6700 = vmatprep.mubr.f32.mxu0 0.0
      %6701 = vmatmul.mubr.f32.gmra.mrb[0].mxu0 %v6468
      %v6702 = vpop.f32.mrb[0].mxu0
      %v6703 = vadd.f32 %v6347, %v6702
      %v6704 = vpop.f32.mrb[0].mxu0
      %6705 = vmatprep.mubr.f32.mxu0 0.0
      %6706 = vmatmul.mubr.f32.gmra.mrb[0].mxu0 %v6471
      %v6707 = vpop.f32.mrb[0].mxu0
      %v6708 = vadd.f32 %v6352, %v6707
      %v6709 = vpop.f32.mrb[0].mxu0
      %6710 = vmatprep.mubr.f32.mxu0 0.0
      %6711 = vmatmul.mubr.f32.gmra.mrb[0].mxu0 %v6474
      %v6712 = vpop.f32.mrb[0].mxu0
      %v6713 = vadd.f32 %v6357, %v6712
      %v6714 = vpop.f32.mrb[0].mxu0
      %6715 = vmatprep.mubr.f32.mxu0 0.0
      %6716 = vmatmul.mubr.f32.gmra.mrb[0].mxu0 %v6477
      %v6717 = vpop.f32.mrb[0].mxu0
      %v6718 = vadd.f32 %v6362, %v6717
      %v6719 = vpop.f32.mrb[0].mxu0
      %6720 = vmatprep.mubr.f32.mxu0 0.0
      %6721 = vmatmul.mubr.f32.gmra.mrb[0].mxu0 %v6480
      %v6722 = vpop.f32.mrb[0].mxu0
      %v6723 = vadd.f32 %v6367, %v6722
      %v6724 = vpop.f32.mrb[0].mxu0
      %6725 = vmatprep.mubr.f32.mxu0 0.0
      %6726 = vmatmul.mubr.f32.gmra.mrb[0].mxu0 %v6483
      %v6727 = vpop.f32.mrb[0].mxu0
      %v6728 = vadd.f32 %v6372, %v6727
      %v6729 = vpop.f32.mrb[0].mxu0
      %6730 = vmatprep.mubr.f32.mxu0 0.0
      %6731 = vmatmul.mubr.f32.gmra.mrb[0].mxu0 %v6486
      %v6732 = vpop.f32.mrb[0].mxu0
      %v6733 = vadd.f32 %v6377, %v6732
      %v6734 = vpop.f32.mrb[0].mxu0
      %6735 = vdwg.mxu0
      %v6736 = vld [vmem:[#allocation2 + $0x2] sm:$0xff]
      %v6737 = vld [vmem:[#allocation2 + $0xa] sm:$0xff]
      %v6738 = vld [vmem:[#allocation2 + $0x12] sm:$0xff]
      %v6739 = vld [vmem:[#allocation2 + $0x1a] sm:$0xff]
      %v6740 = vld [vmem:[#allocation2 + $0x22] sm:$0xff]
      %v6741 = vld [vmem:[#allocation2 + $0x2a] sm:$0xff]
      %v6742 = vld [vmem:[#allocation2 + $0x32] sm:$0xff]
      %v6743 = vld [vmem:[#allocation2 + $0x3a] sm:$0xff]
      %v6744 = vld [vmem:[#allocation2 + $0x42] sm:$0xff]
      %v6745 = vld [vmem:[#allocation2 + $0x4a] sm:$0xff]
      %v6746 = vld [vmem:[#allocation2 + $0x52] sm:$0xff]
      %v6747 = vld [vmem:[#allocation2 + $0x5a] sm:$0xff]
      %v6748 = vld [vmem:[#allocation2 + $0x62] sm:$0xff]
      %v6749 = vld [vmem:[#allocation2 + $0x6a] sm:$0xff]
      %v6750 = vld [vmem:[#allocation2 + $0x72] sm:$0xff]
      %v6751 = vld [vmem:[#allocation2 + $0x7a] sm:$0xff]
      %v6752 = vld [vmem:[#allocation2 + $0x82] sm:$0xff]
      %v6753 = vld [vmem:[#allocation2 + $0x8a] sm:$0xff]
      %v6754 = vld [vmem:[#allocation2 + $0x92] sm:$0xff]
      %v6755 = vld [vmem:[#allocation2 + $0x9a] sm:$0xff]
      %v6756 = vld [vmem:[#allocation2 + $0xa2] sm:$0xff]
      %v6757 = vld [vmem:[#allocation2 + $0xaa] sm:$0xff]
      %v6758 = vld [vmem:[#allocation2 + $0xb2] sm:$0xff]
      %v6759 = vld [vmem:[#allocation2 + $0xba] sm:$0xff]
      %v6760 = vld [vmem:[#allocation2 + $0xc2] sm:$0xff]
      %v6761 = vld [vmem:[#allocation2 + $0xca] sm:$0xff]
      %v6762 = vld [vmem:[#allocation2 + $0xd2] sm:$0xff]
      %v6763 = vld [vmem:[#allocation2 + $0xda] sm:$0xff]
      %v6764 = vld [vmem:[#allocation2 + $0xe2] sm:$0xff]
      %v6765 = vld [vmem:[#allocation2 + $0xea] sm:$0xff]
      %v6766 = vld [vmem:[#allocation2 + $0xf2] sm:$0xff]
      %v6767 = vld [vmem:[#allocation2 + $0xfa] sm:$0xff]
      %v6768 = vld [vmem:[#allocation2 + $0x102] sm:$0xff]
      %v6769 = vld [vmem:[#allocation2 + $0x10a] sm:$0xff]
      %v6770 = vld [vmem:[#allocation2 + $0x112] sm:$0xff]
      %v6771 = vld [vmem:[#allocation2 + $0x11a] sm:$0xff]
      %s6772 = scalar_lea.vmem %s3, 8
      %v6773 = vld [vmem:[%s6772] sm:$0xf]
      %v6775 = vsel %vm916, %v6736, 0
      %v6778 = vsel %vm916, %v6737, 0
      %v6781 = vsel %vm916, %v6738, 0
      %v6784 = vsel %vm916, %v6739, 0
      %v6787 = vsel %vm916, %v6740, 0
      %v6790 = vsel %vm916, %v6741, 0
      %v6793 = vsel %vm916, %v6742, 0
      %v6796 = vsel %vm916, %v6743, 0
      %v6799 = vsel %vm916, %v6744, 0
      %v6802 = vsel %vm916, %v6745, 0
      %v6805 = vsel %vm916, %v6746, 0
      %v6808 = vsel %vm916, %v6747, 0
      %v6811 = vsel %vm916, %v6748, 0
      %v6814 = vsel %vm916, %v6749, 0
      %v6817 = vsel %vm916, %v6750, 0
      %v6820 = vsel %vm916, %v6751, 0
      %v6823 = vsel %vm916, %v6752, 0
      %v6826 = vsel %vm916, %v6753, 0
      %v6829 = vsel %vm916, %v6754, 0
      %v6832 = vsel %vm916, %v6755, 0
      %v6835 = vsel %vm916, %v6756, 0
      %v6838 = vsel %vm916, %v6757, 0
      %v6841 = vsel %vm916, %v6758, 0
      %v6844 = vsel %vm916, %v6759, 0
      %v6847 = vsel %vm916, %v6760, 0
      %v6850 = vsel %vm916, %v6761, 0
      %v6853 = vsel %vm916, %v6762, 0
      %v6856 = vsel %vm916, %v6763, 0
      %v6859 = vsel %vm916, %v6764, 0
      %v6862 = vsel %vm916, %v6765, 0
      %v6865 = vsel %vm916, %v6766, 0
      %v6868 = vsel %vm916, %v6767, 0
      %v6871 = vsel %vm916, %v6768, 0
      %v6874 = vsel %vm916, %v6769, 0
      %v6877 = vsel %vm916, %v6770, 0
      %v6880 = vsel %vm916, %v6771, 0
      %v6883 = vsel %vm1581, %v6773, 0
      %6885 = vmatprep.subr.mxu0 0.0
      %6886 = vmatpush1.msra.mxu0 %v6883
      %6887 = vmatprep.subr.mxu0 0.0
      %6888 = vmatpush1.msra.mxu0 0.0
      %6889 = vmatprep.subr.mxu0 0.0
      %6890 = vmatpush1.msra.mxu0 0.0
      %6891 = vmatprep.subr.mxu0 0.0
      %6892 = vmatpush1.msra.mxu0 0.0
      %6893 = vmatprep.subr.mxu0 0.0
      %6894 = vmatpush1.msra.mxu0 0.0
      %6895 = vmatprep.subr.mxu0 0.0
      %6896 = vmatpush1.msra.mxu0 0.0
      %6897 = vmatprep.subr.mxu0 0.0
      %6898 = vmatpush1.msra.mxu0 0.0
      %6899 = vmatprep.subr.mxu0 0.0
      %6900 = vmatpush1.msra.mxu0 0.0
      %6901 = vmatprep.subr.mxu0 0.0
      %6902 = vmatpush1.msra.mxu0 0.0
      %6903 = vmatprep.subr.mxu0 0.0
      %6904 = vmatpush1.msra.mxu0 0.0
      %6905 = vmatprep.subr.mxu0 0.0
      %6906 = vmatpush1.msra.mxu0 0.0
      %6907 = vmatprep.subr.mxu0 0.0
      %6908 = vmatpush1.msra.mxu0 0.0
      %6909 = vmatprep.subr.mxu0 0.0
      %6910 = vmatpush1.msra.mxu0 0.0
      %6911 = vmatprep.subr.mxu0 0.0
      %6912 = vmatpush1.msra.mxu0 0.0
      %6913 = vmatprep.subr.mxu0 0.0
      %6914 = vmatpush1.msra.mxu0 0.0
      %6915 = vmatprep.subr.mxu0 0.0
      %6916 = vmatpush1.msra.mxu0 0.0
      %6917 = vmatprep.subr.mxu0 0.0
      %6918 = vmatpush1.msra.mxu0 0.0
      %6919 = vmatprep.subr.mxu0 0.0
      %6920 = vmatpush1.msra.mxu0 0.0
      %6921 = vmatprep.subr.mxu0 0.0
      %6922 = vmatpush1.msra.mxu0 0.0
      %6923 = vmatprep.subr.mxu0 0.0
      %6924 = vmatpush1.msra.mxu0 0.0
      %6925 = vmatprep.subr.mxu0 0.0
      %6926 = vmatpush1.msra.mxu0 0.0
      %6927 = vmatprep.subr.mxu0 0.0
      %6928 = vmatpush1.msra.mxu0 0.0
      %6929 = vmatprep.subr.mxu0 0.0
      %6930 = vmatpush1.msra.mxu0 0.0
      %6931 = vmatprep.subr.mxu0 0.0
      %6932 = vmatpush1.msra.mxu0 0.0
      %6933 = vmatprep.subr.mxu0 0.0
      %6934 = vmatpush1.msra.mxu0 0.0
      %6935 = vmatprep.subr.mxu0 0.0
      %6936 = vmatpush1.msra.mxu0 0.0
      %6937 = vmatprep.subr.mxu0 0.0
      %6938 = vmatpush1.msra.mxu0 0.0
      %6939 = vmatprep.subr.mxu0 0.0
      %6940 = vmatpush1.msra.mxu0 0.0
      %6941 = vmatprep.subr.mxu0 0.0
      %6942 = vmatpush1.msra.mxu0 0.0
      %6943 = vmatprep.subr.mxu0 0.0
      %6944 = vmatpush1.msra.mxu0 0.0
      %6945 = vmatprep.subr.mxu0 0.0
      %6946 = vmatpush1.msra.mxu0 0.0
      %6947 = vmatprep.subr.mxu0 0.0
      %6948 = vmatpush1.msra.mxu0 0.0
      %6949 = vmatprep.mubr.f32.mxu0 0.0
      %6950 = vmatmul.mubr.f32.gmra.mrb[0].mxu0 %v6775
      %v6951 = vpop.f32.mrb[0].mxu0
      %v6952 = vadd.f32 0.0, %v6951
      %v6953 = vpop.f32.mrb[0].mxu0
      %6954 = vmatprep.mubr.f32.mxu0 0.0
      %6955 = vmatmul.mubr.f32.gmra.mrb[0].mxu0 %v6778
      %v6956 = vpop.f32.mrb[0].mxu0
      %v6957 = vadd.f32 0.0, %v6956
      %v6958 = vpop.f32.mrb[0].mxu0
      %6959 = vmatprep.mubr.f32.mxu0 0.0
      %6960 = vmatmul.mubr.f32.gmra.mrb[0].mxu0 %v6781
      %v6961 = vpop.f32.mrb[0].mxu0
      %v6962 = vadd.f32 0.0, %v6961
      %v6963 = vpop.f32.mrb[0].mxu0
      %6964 = vmatprep.mubr.f32.mxu0 0.0
      %6965 = vmatmul.mubr.f32.gmra.mrb[0].mxu0 %v6784
      %v6966 = vpop.f32.mrb[0].mxu0
      %v6967 = vadd.f32 0.0, %v6966
      %v6968 = vpop.f32.mrb[0].mxu0
      %6969 = vmatprep.mubr.f32.mxu0 0.0
      %6970 = vmatmul.mubr.f32.gmra.mrb[0].mxu0 %v6787
      %v6971 = vpop.f32.mrb[0].mxu0
      %v6972 = vadd.f32 0.0, %v6971
      %v6973 = vpop.f32.mrb[0].mxu0
      %6974 = vmatprep.mubr.f32.mxu0 0.0
      %6975 = vmatmul.mubr.f32.gmra.mrb[0].mxu0 %v6790
      %v6976 = vpop.f32.mrb[0].mxu0
      %v6977 = vadd.f32 0.0, %v6976
      %v6978 = vpop.f32.mrb[0].mxu0
      %6979 = vmatprep.mubr.f32.mxu0 0.0
      %6980 = vmatmul.mubr.f32.gmra.mrb[0].mxu0 %v6793
      %v6981 = vpop.f32.mrb[0].mxu0
      %v6982 = vadd.f32 0.0, %v6981
      %v6983 = vpop.f32.mrb[0].mxu0
      %6984 = vmatprep.mubr.f32.mxu0 0.0
      %6985 = vmatmul.mubr.f32.gmra.mrb[0].mxu0 %v6796
      %v6986 = vpop.f32.mrb[0].mxu0
      %v6987 = vadd.f32 0.0, %v6986
      %v6988 = vpop.f32.mrb[0].mxu0
      %6989 = vmatprep.mubr.f32.mxu0 0.0
      %6990 = vmatmul.mubr.f32.gmra.mrb[0].mxu0 %v6799
      %v6991 = vpop.f32.mrb[0].mxu0
      %v6992 = vadd.f32 0.0, %v6991
      %v6993 = vpop.f32.mrb[0].mxu0
      %6994 = vmatprep.mubr.f32.mxu0 0.0
      %6995 = vmatmul.mubr.f32.gmra.mrb[0].mxu0 %v6802
      %v6996 = vpop.f32.mrb[0].mxu0
      %v6997 = vadd.f32 0.0, %v6996
      %v6998 = vpop.f32.mrb[0].mxu0
      %6999 = vmatprep.mubr.f32.mxu0 0.0
      %7000 = vmatmul.mubr.f32.gmra.mrb[0].mxu0 %v6805
      %v7001 = vpop.f32.mrb[0].mxu0
      %v7002 = vadd.f32 0.0, %v7001
      %v7003 = vpop.f32.mrb[0].mxu0
      %7004 = vmatprep.mubr.f32.mxu0 0.0
      %7005 = vmatmul.mubr.f32.gmra.mrb[0].mxu0 %v6808
      %v7006 = vpop.f32.mrb[0].mxu0
      %v7007 = vadd.f32 0.0, %v7006
      %v7008 = vpop.f32.mrb[0].mxu0
      %7009 = vmatprep.mubr.f32.mxu0 0.0
      %7010 = vmatmul.mubr.f32.gmra.mrb[0].mxu0 %v6811
      %v7011 = vpop.f32.mrb[0].mxu0
      %v7012 = vadd.f32 0.0, %v7011
      %v7013 = vpop.f32.mrb[0].mxu0
      %7014 = vmatprep.mubr.f32.mxu0 0.0
      %7015 = vmatmul.mubr.f32.gmra.mrb[0].mxu0 %v6814
      %v7016 = vpop.f32.mrb[0].mxu0
      %v7017 = vadd.f32 0.0, %v7016
      %v7018 = vpop.f32.mrb[0].mxu0
      %7019 = vmatprep.mubr.f32.mxu0 0.0
      %7020 = vmatmul.mubr.f32.gmra.mrb[0].mxu0 %v6817
      %v7021 = vpop.f32.mrb[0].mxu0
      %v7022 = vadd.f32 0.0, %v7021
      %v7023 = vpop.f32.mrb[0].mxu0
      %7024 = vmatprep.mubr.f32.mxu0 0.0
      %7025 = vmatmul.mubr.f32.gmra.mrb[0].mxu0 %v6820
      %v7026 = vpop.f32.mrb[0].mxu0
      %v7027 = vadd.f32 0.0, %v7026
      %v7028 = vpop.f32.mrb[0].mxu0
      %7029 = vmatprep.mubr.f32.mxu0 0.0
      %7030 = vmatmul.mubr.f32.gmra.mrb[0].mxu0 %v6823
      %v7031 = vpop.f32.mrb[0].mxu0
      %v7032 = vadd.f32 0.0, %v7031
      %v7033 = vpop.f32.mrb[0].mxu0
      %7034 = vmatprep.mubr.f32.mxu0 0.0
      %7035 = vmatmul.mubr.f32.gmra.mrb[0].mxu0 %v6826
      %v7036 = vpop.f32.mrb[0].mxu0
      %v7037 = vadd.f32 0.0, %v7036
      %v7038 = vpop.f32.mrb[0].mxu0
      %7039 = vmatprep.mubr.f32.mxu0 0.0
      %7040 = vmatmul.mubr.f32.gmra.mrb[0].mxu0 %v6829
      %v7041 = vpop.f32.mrb[0].mxu0
      %v7042 = vadd.f32 0.0, %v7041
      %v7043 = vpop.f32.mrb[0].mxu0
      %7044 = vmatprep.mubr.f32.mxu0 0.0
      %7045 = vmatmul.mubr.f32.gmra.mrb[0].mxu0 %v6832
      %v7046 = vpop.f32.mrb[0].mxu0
      %v7047 = vadd.f32 0.0, %v7046
      %v7048 = vpop.f32.mrb[0].mxu0
      %7049 = vmatprep.mubr.f32.mxu0 0.0
      %7050 = vmatmul.mubr.f32.gmra.mrb[0].mxu0 %v6835
      %v7051 = vpop.f32.mrb[0].mxu0
      %v7052 = vadd.f32 0.0, %v7051
      %v7053 = vpop.f32.mrb[0].mxu0
      %7054 = vmatprep.mubr.f32.mxu0 0.0
      %7055 = vmatmul.mubr.f32.gmra.mrb[0].mxu0 %v6838
      %v7056 = vpop.f32.mrb[0].mxu0
      %v7057 = vadd.f32 0.0, %v7056
      %v7058 = vpop.f32.mrb[0].mxu0
      %7059 = vmatprep.mubr.f32.mxu0 0.0
      %7060 = vmatmul.mubr.f32.gmra.mrb[0].mxu0 %v6841
      %v7061 = vpop.f32.mrb[0].mxu0
      %v7062 = vadd.f32 0.0, %v7061
      %v7063 = vpop.f32.mrb[0].mxu0
      %7064 = vmatprep.mubr.f32.mxu0 0.0
      %7065 = vmatmul.mubr.f32.gmra.mrb[0].mxu0 %v6844
      %v7066 = vpop.f32.mrb[0].mxu0
      %v7067 = vadd.f32 0.0, %v7066
      %v7068 = vpop.f32.mrb[0].mxu0
      %7069 = vmatprep.mubr.f32.mxu0 0.0
      %7070 = vmatmul.mubr.f32.gmra.mrb[0].mxu0 %v6847
      %v7071 = vpop.f32.mrb[0].mxu0
      %v7072 = vadd.f32 0.0, %v7071
      %v7073 = vpop.f32.mrb[0].mxu0
      %7074 = vmatprep.mubr.f32.mxu0 0.0
      %7075 = vmatmul.mubr.f32.gmra.mrb[0].mxu0 %v6850
      %v7076 = vpop.f32.mrb[0].mxu0
      %v7077 = vadd.f32 0.0, %v7076
      %v7078 = vpop.f32.mrb[0].mxu0
      %7079 = vmatprep.mubr.f32.mxu0 0.0
      %7080 = vmatmul.mubr.f32.gmra.mrb[0].mxu0 %v6853
      %v7081 = vpop.f32.mrb[0].mxu0
      %v7082 = vadd.f32 0.0, %v7081
      %v7083 = vpop.f32.mrb[0].mxu0
      %7084 = vmatprep.mubr.f32.mxu0 0.0
      %7085 = vmatmul.mubr.f32.gmra.mrb[0].mxu0 %v6856
      %v7086 = vpop.f32.mrb[0].mxu0
      %v7087 = vadd.f32 0.0, %v7086
      %v7088 = vpop.f32.mrb[0].mxu0
      %7089 = vmatprep.mubr.f32.mxu0 0.0
      %7090 = vmatmul.mubr.f32.gmra.mrb[0].mxu0 %v6859
      %v7091 = vpop.f32.mrb[0].mxu0
      %v7092 = vadd.f32 0.0, %v7091
      %v7093 = vpop.f32.mrb[0].mxu0
      %7094 = vmatprep.mubr.f32.mxu0 0.0
      %7095 = vmatmul.mubr.f32.gmra.mrb[0].mxu0 %v6862
      %v7096 = vpop.f32.mrb[0].mxu0
      %v7097 = vadd.f32 0.0, %v7096
      %v7098 = vpop.f32.mrb[0].mxu0
      %7099 = vmatprep.mubr.f32.mxu0 0.0
      %7100 = vmatmul.mubr.f32.gmra.mrb[0].mxu0 %v6865
      %v7101 = vpop.f32.mrb[0].mxu0
      %v7102 = vadd.f32 0.0, %v7101
      %v7103 = vpop.f32.mrb[0].mxu0
      %7104 = vmatprep.mubr.f32.mxu0 0.0
      %7105 = vmatmul.mubr.f32.gmra.mrb[0].mxu0 %v6868
      %v7106 = vpop.f32.mrb[0].mxu0
      %v7107 = vadd.f32 0.0, %v7106
      %v7108 = vpop.f32.mrb[0].mxu0
      %7109 = vmatprep.mubr.f32.mxu0 0.0
      %7110 = vmatmul.mubr.f32.gmra.mrb[0].mxu0 %v6871
      %v7111 = vpop.f32.mrb[0].mxu0
      %v7112 = vadd.f32 0.0, %v7111
      %v7113 = vpop.f32.mrb[0].mxu0
      %7114 = vmatprep.mubr.f32.mxu0 0.0
      %7115 = vmatmul.mubr.f32.gmra.mrb[0].mxu0 %v6874
      %v7116 = vpop.f32.mrb[0].mxu0
      %v7117 = vadd.f32 0.0, %v7116
      %v7118 = vpop.f32.mrb[0].mxu0
      %7119 = vmatprep.mubr.f32.mxu0 0.0
      %7120 = vmatmul.mubr.f32.gmra.mrb[0].mxu0 %v6877
      %v7121 = vpop.f32.mrb[0].mxu0
      %v7122 = vadd.f32 0.0, %v7121
      %v7123 = vpop.f32.mrb[0].mxu0
      %7124 = vmatprep.mubr.f32.mxu0 0.0
      %7125 = vmatmul.mubr.f32.gmra.mrb[0].mxu0 %v6880
      %v7126 = vpop.f32.mrb[0].mxu0
      %v7127 = vadd.f32 0.0, %v7126
      %v7128 = vpop.f32.mrb[0].mxu0
      %7129 = vdwg.mxu0
      %v7130 = vadd.f32 %v6558, %v6952
      %v7131 = vadd.f32 %v6563, %v6957
      %v7132 = vadd.f32 %v6568, %v6962
      %v7133 = vadd.f32 %v6573, %v6967
      %v7134 = vadd.f32 %v6578, %v6972
      %v7135 = vadd.f32 %v6583, %v6977
      %v7136 = vadd.f32 %v6588, %v6982
      %v7137 = vadd.f32 %v6593, %v6987
      %v7138 = vadd.f32 %v6598, %v6992
      %v7139 = vadd.f32 %v6603, %v6997
      %v7140 = vadd.f32 %v6608, %v7002
      %v7141 = vadd.f32 %v6613, %v7007
      %v7142 = vadd.f32 %v6618, %v7012
      %v7143 = vadd.f32 %v6623, %v7017
      %v7144 = vadd.f32 %v6628, %v7022
      %v7145 = vadd.f32 %v6633, %v7027
      %v7146 = vadd.f32 %v6638, %v7032
      %v7147 = vadd.f32 %v6643, %v7037
      %v7148 = vadd.f32 %v6648, %v7042
      %v7149 = vadd.f32 %v6653, %v7047
      %v7150 = vadd.f32 %v6658, %v7052
      %v7151 = vadd.f32 %v6663, %v7057
      %v7152 = vadd.f32 %v6668, %v7062
      %v7153 = vadd.f32 %v6673, %v7067
      %v7154 = vadd.f32 %v6678, %v7072
      %v7155 = vadd.f32 %v6683, %v7077
      %v7156 = vadd.f32 %v6688, %v7082
      %v7157 = vadd.f32 %v6693, %v7087
      %v7158 = vadd.f32 %v6698, %v7092
      %v7159 = vadd.f32 %v6703, %v7097
      %v7160 = vadd.f32 %v6708, %v7102
      %v7161 = vadd.f32 %v6713, %v7107
      %v7162 = vadd.f32 %v6718, %v7112
      %v7163 = vadd.f32 %v6723, %v7117
      %v7164 = vadd.f32 %v6728, %v7122
      %v7165 = vadd.f32 %v6733, %v7127
      %v7166 = vld [vmem:[#allocation2 + $0x12] sm:$0xff]
      %v7167 = vld [vmem:[#allocation2 + $0x1a] sm:$0xff]
      %v7168 = vld [vmem:[#allocation2 + $0x22] sm:$0xff]
      %v7169 = vld [vmem:[#allocation2 + $0x2a] sm:$0xff]
      %v7170 = vld [vmem:[#allocation2 + $0x32] sm:$0xff]
      %v7171 = vld [vmem:[#allocation2 + $0x3a] sm:$0xff]
      %v7172 = vld [vmem:[#allocation2 + $0x42] sm:$0xff]
      %v7173 = vld [vmem:[#allocation2 + $0x4a] sm:$0xff]
      %v7174 = vld [vmem:[#allocation2 + $0x52] sm:$0xff]
      %v7175 = vld [vmem:[#allocation2 + $0x5a] sm:$0xff]
      %v7176 = vld [vmem:[#allocation2 + $0x62] sm:$0xff]
      %v7177 = vld [vmem:[#allocation2 + $0x6a] sm:$0xff]
      %v7178 = vld [vmem:[#allocation2 + $0x72] sm:$0xff]
      %v7179 = vld [vmem:[#allocation2 + $0x7a] sm:$0xff]
      %v7180 = vld [vmem:[#allocation2 + $0x82] sm:$0xff]
      %v7181 = vld [vmem:[#allocation2 + $0x8a] sm:$0xff]
      %v7182 = vld [vmem:[#allocation2 + $0x92] sm:$0xff]
      %v7183 = vld [vmem:[#allocation2 + $0x9a] sm:$0xff]
      %v7184 = vld [vmem:[#allocation2 + $0xa2] sm:$0xff]
      %v7185 = vld [vmem:[#allocation2 + $0xaa] sm:$0xff]
      %v7186 = vld [vmem:[#allocation2 + $0xb2] sm:$0xff]
      %v7187 = vld [vmem:[#allocation2 + $0xba] sm:$0xff]
      %v7188 = vld [vmem:[#allocation2 + $0xc2] sm:$0xff]
      %v7189 = vld [vmem:[#allocation2 + $0xca] sm:$0xff]
      %v7190 = vld [vmem:[#allocation2 + $0xd2] sm:$0xff]
      %v7191 = vld [vmem:[#allocation2 + $0xda] sm:$0xff]
      %v7192 = vld [vmem:[#allocation2 + $0xe2] sm:$0xff]
      %v7193 = vld [vmem:[#allocation2 + $0xea] sm:$0xff]
      %v7194 = vld [vmem:[#allocation2 + $0xf2] sm:$0xff]
      %v7195 = vld [vmem:[#allocation2 + $0xfa] sm:$0xff]
      %v7196 = vld [vmem:[#allocation2 + $0x102] sm:$0xff]
      %v7197 = vld [vmem:[#allocation2 + $0x10a] sm:$0xff]
      %v7198 = vld [vmem:[#allocation2 + $0x112] sm:$0xff]
      %v7199 = vld [vmem:[#allocation2 + $0x11a] sm:$0xff]
      %v7200 = vld [vmem:[#allocation2 + $0x122] sm:$0xff]
      %v7201 = vld [vmem:[#allocation2 + $0x12a] sm:$0xff]
      %s7202 = scalar_lea.vmem %s3, 12
      %v7203 = vld [vmem:[%s7202] sm:$0xf]
      %v7205 = vsel %vm916, %v7166, 0
      %v7208 = vsel %vm916, %v7167, 0
      %v7211 = vsel %vm916, %v7168, 0
      %v7214 = vsel %vm916, %v7169, 0
      %v7217 = vsel %vm916, %v7170, 0
      %v7220 = vsel %vm916, %v7171, 0
      %v7223 = vsel %vm916, %v7172, 0
      %v7226 = vsel %vm916, %v7173, 0
      %v7229 = vsel %vm916, %v7174, 0
      %v7232 = vsel %vm916, %v7175, 0
      %v7235 = vsel %vm916, %v7176, 0
      %v7238 = vsel %vm916, %v7177, 0
      %v7241 = vsel %vm916, %v7178, 0
      %v7244 = vsel %vm916, %v7179, 0
      %v7247 = vsel %vm916, %v7180, 0
      %v7250 = vsel %vm916, %v7181, 0
      %v7253 = vsel %vm916, %v7182, 0
      %v7256 = vsel %vm916, %v7183, 0
      %v7259 = vsel %vm916, %v7184, 0
      %v7262 = vsel %vm916, %v7185, 0
      %v7265 = vsel %vm916, %v7186, 0
      %v7268 = vsel %vm916, %v7187, 0
      %v7271 = vsel %vm916, %v7188, 0
      %v7274 = vsel %vm916, %v7189, 0
      %v7277 = vsel %vm916, %v7190, 0
      %v7280 = vsel %vm916, %v7191, 0
      %v7283 = vsel %vm916, %v7192, 0
      %v7286 = vsel %vm916, %v7193, 0
      %v7289 = vsel %vm916, %v7194, 0
      %v7292 = vsel %vm916, %v7195, 0
      %v7295 = vsel %vm916, %v7196, 0
      %v7298 = vsel %vm916, %v7197, 0
      %v7301 = vsel %vm916, %v7198, 0
      %v7304 = vsel %vm916, %v7199, 0
      %v7307 = vsel %vm916, %v7200, 0
      %v7310 = vsel %vm916, %v7201, 0
      %v7313 = vsel %vm1581, %v7203, 0
      %7315 = vmatprep.subr.mxu0 0.0
      %7316 = vmatpush1.msra.mxu0 %v7313
      %7317 = vmatprep.subr.mxu0 0.0
      %7318 = vmatpush1.msra.mxu0 0.0
      %7319 = vmatprep.subr.mxu0 0.0
      %7320 = vmatpush1.msra.mxu0 0.0
      %7321 = vmatprep.subr.mxu0 0.0
      %7322 = vmatpush1.msra.mxu0 0.0
      %7323 = vmatprep.subr.mxu0 0.0
      %7324 = vmatpush1.msra.mxu0 0.0
      %7325 = vmatprep.subr.mxu0 0.0
      %7326 = vmatpush1.msra.mxu0 0.0
      %7327 = vmatprep.subr.mxu0 0.0
      %7328 = vmatpush1.msra.mxu0 0.0
      %7329 = vmatprep.subr.mxu0 0.0
      %7330 = vmatpush1.msra.mxu0 0.0
      %7331 = vmatprep.subr.mxu0 0.0
      %7332 = vmatpush1.msra.mxu0 0.0
      %7333 = vmatprep.subr.mxu0 0.0
      %7334 = vmatpush1.msra.mxu0 0.0
      %7335 = vmatprep.subr.mxu0 0.0
      %7336 = vmatpush1.msra.mxu0 0.0
      %7337 = vmatprep.subr.mxu0 0.0
      %7338 = vmatpush1.msra.mxu0 0.0
      %7339 = vmatprep.subr.mxu0 0.0
      %7340 = vmatpush1.msra.mxu0 0.0
      %7341 = vmatprep.subr.mxu0 0.0
      %7342 = vmatpush1.msra.mxu0 0.0
      %7343 = vmatprep.subr.mxu0 0.0
      %7344 = vmatpush1.msra.mxu0 0.0
      %7345 = vmatprep.subr.mxu0 0.0
      %7346 = vmatpush1.msra.mxu0 0.0
      %7347 = vmatprep.subr.mxu0 0.0
      %7348 = vmatpush1.msra.mxu0 0.0
      %7349 = vmatprep.subr.mxu0 0.0
      %7350 = vmatpush1.msra.mxu0 0.0
      %7351 = vmatprep.subr.mxu0 0.0
      %7352 = vmatpush1.msra.mxu0 0.0
      %7353 = vmatprep.subr.mxu0 0.0
      %7354 = vmatpush1.msra.mxu0 0.0
      %7355 = vmatprep.subr.mxu0 0.0
      %7356 = vmatpush1.msra.mxu0 0.0
      %7357 = vmatprep.subr.mxu0 0.0
      %7358 = vmatpush1.msra.mxu0 0.0
      %7359 = vmatprep.subr.mxu0 0.0
      %7360 = vmatpush1.msra.mxu0 0.0
      %7361 = vmatprep.subr.mxu0 0.0
      %7362 = vmatpush1.msra.mxu0 0.0
      %7363 = vmatprep.subr.mxu0 0.0
      %7364 = vmatpush1.msra.mxu0 0.0
      %7365 = vmatprep.subr.mxu0 0.0
      %7366 = vmatpush1.msra.mxu0 0.0
      %7367 = vmatprep.subr.mxu0 0.0
      %7368 = vmatpush1.msra.mxu0 0.0
      %7369 = vmatprep.subr.mxu0 0.0
      %7370 = vmatpush1.msra.mxu0 0.0
      %7371 = vmatprep.subr.mxu0 0.0
      %7372 = vmatpush1.msra.mxu0 0.0
      %7373 = vmatprep.subr.mxu0 0.0
      %7374 = vmatpush1.msra.mxu0 0.0
      %7375 = vmatprep.subr.mxu0 0.0
      %7376 = vmatpush1.msra.mxu0 0.0
      %7377 = vmatprep.subr.mxu0 0.0
      %7378 = vmatpush1.msra.mxu0 0.0
      %7379 = vmatprep.mubr.f32.mxu0 0.0
      %7380 = vmatmul.mubr.f32.gmra.mrb[0].mxu0 %v7205
      %v7381 = vpop.f32.mrb[0].mxu0
      %v7382 = vadd.f32 0.0, %v7381
      %v7383 = vpop.f32.mrb[0].mxu0
      %7384 = vmatprep.mubr.f32.mxu0 0.0
      %7385 = vmatmul.mubr.f32.gmra.mrb[0].mxu0 %v7208
      %v7386 = vpop.f32.mrb[0].mxu0
      %v7387 = vadd.f32 0.0, %v7386
      %v7388 = vpop.f32.mrb[0].mxu0
      %7389 = vmatprep.mubr.f32.mxu0 0.0
      %7390 = vmatmul.mubr.f32.gmra.mrb[0].mxu0 %v7211
      %v7391 = vpop.f32.mrb[0].mxu0
      %v7392 = vadd.f32 0.0, %v7391
      %v7393 = vpop.f32.mrb[0].mxu0
      %7394 = vmatprep.mubr.f32.mxu0 0.0
      %7395 = vmatmul.mubr.f32.gmra.mrb[0].mxu0 %v7214
      %v7396 = vpop.f32.mrb[0].mxu0
      %v7397 = vadd.f32 0.0, %v7396
      %v7398 = vpop.f32.mrb[0].mxu0
      %7399 = vmatprep.mubr.f32.mxu0 0.0
      %7400 = vmatmul.mubr.f32.gmra.mrb[0].mxu0 %v7217
      %v7401 = vpop.f32.mrb[0].mxu0
      %v7402 = vadd.f32 0.0, %v7401
      %v7403 = vpop.f32.mrb[0].mxu0
      %7404 = vmatprep.mubr.f32.mxu0 0.0
      %7405 = vmatmul.mubr.f32.gmra.mrb[0].mxu0 %v7220
      %v7406 = vpop.f32.mrb[0].mxu0
      %v7407 = vadd.f32 0.0, %v7406
      %v7408 = vpop.f32.mrb[0].mxu0
      %7409 = vmatprep.mubr.f32.mxu0 0.0
      %7410 = vmatmul.mubr.f32.gmra.mrb[0].mxu0 %v7223
      %v7411 = vpop.f32.mrb[0].mxu0
      %v7412 = vadd.f32 0.0, %v7411
      %v7413 = vpop.f32.mrb[0].mxu0
      %7414 = vmatprep.mubr.f32.mxu0 0.0
      %7415 = vmatmul.mubr.f32.gmra.mrb[0].mxu0 %v7226
      %v7416 = vpop.f32.mrb[0].mxu0
      %v7417 = vadd.f32 0.0, %v7416
      %v7418 = vpop.f32.mrb[0].mxu0
      %7419 = vmatprep.mubr.f32.mxu0 0.0
      %7420 = vmatmul.mubr.f32.gmra.mrb[0].mxu0 %v7229
      %v7421 = vpop.f32.mrb[0].mxu0
      %v7422 = vadd.f32 0.0, %v7421
      %v7423 = vpop.f32.mrb[0].mxu0
      %7424 = vmatprep.mubr.f32.mxu0 0.0
      %7425 = vmatmul.mubr.f32.gmra.mrb[0].mxu0 %v7232
      %v7426 = vpop.f32.mrb[0].mxu0
      %v7427 = vadd.f32 0.0, %v7426
      %v7428 = vpop.f32.mrb[0].mxu0
      %7429 = vmatprep.mubr.f32.mxu0 0.0
      %7430 = vmatmul.mubr.f32.gmra.mrb[0].mxu0 %v7235
      %v7431 = vpop.f32.mrb[0].mxu0
      %v7432 = vadd.f32 0.0, %v7431
      %v7433 = vpop.f32.mrb[0].mxu0
      %7434 = vmatprep.mubr.f32.mxu0 0.0
      %7435 = vmatmul.mubr.f32.gmra.mrb[0].mxu0 %v7238
      %v7436 = vpop.f32.mrb[0].mxu0
      %v7437 = vadd.f32 0.0, %v7436
      %v7438 = vpop.f32.mrb[0].mxu0
      %7439 = vmatprep.mubr.f32.mxu0 0.0
      %7440 = vmatmul.mubr.f32.gmra.mrb[0].mxu0 %v7241
      %v7441 = vpop.f32.mrb[0].mxu0
      %v7442 = vadd.f32 0.0, %v7441
      %v7443 = vpop.f32.mrb[0].mxu0
      %7444 = vmatprep.mubr.f32.mxu0 0.0
      %7445 = vmatmul.mubr.f32.gmra.mrb[0].mxu0 %v7244
      %v7446 = vpop.f32.mrb[0].mxu0
      %v7447 = vadd.f32 0.0, %v7446
      %v7448 = vpop.f32.mrb[0].mxu0
      %7449 = vmatprep.mubr.f32.mxu0 0.0
      %7450 = vmatmul.mubr.f32.gmra.mrb[0].mxu0 %v7247
      %v7451 = vpop.f32.mrb[0].mxu0
      %v7452 = vadd.f32 0.0, %v7451
      %v7453 = vpop.f32.mrb[0].mxu0
      %7454 = vmatprep.mubr.f32.mxu0 0.0
      %7455 = vmatmul.mubr.f32.gmra.mrb[0].mxu0 %v7250
      %v7456 = vpop.f32.mrb[0].mxu0
      %v7457 = vadd.f32 0.0, %v7456
      %v7458 = vpop.f32.mrb[0].mxu0
      %7459 = vmatprep.mubr.f32.mxu0 0.0
      %7460 = vmatmul.mubr.f32.gmra.mrb[0].mxu0 %v7253
      %v7461 = vpop.f32.mrb[0].mxu0
      %v7462 = vadd.f32 0.0, %v7461
      %v7463 = vpop.f32.mrb[0].mxu0
      %7464 = vmatprep.mubr.f32.mxu0 0.0
      %7465 = vmatmul.mubr.f32.gmra.mrb[0].mxu0 %v7256
      %v7466 = vpop.f32.mrb[0].mxu0
      %v7467 = vadd.f32 0.0, %v7466
      %v7468 = vpop.f32.mrb[0].mxu0
      %7469 = vmatprep.mubr.f32.mxu0 0.0
      %7470 = vmatmul.mubr.f32.gmra.mrb[0].mxu0 %v7259
      %v7471 = vpop.f32.mrb[0].mxu0
      %v7472 = vadd.f32 0.0, %v7471
      %v7473 = vpop.f32.mrb[0].mxu0
      %7474 = vmatprep.mubr.f32.mxu0 0.0
      %7475 = vmatmul.mubr.f32.gmra.mrb[0].mxu0 %v7262
      %v7476 = vpop.f32.mrb[0].mxu0
      %v7477 = vadd.f32 0.0, %v7476
      %v7478 = vpop.f32.mrb[0].mxu0
      %7479 = vmatprep.mubr.f32.mxu0 0.0
      %7480 = vmatmul.mubr.f32.gmra.mrb[0].mxu0 %v7265
      %v7481 = vpop.f32.mrb[0].mxu0
      %v7482 = vadd.f32 0.0, %v7481
      %v7483 = vpop.f32.mrb[0].mxu0
      %7484 = vmatprep.mubr.f32.mxu0 0.0
      %7485 = vmatmul.mubr.f32.gmra.mrb[0].mxu0 %v7268
      %v7486 = vpop.f32.mrb[0].mxu0
      %v7487 = vadd.f32 0.0, %v7486
      %v7488 = vpop.f32.mrb[0].mxu0
      %7489 = vmatprep.mubr.f32.mxu0 0.0
      %7490 = vmatmul.mubr.f32.gmra.mrb[0].mxu0 %v7271
      %v7491 = vpop.f32.mrb[0].mxu0
      %v7492 = vadd.f32 0.0, %v7491
      %v7493 = vpop.f32.mrb[0].mxu0
      %7494 = vmatprep.mubr.f32.mxu0 0.0
      %7495 = vmatmul.mubr.f32.gmra.mrb[0].mxu0 %v7274
      %v7496 = vpop.f32.mrb[0].mxu0
      %v7497 = vadd.f32 0.0, %v7496
      %v7498 = vpop.f32.mrb[0].mxu0
      %7499 = vmatprep.mubr.f32.mxu0 0.0
      %7500 = vmatmul.mubr.f32.gmra.mrb[0].mxu0 %v7277
      %v7501 = vpop.f32.mrb[0].mxu0
      %v7502 = vadd.f32 0.0, %v7501
      %v7503 = vpop.f32.mrb[0].mxu0
      %7504 = vmatprep.mubr.f32.mxu0 0.0
      %7505 = vmatmul.mubr.f32.gmra.mrb[0].mxu0 %v7280
      %v7506 = vpop.f32.mrb[0].mxu0
      %v7507 = vadd.f32 0.0, %v7506
      %v7508 = vpop.f32.mrb[0].mxu0
      %7509 = vmatprep.mubr.f32.mxu0 0.0
      %7510 = vmatmul.mubr.f32.gmra.mrb[0].mxu0 %v7283
      %v7511 = vpop.f32.mrb[0].mxu0
      %v7512 = vadd.f32 0.0, %v7511
      %v7513 = vpop.f32.mrb[0].mxu0
      %7514 = vmatprep.mubr.f32.mxu0 0.0
      %7515 = vmatmul.mubr.f32.gmra.mrb[0].mxu0 %v7286
      %v7516 = vpop.f32.mrb[0].mxu0
      %v7517 = vadd.f32 0.0, %v7516
      %v7518 = vpop.f32.mrb[0].mxu0
      %7519 = vmatprep.mubr.f32.mxu0 0.0
      %7520 = vmatmul.mubr.f32.gmra.mrb[0].mxu0 %v7289
      %v7521 = vpop.f32.mrb[0].mxu0
      %v7522 = vadd.f32 0.0, %v7521
      %v7523 = vpop.f32.mrb[0].mxu0
      %7524 = vmatprep.mubr.f32.mxu0 0.0
      %7525 = vmatmul.mubr.f32.gmra.mrb[0].mxu0 %v7292
      %v7526 = vpop.f32.mrb[0].mxu0
      %v7527 = vadd.f32 0.0, %v7526
      %v7528 = vpop.f32.mrb[0].mxu0
      %7529 = vmatprep.mubr.f32.mxu0 0.0
      %7530 = vmatmul.mubr.f32.gmra.mrb[0].mxu0 %v7295
      %v7531 = vpop.f32.mrb[0].mxu0
      %v7532 = vadd.f32 0.0, %v7531
      %v7533 = vpop.f32.mrb[0].mxu0
      %7534 = vmatprep.mubr.f32.mxu0 0.0
      %7535 = vmatmul.mubr.f32.gmra.mrb[0].mxu0 %v7298
      %v7536 = vpop.f32.mrb[0].mxu0
      %v7537 = vadd.f32 0.0, %v7536
      %v7538 = vpop.f32.mrb[0].mxu0
      %7539 = vmatprep.mubr.f32.mxu0 0.0
      %7540 = vmatmul.mubr.f32.gmra.mrb[0].mxu0 %v7301
      %v7541 = vpop.f32.mrb[0].mxu0
      %v7542 = vadd.f32 0.0, %v7541
      %v7543 = vpop.f32.mrb[0].mxu0
      %7544 = vmatprep.mubr.f32.mxu0 0.0
      %7545 = vmatmul.mubr.f32.gmra.mrb[0].mxu0 %v7304
      %v7546 = vpop.f32.mrb[0].mxu0
      %v7547 = vadd.f32 0.0, %v7546
      %v7548 = vpop.f32.mrb[0].mxu0
      %7549 = vmatprep.mubr.f32.mxu0 0.0
      %7550 = vmatmul.mubr.f32.gmra.mrb[0].mxu0 %v7307
      %v7551 = vpop.f32.mrb[0].mxu0
      %v7552 = vadd.f32 0.0, %v7551
      %v7553 = vpop.f32.mrb[0].mxu0
      %7554 = vmatprep.mubr.f32.mxu0 0.0
      %7555 = vmatmul.mubr.f32.gmra.mrb[0].mxu0 %v7310
      %v7556 = vpop.f32.mrb[0].mxu0
      %v7557 = vadd.f32 0.0, %v7556
      %v7558 = vpop.f32.mrb[0].mxu0
      %7559 = vdwg.mxu0
      %v7560 = vadd.f32 %v7130, %v7382
      %v7561 = vadd.f32 %v7131, %v7387
      %v7562 = vadd.f32 %v7132, %v7392
      %v7563 = vadd.f32 %v7133, %v7397
      %v7564 = vadd.f32 %v7134, %v7402
      %v7565 = vadd.f32 %v7135, %v7407
      %v7566 = vadd.f32 %v7136, %v7412
      %v7567 = vadd.f32 %v7137, %v7417
      %v7568 = vadd.f32 %v7138, %v7422
      %v7569 = vadd.f32 %v7139, %v7427
      %v7570 = vadd.f32 %v7140, %v7432
      %v7571 = vadd.f32 %v7141, %v7437
      %v7572 = vadd.f32 %v7142, %v7442
      %v7573 = vadd.f32 %v7143, %v7447
      %v7574 = vadd.f32 %v7144, %v7452
      %v7575 = vadd.f32 %v7145, %v7457
      %v7576 = vadd.f32 %v7146, %v7462
      %v7577 = vadd.f32 %v7147, %v7467
      %v7578 = vadd.f32 %v7148, %v7472
      %v7579 = vadd.f32 %v7149, %v7477
      %v7580 = vadd.f32 %v7150, %v7482
      %v7581 = vadd.f32 %v7151, %v7487
      %v7582 = vadd.f32 %v7152, %v7492
      %v7583 = vadd.f32 %v7153, %v7497
      %v7584 = vadd.f32 %v7154, %v7502
      %v7585 = vadd.f32 %v7155, %v7507
      %v7586 = vadd.f32 %v7156, %v7512
      %v7587 = vadd.f32 %v7157, %v7517
      %v7588 = vadd.f32 %v7158, %v7522
      %v7589 = vadd.f32 %v7159, %v7527
      %v7590 = vadd.f32 %v7160, %v7532
      %v7591 = vadd.f32 %v7161, %v7537
      %v7592 = vadd.f32 %v7162, %v7542
      %v7593 = vadd.f32 %v7163, %v7547
      %v7594 = vadd.f32 %v7164, %v7552
      %v7595 = vadd.f32 %v7165, %v7557
      %v7596 = vld [vmem:[#allocation2 + $0x13] sm:$0xff]
      %v7597 = vld [vmem:[#allocation2 + $0x1b] sm:$0xff]
      %v7598 = vld [vmem:[#allocation2 + $0x23] sm:$0xff]
      %v7599 = vld [vmem:[#allocation2 + $0x2b] sm:$0xff]
      %v7600 = vld [vmem:[#allocation2 + $0x33] sm:$0xff]
      %v7601 = vld [vmem:[#allocation2 + $0x3b] sm:$0xff]
      %v7602 = vld [vmem:[#allocation2 + $0x43] sm:$0xff]
      %v7603 = vld [vmem:[#allocation2 + $0x4b] sm:$0xff]
      %v7604 = vld [vmem:[#allocation2 + $0x53] sm:$0xff]
      %v7605 = vld [vmem:[#allocation2 + $0x5b] sm:$0xff]
      %v7606 = vld [vmem:[#allocation2 + $0x63] sm:$0xff]
      %v7607 = vld [vmem:[#allocation2 + $0x6b] sm:$0xff]
      %v7608 = vld [vmem:[#allocation2 + $0x73] sm:$0xff]
      %v7609 = vld [vmem:[#allocation2 + $0x7b] sm:$0xff]
      %v7610 = vld [vmem:[#allocation2 + $0x83] sm:$0xff]
      %v7611 = vld [vmem:[#allocation2 + $0x8b] sm:$0xff]
      %v7612 = vld [vmem:[#allocation2 + $0x93] sm:$0xff]
      %v7613 = vld [vmem:[#allocation2 + $0x9b] sm:$0xff]
      %v7614 = vld [vmem:[#allocation2 + $0xa3] sm:$0xff]
      %v7615 = vld [vmem:[#allocation2 + $0xab] sm:$0xff]
      %v7616 = vld [vmem:[#allocation2 + $0xb3] sm:$0xff]
      %v7617 = vld [vmem:[#allocation2 + $0xbb] sm:$0xff]
      %v7618 = vld [vmem:[#allocation2 + $0xc3] sm:$0xff]
      %v7619 = vld [vmem:[#allocation2 + $0xcb] sm:$0xff]
      %v7620 = vld [vmem:[#allocation2 + $0xd3] sm:$0xff]
      %v7621 = vld [vmem:[#allocation2 + $0xdb] sm:$0xff]
      %v7622 = vld [vmem:[#allocation2 + $0xe3] sm:$0xff]
      %v7623 = vld [vmem:[#allocation2 + $0xeb] sm:$0xff]
      %v7624 = vld [vmem:[#allocation2 + $0xf3] sm:$0xff]
      %v7625 = vld [vmem:[#allocation2 + $0xfb] sm:$0xff]
      %v7626 = vld [vmem:[#allocation2 + $0x103] sm:$0xff]
      %v7627 = vld [vmem:[#allocation2 + $0x10b] sm:$0xff]
      %v7628 = vld [vmem:[#allocation2 + $0x113] sm:$0xff]
      %v7629 = vld [vmem:[#allocation2 + $0x11b] sm:$0xff]
      %v7630 = vld [vmem:[#allocation2 + $0x123] sm:$0xff]
      %v7631 = vld [vmem:[#allocation2 + $0x12b] sm:$0xff]
      %s7632 = scalar_lea.vmem %s3, 16
      %v7633 = vld [vmem:[%s7632] sm:$0xf]
      %v7635 = vsel %vm916, %v7596, 0
      %v7638 = vsel %vm916, %v7597, 0
      %v7641 = vsel %vm916, %v7598, 0
      %v7644 = vsel %vm916, %v7599, 0
      %v7647 = vsel %vm916, %v7600, 0
      %v7650 = vsel %vm916, %v7601, 0
      %v7653 = vsel %vm916, %v7602, 0
      %v7656 = vsel %vm916, %v7603, 0
      %v7659 = vsel %vm916, %v7604, 0
      %v7662 = vsel %vm916, %v7605, 0
      %v7665 = vsel %vm916, %v7606, 0
      %v7668 = vsel %vm916, %v7607, 0
      %v7671 = vsel %vm916, %v7608, 0
      %v7674 = vsel %vm916, %v7609, 0
      %v7677 = vsel %vm916, %v7610, 0
      %v7680 = vsel %vm916, %v7611, 0
      %v7683 = vsel %vm916, %v7612, 0
      %v7686 = vsel %vm916, %v7613, 0
      %v7689 = vsel %vm916, %v7614, 0
      %v7692 = vsel %vm916, %v7615, 0
      %v7695 = vsel %vm916, %v7616, 0
      %v7698 = vsel %vm916, %v7617, 0
      %v7701 = vsel %vm916, %v7618, 0
      %v7704 = vsel %vm916, %v7619, 0
      %v7707 = vsel %vm916, %v7620, 0
      %v7710 = vsel %vm916, %v7621, 0
      %v7713 = vsel %vm916, %v7622, 0
      %v7716 = vsel %vm916, %v7623, 0
      %v7719 = vsel %vm916, %v7624, 0
      %v7722 = vsel %vm916, %v7625, 0
      %v7725 = vsel %vm916, %v7626, 0
      %v7728 = vsel %vm916, %v7627, 0
      %v7731 = vsel %vm916, %v7628, 0
      %v7734 = vsel %vm916, %v7629, 0
      %v7737 = vsel %vm916, %v7630, 0
      %v7740 = vsel %vm916, %v7631, 0
      %v7743 = vsel %vm1581, %v7633, 0
      %7745 = vmatprep.subr.mxu0 0.0
      %7746 = vmatpush1.msra.mxu0 %v7743
      %7747 = vmatprep.subr.mxu0 0.0
      %7748 = vmatpush1.msra.mxu0 0.0
      %7749 = vmatprep.subr.mxu0 0.0
      %7750 = vmatpush1.msra.mxu0 0.0
      %7751 = vmatprep.subr.mxu0 0.0
      %7752 = vmatpush1.msra.mxu0 0.0
      %7753 = vmatprep.subr.mxu0 0.0
      %7754 = vmatpush1.msra.mxu0 0.0
      %7755 = vmatprep.subr.mxu0 0.0
      %7756 = vmatpush1.msra.mxu0 0.0
      %7757 = vmatprep.subr.mxu0 0.0
      %7758 = vmatpush1.msra.mxu0 0.0
      %7759 = vmatprep.subr.mxu0 0.0
      %7760 = vmatpush1.msra.mxu0 0.0
      %7761 = vmatprep.subr.mxu0 0.0
      %7762 = vmatpush1.msra.mxu0 0.0
      %7763 = vmatprep.subr.mxu0 0.0
      %7764 = vmatpush1.msra.mxu0 0.0
      %7765 = vmatprep.subr.mxu0 0.0
      %7766 = vmatpush1.msra.mxu0 0.0
      %7767 = vmatprep.subr.mxu0 0.0
      %7768 = vmatpush1.msra.mxu0 0.0
      %7769 = vmatprep.subr.mxu0 0.0
      %7770 = vmatpush1.msra.mxu0 0.0
      %7771 = vmatprep.subr.mxu0 0.0
      %7772 = vmatpush1.msra.mxu0 0.0
      %7773 = vmatprep.subr.mxu0 0.0
      %7774 = vmatpush1.msra.mxu0 0.0
      %7775 = vmatprep.subr.mxu0 0.0
      %7776 = vmatpush1.msra.mxu0 0.0
      %7777 = vmatprep.subr.mxu0 0.0
      %7778 = vmatpush1.msra.mxu0 0.0
      %7779 = vmatprep.subr.mxu0 0.0
      %7780 = vmatpush1.msra.mxu0 0.0
      %7781 = vmatprep.subr.mxu0 0.0
      %7782 = vmatpush1.msra.mxu0 0.0
      %7783 = vmatprep.subr.mxu0 0.0
      %7784 = vmatpush1.msra.mxu0 0.0
      %7785 = vmatprep.subr.mxu0 0.0
      %7786 = vmatpush1.msra.mxu0 0.0
      %7787 = vmatprep.subr.mxu0 0.0
      %7788 = vmatpush1.msra.mxu0 0.0
      %7789 = vmatprep.subr.mxu0 0.0
      %7790 = vmatpush1.msra.mxu0 0.0
      %7791 = vmatprep.subr.mxu0 0.0
      %7792 = vmatpush1.msra.mxu0 0.0
      %7793 = vmatprep.subr.mxu0 0.0
      %7794 = vmatpush1.msra.mxu0 0.0
      %7795 = vmatprep.subr.mxu0 0.0
      %7796 = vmatpush1.msra.mxu0 0.0
      %7797 = vmatprep.subr.mxu0 0.0
      %7798 = vmatpush1.msra.mxu0 0.0
      %7799 = vmatprep.subr.mxu0 0.0
      %7800 = vmatpush1.msra.mxu0 0.0
      %7801 = vmatprep.subr.mxu0 0.0
      %7802 = vmatpush1.msra.mxu0 0.0
      %7803 = vmatprep.subr.mxu0 0.0
      %7804 = vmatpush1.msra.mxu0 0.0
      %7805 = vmatprep.subr.mxu0 0.0
      %7806 = vmatpush1.msra.mxu0 0.0
      %7807 = vmatprep.subr.mxu0 0.0
      %7808 = vmatpush1.msra.mxu0 0.0
      %7809 = vmatprep.mubr.f32.mxu0 0.0
      %7810 = vmatmul.mubr.f32.gmra.mrb[0].mxu0 %v7635
      %v7811 = vpop.f32.mrb[0].mxu0
      %v7812 = vadd.f32 0.0, %v7811
      %v7813 = vpop.f32.mrb[0].mxu0
      %7814 = vmatprep.mubr.f32.mxu0 0.0
      %7815 = vmatmul.mubr.f32.gmra.mrb[0].mxu0 %v7638
      %v7816 = vpop.f32.mrb[0].mxu0
      %v7817 = vadd.f32 0.0, %v7816
      %v7818 = vpop.f32.mrb[0].mxu0
      %7819 = vmatprep.mubr.f32.mxu0 0.0
      %7820 = vmatmul.mubr.f32.gmra.mrb[0].mxu0 %v7641
      %v7821 = vpop.f32.mrb[0].mxu0
      %v7822 = vadd.f32 0.0, %v7821
      %v7823 = vpop.f32.mrb[0].mxu0
      %7824 = vmatprep.mubr.f32.mxu0 0.0
      %7825 = vmatmul.mubr.f32.gmra.mrb[0].mxu0 %v7644
      %v7826 = vpop.f32.mrb[0].mxu0
      %v7827 = vadd.f32 0.0, %v7826
      %v7828 = vpop.f32.mrb[0].mxu0
      %7829 = vmatprep.mubr.f32.mxu0 0.0
      %7830 = vmatmul.mubr.f32.gmra.mrb[0].mxu0 %v7647
      %v7831 = vpop.f32.mrb[0].mxu0
      %v7832 = vadd.f32 0.0, %v7831
      %v7833 = vpop.f32.mrb[0].mxu0
      %7834 = vmatprep.mubr.f32.mxu0 0.0
      %7835 = vmatmul.mubr.f32.gmra.mrb[0].mxu0 %v7650
      %v7836 = vpop.f32.mrb[0].mxu0
      %v7837 = vadd.f32 0.0, %v7836
      %v7838 = vpop.f32.mrb[0].mxu0
      %7839 = vmatprep.mubr.f32.mxu0 0.0
      %7840 = vmatmul.mubr.f32.gmra.mrb[0].mxu0 %v7653
      %v7841 = vpop.f32.mrb[0].mxu0
      %v7842 = vadd.f32 0.0, %v7841
      %v7843 = vpop.f32.mrb[0].mxu0
      %7844 = vmatprep.mubr.f32.mxu0 0.0
      %7845 = vmatmul.mubr.f32.gmra.mrb[0].mxu0 %v7656
      %v7846 = vpop.f32.mrb[0].mxu0
      %v7847 = vadd.f32 0.0, %v7846
      %v7848 = vpop.f32.mrb[0].mxu0
      %7849 = vmatprep.mubr.f32.mxu0 0.0
      %7850 = vmatmul.mubr.f32.gmra.mrb[0].mxu0 %v7659
      %v7851 = vpop.f32.mrb[0].mxu0
      %v7852 = vadd.f32 0.0, %v7851
      %v7853 = vpop.f32.mrb[0].mxu0
      %7854 = vmatprep.mubr.f32.mxu0 0.0
      %7855 = vmatmul.mubr.f32.gmra.mrb[0].mxu0 %v7662
      %v7856 = vpop.f32.mrb[0].mxu0
      %v7857 = vadd.f32 0.0, %v7856
      %v7858 = vpop.f32.mrb[0].mxu0
      %7859 = vmatprep.mubr.f32.mxu0 0.0
      %7860 = vmatmul.mubr.f32.gmra.mrb[0].mxu0 %v7665
      %v7861 = vpop.f32.mrb[0].mxu0
      %v7862 = vadd.f32 0.0, %v7861
      %v7863 = vpop.f32.mrb[0].mxu0
      %7864 = vmatprep.mubr.f32.mxu0 0.0
      %7865 = vmatmul.mubr.f32.gmra.mrb[0].mxu0 %v7668
      %v7866 = vpop.f32.mrb[0].mxu0
      %v7867 = vadd.f32 0.0, %v7866
      %v7868 = vpop.f32.mrb[0].mxu0
      %7869 = vmatprep.mubr.f32.mxu0 0.0
      %7870 = vmatmul.mubr.f32.gmra.mrb[0].mxu0 %v7671
      %v7871 = vpop.f32.mrb[0].mxu0
      %v7872 = vadd.f32 0.0, %v7871
      %v7873 = vpop.f32.mrb[0].mxu0
      %7874 = vmatprep.mubr.f32.mxu0 0.0
      %7875 = vmatmul.mubr.f32.gmra.mrb[0].mxu0 %v7674
      %v7876 = vpop.f32.mrb[0].mxu0
      %v7877 = vadd.f32 0.0, %v7876
      %v7878 = vpop.f32.mrb[0].mxu0
      %7879 = vmatprep.mubr.f32.mxu0 0.0
      %7880 = vmatmul.mubr.f32.gmra.mrb[0].mxu0 %v7677
      %v7881 = vpop.f32.mrb[0].mxu0
      %v7882 = vadd.f32 0.0, %v7881
      %v7883 = vpop.f32.mrb[0].mxu0
      %7884 = vmatprep.mubr.f32.mxu0 0.0
      %7885 = vmatmul.mubr.f32.gmra.mrb[0].mxu0 %v7680
      %v7886 = vpop.f32.mrb[0].mxu0
      %v7887 = vadd.f32 0.0, %v7886
      %v7888 = vpop.f32.mrb[0].mxu0
      %7889 = vmatprep.mubr.f32.mxu0 0.0
      %7890 = vmatmul.mubr.f32.gmra.mrb[0].mxu0 %v7683
      %v7891 = vpop.f32.mrb[0].mxu0
      %v7892 = vadd.f32 0.0, %v7891
      %v7893 = vpop.f32.mrb[0].mxu0
      %7894 = vmatprep.mubr.f32.mxu0 0.0
      %7895 = vmatmul.mubr.f32.gmra.mrb[0].mxu0 %v7686
      %v7896 = vpop.f32.mrb[0].mxu0
      %v7897 = vadd.f32 0.0, %v7896
      %v7898 = vpop.f32.mrb[0].mxu0
      %7899 = vmatprep.mubr.f32.mxu0 0.0
      %7900 = vmatmul.mubr.f32.gmra.mrb[0].mxu0 %v7689
      %v7901 = vpop.f32.mrb[0].mxu0
      %v7902 = vadd.f32 0.0, %v7901
      %v7903 = vpop.f32.mrb[0].mxu0
      %7904 = vmatprep.mubr.f32.mxu0 0.0
      %7905 = vmatmul.mubr.f32.gmra.mrb[0].mxu0 %v7692
      %v7906 = vpop.f32.mrb[0].mxu0
      %v7907 = vadd.f32 0.0, %v7906
      %v7908 = vpop.f32.mrb[0].mxu0
      %7909 = vmatprep.mubr.f32.mxu0 0.0
      %7910 = vmatmul.mubr.f32.gmra.mrb[0].mxu0 %v7695
      %v7911 = vpop.f32.mrb[0].mxu0
      %v7912 = vadd.f32 0.0, %v7911
      %v7913 = vpop.f32.mrb[0].mxu0
      %7914 = vmatprep.mubr.f32.mxu0 0.0
      %7915 = vmatmul.mubr.f32.gmra.mrb[0].mxu0 %v7698
      %v7916 = vpop.f32.mrb[0].mxu0
      %v7917 = vadd.f32 0.0, %v7916
      %v7918 = vpop.f32.mrb[0].mxu0
      %7919 = vmatprep.mubr.f32.mxu0 0.0
      %7920 = vmatmul.mubr.f32.gmra.mrb[0].mxu0 %v7701
      %v7921 = vpop.f32.mrb[0].mxu0
      %v7922 = vadd.f32 0.0, %v7921
      %v7923 = vpop.f32.mrb[0].mxu0
      %7924 = vmatprep.mubr.f32.mxu0 0.0
      %7925 = vmatmul.mubr.f32.gmra.mrb[0].mxu0 %v7704
      %v7926 = vpop.f32.mrb[0].mxu0
      %v7927 = vadd.f32 0.0, %v7926
      %v7928 = vpop.f32.mrb[0].mxu0
      %7929 = vmatprep.mubr.f32.mxu0 0.0
      %7930 = vmatmul.mubr.f32.gmra.mrb[0].mxu0 %v7707
      %v7931 = vpop.f32.mrb[0].mxu0
      %v7932 = vadd.f32 0.0, %v7931
      %v7933 = vpop.f32.mrb[0].mxu0
      %7934 = vmatprep.mubr.f32.mxu0 0.0
      %7935 = vmatmul.mubr.f32.gmra.mrb[0].mxu0 %v7710
      %v7936 = vpop.f32.mrb[0].mxu0
      %v7937 = vadd.f32 0.0, %v7936
      %v7938 = vpop.f32.mrb[0].mxu0
      %7939 = vmatprep.mubr.f32.mxu0 0.0
      %7940 = vmatmul.mubr.f32.gmra.mrb[0].mxu0 %v7713
      %v7941 = vpop.f32.mrb[0].mxu0
      %v7942 = vadd.f32 0.0, %v7941
      %v7943 = vpop.f32.mrb[0].mxu0
      %7944 = vmatprep.mubr.f32.mxu0 0.0
      %7945 = vmatmul.mubr.f32.gmra.mrb[0].mxu0 %v7716
      %v7946 = vpop.f32.mrb[0].mxu0
      %v7947 = vadd.f32 0.0, %v7946
      %v7948 = vpop.f32.mrb[0].mxu0
      %7949 = vmatprep.mubr.f32.mxu0 0.0
      %7950 = vmatmul.mubr.f32.gmra.mrb[0].mxu0 %v7719
      %v7951 = vpop.f32.mrb[0].mxu0
      %v7952 = vadd.f32 0.0, %v7951
      %v7953 = vpop.f32.mrb[0].mxu0
      %7954 = vmatprep.mubr.f32.mxu0 0.0
      %7955 = vmatmul.mubr.f32.gmra.mrb[0].mxu0 %v7722
      %v7956 = vpop.f32.mrb[0].mxu0
      %v7957 = vadd.f32 0.0, %v7956
      %v7958 = vpop.f32.mrb[0].mxu0
      %7959 = vmatprep.mubr.f32.mxu0 0.0
      %7960 = vmatmul.mubr.f32.gmra.mrb[0].mxu0 %v7725
      %v7961 = vpop.f32.mrb[0].mxu0
      %v7962 = vadd.f32 0.0, %v7961
      %v7963 = vpop.f32.mrb[0].mxu0
      %7964 = vmatprep.mubr.f32.mxu0 0.0
      %7965 = vmatmul.mubr.f32.gmra.mrb[0].mxu0 %v7728
      %v7966 = vpop.f32.mrb[0].mxu0
      %v7967 = vadd.f32 0.0, %v7966
      %v7968 = vpop.f32.mrb[0].mxu0
      %7969 = vmatprep.mubr.f32.mxu0 0.0
      %7970 = vmatmul.mubr.f32.gmra.mrb[0].mxu0 %v7731
      %v7971 = vpop.f32.mrb[0].mxu0
      %v7972 = vadd.f32 0.0, %v7971
      %v7973 = vpop.f32.mrb[0].mxu0
      %7974 = vmatprep.mubr.f32.mxu0 0.0
      %7975 = vmatmul.mubr.f32.gmra.mrb[0].mxu0 %v7734
      %v7976 = vpop.f32.mrb[0].mxu0
      %v7977 = vadd.f32 0.0, %v7976
      %v7978 = vpop.f32.mrb[0].mxu0
      %7979 = vmatprep.mubr.f32.mxu0 0.0
      %7980 = vmatmul.mubr.f32.gmra.mrb[0].mxu0 %v7737
      %v7981 = vpop.f32.mrb[0].mxu0
      %v7982 = vadd.f32 0.0, %v7981
      %v7983 = vpop.f32.mrb[0].mxu0
      %7984 = vmatprep.mubr.f32.mxu0 0.0
      %7985 = vmatmul.mubr.f32.gmra.mrb[0].mxu0 %v7740
      %v7986 = vpop.f32.mrb[0].mxu0
      %v7987 = vadd.f32 0.0, %v7986
      %v7988 = vpop.f32.mrb[0].mxu0
      %7989 = vdwg.mxu0
      %v7990 = vadd.f32 %v7560, %v7812
      %v7991 = vadd.f32 %v7561, %v7817
      %v7992 = vadd.f32 %v7562, %v7822
      %v7993 = vadd.f32 %v7563, %v7827
      %v7994 = vadd.f32 %v7564, %v7832
      %v7995 = vadd.f32 %v7565, %v7837
      %v7996 = vadd.f32 %v7566, %v7842
      %v7997 = vadd.f32 %v7567, %v7847
      %v7998 = vadd.f32 %v7568, %v7852
      %v7999 = vadd.f32 %v7569, %v7857
      %v8000 = vadd.f32 %v7570, %v7862
      %v8001 = vadd.f32 %v7571, %v7867
      %v8002 = vadd.f32 %v7572, %v7872
      %v8003 = vadd.f32 %v7573, %v7877
      %v8004 = vadd.f32 %v7574, %v7882
      %v8005 = vadd.f32 %v7575, %v7887
      %v8006 = vadd.f32 %v7576, %v7892
      %v8007 = vadd.f32 %v7577, %v7897
      %v8008 = vadd.f32 %v7578, %v7902
      %v8009 = vadd.f32 %v7579, %v7907
      %v8010 = vadd.f32 %v7580, %v7912
      %v8011 = vadd.f32 %v7581, %v7917
      %v8012 = vadd.f32 %v7582, %v7922
      %v8013 = vadd.f32 %v7583, %v7927
      %v8014 = vadd.f32 %v7584, %v7932
      %v8015 = vadd.f32 %v7585, %v7937
      %v8016 = vadd.f32 %v7586, %v7942
      %v8017 = vadd.f32 %v7587, %v7947
      %v8018 = vadd.f32 %v7588, %v7952
      %v8019 = vadd.f32 %v7589, %v7957
      %v8020 = vadd.f32 %v7590, %v7962
      %v8021 = vadd.f32 %v7591, %v7967
      %v8022 = vadd.f32 %v7592, %v7972
      %v8023 = vadd.f32 %v7593, %v7977
      %v8024 = vadd.f32 %v7594, %v7982
      %v8025 = vadd.f32 %v7595, %v7987
      %v8026 = vld [vmem:[#allocation2 + $0x14] sm:$0xff]
      %v8027 = vld [vmem:[#allocation2 + $0x1c] sm:$0xff]
      %v8028 = vld [vmem:[#allocation2 + $0x24] sm:$0xff]
      %v8029 = vld [vmem:[#allocation2 + $0x2c] sm:$0xff]
      %v8030 = vld [vmem:[#allocation2 + $0x34] sm:$0xff]
      %v8031 = vld [vmem:[#allocation2 + $0x3c] sm:$0xff]
      %v8032 = vld [vmem:[#allocation2 + $0x44] sm:$0xff]
      %v8033 = vld [vmem:[#allocation2 + $0x4c] sm:$0xff]
      %v8034 = vld [vmem:[#allocation2 + $0x54] sm:$0xff]
      %v8035 = vld [vmem:[#allocation2 + $0x5c] sm:$0xff]
      %v8036 = vld [vmem:[#allocation2 + $0x64] sm:$0xff]
      %v8037 = vld [vmem:[#allocation2 + $0x6c] sm:$0xff]
      %v8038 = vld [vmem:[#allocation2 + $0x74] sm:$0xff]
      %v8039 = vld [vmem:[#allocation2 + $0x7c] sm:$0xff]
      %v8040 = vld [vmem:[#allocation2 + $0x84] sm:$0xff]
      %v8041 = vld [vmem:[#allocation2 + $0x8c] sm:$0xff]
      %v8042 = vld [vmem:[#allocation2 + $0x94] sm:$0xff]
      %v8043 = vld [vmem:[#allocation2 + $0x9c] sm:$0xff]
      %v8044 = vld [vmem:[#allocation2 + $0xa4] sm:$0xff]
      %v8045 = vld [vmem:[#allocation2 + $0xac] sm:$0xff]
      %v8046 = vld [vmem:[#allocation2 + $0xb4] sm:$0xff]
      %v8047 = vld [vmem:[#allocation2 + $0xbc] sm:$0xff]
      %v8048 = vld [vmem:[#allocation2 + $0xc4] sm:$0xff]
      %v8049 = vld [vmem:[#allocation2 + $0xcc] sm:$0xff]
      %v8050 = vld [vmem:[#allocation2 + $0xd4] sm:$0xff]
      %v8051 = vld [vmem:[#allocation2 + $0xdc] sm:$0xff]
      %v8052 = vld [vmem:[#allocation2 + $0xe4] sm:$0xff]
      %v8053 = vld [vmem:[#allocation2 + $0xec] sm:$0xff]
      %v8054 = vld [vmem:[#allocation2 + $0xf4] sm:$0xff]
      %v8055 = vld [vmem:[#allocation2 + $0xfc] sm:$0xff]
      %v8056 = vld [vmem:[#allocation2 + $0x104] sm:$0xff]
      %v8057 = vld [vmem:[#allocation2 + $0x10c] sm:$0xff]
      %v8058 = vld [vmem:[#allocation2 + $0x114] sm:$0xff]
      %v8059 = vld [vmem:[#allocation2 + $0x11c] sm:$0xff]
      %v8060 = vld [vmem:[#allocation2 + $0x124] sm:$0xff]
      %v8061 = vld [vmem:[#allocation2 + $0x12c] sm:$0xff]
      %s8062 = scalar_lea.vmem %s3, 20
      %v8063 = vld [vmem:[%s8062] sm:$0xf]
      %v8065 = vsel %vm916, %v8026, 0
      %v8068 = vsel %vm916, %v8027, 0
      %v8071 = vsel %vm916, %v8028, 0
      %v8074 = vsel %vm916, %v8029, 0
      %v8077 = vsel %vm916, %v8030, 0
      %v8080 = vsel %vm916, %v8031, 0
      %v8083 = vsel %vm916, %v8032, 0
      %v8086 = vsel %vm916, %v8033, 0
      %v8089 = vsel %vm916, %v8034, 0
      %v8092 = vsel %vm916, %v8035, 0
      %v8095 = vsel %vm916, %v8036, 0
      %v8098 = vsel %vm916, %v8037, 0
      %v8101 = vsel %vm916, %v8038, 0
      %v8104 = vsel %vm916, %v8039, 0
      %v8107 = vsel %vm916, %v8040, 0
      %v8110 = vsel %vm916, %v8041, 0
      %v8113 = vsel %vm916, %v8042, 0
      %v8116 = vsel %vm916, %v8043, 0
      %v8119 = vsel %vm916, %v8044, 0
      %v8122 = vsel %vm916, %v8045, 0
      %v8125 = vsel %vm916, %v8046, 0
      %v8128 = vsel %vm916, %v8047, 0
      %v8131 = vsel %vm916, %v8048, 0
      %v8134 = vsel %vm916, %v8049, 0
      %v8137 = vsel %vm916, %v8050, 0
      %v8140 = vsel %vm916, %v8051, 0
      %v8143 = vsel %vm916, %v8052, 0
      %v8146 = vsel %vm916, %v8053, 0
      %v8149 = vsel %vm916, %v8054, 0
      %v8152 = vsel %vm916, %v8055, 0
      %v8155 = vsel %vm916, %v8056, 0
      %v8158 = vsel %vm916, %v8057, 0
      %v8161 = vsel %vm916, %v8058, 0
      %v8164 = vsel %vm916, %v8059, 0
      %v8167 = vsel %vm916, %v8060, 0
      %v8170 = vsel %vm916, %v8061, 0
      %v8173 = vsel %vm1581, %v8063, 0
      %8175 = vmatprep.subr.mxu0 0.0
      %8176 = vmatpush1.msra.mxu0 %v8173
      %8177 = vmatprep.subr.mxu0 0.0
      %8178 = vmatpush1.msra.mxu0 0.0
      %8179 = vmatprep.subr.mxu0 0.0
      %8180 = vmatpush1.msra.mxu0 0.0
      %8181 = vmatprep.subr.mxu0 0.0
      %8182 = vmatpush1.msra.mxu0 0.0
      %8183 = vmatprep.subr.mxu0 0.0
      %8184 = vmatpush1.msra.mxu0 0.0
      %8185 = vmatprep.subr.mxu0 0.0
      %8186 = vmatpush1.msra.mxu0 0.0
      %8187 = vmatprep.subr.mxu0 0.0
      %8188 = vmatpush1.msra.mxu0 0.0
      %8189 = vmatprep.subr.mxu0 0.0
      %8190 = vmatpush1.msra.mxu0 0.0
      %8191 = vmatprep.subr.mxu0 0.0
      %8192 = vmatpush1.msra.mxu0 0.0
      %8193 = vmatprep.subr.mxu0 0.0
      %8194 = vmatpush1.msra.mxu0 0.0
      %8195 = vmatprep.subr.mxu0 0.0
      %8196 = vmatpush1.msra.mxu0 0.0
      %8197 = vmatprep.subr.mxu0 0.0
      %8198 = vmatpush1.msra.mxu0 0.0
      %8199 = vmatprep.subr.mxu0 0.0
      %8200 = vmatpush1.msra.mxu0 0.0
      %8201 = vmatprep.subr.mxu0 0.0
      %8202 = vmatpush1.msra.mxu0 0.0
      %8203 = vmatprep.subr.mxu0 0.0
      %8204 = vmatpush1.msra.mxu0 0.0
      %8205 = vmatprep.subr.mxu0 0.0
      %8206 = vmatpush1.msra.mxu0 0.0
      %8207 = vmatprep.subr.mxu0 0.0
      %8208 = vmatpush1.msra.mxu0 0.0
      %8209 = vmatprep.subr.mxu0 0.0
      %8210 = vmatpush1.msra.mxu0 0.0
      %8211 = vmatprep.subr.mxu0 0.0
      %8212 = vmatpush1.msra.mxu0 0.0
      %8213 = vmatprep.subr.mxu0 0.0
      %8214 = vmatpush1.msra.mxu0 0.0
      %8215 = vmatprep.subr.mxu0 0.0
      %8216 = vmatpush1.msra.mxu0 0.0
      %8217 = vmatprep.subr.mxu0 0.0
      %8218 = vmatpush1.msra.mxu0 0.0
      %8219 = vmatprep.subr.mxu0 0.0
      %8220 = vmatpush1.msra.mxu0 0.0
      %8221 = vmatprep.subr.mxu0 0.0
      %8222 = vmatpush1.msra.mxu0 0.0
      %8223 = vmatprep.subr.mxu0 0.0
      %8224 = vmatpush1.msra.mxu0 0.0
      %8225 = vmatprep.subr.mxu0 0.0
      %8226 = vmatpush1.msra.mxu0 0.0
      %8227 = vmatprep.subr.mxu0 0.0
      %8228 = vmatpush1.msra.mxu0 0.0
      %8229 = vmatprep.subr.mxu0 0.0
      %8230 = vmatpush1.msra.mxu0 0.0
      %8231 = vmatprep.subr.mxu0 0.0
      %8232 = vmatpush1.msra.mxu0 0.0
      %8233 = vmatprep.subr.mxu0 0.0
      %8234 = vmatpush1.msra.mxu0 0.0
      %8235 = vmatprep.subr.mxu0 0.0
      %8236 = vmatpush1.msra.mxu0 0.0
      %8237 = vmatprep.subr.mxu0 0.0
      %8238 = vmatpush1.msra.mxu0 0.0
      %8239 = vmatprep.mubr.f32.mxu0 0.0
      %8240 = vmatmul.mubr.f32.gmra.mrb[0].mxu0 %v8065
      %v8241 = vpop.f32.mrb[0].mxu0
      %v8242 = vadd.f32 0.0, %v8241
      %v8243 = vpop.f32.mrb[0].mxu0
      %8244 = vmatprep.mubr.f32.mxu0 0.0
      %8245 = vmatmul.mubr.f32.gmra.mrb[0].mxu0 %v8068
      %v8246 = vpop.f32.mrb[0].mxu0
      %v8247 = vadd.f32 0.0, %v8246
      %v8248 = vpop.f32.mrb[0].mxu0
      %8249 = vmatprep.mubr.f32.mxu0 0.0
      %8250 = vmatmul.mubr.f32.gmra.mrb[0].mxu0 %v8071
      %v8251 = vpop.f32.mrb[0].mxu0
      %v8252 = vadd.f32 0.0, %v8251
      %v8253 = vpop.f32.mrb[0].mxu0
      %8254 = vmatprep.mubr.f32.mxu0 0.0
      %8255 = vmatmul.mubr.f32.gmra.mrb[0].mxu0 %v8074
      %v8256 = vpop.f32.mrb[0].mxu0
      %v8257 = vadd.f32 0.0, %v8256
      %v8258 = vpop.f32.mrb[0].mxu0
      %8259 = vmatprep.mubr.f32.mxu0 0.0
      %8260 = vmatmul.mubr.f32.gmra.mrb[0].mxu0 %v8077
      %v8261 = vpop.f32.mrb[0].mxu0
      %v8262 = vadd.f32 0.0, %v8261
      %v8263 = vpop.f32.mrb[0].mxu0
      %8264 = vmatprep.mubr.f32.mxu0 0.0
      %8265 = vmatmul.mubr.f32.gmra.mrb[0].mxu0 %v8080
      %v8266 = vpop.f32.mrb[0].mxu0
      %v8267 = vadd.f32 0.0, %v8266
      %v8268 = vpop.f32.mrb[0].mxu0
      %8269 = vmatprep.mubr.f32.mxu0 0.0
      %8270 = vmatmul.mubr.f32.gmra.mrb[0].mxu0 %v8083
      %v8271 = vpop.f32.mrb[0].mxu0
      %v8272 = vadd.f32 0.0, %v8271
      %v8273 = vpop.f32.mrb[0].mxu0
      %8274 = vmatprep.mubr.f32.mxu0 0.0
      %8275 = vmatmul.mubr.f32.gmra.mrb[0].mxu0 %v8086
      %v8276 = vpop.f32.mrb[0].mxu0
      %v8277 = vadd.f32 0.0, %v8276
      %v8278 = vpop.f32.mrb[0].mxu0
      %8279 = vmatprep.mubr.f32.mxu0 0.0
      %8280 = vmatmul.mubr.f32.gmra.mrb[0].mxu0 %v8089
      %v8281 = vpop.f32.mrb[0].mxu0
      %v8282 = vadd.f32 0.0, %v8281
      %v8283 = vpop.f32.mrb[0].mxu0
      %8284 = vmatprep.mubr.f32.mxu0 0.0
      %8285 = vmatmul.mubr.f32.gmra.mrb[0].mxu0 %v8092
      %v8286 = vpop.f32.mrb[0].mxu0
      %v8287 = vadd.f32 0.0, %v8286
      %v8288 = vpop.f32.mrb[0].mxu0
      %8289 = vmatprep.mubr.f32.mxu0 0.0
      %8290 = vmatmul.mubr.f32.gmra.mrb[0].mxu0 %v8095
      %v8291 = vpop.f32.mrb[0].mxu0
      %v8292 = vadd.f32 0.0, %v8291
      %v8293 = vpop.f32.mrb[0].mxu0
      %8294 = vmatprep.mubr.f32.mxu0 0.0
      %8295 = vmatmul.mubr.f32.gmra.mrb[0].mxu0 %v8098
      %v8296 = vpop.f32.mrb[0].mxu0
      %v8297 = vadd.f32 0.0, %v8296
      %v8298 = vpop.f32.mrb[0].mxu0
      %8299 = vmatprep.mubr.f32.mxu0 0.0
      %8300 = vmatmul.mubr.f32.gmra.mrb[0].mxu0 %v8101
      %v8301 = vpop.f32.mrb[0].mxu0
      %v8302 = vadd.f32 0.0, %v8301
      %v8303 = vpop.f32.mrb[0].mxu0
      %8304 = vmatprep.mubr.f32.mxu0 0.0
      %8305 = vmatmul.mubr.f32.gmra.mrb[0].mxu0 %v8104
      %v8306 = vpop.f32.mrb[0].mxu0
      %v8307 = vadd.f32 0.0, %v8306
      %v8308 = vpop.f32.mrb[0].mxu0
      %8309 = vmatprep.mubr.f32.mxu0 0.0
      %8310 = vmatmul.mubr.f32.gmra.mrb[0].mxu0 %v8107
      %v8311 = vpop.f32.mrb[0].mxu0
      %v8312 = vadd.f32 0.0, %v8311
      %v8313 = vpop.f32.mrb[0].mxu0
      %8314 = vmatprep.mubr.f32.mxu0 0.0
      %8315 = vmatmul.mubr.f32.gmra.mrb[0].mxu0 %v8110
      %v8316 = vpop.f32.mrb[0].mxu0
      %v8317 = vadd.f32 0.0, %v8316
      %v8318 = vpop.f32.mrb[0].mxu0
      %8319 = vmatprep.mubr.f32.mxu0 0.0
      %8320 = vmatmul.mubr.f32.gmra.mrb[0].mxu0 %v8113
      %v8321 = vpop.f32.mrb[0].mxu0
      %v8322 = vadd.f32 0.0, %v8321
      %v8323 = vpop.f32.mrb[0].mxu0
      %8324 = vmatprep.mubr.f32.mxu0 0.0
      %8325 = vmatmul.mubr.f32.gmra.mrb[0].mxu0 %v8116
      %v8326 = vpop.f32.mrb[0].mxu0
      %v8327 = vadd.f32 0.0, %v8326
      %v8328 = vpop.f32.mrb[0].mxu0
      %8329 = vmatprep.mubr.f32.mxu0 0.0
      %8330 = vmatmul.mubr.f32.gmra.mrb[0].mxu0 %v8119
      %v8331 = vpop.f32.mrb[0].mxu0
      %v8332 = vadd.f32 0.0, %v8331
      %v8333 = vpop.f32.mrb[0].mxu0
      %8334 = vmatprep.mubr.f32.mxu0 0.0
      %8335 = vmatmul.mubr.f32.gmra.mrb[0].mxu0 %v8122
      %v8336 = vpop.f32.mrb[0].mxu0
      %v8337 = vadd.f32 0.0, %v8336
      %v8338 = vpop.f32.mrb[0].mxu0
      %8339 = vmatprep.mubr.f32.mxu0 0.0
      %8340 = vmatmul.mubr.f32.gmra.mrb[0].mxu0 %v8125
      %v8341 = vpop.f32.mrb[0].mxu0
      %v8342 = vadd.f32 0.0, %v8341
      %v8343 = vpop.f32.mrb[0].mxu0
      %8344 = vmatprep.mubr.f32.mxu0 0.0
      %8345 = vmatmul.mubr.f32.gmra.mrb[0].mxu0 %v8128
      %v8346 = vpop.f32.mrb[0].mxu0
      %v8347 = vadd.f32 0.0, %v8346
      %v8348 = vpop.f32.mrb[0].mxu0
      %8349 = vmatprep.mubr.f32.mxu0 0.0
      %8350 = vmatmul.mubr.f32.gmra.mrb[0].mxu0 %v8131
      %v8351 = vpop.f32.mrb[0].mxu0
      %v8352 = vadd.f32 0.0, %v8351
      %v8353 = vpop.f32.mrb[0].mxu0
      %8354 = vmatprep.mubr.f32.mxu0 0.0
      %8355 = vmatmul.mubr.f32.gmra.mrb[0].mxu0 %v8134
      %v8356 = vpop.f32.mrb[0].mxu0
      %v8357 = vadd.f32 0.0, %v8356
      %v8358 = vpop.f32.mrb[0].mxu0
      %8359 = vmatprep.mubr.f32.mxu0 0.0
      %8360 = vmatmul.mubr.f32.gmra.mrb[0].mxu0 %v8137
      %v8361 = vpop.f32.mrb[0].mxu0
      %v8362 = vadd.f32 0.0, %v8361
      %v8363 = vpop.f32.mrb[0].mxu0
      %8364 = vmatprep.mubr.f32.mxu0 0.0
      %8365 = vmatmul.mubr.f32.gmra.mrb[0].mxu0 %v8140
      %v8366 = vpop.f32.mrb[0].mxu0
      %v8367 = vadd.f32 0.0, %v8366
      %v8368 = vpop.f32.mrb[0].mxu0
      %8369 = vmatprep.mubr.f32.mxu0 0.0
      %8370 = vmatmul.mubr.f32.gmra.mrb[0].mxu0 %v8143
      %v8371 = vpop.f32.mrb[0].mxu0
      %v8372 = vadd.f32 0.0, %v8371
      %v8373 = vpop.f32.mrb[0].mxu0
      %8374 = vmatprep.mubr.f32.mxu0 0.0
      %8375 = vmatmul.mubr.f32.gmra.mrb[0].mxu0 %v8146
      %v8376 = vpop.f32.mrb[0].mxu0
      %v8377 = vadd.f32 0.0, %v8376
      %v8378 = vpop.f32.mrb[0].mxu0
      %8379 = vmatprep.mubr.f32.mxu0 0.0
      %8380 = vmatmul.mubr.f32.gmra.mrb[0].mxu0 %v8149
      %v8381 = vpop.f32.mrb[0].mxu0
      %v8382 = vadd.f32 0.0, %v8381
      %v8383 = vpop.f32.mrb[0].mxu0
      %8384 = vmatprep.mubr.f32.mxu0 0.0
      %8385 = vmatmul.mubr.f32.gmra.mrb[0].mxu0 %v8152
      %v8386 = vpop.f32.mrb[0].mxu0
      %v8387 = vadd.f32 0.0, %v8386
      %v8388 = vpop.f32.mrb[0].mxu0
      %8389 = vmatprep.mubr.f32.mxu0 0.0
      %8390 = vmatmul.mubr.f32.gmra.mrb[0].mxu0 %v8155
      %v8391 = vpop.f32.mrb[0].mxu0
      %v8392 = vadd.f32 0.0, %v8391
      %v8393 = vpop.f32.mrb[0].mxu0
      %8394 = vmatprep.mubr.f32.mxu0 0.0
      %8395 = vmatmul.mubr.f32.gmra.mrb[0].mxu0 %v8158
      %v8396 = vpop.f32.mrb[0].mxu0
      %v8397 = vadd.f32 0.0, %v8396
      %v8398 = vpop.f32.mrb[0].mxu0
      %8399 = vmatprep.mubr.f32.mxu0 0.0
      %8400 = vmatmul.mubr.f32.gmra.mrb[0].mxu0 %v8161
      %v8401 = vpop.f32.mrb[0].mxu0
      %v8402 = vadd.f32 0.0, %v8401
      %v8403 = vpop.f32.mrb[0].mxu0
      %8404 = vmatprep.mubr.f32.mxu0 0.0
      %8405 = vmatmul.mubr.f32.gmra.mrb[0].mxu0 %v8164
      %v8406 = vpop.f32.mrb[0].mxu0
      %v8407 = vadd.f32 0.0, %v8406
      %v8408 = vpop.f32.mrb[0].mxu0
      %8409 = vmatprep.mubr.f32.mxu0 0.0
      %8410 = vmatmul.mubr.f32.gmra.mrb[0].mxu0 %v8167
      %v8411 = vpop.f32.mrb[0].mxu0
      %v8412 = vadd.f32 0.0, %v8411
      %v8413 = vpop.f32.mrb[0].mxu0
      %8414 = vmatprep.mubr.f32.mxu0 0.0
      %8415 = vmatmul.mubr.f32.gmra.mrb[0].mxu0 %v8170
      %v8416 = vpop.f32.mrb[0].mxu0
      %v8417 = vadd.f32 0.0, %v8416
      %v8418 = vpop.f32.mrb[0].mxu0
      %8419 = vdwg.mxu0
      %v8420 = vadd.f32 %v7990, %v8242
      %v8421 = vadd.f32 %v7991, %v8247
      %v8422 = vadd.f32 %v7992, %v8252
      %v8423 = vadd.f32 %v7993, %v8257
      %v8424 = vadd.f32 %v7994, %v8262
      %v8425 = vadd.f32 %v7995, %v8267
      %v8426 = vadd.f32 %v7996, %v8272
      %v8427 = vadd.f32 %v7997, %v8277
      %v8428 = vadd.f32 %v7998, %v8282
      %v8429 = vadd.f32 %v7999, %v8287
      %v8430 = vadd.f32 %v8000, %v8292
      %v8431 = vadd.f32 %v8001, %v8297
      %v8432 = vadd.f32 %v8002, %v8302
      %v8433 = vadd.f32 %v8003, %v8307
      %v8434 = vadd.f32 %v8004, %v8312
      %v8435 = vadd.f32 %v8005, %v8317
      %v8436 = vadd.f32 %v8006, %v8322
      %v8437 = vadd.f32 %v8007, %v8327
      %v8438 = vadd.f32 %v8008, %v8332
      %v8439 = vadd.f32 %v8009, %v8337
      %v8440 = vadd.f32 %v8010, %v8342
      %v8441 = vadd.f32 %v8011, %v8347
      %v8442 = vadd.f32 %v8012, %v8352
      %v8443 = vadd.f32 %v8013, %v8357
      %v8444 = vadd.f32 %v8014, %v8362
      %v8445 = vadd.f32 %v8015, %v8367
      %v8446 = vadd.f32 %v8016, %v8372
      %v8447 = vadd.f32 %v8017, %v8377
      %v8448 = vadd.f32 %v8018, %v8382
      %v8449 = vadd.f32 %v8019, %v8387
      %v8450 = vadd.f32 %v8020, %v8392
      %v8451 = vadd.f32 %v8021, %v8397
      %v8452 = vadd.f32 %v8022, %v8402
      %v8453 = vadd.f32 %v8023, %v8407
      %v8454 = vadd.f32 %v8024, %v8412
      %v8455 = vadd.f32 %v8025, %v8417
      %v8456 = vld [vmem:[#allocation2 + $0x24] sm:$0xff]
      %v8457 = vld [vmem:[#allocation2 + $0x2c] sm:$0xff]
      %v8458 = vld [vmem:[#allocation2 + $0x34] sm:$0xff]
      %v8459 = vld [vmem:[#allocation2 + $0x3c] sm:$0xff]
      %v8460 = vld [vmem:[#allocation2 + $0x44] sm:$0xff]
      %v8461 = vld [vmem:[#allocation2 + $0x4c] sm:$0xff]
      %v8462 = vld [vmem:[#allocation2 + $0x54] sm:$0xff]
      %v8463 = vld [vmem:[#allocation2 + $0x5c] sm:$0xff]
      %v8464 = vld [vmem:[#allocation2 + $0x64] sm:$0xff]
      %v8465 = vld [vmem:[#allocation2 + $0x6c] sm:$0xff]
      %v8466 = vld [vmem:[#allocation2 + $0x74] sm:$0xff]
      %v8467 = vld [vmem:[#allocation2 + $0x7c] sm:$0xff]
      %v8468 = vld [vmem:[#allocation2 + $0x84] sm:$0xff]
      %v8469 = vld [vmem:[#allocation2 + $0x8c] sm:$0xff]
      %v8470 = vld [vmem:[#allocation2 + $0x94] sm:$0xff]
      %v8471 = vld [vmem:[#allocation2 + $0x9c] sm:$0xff]
      %v8472 = vld [vmem:[#allocation2 + $0xa4] sm:$0xff]
      %v8473 = vld [vmem:[#allocation2 + $0xac] sm:$0xff]
      %v8474 = vld [vmem:[#allocation2 + $0xb4] sm:$0xff]
      %v8475 = vld [vmem:[#allocation2 + $0xbc] sm:$0xff]
      %v8476 = vld [vmem:[#allocation2 + $0xc4] sm:$0xff]
      %v8477 = vld [vmem:[#allocation2 + $0xcc] sm:$0xff]
      %v8478 = vld [vmem:[#allocation2 + $0xd4] sm:$0xff]
      %v8479 = vld [vmem:[#allocation2 + $0xdc] sm:$0xff]
      %v8480 = vld [vmem:[#allocation2 + $0xe4] sm:$0xff]
      %v8481 = vld [vmem:[#allocation2 + $0xec] sm:$0xff]
      %v8482 = vld [vmem:[#allocation2 + $0xf4] sm:$0xff]
      %v8483 = vld [vmem:[#allocation2 + $0xfc] sm:$0xff]
      %v8484 = vld [vmem:[#allocation2 + $0x104] sm:$0xff]
      %v8485 = vld [vmem:[#allocation2 + $0x10c] sm:$0xff]
      %v8486 = vld [vmem:[#allocation2 + $0x114] sm:$0xff]
      %v8487 = vld [vmem:[#allocation2 + $0x11c] sm:$0xff]
      %v8488 = vld [vmem:[#allocation2 + $0x124] sm:$0xff]
      %v8489 = vld [vmem:[#allocation2 + $0x12c] sm:$0xff]
      %v8490 = vld [vmem:[#allocation2 + $0x134] sm:$0xff]
      %v8491 = vld [vmem:[#allocation2 + $0x13c] sm:$0xff]
      %s8492 = scalar_lea.vmem %s3, 24
      %v8493 = vld [vmem:[%s8492] sm:$0xf]
      %v8495 = vsel %vm916, %v8456, 0
      %v8498 = vsel %vm916, %v8457, 0
      %v8501 = vsel %vm916, %v8458, 0
      %v8504 = vsel %vm916, %v8459, 0
      %v8507 = vsel %vm916, %v8460, 0
      %v8510 = vsel %vm916, %v8461, 0
      %v8513 = vsel %vm916, %v8462, 0
      %v8516 = vsel %vm916, %v8463, 0
      %v8519 = vsel %vm916, %v8464, 0
      %v8522 = vsel %vm916, %v8465, 0
      %v8525 = vsel %vm916, %v8466, 0
      %v8528 = vsel %vm916, %v8467, 0
      %v8531 = vsel %vm916, %v8468, 0
      %v8534 = vsel %vm916, %v8469, 0
      %v8537 = vsel %vm916, %v8470, 0
      %v8540 = vsel %vm916, %v8471, 0
      %v8543 = vsel %vm916, %v8472, 0
      %v8546 = vsel %vm916, %v8473, 0
      %v8549 = vsel %vm916, %v8474, 0
      %v8552 = vsel %vm916, %v8475, 0
      %v8555 = vsel %vm916, %v8476, 0
      %v8558 = vsel %vm916, %v8477, 0
      %v8561 = vsel %vm916, %v8478, 0
      %v8564 = vsel %vm916, %v8479, 0
      %v8567 = vsel %vm916, %v8480, 0
      %v8570 = vsel %vm916, %v8481, 0
      %v8573 = vsel %vm916, %v8482, 0
      %v8576 = vsel %vm916, %v8483, 0
      %v8579 = vsel %vm916, %v8484, 0
      %v8582 = vsel %vm916, %v8485, 0
      %v8585 = vsel %vm916, %v8486, 0
      %v8588 = vsel %vm916, %v8487, 0
      %v8591 = vsel %vm916, %v8488, 0
      %v8594 = vsel %vm916, %v8489, 0
      %v8597 = vsel %vm916, %v8490, 0
      %v8600 = vsel %vm916, %v8491, 0
      %v8603 = vsel %vm1581, %v8493, 0
      %8605 = vmatprep.subr.mxu0 0.0
      %8606 = vmatpush1.msra.mxu0 %v8603
      %8607 = vmatprep.subr.mxu0 0.0
      %8608 = vmatpush1.msra.mxu0 0.0
      %8609 = vmatprep.subr.mxu0 0.0
      %8610 = vmatpush1.msra.mxu0 0.0
      %8611 = vmatprep.subr.mxu0 0.0
      %8612 = vmatpush1.msra.mxu0 0.0
      %8613 = vmatprep.subr.mxu0 0.0
      %8614 = vmatpush1.msra.mxu0 0.0
      %8615 = vmatprep.subr.mxu0 0.0
      %8616 = vmatpush1.msra.mxu0 0.0
      %8617 = vmatprep.subr.mxu0 0.0
      %8618 = vmatpush1.msra.mxu0 0.0
      %8619 = vmatprep.subr.mxu0 0.0
      %8620 = vmatpush1.msra.mxu0 0.0
      %8621 = vmatprep.subr.mxu0 0.0
      %8622 = vmatpush1.msra.mxu0 0.0
      %8623 = vmatprep.subr.mxu0 0.0
      %8624 = vmatpush1.msra.mxu0 0.0
      %8625 = vmatprep.subr.mxu0 0.0
      %8626 = vmatpush1.msra.mxu0 0.0
      %8627 = vmatprep.subr.mxu0 0.0
      %8628 = vmatpush1.msra.mxu0 0.0
      %8629 = vmatprep.subr.mxu0 0.0
      %8630 = vmatpush1.msra.mxu0 0.0
      %8631 = vmatprep.subr.mxu0 0.0
      %8632 = vmatpush1.msra.mxu0 0.0
      %8633 = vmatprep.subr.mxu0 0.0
      %8634 = vmatpush1.msra.mxu0 0.0
      %8635 = vmatprep.subr.mxu0 0.0
      %8636 = vmatpush1.msra.mxu0 0.0
      %8637 = vmatprep.subr.mxu0 0.0
      %8638 = vmatpush1.msra.mxu0 0.0
      %8639 = vmatprep.subr.mxu0 0.0
      %8640 = vmatpush1.msra.mxu0 0.0
      %8641 = vmatprep.subr.mxu0 0.0
      %8642 = vmatpush1.msra.mxu0 0.0
      %8643 = vmatprep.subr.mxu0 0.0
      %8644 = vmatpush1.msra.mxu0 0.0
      %8645 = vmatprep.subr.mxu0 0.0
      %8646 = vmatpush1.msra.mxu0 0.0
      %8647 = vmatprep.subr.mxu0 0.0
      %8648 = vmatpush1.msra.mxu0 0.0
      %8649 = vmatprep.subr.mxu0 0.0
      %8650 = vmatpush1.msra.mxu0 0.0
      %8651 = vmatprep.subr.mxu0 0.0
      %8652 = vmatpush1.msra.mxu0 0.0
      %8653 = vmatprep.subr.mxu0 0.0
      %8654 = vmatpush1.msra.mxu0 0.0
      %8655 = vmatprep.subr.mxu0 0.0
      %8656 = vmatpush1.msra.mxu0 0.0
      %8657 = vmatprep.subr.mxu0 0.0
      %8658 = vmatpush1.msra.mxu0 0.0
      %8659 = vmatprep.subr.mxu0 0.0
      %8660 = vmatpush1.msra.mxu0 0.0
      %8661 = vmatprep.subr.mxu0 0.0
      %8662 = vmatpush1.msra.mxu0 0.0
      %8663 = vmatprep.subr.mxu0 0.0
      %8664 = vmatpush1.msra.mxu0 0.0
      %8665 = vmatprep.subr.mxu0 0.0
      %8666 = vmatpush1.msra.mxu0 0.0
      %8667 = vmatprep.subr.mxu0 0.0
      %8668 = vmatpush1.msra.mxu0 0.0
      %8669 = vmatprep.mubr.f32.mxu0 0.0
      %8670 = vmatmul.mubr.f32.gmra.mrb[0].mxu0 %v8495
      %v8671 = vpop.f32.mrb[0].mxu0
      %v8672 = vadd.f32 0.0, %v8671
      %v8673 = vpop.f32.mrb[0].mxu0
      %8674 = vmatprep.mubr.f32.mxu0 0.0
      %8675 = vmatmul.mubr.f32.gmra.mrb[0].mxu0 %v8498
      %v8676 = vpop.f32.mrb[0].mxu0
      %v8677 = vadd.f32 0.0, %v8676
      %v8678 = vpop.f32.mrb[0].mxu0
      %8679 = vmatprep.mubr.f32.mxu0 0.0
      %8680 = vmatmul.mubr.f32.gmra.mrb[0].mxu0 %v8501
      %v8681 = vpop.f32.mrb[0].mxu0
      %v8682 = vadd.f32 0.0, %v8681
      %v8683 = vpop.f32.mrb[0].mxu0
      %8684 = vmatprep.mubr.f32.mxu0 0.0
      %8685 = vmatmul.mubr.f32.gmra.mrb[0].mxu0 %v8504
      %v8686 = vpop.f32.mrb[0].mxu0
      %v8687 = vadd.f32 0.0, %v8686
      %v8688 = vpop.f32.mrb[0].mxu0
      %8689 = vmatprep.mubr.f32.mxu0 0.0
      %8690 = vmatmul.mubr.f32.gmra.mrb[0].mxu0 %v8507
      %v8691 = vpop.f32.mrb[0].mxu0
      %v8692 = vadd.f32 0.0, %v8691
      %v8693 = vpop.f32.mrb[0].mxu0
      %8694 = vmatprep.mubr.f32.mxu0 0.0
      %8695 = vmatmul.mubr.f32.gmra.mrb[0].mxu0 %v8510
      %v8696 = vpop.f32.mrb[0].mxu0
      %v8697 = vadd.f32 0.0, %v8696
      %v8698 = vpop.f32.mrb[0].mxu0
      %8699 = vmatprep.mubr.f32.mxu0 0.0
      %8700 = vmatmul.mubr.f32.gmra.mrb[0].mxu0 %v8513
      %v8701 = vpop.f32.mrb[0].mxu0
      %v8702 = vadd.f32 0.0, %v8701
      %v8703 = vpop.f32.mrb[0].mxu0
      %8704 = vmatprep.mubr.f32.mxu0 0.0
      %8705 = vmatmul.mubr.f32.gmra.mrb[0].mxu0 %v8516
      %v8706 = vpop.f32.mrb[0].mxu0
      %v8707 = vadd.f32 0.0, %v8706
      %v8708 = vpop.f32.mrb[0].mxu0
      %8709 = vmatprep.mubr.f32.mxu0 0.0
      %8710 = vmatmul.mubr.f32.gmra.mrb[0].mxu0 %v8519
      %v8711 = vpop.f32.mrb[0].mxu0
      %v8712 = vadd.f32 0.0, %v8711
      %v8713 = vpop.f32.mrb[0].mxu0
      %8714 = vmatprep.mubr.f32.mxu0 0.0
      %8715 = vmatmul.mubr.f32.gmra.mrb[0].mxu0 %v8522
      %v8716 = vpop.f32.mrb[0].mxu0
      %v8717 = vadd.f32 0.0, %v8716
      %v8718 = vpop.f32.mrb[0].mxu0
      %8719 = vmatprep.mubr.f32.mxu0 0.0
      %8720 = vmatmul.mubr.f32.gmra.mrb[0].mxu0 %v8525
      %v8721 = vpop.f32.mrb[0].mxu0
      %v8722 = vadd.f32 0.0, %v8721
      %v8723 = vpop.f32.mrb[0].mxu0
      %8724 = vmatprep.mubr.f32.mxu0 0.0
      %8725 = vmatmul.mubr.f32.gmra.mrb[0].mxu0 %v8528
      %v8726 = vpop.f32.mrb[0].mxu0
      %v8727 = vadd.f32 0.0, %v8726
      %v8728 = vpop.f32.mrb[0].mxu0
      %8729 = vmatprep.mubr.f32.mxu0 0.0
      %8730 = vmatmul.mubr.f32.gmra.mrb[0].mxu0 %v8531
      %v8731 = vpop.f32.mrb[0].mxu0
      %v8732 = vadd.f32 0.0, %v8731
      %v8733 = vpop.f32.mrb[0].mxu0
      %8734 = vmatprep.mubr.f32.mxu0 0.0
      %8735 = vmatmul.mubr.f32.gmra.mrb[0].mxu0 %v8534
      %v8736 = vpop.f32.mrb[0].mxu0
      %v8737 = vadd.f32 0.0, %v8736
      %v8738 = vpop.f32.mrb[0].mxu0
      %8739 = vmatprep.mubr.f32.mxu0 0.0
      %8740 = vmatmul.mubr.f32.gmra.mrb[0].mxu0 %v8537
      %v8741 = vpop.f32.mrb[0].mxu0
      %v8742 = vadd.f32 0.0, %v8741
      %v8743 = vpop.f32.mrb[0].mxu0
      %8744 = vmatprep.mubr.f32.mxu0 0.0
      %8745 = vmatmul.mubr.f32.gmra.mrb[0].mxu0 %v8540
      %v8746 = vpop.f32.mrb[0].mxu0
      %v8747 = vadd.f32 0.0, %v8746
      %v8748 = vpop.f32.mrb[0].mxu0
      %8749 = vmatprep.mubr.f32.mxu0 0.0
      %8750 = vmatmul.mubr.f32.gmra.mrb[0].mxu0 %v8543
      %v8751 = vpop.f32.mrb[0].mxu0
      %v8752 = vadd.f32 0.0, %v8751
      %v8753 = vpop.f32.mrb[0].mxu0
      %8754 = vmatprep.mubr.f32.mxu0 0.0
      %8755 = vmatmul.mubr.f32.gmra.mrb[0].mxu0 %v8546
      %v8756 = vpop.f32.mrb[0].mxu0
      %v8757 = vadd.f32 0.0, %v8756
      %v8758 = vpop.f32.mrb[0].mxu0
      %8759 = vmatprep.mubr.f32.mxu0 0.0
      %8760 = vmatmul.mubr.f32.gmra.mrb[0].mxu0 %v8549
      %v8761 = vpop.f32.mrb[0].mxu0
      %v8762 = vadd.f32 0.0, %v8761
      %v8763 = vpop.f32.mrb[0].mxu0
      %8764 = vmatprep.mubr.f32.mxu0 0.0
      %8765 = vmatmul.mubr.f32.gmra.mrb[0].mxu0 %v8552
      %v8766 = vpop.f32.mrb[0].mxu0
      %v8767 = vadd.f32 0.0, %v8766
      %v8768 = vpop.f32.mrb[0].mxu0
      %8769 = vmatprep.mubr.f32.mxu0 0.0
      %8770 = vmatmul.mubr.f32.gmra.mrb[0].mxu0 %v8555
      %v8771 = vpop.f32.mrb[0].mxu0
      %v8772 = vadd.f32 0.0, %v8771
      %v8773 = vpop.f32.mrb[0].mxu0
      %8774 = vmatprep.mubr.f32.mxu0 0.0
      %8775 = vmatmul.mubr.f32.gmra.mrb[0].mxu0 %v8558
      %v8776 = vpop.f32.mrb[0].mxu0
      %v8777 = vadd.f32 0.0, %v8776
      %v8778 = vpop.f32.mrb[0].mxu0
      %8779 = vmatprep.mubr.f32.mxu0 0.0
      %8780 = vmatmul.mubr.f32.gmra.mrb[0].mxu0 %v8561
      %v8781 = vpop.f32.mrb[0].mxu0
      %v8782 = vadd.f32 0.0, %v8781
      %v8783 = vpop.f32.mrb[0].mxu0
      %8784 = vmatprep.mubr.f32.mxu0 0.0
      %8785 = vmatmul.mubr.f32.gmra.mrb[0].mxu0 %v8564
      %v8786 = vpop.f32.mrb[0].mxu0
      %v8787 = vadd.f32 0.0, %v8786
      %v8788 = vpop.f32.mrb[0].mxu0
      %8789 = vmatprep.mubr.f32.mxu0 0.0
      %8790 = vmatmul.mubr.f32.gmra.mrb[0].mxu0 %v8567
      %v8791 = vpop.f32.mrb[0].mxu0
      %v8792 = vadd.f32 0.0, %v8791
      %v8793 = vpop.f32.mrb[0].mxu0
      %8794 = vmatprep.mubr.f32.mxu0 0.0
      %8795 = vmatmul.mubr.f32.gmra.mrb[0].mxu0 %v8570
      %v8796 = vpop.f32.mrb[0].mxu0
      %v8797 = vadd.f32 0.0, %v8796
      %v8798 = vpop.f32.mrb[0].mxu0
      %8799 = vmatprep.mubr.f32.mxu0 0.0
      %8800 = vmatmul.mubr.f32.gmra.mrb[0].mxu0 %v8573
      %v8801 = vpop.f32.mrb[0].mxu0
      %v8802 = vadd.f32 0.0, %v8801
      %v8803 = vpop.f32.mrb[0].mxu0
      %8804 = vmatprep.mubr.f32.mxu0 0.0
      %8805 = vmatmul.mubr.f32.gmra.mrb[0].mxu0 %v8576
      %v8806 = vpop.f32.mrb[0].mxu0
      %v8807 = vadd.f32 0.0, %v8806
      %v8808 = vpop.f32.mrb[0].mxu0
      %8809 = vmatprep.mubr.f32.mxu0 0.0
      %8810 = vmatmul.mubr.f32.gmra.mrb[0].mxu0 %v8579
      %v8811 = vpop.f32.mrb[0].mxu0
      %v8812 = vadd.f32 0.0, %v8811
      %v8813 = vpop.f32.mrb[0].mxu0
      %8814 = vmatprep.mubr.f32.mxu0 0.0
      %8815 = vmatmul.mubr.f32.gmra.mrb[0].mxu0 %v8582
      %v8816 = vpop.f32.mrb[0].mxu0
      %v8817 = vadd.f32 0.0, %v8816
      %v8818 = vpop.f32.mrb[0].mxu0
      %8819 = vmatprep.mubr.f32.mxu0 0.0
      %8820 = vmatmul.mubr.f32.gmra.mrb[0].mxu0 %v8585
      %v8821 = vpop.f32.mrb[0].mxu0
      %v8822 = vadd.f32 0.0, %v8821
      %v8823 = vpop.f32.mrb[0].mxu0
      %8824 = vmatprep.mubr.f32.mxu0 0.0
      %8825 = vmatmul.mubr.f32.gmra.mrb[0].mxu0 %v8588
      %v8826 = vpop.f32.mrb[0].mxu0
      %v8827 = vadd.f32 0.0, %v8826
      %v8828 = vpop.f32.mrb[0].mxu0
      %8829 = vmatprep.mubr.f32.mxu0 0.0
      %8830 = vmatmul.mubr.f32.gmra.mrb[0].mxu0 %v8591
      %v8831 = vpop.f32.mrb[0].mxu0
      %v8832 = vadd.f32 0.0, %v8831
      %v8833 = vpop.f32.mrb[0].mxu0
      %8834 = vmatprep.mubr.f32.mxu0 0.0
      %8835 = vmatmul.mubr.f32.gmra.mrb[0].mxu0 %v8594
      %v8836 = vpop.f32.mrb[0].mxu0
      %v8837 = vadd.f32 0.0, %v8836
      %v8838 = vpop.f32.mrb[0].mxu0
      %8839 = vmatprep.mubr.f32.mxu0 0.0
      %8840 = vmatmul.mubr.f32.gmra.mrb[0].mxu0 %v8597
      %v8841 = vpop.f32.mrb[0].mxu0
      %v8842 = vadd.f32 0.0, %v8841
      %v8843 = vpop.f32.mrb[0].mxu0
      %8844 = vmatprep.mubr.f32.mxu0 0.0
      %8845 = vmatmul.mubr.f32.gmra.mrb[0].mxu0 %v8600
      %v8846 = vpop.f32.mrb[0].mxu0
      %v8847 = vadd.f32 0.0, %v8846
      %v8848 = vpop.f32.mrb[0].mxu0
      %8849 = vdwg.mxu0
      %v8850 = vadd.f32 %v8420, %v8672
      %v8851 = vadd.f32 %v8421, %v8677
      %v8852 = vadd.f32 %v8422, %v8682
      %v8853 = vadd.f32 %v8423, %v8687
      %v8854 = vadd.f32 %v8424, %v8692
      %v8855 = vadd.f32 %v8425, %v8697
      %v8856 = vadd.f32 %v8426, %v8702
      %v8857 = vadd.f32 %v8427, %v8707
      %v8858 = vadd.f32 %v8428, %v8712
      %v8859 = vadd.f32 %v8429, %v8717
      %v8860 = vadd.f32 %v8430, %v8722
      %v8861 = vadd.f32 %v8431, %v8727
      %v8862 = vadd.f32 %v8432, %v8732
      %v8863 = vadd.f32 %v8433, %v8737
      %v8864 = vadd.f32 %v8434, %v8742
      %v8865 = vadd.f32 %v8435, %v8747
      %v8866 = vadd.f32 %v8436, %v8752
      %v8867 = vadd.f32 %v8437, %v8757
      %v8868 = vadd.f32 %v8438, %v8762
      %v8869 = vadd.f32 %v8439, %v8767
      %v8870 = vadd.f32 %v8440, %v8772
      %v8871 = vadd.f32 %v8441, %v8777
      %v8872 = vadd.f32 %v8442, %v8782
      %v8873 = vadd.f32 %v8443, %v8787
      %v8874 = vadd.f32 %v8444, %v8792
      %v8875 = vadd.f32 %v8445, %v8797
      %v8876 = vadd.f32 %v8446, %v8802
      %v8877 = vadd.f32 %v8447, %v8807
      %v8878 = vadd.f32 %v8448, %v8812
      %v8879 = vadd.f32 %v8449, %v8817
      %v8880 = vadd.f32 %v8450, %v8822
      %v8881 = vadd.f32 %v8451, %v8827
      %v8882 = vadd.f32 %v8452, %v8832
      %v8883 = vadd.f32 %v8453, %v8837
      %v8884 = vadd.f32 %v8454, %v8842
      %v8885 = vadd.f32 %v8455, %v8847
      %v8886 = vld [vmem:[#allocation2 + $0x25] sm:$0xff]
      %v8887 = vld [vmem:[#allocation2 + $0x2d] sm:$0xff]
      %v8888 = vld [vmem:[#allocation2 + $0x35] sm:$0xff]
      %v8889 = vld [vmem:[#allocation2 + $0x3d] sm:$0xff]
      %v8890 = vld [vmem:[#allocation2 + $0x45] sm:$0xff]
      %v8891 = vld [vmem:[#allocation2 + $0x4d] sm:$0xff]
      %v8892 = vld [vmem:[#allocation2 + $0x55] sm:$0xff]
      %v8893 = vld [vmem:[#allocation2 + $0x5d] sm:$0xff]
      %v8894 = vld [vmem:[#allocation2 + $0x65] sm:$0xff]
      %v8895 = vld [vmem:[#allocation2 + $0x6d] sm:$0xff]
      %v8896 = vld [vmem:[#allocation2 + $0x75] sm:$0xff]
      %v8897 = vld [vmem:[#allocation2 + $0x7d] sm:$0xff]
      %v8898 = vld [vmem:[#allocation2 + $0x85] sm:$0xff]
      %v8899 = vld [vmem:[#allocation2 + $0x8d] sm:$0xff]
      %v8900 = vld [vmem:[#allocation2 + $0x95] sm:$0xff]
      %v8901 = vld [vmem:[#allocation2 + $0x9d] sm:$0xff]
      %v8902 = vld [vmem:[#allocation2 + $0xa5] sm:$0xff]
      %v8903 = vld [vmem:[#allocation2 + $0xad] sm:$0xff]
      %v8904 = vld [vmem:[#allocation2 + $0xb5] sm:$0xff]
      %v8905 = vld [vmem:[#allocation2 + $0xbd] sm:$0xff]
      %v8906 = vld [vmem:[#allocation2 + $0xc5] sm:$0xff]
      %v8907 = vld [vmem:[#allocation2 + $0xcd] sm:$0xff]
      %v8908 = vld [vmem:[#allocation2 + $0xd5] sm:$0xff]
      %v8909 = vld [vmem:[#allocation2 + $0xdd] sm:$0xff]
      %v8910 = vld [vmem:[#allocation2 + $0xe5] sm:$0xff]
      %v8911 = vld [vmem:[#allocation2 + $0xed] sm:$0xff]
      %v8912 = vld [vmem:[#allocation2 + $0xf5] sm:$0xff]
      %v8913 = vld [vmem:[#allocation2 + $0xfd] sm:$0xff]
      %v8914 = vld [vmem:[#allocation2 + $0x105] sm:$0xff]
      %v8915 = vld [vmem:[#allocation2 + $0x10d] sm:$0xff]
      %v8916 = vld [vmem:[#allocation2 + $0x115] sm:$0xff]
      %v8917 = vld [vmem:[#allocation2 + $0x11d] sm:$0xff]
      %v8918 = vld [vmem:[#allocation2 + $0x125] sm:$0xff]
      %v8919 = vld [vmem:[#allocation2 + $0x12d] sm:$0xff]
      %v8920 = vld [vmem:[#allocation2 + $0x135] sm:$0xff]
      %v8921 = vld [vmem:[#allocation2 + $0x13d] sm:$0xff]
      %s8922 = scalar_lea.vmem %s3, 28
      %v8923 = vld [vmem:[%s8922] sm:$0xf]
      %v8925 = vsel %vm916, %v8886, 0
      %v8928 = vsel %vm916, %v8887, 0
      %v8931 = vsel %vm916, %v8888, 0
      %v8934 = vsel %vm916, %v8889, 0
      %v8937 = vsel %vm916, %v8890, 0
      %v8940 = vsel %vm916, %v8891, 0
      %v8943 = vsel %vm916, %v8892, 0
      %v8946 = vsel %vm916, %v8893, 0
      %v8949 = vsel %vm916, %v8894, 0
      %v8952 = vsel %vm916, %v8895, 0
      %v8955 = vsel %vm916, %v8896, 0
      %v8958 = vsel %vm916, %v8897, 0
      %v8961 = vsel %vm916, %v8898, 0
      %v8964 = vsel %vm916, %v8899, 0
      %v8967 = vsel %vm916, %v8900, 0
      %v8970 = vsel %vm916, %v8901, 0
      %v8973 = vsel %vm916, %v8902, 0
      %v8976 = vsel %vm916, %v8903, 0
      %v8979 = vsel %vm916, %v8904, 0
      %v8982 = vsel %vm916, %v8905, 0
      %v8985 = vsel %vm916, %v8906, 0
      %v8988 = vsel %vm916, %v8907, 0
      %v8991 = vsel %vm916, %v8908, 0
      %v8994 = vsel %vm916, %v8909, 0
      %v8997 = vsel %vm916, %v8910, 0
      %v9000 = vsel %vm916, %v8911, 0
      %v9003 = vsel %vm916, %v8912, 0
      %v9006 = vsel %vm916, %v8913, 0
      %v9009 = vsel %vm916, %v8914, 0
      %v9012 = vsel %vm916, %v8915, 0
      %v9015 = vsel %vm916, %v8916, 0
      %v9018 = vsel %vm916, %v8917, 0
      %v9021 = vsel %vm916, %v8918, 0
      %v9024 = vsel %vm916, %v8919, 0
      %v9027 = vsel %vm916, %v8920, 0
      %v9030 = vsel %vm916, %v8921, 0
      %v9033 = vsel %vm1581, %v8923, 0
      %9035 = vmatprep.subr.mxu0 0.0
      %9036 = vmatpush1.msra.mxu0 %v9033
      %9037 = vmatprep.subr.mxu0 0.0
      %9038 = vmatpush1.msra.mxu0 0.0
      %9039 = vmatprep.subr.mxu0 0.0
      %9040 = vmatpush1.msra.mxu0 0.0
      %9041 = vmatprep.subr.mxu0 0.0
      %9042 = vmatpush1.msra.mxu0 0.0
      %9043 = vmatprep.subr.mxu0 0.0
      %9044 = vmatpush1.msra.mxu0 0.0
      %9045 = vmatprep.subr.mxu0 0.0
      %9046 = vmatpush1.msra.mxu0 0.0
      %9047 = vmatprep.subr.mxu0 0.0
      %9048 = vmatpush1.msra.mxu0 0.0
      %9049 = vmatprep.subr.mxu0 0.0
      %9050 = vmatpush1.msra.mxu0 0.0
      %9051 = vmatprep.subr.mxu0 0.0
      %9052 = vmatpush1.msra.mxu0 0.0
      %9053 = vmatprep.subr.mxu0 0.0
      %9054 = vmatpush1.msra.mxu0 0.0
      %9055 = vmatprep.subr.mxu0 0.0
      %9056 = vmatpush1.msra.mxu0 0.0
      %9057 = vmatprep.subr.mxu0 0.0
      %9058 = vmatpush1.msra.mxu0 0.0
      %9059 = vmatprep.subr.mxu0 0.0
      %9060 = vmatpush1.msra.mxu0 0.0
      %9061 = vmatprep.subr.mxu0 0.0
      %9062 = vmatpush1.msra.mxu0 0.0
      %9063 = vmatprep.subr.mxu0 0.0
      %9064 = vmatpush1.msra.mxu0 0.0
      %9065 = vmatprep.subr.mxu0 0.0
      %9066 = vmatpush1.msra.mxu0 0.0
      %9067 = vmatprep.subr.mxu0 0.0
      %9068 = vmatpush1.msra.mxu0 0.0
      %9069 = vmatprep.subr.mxu0 0.0
      %9070 = vmatpush1.msra.mxu0 0.0
      %9071 = vmatprep.subr.mxu0 0.0
      %9072 = vmatpush1.msra.mxu0 0.0
      %9073 = vmatprep.subr.mxu0 0.0
      %9074 = vmatpush1.msra.mxu0 0.0
      %9075 = vmatprep.subr.mxu0 0.0
      %9076 = vmatpush1.msra.mxu0 0.0
      %9077 = vmatprep.subr.mxu0 0.0
      %9078 = vmatpush1.msra.mxu0 0.0
      %9079 = vmatprep.subr.mxu0 0.0
      %9080 = vmatpush1.msra.mxu0 0.0
      %9081 = vmatprep.subr.mxu0 0.0
      %9082 = vmatpush1.msra.mxu0 0.0
      %9083 = vmatprep.subr.mxu0 0.0
      %9084 = vmatpush1.msra.mxu0 0.0
      %9085 = vmatprep.subr.mxu0 0.0
      %9086 = vmatpush1.msra.mxu0 0.0
      %9087 = vmatprep.subr.mxu0 0.0
      %9088 = vmatpush1.msra.mxu0 0.0
      %9089 = vmatprep.subr.mxu0 0.0
      %9090 = vmatpush1.msra.mxu0 0.0
      %9091 = vmatprep.subr.mxu0 0.0
      %9092 = vmatpush1.msra.mxu0 0.0
      %9093 = vmatprep.subr.mxu0 0.0
      %9094 = vmatpush1.msra.mxu0 0.0
      %9095 = vmatprep.subr.mxu0 0.0
      %9096 = vmatpush1.msra.mxu0 0.0
      %9097 = vmatprep.subr.mxu0 0.0
      %9098 = vmatpush1.msra.mxu0 0.0
      %9099 = vmatprep.mubr.f32.mxu0 0.0
      %9100 = vmatmul.mubr.f32.gmra.mrb[0].mxu0 %v8925
      %v9101 = vpop.f32.mrb[0].mxu0
      %v9102 = vadd.f32 0.0, %v9101
      %v9103 = vpop.f32.mrb[0].mxu0
      %9104 = vmatprep.mubr.f32.mxu0 0.0
      %9105 = vmatmul.mubr.f32.gmra.mrb[0].mxu0 %v8928
      %v9106 = vpop.f32.mrb[0].mxu0
      %v9107 = vadd.f32 0.0, %v9106
      %v9108 = vpop.f32.mrb[0].mxu0
      %9109 = vmatprep.mubr.f32.mxu0 0.0
      %9110 = vmatmul.mubr.f32.gmra.mrb[0].mxu0 %v8931
      %v9111 = vpop.f32.mrb[0].mxu0
      %v9112 = vadd.f32 0.0, %v9111
      %v9113 = vpop.f32.mrb[0].mxu0
      %9114 = vmatprep.mubr.f32.mxu0 0.0
      %9115 = vmatmul.mubr.f32.gmra.mrb[0].mxu0 %v8934
      %v9116 = vpop.f32.mrb[0].mxu0
      %v9117 = vadd.f32 0.0, %v9116
      %v9118 = vpop.f32.mrb[0].mxu0
      %9119 = vmatprep.mubr.f32.mxu0 0.0
      %9120 = vmatmul.mubr.f32.gmra.mrb[0].mxu0 %v8937
      %v9121 = vpop.f32.mrb[0].mxu0
      %v9122 = vadd.f32 0.0, %v9121
      %v9123 = vpop.f32.mrb[0].mxu0
      %9124 = vmatprep.mubr.f32.mxu0 0.0
      %9125 = vmatmul.mubr.f32.gmra.mrb[0].mxu0 %v8940
      %v9126 = vpop.f32.mrb[0].mxu0
      %v9127 = vadd.f32 0.0, %v9126
      %v9128 = vpop.f32.mrb[0].mxu0
      %9129 = vmatprep.mubr.f32.mxu0 0.0
      %9130 = vmatmul.mubr.f32.gmra.mrb[0].mxu0 %v8943
      %v9131 = vpop.f32.mrb[0].mxu0
      %v9132 = vadd.f32 0.0, %v9131
      %v9133 = vpop.f32.mrb[0].mxu0
      %9134 = vmatprep.mubr.f32.mxu0 0.0
      %9135 = vmatmul.mubr.f32.gmra.mrb[0].mxu0 %v8946
      %v9136 = vpop.f32.mrb[0].mxu0
      %v9137 = vadd.f32 0.0, %v9136
      %v9138 = vpop.f32.mrb[0].mxu0
      %9139 = vmatprep.mubr.f32.mxu0 0.0
      %9140 = vmatmul.mubr.f32.gmra.mrb[0].mxu0 %v8949
      %v9141 = vpop.f32.mrb[0].mxu0
      %v9142 = vadd.f32 0.0, %v9141
      %v9143 = vpop.f32.mrb[0].mxu0
      %9144 = vmatprep.mubr.f32.mxu0 0.0
      %9145 = vmatmul.mubr.f32.gmra.mrb[0].mxu0 %v8952
      %v9146 = vpop.f32.mrb[0].mxu0
      %v9147 = vadd.f32 0.0, %v9146
      %v9148 = vpop.f32.mrb[0].mxu0
      %9149 = vmatprep.mubr.f32.mxu0 0.0
      %9150 = vmatmul.mubr.f32.gmra.mrb[0].mxu0 %v8955
      %v9151 = vpop.f32.mrb[0].mxu0
      %v9152 = vadd.f32 0.0, %v9151
      %v9153 = vpop.f32.mrb[0].mxu0
      %9154 = vmatprep.mubr.f32.mxu0 0.0
      %9155 = vmatmul.mubr.f32.gmra.mrb[0].mxu0 %v8958
      %v9156 = vpop.f32.mrb[0].mxu0
      %v9157 = vadd.f32 0.0, %v9156
      %v9158 = vpop.f32.mrb[0].mxu0
      %9159 = vmatprep.mubr.f32.mxu0 0.0
      %9160 = vmatmul.mubr.f32.gmra.mrb[0].mxu0 %v8961
      %v9161 = vpop.f32.mrb[0].mxu0
      %v9162 = vadd.f32 0.0, %v9161
      %v9163 = vpop.f32.mrb[0].mxu0
      %9164 = vmatprep.mubr.f32.mxu0 0.0
      %9165 = vmatmul.mubr.f32.gmra.mrb[0].mxu0 %v8964
      %v9166 = vpop.f32.mrb[0].mxu0
      %v9167 = vadd.f32 0.0, %v9166
      %v9168 = vpop.f32.mrb[0].mxu0
      %9169 = vmatprep.mubr.f32.mxu0 0.0
      %9170 = vmatmul.mubr.f32.gmra.mrb[0].mxu0 %v8967
      %v9171 = vpop.f32.mrb[0].mxu0
      %v9172 = vadd.f32 0.0, %v9171
      %v9173 = vpop.f32.mrb[0].mxu0
      %9174 = vmatprep.mubr.f32.mxu0 0.0
      %9175 = vmatmul.mubr.f32.gmra.mrb[0].mxu0 %v8970
      %v9176 = vpop.f32.mrb[0].mxu0
      %v9177 = vadd.f32 0.0, %v9176
      %v9178 = vpop.f32.mrb[0].mxu0
      %9179 = vmatprep.mubr.f32.mxu0 0.0
      %9180 = vmatmul.mubr.f32.gmra.mrb[0].mxu0 %v8973
      %v9181 = vpop.f32.mrb[0].mxu0
      %v9182 = vadd.f32 0.0, %v9181
      %v9183 = vpop.f32.mrb[0].mxu0
      %9184 = vmatprep.mubr.f32.mxu0 0.0
      %9185 = vmatmul.mubr.f32.gmra.mrb[0].mxu0 %v8976
      %v9186 = vpop.f32.mrb[0].mxu0
      %v9187 = vadd.f32 0.0, %v9186
      %v9188 = vpop.f32.mrb[0].mxu0
      %9189 = vmatprep.mubr.f32.mxu0 0.0
      %9190 = vmatmul.mubr.f32.gmra.mrb[0].mxu0 %v8979
      %v9191 = vpop.f32.mrb[0].mxu0
      %v9192 = vadd.f32 0.0, %v9191
      %v9193 = vpop.f32.mrb[0].mxu0
      %9194 = vmatprep.mubr.f32.mxu0 0.0
      %9195 = vmatmul.mubr.f32.gmra.mrb[0].mxu0 %v8982
      %v9196 = vpop.f32.mrb[0].mxu0
      %v9197 = vadd.f32 0.0, %v9196
      %v9198 = vpop.f32.mrb[0].mxu0
      %9199 = vmatprep.mubr.f32.mxu0 0.0
      %9200 = vmatmul.mubr.f32.gmra.mrb[0].mxu0 %v8985
      %v9201 = vpop.f32.mrb[0].mxu0
      %v9202 = vadd.f32 0.0, %v9201
      %v9203 = vpop.f32.mrb[0].mxu0
      %9204 = vmatprep.mubr.f32.mxu0 0.0
      %9205 = vmatmul.mubr.f32.gmra.mrb[0].mxu0 %v8988
      %v9206 = vpop.f32.mrb[0].mxu0
      %v9207 = vadd.f32 0.0, %v9206
      %v9208 = vpop.f32.mrb[0].mxu0
      %9209 = vmatprep.mubr.f32.mxu0 0.0
      %9210 = vmatmul.mubr.f32.gmra.mrb[0].mxu0 %v8991
      %v9211 = vpop.f32.mrb[0].mxu0
      %v9212 = vadd.f32 0.0, %v9211
      %v9213 = vpop.f32.mrb[0].mxu0
      %9214 = vmatprep.mubr.f32.mxu0 0.0
      %9215 = vmatmul.mubr.f32.gmra.mrb[0].mxu0 %v8994
      %v9216 = vpop.f32.mrb[0].mxu0
      %v9217 = vadd.f32 0.0, %v9216
      %v9218 = vpop.f32.mrb[0].mxu0
      %9219 = vmatprep.mubr.f32.mxu0 0.0
      %9220 = vmatmul.mubr.f32.gmra.mrb[0].mxu0 %v8997
      %v9221 = vpop.f32.mrb[0].mxu0
      %v9222 = vadd.f32 0.0, %v9221
      %v9223 = vpop.f32.mrb[0].mxu0
      %9224 = vmatprep.mubr.f32.mxu0 0.0
      %9225 = vmatmul.mubr.f32.gmra.mrb[0].mxu0 %v9000
      %v9226 = vpop.f32.mrb[0].mxu0
      %v9227 = vadd.f32 0.0, %v9226
      %v9228 = vpop.f32.mrb[0].mxu0
      %9229 = vmatprep.mubr.f32.mxu0 0.0
      %9230 = vmatmul.mubr.f32.gmra.mrb[0].mxu0 %v9003
      %v9231 = vpop.f32.mrb[0].mxu0
      %v9232 = vadd.f32 0.0, %v9231
      %v9233 = vpop.f32.mrb[0].mxu0
      %9234 = vmatprep.mubr.f32.mxu0 0.0
      %9235 = vmatmul.mubr.f32.gmra.mrb[0].mxu0 %v9006
      %v9236 = vpop.f32.mrb[0].mxu0
      %v9237 = vadd.f32 0.0, %v9236
      %v9238 = vpop.f32.mrb[0].mxu0
      %9239 = vmatprep.mubr.f32.mxu0 0.0
      %9240 = vmatmul.mubr.f32.gmra.mrb[0].mxu0 %v9009
      %v9241 = vpop.f32.mrb[0].mxu0
      %v9242 = vadd.f32 0.0, %v9241
      %v9243 = vpop.f32.mrb[0].mxu0
      %9244 = vmatprep.mubr.f32.mxu0 0.0
      %9245 = vmatmul.mubr.f32.gmra.mrb[0].mxu0 %v9012
      %v9246 = vpop.f32.mrb[0].mxu0
      %v9247 = vadd.f32 0.0, %v9246
      %v9248 = vpop.f32.mrb[0].mxu0
      %9249 = vmatprep.mubr.f32.mxu0 0.0
      %9250 = vmatmul.mubr.f32.gmra.mrb[0].mxu0 %v9015
      %v9251 = vpop.f32.mrb[0].mxu0
      %v9252 = vadd.f32 0.0, %v9251
      %v9253 = vpop.f32.mrb[0].mxu0
      %9254 = vmatprep.mubr.f32.mxu0 0.0
      %9255 = vmatmul.mubr.f32.gmra.mrb[0].mxu0 %v9018
      %v9256 = vpop.f32.mrb[0].mxu0
      %v9257 = vadd.f32 0.0, %v9256
      %v9258 = vpop.f32.mrb[0].mxu0
      %9259 = vmatprep.mubr.f32.mxu0 0.0
      %9260 = vmatmul.mubr.f32.gmra.mrb[0].mxu0 %v9021
      %v9261 = vpop.f32.mrb[0].mxu0
      %v9262 = vadd.f32 0.0, %v9261
      %v9263 = vpop.f32.mrb[0].mxu0
      %9264 = vmatprep.mubr.f32.mxu0 0.0
      %9265 = vmatmul.mubr.f32.gmra.mrb[0].mxu0 %v9024
      %v9266 = vpop.f32.mrb[0].mxu0
      %v9267 = vadd.f32 0.0, %v9266
      %v9268 = vpop.f32.mrb[0].mxu0
      %9269 = vmatprep.mubr.f32.mxu0 0.0
      %9270 = vmatmul.mubr.f32.gmra.mrb[0].mxu0 %v9027
      %v9271 = vpop.f32.mrb[0].mxu0
      %v9272 = vadd.f32 0.0, %v9271
      %v9273 = vpop.f32.mrb[0].mxu0
      %9274 = vmatprep.mubr.f32.mxu0 0.0
      %9275 = vmatmul.mubr.f32.gmra.mrb[0].mxu0 %v9030
      %v9276 = vpop.f32.mrb[0].mxu0
      %v9277 = vadd.f32 0.0, %v9276
      %v9278 = vpop.f32.mrb[0].mxu0
      %9279 = vdwg.mxu0
      %v9280 = vadd.f32 %v8850, %v9102
      %v9281 = vadd.f32 %v8851, %v9107
      %v9282 = vadd.f32 %v8852, %v9112
      %v9283 = vadd.f32 %v8853, %v9117
      %v9284 = vadd.f32 %v8854, %v9122
      %v9285 = vadd.f32 %v8855, %v9127
      %v9286 = vadd.f32 %v8856, %v9132
      %v9287 = vadd.f32 %v8857, %v9137
      %v9288 = vadd.f32 %v8858, %v9142
      %v9289 = vadd.f32 %v8859, %v9147
      %v9290 = vadd.f32 %v8860, %v9152
      %v9291 = vadd.f32 %v8861, %v9157
      %v9292 = vadd.f32 %v8862, %v9162
      %v9293 = vadd.f32 %v8863, %v9167
      %v9294 = vadd.f32 %v8864, %v9172
      %v9295 = vadd.f32 %v8865, %v9177
      %v9296 = vadd.f32 %v8866, %v9182
      %v9297 = vadd.f32 %v8867, %v9187
      %v9298 = vadd.f32 %v8868, %v9192
      %v9299 = vadd.f32 %v8869, %v9197
      %v9300 = vadd.f32 %v8870, %v9202
      %v9301 = vadd.f32 %v8871, %v9207
      %v9302 = vadd.f32 %v8872, %v9212
      %v9303 = vadd.f32 %v8873, %v9217
      %v9304 = vadd.f32 %v8874, %v9222
      %v9305 = vadd.f32 %v8875, %v9227
      %v9306 = vadd.f32 %v8876, %v9232
      %v9307 = vadd.f32 %v8877, %v9237
      %v9308 = vadd.f32 %v8878, %v9242
      %v9309 = vadd.f32 %v8879, %v9247
      %v9310 = vadd.f32 %v8880, %v9252
      %v9311 = vadd.f32 %v8881, %v9257
      %v9312 = vadd.f32 %v8882, %v9262
      %v9313 = vadd.f32 %v8883, %v9267
      %v9314 = vadd.f32 %v8884, %v9272
      %v9315 = vadd.f32 %v8885, %v9277
      %v9316 = vld [vmem:[#allocation2 + $0x26] sm:$0xff]
      %v9317 = vld [vmem:[#allocation2 + $0x2e] sm:$0xff]
      %v9318 = vld [vmem:[#allocation2 + $0x36] sm:$0xff]
      %v9319 = vld [vmem:[#allocation2 + $0x3e] sm:$0xff]
      %v9320 = vld [vmem:[#allocation2 + $0x46] sm:$0xff]
      %v9321 = vld [vmem:[#allocation2 + $0x4e] sm:$0xff]
      %v9322 = vld [vmem:[#allocation2 + $0x56] sm:$0xff]
      %v9323 = vld [vmem:[#allocation2 + $0x5e] sm:$0xff]
      %v9324 = vld [vmem:[#allocation2 + $0x66] sm:$0xff]
      %v9325 = vld [vmem:[#allocation2 + $0x6e] sm:$0xff]
      %v9326 = vld [vmem:[#allocation2 + $0x76] sm:$0xff]
      %v9327 = vld [vmem:[#allocation2 + $0x7e] sm:$0xff]
      %v9328 = vld [vmem:[#allocation2 + $0x86] sm:$0xff]
      %v9329 = vld [vmem:[#allocation2 + $0x8e] sm:$0xff]
      %v9330 = vld [vmem:[#allocation2 + $0x96] sm:$0xff]
      %v9331 = vld [vmem:[#allocation2 + $0x9e] sm:$0xff]
      %v9332 = vld [vmem:[#allocation2 + $0xa6] sm:$0xff]
      %v9333 = vld [vmem:[#allocation2 + $0xae] sm:$0xff]
      %v9334 = vld [vmem:[#allocation2 + $0xb6] sm:$0xff]
      %v9335 = vld [vmem:[#allocation2 + $0xbe] sm:$0xff]
      %v9336 = vld [vmem:[#allocation2 + $0xc6] sm:$0xff]
      %v9337 = vld [vmem:[#allocation2 + $0xce] sm:$0xff]
      %v9338 = vld [vmem:[#allocation2 + $0xd6] sm:$0xff]
      %v9339 = vld [vmem:[#allocation2 + $0xde] sm:$0xff]
      %v9340 = vld [vmem:[#allocation2 + $0xe6] sm:$0xff]
      %v9341 = vld [vmem:[#allocation2 + $0xee] sm:$0xff]
      %v9342 = vld [vmem:[#allocation2 + $0xf6] sm:$0xff]
      %v9343 = vld [vmem:[#allocation2 + $0xfe] sm:$0xff]
      %v9344 = vld [vmem:[#allocation2 + $0x106] sm:$0xff]
      %v9345 = vld [vmem:[#allocation2 + $0x10e] sm:$0xff]
      %v9346 = vld [vmem:[#allocation2 + $0x116] sm:$0xff]
      %v9347 = vld [vmem:[#allocation2 + $0x11e] sm:$0xff]
      %v9348 = vld [vmem:[#allocation2 + $0x126] sm:$0xff]
      %v9349 = vld [vmem:[#allocation2 + $0x12e] sm:$0xff]
      %v9350 = vld [vmem:[#allocation2 + $0x136] sm:$0xff]
      %v9351 = vld [vmem:[#allocation2 + $0x13e] sm:$0xff]
      %s9352 = scalar_lea.vmem %s3, 32
      %v9353 = vld [vmem:[%s9352] sm:$0xf]
      %v9355 = vsel %vm916, %v9316, 0
      %v9358 = vsel %vm916, %v9317, 0
      %v9361 = vsel %vm916, %v9318, 0
      %v9364 = vsel %vm916, %v9319, 0
      %v9367 = vsel %vm916, %v9320, 0
      %v9370 = vsel %vm916, %v9321, 0
      %v9373 = vsel %vm916, %v9322, 0
      %v9376 = vsel %vm916, %v9323, 0
      %v9379 = vsel %vm916, %v9324, 0
      %v9382 = vsel %vm916, %v9325, 0
      %v9385 = vsel %vm916, %v9326, 0
      %v9388 = vsel %vm916, %v9327, 0
      %v9391 = vsel %vm916, %v9328, 0
      %v9394 = vsel %vm916, %v9329, 0
      %v9397 = vsel %vm916, %v9330, 0
      %v9400 = vsel %vm916, %v9331, 0
      %v9403 = vsel %vm916, %v9332, 0
      %v9406 = vsel %vm916, %v9333, 0
      %v9409 = vsel %vm916, %v9334, 0
      %v9412 = vsel %vm916, %v9335, 0
      %v9415 = vsel %vm916, %v9336, 0
      %v9418 = vsel %vm916, %v9337, 0
      %v9421 = vsel %vm916, %v9338, 0
      %v9424 = vsel %vm916, %v9339, 0
      %v9427 = vsel %vm916, %v9340, 0
      %v9430 = vsel %vm916, %v9341, 0
      %v9433 = vsel %vm916, %v9342, 0
      %v9436 = vsel %vm916, %v9343, 0
      %v9439 = vsel %vm916, %v9344, 0
      %v9442 = vsel %vm916, %v9345, 0
      %v9445 = vsel %vm916, %v9346, 0
      %v9448 = vsel %vm916, %v9347, 0
      %v9451 = vsel %vm916, %v9348, 0
      %v9454 = vsel %vm916, %v9349, 0
      %v9457 = vsel %vm916, %v9350, 0
      %v9460 = vsel %vm916, %v9351, 0
      %v9463 = vsel %vm1581, %v9353, 0
      %9465 = vmatprep.subr.mxu0 0.0
      %9466 = vmatpush1.msra.mxu0 %v9463
      %9467 = vmatprep.subr.mxu0 0.0
      %9468 = vmatpush1.msra.mxu0 0.0
      %9469 = vmatprep.subr.mxu0 0.0
      %9470 = vmatpush1.msra.mxu0 0.0
      %9471 = vmatprep.subr.mxu0 0.0
      %9472 = vmatpush1.msra.mxu0 0.0
      %9473 = vmatprep.subr.mxu0 0.0
      %9474 = vmatpush1.msra.mxu0 0.0
      %9475 = vmatprep.subr.mxu0 0.0
      %9476 = vmatpush1.msra.mxu0 0.0
      %9477 = vmatprep.subr.mxu0 0.0
      %9478 = vmatpush1.msra.mxu0 0.0
      %9479 = vmatprep.subr.mxu0 0.0
      %9480 = vmatpush1.msra.mxu0 0.0
      %9481 = vmatprep.subr.mxu0 0.0
      %9482 = vmatpush1.msra.mxu0 0.0
      %9483 = vmatprep.subr.mxu0 0.0
      %9484 = vmatpush1.msra.mxu0 0.0
      %9485 = vmatprep.subr.mxu0 0.0
      %9486 = vmatpush1.msra.mxu0 0.0
      %9487 = vmatprep.subr.mxu0 0.0
      %9488 = vmatpush1.msra.mxu0 0.0
      %9489 = vmatprep.subr.mxu0 0.0
      %9490 = vmatpush1.msra.mxu0 0.0
      %9491 = vmatprep.subr.mxu0 0.0
      %9492 = vmatpush1.msra.mxu0 0.0
      %9493 = vmatprep.subr.mxu0 0.0
      %9494 = vmatpush1.msra.mxu0 0.0
      %9495 = vmatprep.subr.mxu0 0.0
      %9496 = vmatpush1.msra.mxu0 0.0
      %9497 = vmatprep.subr.mxu0 0.0
      %9498 = vmatpush1.msra.mxu0 0.0
      %9499 = vmatprep.subr.mxu0 0.0
      %9500 = vmatpush1.msra.mxu0 0.0
      %9501 = vmatprep.subr.mxu0 0.0
      %9502 = vmatpush1.msra.mxu0 0.0
      %9503 = vmatprep.subr.mxu0 0.0
      %9504 = vmatpush1.msra.mxu0 0.0
      %9505 = vmatprep.subr.mxu0 0.0
      %9506 = vmatpush1.msra.mxu0 0.0
      %9507 = vmatprep.subr.mxu0 0.0
      %9508 = vmatpush1.msra.mxu0 0.0
      %9509 = vmatprep.subr.mxu0 0.0
      %9510 = vmatpush1.msra.mxu0 0.0
      %9511 = vmatprep.subr.mxu0 0.0
      %9512 = vmatpush1.msra.mxu0 0.0
      %9513 = vmatprep.subr.mxu0 0.0
      %9514 = vmatpush1.msra.mxu0 0.0
      %9515 = vmatprep.subr.mxu0 0.0
      %9516 = vmatpush1.msra.mxu0 0.0
      %9517 = vmatprep.subr.mxu0 0.0
      %9518 = vmatpush1.msra.mxu0 0.0
      %9519 = vmatprep.subr.mxu0 0.0
      %9520 = vmatpush1.msra.mxu0 0.0
      %9521 = vmatprep.subr.mxu0 0.0
      %9522 = vmatpush1.msra.mxu0 0.0
      %9523 = vmatprep.subr.mxu0 0.0
      %9524 = vmatpush1.msra.mxu0 0.0
      %9525 = vmatprep.subr.mxu0 0.0
      %9526 = vmatpush1.msra.mxu0 0.0
      %9527 = vmatprep.subr.mxu0 0.0
      %9528 = vmatpush1.msra.mxu0 0.0
      %9529 = vmatprep.mubr.f32.mxu0 0.0
      %9530 = vmatmul.mubr.f32.gmra.mrb[0].mxu0 %v9355
      %v9531 = vpop.f32.mrb[0].mxu0
      %v9532 = vadd.f32 0.0, %v9531
      %v9533 = vpop.f32.mrb[0].mxu0
      %9534 = vmatprep.mubr.f32.mxu0 0.0
      %9535 = vmatmul.mubr.f32.gmra.mrb[0].mxu0 %v9358
      %v9536 = vpop.f32.mrb[0].mxu0
      %v9537 = vadd.f32 0.0, %v9536
      %v9538 = vpop.f32.mrb[0].mxu0
      %9539 = vmatprep.mubr.f32.mxu0 0.0
      %9540 = vmatmul.mubr.f32.gmra.mrb[0].mxu0 %v9361
      %v9541 = vpop.f32.mrb[0].mxu0
      %v9542 = vadd.f32 0.0, %v9541
      %v9543 = vpop.f32.mrb[0].mxu0
      %9544 = vmatprep.mubr.f32.mxu0 0.0
      %9545 = vmatmul.mubr.f32.gmra.mrb[0].mxu0 %v9364
      %v9546 = vpop.f32.mrb[0].mxu0
      %v9547 = vadd.f32 0.0, %v9546
      %v9548 = vpop.f32.mrb[0].mxu0
      %9549 = vmatprep.mubr.f32.mxu0 0.0
      %9550 = vmatmul.mubr.f32.gmra.mrb[0].mxu0 %v9367
      %v9551 = vpop.f32.mrb[0].mxu0
      %v9552 = vadd.f32 0.0, %v9551
      %v9553 = vpop.f32.mrb[0].mxu0
      %9554 = vmatprep.mubr.f32.mxu0 0.0
      %9555 = vmatmul.mubr.f32.gmra.mrb[0].mxu0 %v9370
      %v9556 = vpop.f32.mrb[0].mxu0
      %v9557 = vadd.f32 0.0, %v9556
      %v9558 = vpop.f32.mrb[0].mxu0
      %9559 = vmatprep.mubr.f32.mxu0 0.0
      %9560 = vmatmul.mubr.f32.gmra.mrb[0].mxu0 %v9373
      %v9561 = vpop.f32.mrb[0].mxu0
      %v9562 = vadd.f32 0.0, %v9561
      %v9563 = vpop.f32.mrb[0].mxu0
      %9564 = vmatprep.mubr.f32.mxu0 0.0
      %9565 = vmatmul.mubr.f32.gmra.mrb[0].mxu0 %v9376
      %v9566 = vpop.f32.mrb[0].mxu0
      %v9567 = vadd.f32 0.0, %v9566
      %v9568 = vpop.f32.mrb[0].mxu0
      %9569 = vmatprep.mubr.f32.mxu0 0.0
      %9570 = vmatmul.mubr.f32.gmra.mrb[0].mxu0 %v9379
      %v9571 = vpop.f32.mrb[0].mxu0
      %v9572 = vadd.f32 0.0, %v9571
      %v9573 = vpop.f32.mrb[0].mxu0
      %9574 = vmatprep.mubr.f32.mxu0 0.0
      %9575 = vmatmul.mubr.f32.gmra.mrb[0].mxu0 %v9382
      %v9576 = vpop.f32.mrb[0].mxu0
      %v9577 = vadd.f32 0.0, %v9576
      %v9578 = vpop.f32.mrb[0].mxu0
      %9579 = vmatprep.mubr.f32.mxu0 0.0
      %9580 = vmatmul.mubr.f32.gmra.mrb[0].mxu0 %v9385
      %v9581 = vpop.f32.mrb[0].mxu0
      %v9582 = vadd.f32 0.0, %v9581
      %v9583 = vpop.f32.mrb[0].mxu0
      %9584 = vmatprep.mubr.f32.mxu0 0.0
      %9585 = vmatmul.mubr.f32.gmra.mrb[0].mxu0 %v9388
      %v9586 = vpop.f32.mrb[0].mxu0
      %v9587 = vadd.f32 0.0, %v9586
      %v9588 = vpop.f32.mrb[0].mxu0
      %9589 = vmatprep.mubr.f32.mxu0 0.0
      %9590 = vmatmul.mubr.f32.gmra.mrb[0].mxu0 %v9391
      %v9591 = vpop.f32.mrb[0].mxu0
      %v9592 = vadd.f32 0.0, %v9591
      %v9593 = vpop.f32.mrb[0].mxu0
      %9594 = vmatprep.mubr.f32.mxu0 0.0
      %9595 = vmatmul.mubr.f32.gmra.mrb[0].mxu0 %v9394
      %v9596 = vpop.f32.mrb[0].mxu0
      %v9597 = vadd.f32 0.0, %v9596
      %v9598 = vpop.f32.mrb[0].mxu0
      %9599 = vmatprep.mubr.f32.mxu0 0.0
      %9600 = vmatmul.mubr.f32.gmra.mrb[0].mxu0 %v9397
      %v9601 = vpop.f32.mrb[0].mxu0
      %v9602 = vadd.f32 0.0, %v9601
      %v9603 = vpop.f32.mrb[0].mxu0
      %9604 = vmatprep.mubr.f32.mxu0 0.0
      %9605 = vmatmul.mubr.f32.gmra.mrb[0].mxu0 %v9400
      %v9606 = vpop.f32.mrb[0].mxu0
      %v9607 = vadd.f32 0.0, %v9606
      %v9608 = vpop.f32.mrb[0].mxu0
      %9609 = vmatprep.mubr.f32.mxu0 0.0
      %9610 = vmatmul.mubr.f32.gmra.mrb[0].mxu0 %v9403
      %v9611 = vpop.f32.mrb[0].mxu0
      %v9612 = vadd.f32 0.0, %v9611
      %v9613 = vpop.f32.mrb[0].mxu0
      %9614 = vmatprep.mubr.f32.mxu0 0.0
      %9615 = vmatmul.mubr.f32.gmra.mrb[0].mxu0 %v9406
      %v9616 = vpop.f32.mrb[0].mxu0
      %v9617 = vadd.f32 0.0, %v9616
      %v9618 = vpop.f32.mrb[0].mxu0
      %9619 = vmatprep.mubr.f32.mxu0 0.0
      %9620 = vmatmul.mubr.f32.gmra.mrb[0].mxu0 %v9409
      %v9621 = vpop.f32.mrb[0].mxu0
      %v9622 = vadd.f32 0.0, %v9621
      %v9623 = vpop.f32.mrb[0].mxu0
      %9624 = vmatprep.mubr.f32.mxu0 0.0
      %9625 = vmatmul.mubr.f32.gmra.mrb[0].mxu0 %v9412
      %v9626 = vpop.f32.mrb[0].mxu0
      %v9627 = vadd.f32 0.0, %v9626
      %v9628 = vpop.f32.mrb[0].mxu0
      %9629 = vmatprep.mubr.f32.mxu0 0.0
      %9630 = vmatmul.mubr.f32.gmra.mrb[0].mxu0 %v9415
      %v9631 = vpop.f32.mrb[0].mxu0
      %v9632 = vadd.f32 0.0, %v9631
      %v9633 = vpop.f32.mrb[0].mxu0
      %9634 = vmatprep.mubr.f32.mxu0 0.0
      %9635 = vmatmul.mubr.f32.gmra.mrb[0].mxu0 %v9418
      %v9636 = vpop.f32.mrb[0].mxu0
      %v9637 = vadd.f32 0.0, %v9636
      %v9638 = vpop.f32.mrb[0].mxu0
      %9639 = vmatprep.mubr.f32.mxu0 0.0
      %9640 = vmatmul.mubr.f32.gmra.mrb[0].mxu0 %v9421
      %v9641 = vpop.f32.mrb[0].mxu0
      %v9642 = vadd.f32 0.0, %v9641
      %v9643 = vpop.f32.mrb[0].mxu0
      %9644 = vmatprep.mubr.f32.mxu0 0.0
      %9645 = vmatmul.mubr.f32.gmra.mrb[0].mxu0 %v9424
      %v9646 = vpop.f32.mrb[0].mxu0
      %v9647 = vadd.f32 0.0, %v9646
      %v9648 = vpop.f32.mrb[0].mxu0
      %9649 = vmatprep.mubr.f32.mxu0 0.0
      %9650 = vmatmul.mubr.f32.gmra.mrb[0].mxu0 %v9427
      %v9651 = vpop.f32.mrb[0].mxu0
      %v9652 = vadd.f32 0.0, %v9651
      %v9653 = vpop.f32.mrb[0].mxu0
      %9654 = vmatprep.mubr.f32.mxu0 0.0
      %9655 = vmatmul.mubr.f32.gmra.mrb[0].mxu0 %v9430
      %v9656 = vpop.f32.mrb[0].mxu0
      %v9657 = vadd.f32 0.0, %v9656
      %v9658 = vpop.f32.mrb[0].mxu0
      %9659 = vmatprep.mubr.f32.mxu0 0.0
      %9660 = vmatmul.mubr.f32.gmra.mrb[0].mxu0 %v9433
      %v9661 = vpop.f32.mrb[0].mxu0
      %v9662 = vadd.f32 0.0, %v9661
      %v9663 = vpop.f32.mrb[0].mxu0
      %9664 = vmatprep.mubr.f32.mxu0 0.0
      %9665 = vmatmul.mubr.f32.gmra.mrb[0].mxu0 %v9436
      %v9666 = vpop.f32.mrb[0].mxu0
      %v9667 = vadd.f32 0.0, %v9666
      %v9668 = vpop.f32.mrb[0].mxu0
      %9669 = vmatprep.mubr.f32.mxu0 0.0
      %9670 = vmatmul.mubr.f32.gmra.mrb[0].mxu0 %v9439
      %v9671 = vpop.f32.mrb[0].mxu0
      %v9672 = vadd.f32 0.0, %v9671
      %v9673 = vpop.f32.mrb[0].mxu0
      %9674 = vmatprep.mubr.f32.mxu0 0.0
      %9675 = vmatmul.mubr.f32.gmra.mrb[0].mxu0 %v9442
      %v9676 = vpop.f32.mrb[0].mxu0
      %v9677 = vadd.f32 0.0, %v9676
      %v9678 = vpop.f32.mrb[0].mxu0
      %9679 = vmatprep.mubr.f32.mxu0 0.0
      %9680 = vmatmul.mubr.f32.gmra.mrb[0].mxu0 %v9445
      %v9681 = vpop.f32.mrb[0].mxu0
      %v9682 = vadd.f32 0.0, %v9681
      %v9683 = vpop.f32.mrb[0].mxu0
      %9684 = vmatprep.mubr.f32.mxu0 0.0
      %9685 = vmatmul.mubr.f32.gmra.mrb[0].mxu0 %v9448
      %v9686 = vpop.f32.mrb[0].mxu0
      %v9687 = vadd.f32 0.0, %v9686
      %v9688 = vpop.f32.mrb[0].mxu0
      %9689 = vmatprep.mubr.f32.mxu0 0.0
      %9690 = vmatmul.mubr.f32.gmra.mrb[0].mxu0 %v9451
      %v9691 = vpop.f32.mrb[0].mxu0
      %v9692 = vadd.f32 0.0, %v9691
      %v9693 = vpop.f32.mrb[0].mxu0
      %9694 = vmatprep.mubr.f32.mxu0 0.0
      %9695 = vmatmul.mubr.f32.gmra.mrb[0].mxu0 %v9454
      %v9696 = vpop.f32.mrb[0].mxu0
      %v9697 = vadd.f32 0.0, %v9696
      %v9698 = vpop.f32.mrb[0].mxu0
      %9699 = vmatprep.mubr.f32.mxu0 0.0
      %9700 = vmatmul.mubr.f32.gmra.mrb[0].mxu0 %v9457
      %v9701 = vpop.f32.mrb[0].mxu0
      %v9702 = vadd.f32 0.0, %v9701
      %v9703 = vpop.f32.mrb[0].mxu0
      %9704 = vmatprep.mubr.f32.mxu0 0.0
      %9705 = vmatmul.mubr.f32.gmra.mrb[0].mxu0 %v9460
      %v9706 = vpop.f32.mrb[0].mxu0
      %v9707 = vadd.f32 0.0, %v9706
      %v9708 = vpop.f32.mrb[0].mxu0
      %9709 = vdwg.mxu0
      %v9710 = vadd.f32 %v9280, %v9532
      %v9711 = vadd.f32 %v9281, %v9537
      %v9712 = vadd.f32 %v9282, %v9542
      %v9713 = vadd.f32 %v9283, %v9547
      %v9714 = vadd.f32 %v9284, %v9552
      %v9715 = vadd.f32 %v9285, %v9557
      %v9716 = vadd.f32 %v9286, %v9562
      %v9717 = vadd.f32 %v9287, %v9567
      %v9718 = vadd.f32 %v9288, %v9572
      %v9719 = vadd.f32 %v9289, %v9577
      %v9720 = vadd.f32 %v9290, %v9582
      %v9721 = vadd.f32 %v9291, %v9587
      %v9722 = vadd.f32 %v9292, %v9592
      %v9723 = vadd.f32 %v9293, %v9597
      %v9724 = vadd.f32 %v9294, %v9602
      %v9725 = vadd.f32 %v9295, %v9607
      %v9726 = vadd.f32 %v9296, %v9612
      %v9727 = vadd.f32 %v9297, %v9617
      %v9728 = vadd.f32 %v9298, %v9622
      %v9729 = vadd.f32 %v9299, %v9627
      %v9730 = vadd.f32 %v9300, %v9632
      %v9731 = vadd.f32 %v9301, %v9637
      %v9732 = vadd.f32 %v9302, %v9642
      %v9733 = vadd.f32 %v9303, %v9647
      %v9734 = vadd.f32 %v9304, %v9652
      %v9735 = vadd.f32 %v9305, %v9657
      %v9736 = vadd.f32 %v9306, %v9662
      %v9737 = vadd.f32 %v9307, %v9667
      %v9738 = vadd.f32 %v9308, %v9672
      %v9739 = vadd.f32 %v9309, %v9677
      %v9740 = vadd.f32 %v9310, %v9682
      %v9741 = vadd.f32 %v9311, %v9687
      %v9742 = vadd.f32 %v9312, %v9692
      %v9743 = vadd.f32 %v9313, %v9697
      %v9744 = vadd.f32 %v9314, %v9702
      %v9745 = vadd.f32 %v9315, %v9707
      %v9746 = vld [vmem:[%s4] sm:$0x1]
      %v9748 = vlaneseq
      %v9749 = vshrl.u32 %v9748, 7
      %v9750 = vsub.s32 0, %v9749
      %v9751 = vrot.slane %v9746, %v9750
      %v9753 = vadd.f32 %v9710, %v9751
      %v9754 = vadd.f32 %v9711, %v9751
      %v9755 = vadd.f32 %v9712, %v9751
      %v9756 = vadd.f32 %v9713, %v9751
      %v9757 = vadd.f32 %v9714, %v9751
      %v9758 = vadd.f32 %v9715, %v9751
      %v9759 = vadd.f32 %v9716, %v9751
      %v9760 = vadd.f32 %v9717, %v9751
      %v9761 = vadd.f32 %v9718, %v9751
      %v9762 = vadd.f32 %v9719, %v9751
      %v9763 = vadd.f32 %v9720, %v9751
      %v9764 = vadd.f32 %v9721, %v9751
      %v9765 = vadd.f32 %v9722, %v9751
      %v9766 = vadd.f32 %v9723, %v9751
      %v9767 = vadd.f32 %v9724, %v9751
      %v9768 = vadd.f32 %v9725, %v9751
      %v9769 = vadd.f32 %v9726, %v9751
      %v9770 = vadd.f32 %v9727, %v9751
      %v9771 = vadd.f32 %v9728, %v9751
      %v9772 = vadd.f32 %v9729, %v9751
      %v9773 = vadd.f32 %v9730, %v9751
      %v9774 = vadd.f32 %v9731, %v9751
      %v9775 = vadd.f32 %v9732, %v9751
      %v9776 = vadd.f32 %v9733, %v9751
      %v9777 = vadd.f32 %v9734, %v9751
      %v9778 = vadd.f32 %v9735, %v9751
      %v9779 = vadd.f32 %v9736, %v9751
      %v9780 = vadd.f32 %v9737, %v9751
      %v9781 = vadd.f32 %v9738, %v9751
      %v9782 = vadd.f32 %v9739, %v9751
      %v9783 = vadd.f32 %v9740, %v9751
      %v9784 = vadd.f32 %v9741, %v9751
      %v9785 = vadd.f32 %v9742, %v9751
      %v9786 = vadd.f32 %v9743, %v9751
      %v9787 = vadd.f32 %v9744, %v9751
      %v9788 = vadd.f32 %v9745, %v9751
      %v9789 = vsel %vm5275, %v9753, 0.0
      %v9790 = vsel %vm5276, %v9754, 0.0
      %v9791 = vsel %vm5277, %v9755, 0.0
      %v9792 = vsel %vm5278, %v9756, 0.0
      %v9793 = vsel %vm5279, %v9757, 0.0
      %v9794 = vsel %vm5280, %v9758, 0.0
      %v9795 = vsel %vm5281, %v9759, 0.0
      %v9796 = vsel %vm5282, %v9760, 0.0
      %v9797 = vsel %vm5283, %v9761, 0.0
      %v9798 = vsel %vm5284, %v9762, 0.0
      %v9799 = vsel %vm5285, %v9763, 0.0
      %v9800 = vsel %vm5286, %v9764, 0.0
      %v9801 = vsel %vm5287, %v9765, 0.0
      %v9802 = vsel %vm5288, %v9766, 0.0
      %v9803 = vsel %vm5289, %v9767, 0.0
      %v9804 = vsel %vm5290, %v9768, 0.0
      %v9805 = vsel %vm5291, %v9769, 0.0
      %v9806 = vsel %vm5292, %v9770, 0.0
      %v9807 = vsel %vm5293, %v9771, 0.0
      %v9808 = vsel %vm5294, %v9772, 0.0
      %v9809 = vsel %vm5295, %v9773, 0.0
      %v9810 = vsel %vm5296, %v9774, 0.0
      %v9811 = vsel %vm5297, %v9775, 0.0
      %v9812 = vsel %vm5298, %v9776, 0.0
      %v9813 = vsel %vm5299, %v9777, 0.0
      %v9814 = vsel %vm5300, %v9778, 0.0
      %v9815 = vsel %vm5301, %v9779, 0.0
      %v9816 = vsel %vm5302, %v9780, 0.0
      %v9817 = vsel %vm5303, %v9781, 0.0
      %v9818 = vsel %vm5304, %v9782, 0.0
      %v9819 = vsel %vm5305, %v9783, 0.0
      %v9820 = vsel %vm5306, %v9784, 0.0
      %v9821 = vsel %vm5307, %v9785, 0.0
      %v9822 = vsel %vm5308, %v9786, 0.0
      %v9823 = vsel %vm5309, %v9787, 0.0
      %v9824 = vsel %vm5310, %v9788, 0.0
      %v9825 = vsel %vm916, %v9789, 0.0
      %v9826 = vsel %vm916, %v9790, 0.0
      %v9827 = vadd.f32 %v9825, %v9826
      %v9828 = vsel %vm916, %v9791, 0.0
      %v9829 = vadd.f32 %v9827, %v9828
      %v9830 = vsel %vm916, %v9792, 0.0
      %v9831 = vadd.f32 %v9829, %v9830
      %v9832 = vsel %vm916, %v9793, 0.0
      %v9833 = vadd.f32 %v9831, %v9832
      %v9834 = vsel %vm916, %v9794, 0.0
      %v9835 = vadd.f32 %v9833, %v9834
      %v9836 = vsel %vm916, %v9795, 0.0
      %v9837 = vadd.f32 %v9835, %v9836
      %v9838 = vsel %vm916, %v9796, 0.0
      %v9839 = vadd.f32 %v9837, %v9838
      %v9840 = vsel %vm916, %v9797, 0.0
      %v9841 = vadd.f32 %v9839, %v9840
      %v9842 = vsel %vm916, %v9798, 0.0
      %v9843 = vadd.f32 %v9841, %v9842
      %v9844 = vsel %vm916, %v9799, 0.0
      %v9845 = vadd.f32 %v9843, %v9844
      %v9846 = vsel %vm916, %v9800, 0.0
      %v9847 = vadd.f32 %v9845, %v9846
      %v9848 = vsel %vm916, %v9801, 0.0
      %v9849 = vadd.f32 %v9847, %v9848
      %v9850 = vsel %vm916, %v9802, 0.0
      %v9851 = vadd.f32 %v9849, %v9850
      %v9852 = vsel %vm916, %v9803, 0.0
      %v9853 = vadd.f32 %v9851, %v9852
      %v9854 = vsel %vm916, %v9804, 0.0
      %v9855 = vadd.f32 %v9853, %v9854
      %v9856 = vsel %vm916, %v9805, 0.0
      %v9857 = vadd.f32 %v9855, %v9856
      %v9858 = vsel %vm916, %v9806, 0.0
      %v9859 = vadd.f32 %v9857, %v9858
      %v9860 = vsel %vm916, %v9807, 0.0
      %v9861 = vadd.f32 %v9859, %v9860
      %v9862 = vsel %vm916, %v9808, 0.0
      %v9863 = vadd.f32 %v9861, %v9862
      %v9864 = vsel %vm916, %v9809, 0.0
      %v9865 = vadd.f32 %v9863, %v9864
      %v9866 = vsel %vm916, %v9810, 0.0
      %v9867 = vadd.f32 %v9865, %v9866
      %v9868 = vsel %vm916, %v9811, 0.0
      %v9869 = vadd.f32 %v9867, %v9868
      %v9870 = vsel %vm916, %v9812, 0.0
      %v9871 = vadd.f32 %v9869, %v9870
      %v9872 = vsel %vm916, %v9813, 0.0
      %v9873 = vadd.f32 %v9871, %v9872
      %v9874 = vsel %vm916, %v9814, 0.0
      %v9875 = vadd.f32 %v9873, %v9874
      %v9876 = vsel %vm916, %v9815, 0.0
      %v9877 = vadd.f32 %v9875, %v9876
      %v9878 = vsel %vm916, %v9816, 0.0
      %v9879 = vadd.f32 %v9877, %v9878
      %v9880 = vsel %vm916, %v9817, 0.0
      %v9881 = vadd.f32 %v9879, %v9880
      %v9882 = vsel %vm916, %v9818, 0.0
      %v9883 = vadd.f32 %v9881, %v9882
      %v9884 = vsel %vm916, %v9819, 0.0
      %v9885 = vadd.f32 %v9883, %v9884
      %v9886 = vsel %vm916, %v9820, 0.0
      %v9887 = vadd.f32 %v9885, %v9886
      %v9888 = vsel %vm916, %v9821, 0.0
      %v9889 = vadd.f32 %v9887, %v9888
      %v9890 = vsel %vm916, %v9822, 0.0
      %v9891 = vadd.f32 %v9889, %v9890
      %v9892 = vsel %vm916, %v9823, 0.0
      %v9893 = vadd.f32 %v9891, %v9892
      %v9894 = vsel %vm916, %v9824, 0.0
      %v9895 = vadd.f32 %v9893, %v9894
      %v9896 = vrot.slane %v9895, 4
      %v9897 = vadd.f32 %v9895, %v9896
      %v9898 = vrot.slane %v9897, 2
      %v9899 = vadd.f32 %v9897, %v9898
      %v9900 = vrot.slane %v9899, 1
      %v9901 = vadd.f32 %v9899, %v9900
      %v9902 = vmul.f32 %v9901, 0.00390625
      %v9903 = vsub.f32 %v9753, %v9902
      %v9904 = vsub.f32 %v9754, %v9902
      %v9905 = vsub.f32 %v9755, %v9902
      %v9906 = vsub.f32 %v9756, %v9902
      %v9907 = vsub.f32 %v9757, %v9902
      %v9908 = vsub.f32 %v9758, %v9902
      %v9909 = vsub.f32 %v9759, %v9902
      %v9910 = vsub.f32 %v9760, %v9902
      %v9911 = vsub.f32 %v9761, %v9902
      %v9912 = vsub.f32 %v9762, %v9902
      %v9913 = vsub.f32 %v9763, %v9902
      %v9914 = vsub.f32 %v9764, %v9902
      %v9915 = vsub.f32 %v9765, %v9902
      %v9916 = vsub.f32 %v9766, %v9902
      %v9917 = vsub.f32 %v9767, %v9902
      %v9918 = vsub.f32 %v9768, %v9902
      %v9919 = vsub.f32 %v9769, %v9902
      %v9920 = vsub.f32 %v9770, %v9902
      %v9921 = vsub.f32 %v9771, %v9902
      %v9922 = vsub.f32 %v9772, %v9902
      %v9923 = vsub.f32 %v9773, %v9902
      %v9924 = vsub.f32 %v9774, %v9902
      %v9925 = vsub.f32 %v9775, %v9902
      %v9926 = vsub.f32 %v9776, %v9902
      %v9927 = vsub.f32 %v9777, %v9902
      %v9928 = vsub.f32 %v9778, %v9902
      %v9929 = vsub.f32 %v9779, %v9902
      %v9930 = vsub.f32 %v9780, %v9902
      %v9931 = vsub.f32 %v9781, %v9902
      %v9932 = vsub.f32 %v9782, %v9902
      %v9933 = vsub.f32 %v9783, %v9902
      %v9934 = vsub.f32 %v9784, %v9902
      %v9935 = vsub.f32 %v9785, %v9902
      %v9936 = vsub.f32 %v9786, %v9902
      %v9937 = vsub.f32 %v9787, %v9902
      %v9938 = vsub.f32 %v9788, %v9902
      %v9939 = vsel %vm5275, %v9903, 0.0
      %v9940 = vsel %vm5276, %v9904, 0.0
      %v9941 = vsel %vm5277, %v9905, 0.0
      %v9942 = vsel %vm5278, %v9906, 0.0
      %v9943 = vsel %vm5279, %v9907, 0.0
      %v9944 = vsel %vm5280, %v9908, 0.0
      %v9945 = vsel %vm5281, %v9909, 0.0
      %v9946 = vsel %vm5282, %v9910, 0.0
      %v9947 = vsel %vm5283, %v9911, 0.0
      %v9948 = vsel %vm5284, %v9912, 0.0
      %v9949 = vsel %vm5285, %v9913, 0.0
      %v9950 = vsel %vm5286, %v9914, 0.0
      %v9951 = vsel %vm5287, %v9915, 0.0
      %v9952 = vsel %vm5288, %v9916, 0.0
      %v9953 = vsel %vm5289, %v9917, 0.0
      %v9954 = vsel %vm5290, %v9918, 0.0
      %v9955 = vsel %vm5291, %v9919, 0.0
      %v9956 = vsel %vm5292, %v9920, 0.0
      %v9957 = vsel %vm5293, %v9921, 0.0
      %v9958 = vsel %vm5294, %v9922, 0.0
      %v9959 = vsel %vm5295, %v9923, 0.0
      %v9960 = vsel %vm5296, %v9924, 0.0
      %v9961 = vsel %vm5297, %v9925, 0.0
      %v9962 = vsel %vm5298, %v9926, 0.0
      %v9963 = vsel %vm5299, %v9927, 0.0
      %v9964 = vsel %vm5300, %v9928, 0.0
      %v9965 = vsel %vm5301, %v9929, 0.0
      %v9966 = vsel %vm5302, %v9930, 0.0
      %v9967 = vsel %vm5303, %v9931, 0.0
      %v9968 = vsel %vm5304, %v9932, 0.0
      %v9969 = vsel %vm5305, %v9933, 0.0
      %v9970 = vsel %vm5306, %v9934, 0.0
      %v9971 = vsel %vm5307, %v9935, 0.0
      %v9972 = vsel %vm5308, %v9936, 0.0
      %v9973 = vsel %vm5309, %v9937, 0.0
      %v9974 = vsel %vm5310, %v9938, 0.0
      %v9975 = vmul.f32 %v9939, %v9939
      %v9976 = vmul.f32 %v9940, %v9940
      %v9977 = vmul.f32 %v9941, %v9941
      %v9978 = vmul.f32 %v9942, %v9942
      %v9979 = vmul.f32 %v9943, %v9943
      %v9980 = vmul.f32 %v9944, %v9944
      %v9981 = vmul.f32 %v9945, %v9945
      %v9982 = vmul.f32 %v9946, %v9946
      %v9983 = vmul.f32 %v9947, %v9947
      %v9984 = vmul.f32 %v9948, %v9948
      %v9985 = vmul.f32 %v9949, %v9949
      %v9986 = vmul.f32 %v9950, %v9950
      %v9987 = vmul.f32 %v9951, %v9951
      %v9988 = vmul.f32 %v9952, %v9952
      %v9989 = vmul.f32 %v9953, %v9953
      %v9990 = vmul.f32 %v9954, %v9954
      %v9991 = vmul.f32 %v9955, %v9955
      %v9992 = vmul.f32 %v9956, %v9956
      %v9993 = vmul.f32 %v9957, %v9957
      %v9994 = vmul.f32 %v9958, %v9958
      %v9995 = vmul.f32 %v9959, %v9959
      %v9996 = vmul.f32 %v9960, %v9960
      %v9997 = vmul.f32 %v9961, %v9961
      %v9998 = vmul.f32 %v9962, %v9962
      %v9999 = vmul.f32 %v9963, %v9963
      %v10000 = vmul.f32 %v9964, %v9964
      %v10001 = vmul.f32 %v9965, %v9965
      %v10002 = vmul.f32 %v9966, %v9966
      %v10003 = vmul.f32 %v9967, %v9967
      %v10004 = vmul.f32 %v9968, %v9968
      %v10005 = vmul.f32 %v9969, %v9969
      %v10006 = vmul.f32 %v9970, %v9970
      %v10007 = vmul.f32 %v9971, %v9971
      %v10008 = vmul.f32 %v9972, %v9972
      %v10009 = vmul.f32 %v9973, %v9973
      %v10010 = vmul.f32 %v9974, %v9974
      %v10011 = vsel %vm916, %v9975, 0.0
      %v10012 = vsel %vm916, %v9976, 0.0
      %v10013 = vadd.f32 %v10011, %v10012
      %v10014 = vsel %vm916, %v9977, 0.0
      %v10015 = vadd.f32 %v10013, %v10014
      %v10016 = vsel %vm916, %v9978, 0.0
      %v10017 = vadd.f32 %v10015, %v10016
      %v10018 = vsel %vm916, %v9979, 0.0
      %v10019 = vadd.f32 %v10017, %v10018
      %v10020 = vsel %vm916, %v9980, 0.0
      %v10021 = vadd.f32 %v10019, %v10020
      %v10022 = vsel %vm916, %v9981, 0.0
      %v10023 = vadd.f32 %v10021, %v10022
      %v10024 = vsel %vm916, %v9982, 0.0
      %v10025 = vadd.f32 %v10023, %v10024
      %v10026 = vsel %vm916, %v9983, 0.0
      %v10027 = vadd.f32 %v10025, %v10026
      %v10028 = vsel %vm916, %v9984, 0.0
      %v10029 = vadd.f32 %v10027, %v10028
      %v10030 = vsel %vm916, %v9985, 0.0
      %v10031 = vadd.f32 %v10029, %v10030
      %v10032 = vsel %vm916, %v9986, 0.0
      %v10033 = vadd.f32 %v10031, %v10032
      %v10034 = vsel %vm916, %v9987, 0.0
      %v10035 = vadd.f32 %v10033, %v10034
      %v10036 = vsel %vm916, %v9988, 0.0
      %v10037 = vadd.f32 %v10035, %v10036
      %v10038 = vsel %vm916, %v9989, 0.0
      %v10039 = vadd.f32 %v10037, %v10038
      %v10040 = vsel %vm916, %v9990, 0.0
      %v10041 = vadd.f32 %v10039, %v10040
      %v10042 = vsel %vm916, %v9991, 0.0
      %v10043 = vadd.f32 %v10041, %v10042
      %v10044 = vsel %vm916, %v9992, 0.0
      %v10045 = vadd.f32 %v10043, %v10044
      %v10046 = vsel %vm916, %v9993, 0.0
      %v10047 = vadd.f32 %v10045, %v10046
      %v10048 = vsel %vm916, %v9994, 0.0
      %v10049 = vadd.f32 %v10047, %v10048
      %v10050 = vsel %vm916, %v9995, 0.0
      %v10051 = vadd.f32 %v10049, %v10050
      %v10052 = vsel %vm916, %v9996, 0.0
      %v10053 = vadd.f32 %v10051, %v10052
      %v10054 = vsel %vm916, %v9997, 0.0
      %v10055 = vadd.f32 %v10053, %v10054
      %v10056 = vsel %vm916, %v9998, 0.0
      %v10057 = vadd.f32 %v10055, %v10056
      %v10058 = vsel %vm916, %v9999, 0.0
      %v10059 = vadd.f32 %v10057, %v10058
      %v10060 = vsel %vm916, %v10000, 0.0
      %v10061 = vadd.f32 %v10059, %v10060
      %v10062 = vsel %vm916, %v10001, 0.0
      %v10063 = vadd.f32 %v10061, %v10062
      %v10064 = vsel %vm916, %v10002, 0.0
      %v10065 = vadd.f32 %v10063, %v10064
      %v10066 = vsel %vm916, %v10003, 0.0
      %v10067 = vadd.f32 %v10065, %v10066
      %v10068 = vsel %vm916, %v10004, 0.0
      %v10069 = vadd.f32 %v10067, %v10068
      %v10070 = vsel %vm916, %v10005, 0.0
      %v10071 = vadd.f32 %v10069, %v10070
      %v10072 = vsel %vm916, %v10006, 0.0
      %v10073 = vadd.f32 %v10071, %v10072
      %v10074 = vsel %vm916, %v10007, 0.0
      %v10075 = vadd.f32 %v10073, %v10074
      %v10076 = vsel %vm916, %v10008, 0.0
      %v10077 = vadd.f32 %v10075, %v10076
      %v10078 = vsel %vm916, %v10009, 0.0
      %v10079 = vadd.f32 %v10077, %v10078
      %v10080 = vsel %vm916, %v10010, 0.0
      %v10081 = vadd.f32 %v10079, %v10080
      %v10082 = vrot.slane %v10081, 4
      %v10083 = vadd.f32 %v10081, %v10082
      %v10084 = vrot.slane %v10083, 2
      %v10085 = vadd.f32 %v10083, %v10084
      %v10086 = vrot.slane %v10085, 1
      %v10087 = vadd.f32 %v10085, %v10086
      %v10088 = vmul.f32 %v10087, 0.00390625
      %v10089 = vadd.f32 %v10088, 1e-05
      %v10090 = vrsqrt.pop %v10089
      %v10091 = vmul.f32 %v9903, %v10090
      %v10092 = vmul.f32 %v9904, %v10090
      %v10093 = vmul.f32 %v9905, %v10090
      %v10094 = vmul.f32 %v9906, %v10090
      %v10095 = vmul.f32 %v9907, %v10090
      %v10096 = vmul.f32 %v9908, %v10090
      %v10097 = vmul.f32 %v9909, %v10090
      %v10098 = vmul.f32 %v9910, %v10090
      %v10099 = vmul.f32 %v9911, %v10090
      %v10100 = vmul.f32 %v9912, %v10090
      %v10101 = vmul.f32 %v9913, %v10090
      %v10102 = vmul.f32 %v9914, %v10090
      %v10103 = vmul.f32 %v9915, %v10090
      %v10104 = vmul.f32 %v9916, %v10090
      %v10105 = vmul.f32 %v9917, %v10090
      %v10106 = vmul.f32 %v9918, %v10090
      %v10107 = vmul.f32 %v9919, %v10090
      %v10108 = vmul.f32 %v9920, %v10090
      %v10109 = vmul.f32 %v9921, %v10090
      %v10110 = vmul.f32 %v9922, %v10090
      %v10111 = vmul.f32 %v9923, %v10090
      %v10112 = vmul.f32 %v9924, %v10090
      %v10113 = vmul.f32 %v9925, %v10090
      %v10114 = vmul.f32 %v9926, %v10090
      %v10115 = vmul.f32 %v9927, %v10090
      %v10116 = vmul.f32 %v9928, %v10090
      %v10117 = vmul.f32 %v9929, %v10090
      %v10118 = vmul.f32 %v9930, %v10090
      %v10119 = vmul.f32 %v9931, %v10090
      %v10120 = vmul.f32 %v9932, %v10090
      %v10121 = vmul.f32 %v9933, %v10090
      %v10122 = vmul.f32 %v9934, %v10090
      %v10123 = vmul.f32 %v9935, %v10090
      %v10124 = vmul.f32 %v9936, %v10090
      %v10125 = vmul.f32 %v9937, %v10090
      %v10126 = vmul.f32 %v9938, %v10090
      %v10127 = vld [vmem:[%s219] sm:$0xff]
      %v10128 = vld [vmem:[%s219 + $0x8] sm:$0xff]
      %v10129 = vld [vmem:[%s219 + $0x10] sm:$0xff]
      %v10130 = vld [vmem:[%s219 + $0x18] sm:$0xff]
      %v10131 = vld [vmem:[%s219 + $0x20] sm:$0xff]
      %v10132 = vld [vmem:[%s219 + $0x28] sm:$0xff]
      %v10133 = vld [vmem:[%s219 + $0x30] sm:$0xff]
      %v10134 = vld [vmem:[%s219 + $0x38] sm:$0xff]
      %v10135 = vld [vmem:[%s219 + $0x40] sm:$0xff]
      %v10136 = vld [vmem:[%s219 + $0x48] sm:$0xff]
      %v10137 = vld [vmem:[%s219 + $0x50] sm:$0xff]
      %v10138 = vld [vmem:[%s219 + $0x58] sm:$0xff]
      %v10139 = vld [vmem:[%s219 + $0x60] sm:$0xff]
      %v10140 = vld [vmem:[%s219 + $0x68] sm:$0xff]
      %v10141 = vld [vmem:[%s219 + $0x70] sm:$0xff]
      %v10142 = vld [vmem:[%s219 + $0x78] sm:$0xff]
      %v10143 = vld [vmem:[%s219 + $0x80] sm:$0xff]
      %v10144 = vld [vmem:[%s219 + $0x88] sm:$0xff]
      %v10145 = vld [vmem:[%s219 + $0x90] sm:$0xff]
      %v10146 = vld [vmem:[%s219 + $0x98] sm:$0xff]
      %v10147 = vld [vmem:[%s219 + $0xa0] sm:$0xff]
      %v10148 = vld [vmem:[%s219 + $0xa8] sm:$0xff]
      %v10149 = vld [vmem:[%s219 + $0xb0] sm:$0xff]
      %v10150 = vld [vmem:[%s219 + $0xb8] sm:$0xff]
      %v10151 = vld [vmem:[%s219 + $0xc0] sm:$0xff]
      %v10152 = vld [vmem:[%s219 + $0xc8] sm:$0xff]
      %v10153 = vld [vmem:[%s219 + $0xd0] sm:$0xff]
      %v10154 = vld [vmem:[%s219 + $0xd8] sm:$0xff]
      %v10155 = vld [vmem:[%s219 + $0xe0] sm:$0xff]
      %v10156 = vld [vmem:[%s219 + $0xe8] sm:$0xff]
      %v10157 = vld [vmem:[%s219 + $0xf0] sm:$0xff]
      %v10158 = vld [vmem:[%s219 + $0xf8] sm:$0xff]
      %v10159 = vld [vmem:[%s219 + $0x100] sm:$0xff]
      %v10160 = vld [vmem:[%s219 + $0x108] sm:$0xff]
      %v10161 = vld [vmem:[%s219 + $0x110] sm:$0xff]
      %v10162 = vld [vmem:[%s219 + $0x118] sm:$0xff]
      %v10163 = vadd.f32 %v10127, %v10091
      %v10164 = vadd.f32 %v10128, %v10092
      %v10165 = vadd.f32 %v10129, %v10093
      %v10166 = vadd.f32 %v10130, %v10094
      %v10167 = vadd.f32 %v10131, %v10095
      %v10168 = vadd.f32 %v10132, %v10096
      %v10169 = vadd.f32 %v10133, %v10097
      %v10170 = vadd.f32 %v10134, %v10098
      %v10171 = vadd.f32 %v10135, %v10099
      %v10172 = vadd.f32 %v10136, %v10100
      %v10173 = vadd.f32 %v10137, %v10101
      %v10174 = vadd.f32 %v10138, %v10102
      %v10175 = vadd.f32 %v10139, %v10103
      %v10176 = vadd.f32 %v10140, %v10104
      %v10177 = vadd.f32 %v10141, %v10105
      %v10178 = vadd.f32 %v10142, %v10106
      %v10179 = vadd.f32 %v10143, %v10107
      %v10180 = vadd.f32 %v10144, %v10108
      %v10181 = vadd.f32 %v10145, %v10109
      %v10182 = vadd.f32 %v10146, %v10110
      %v10183 = vadd.f32 %v10147, %v10111
      %v10184 = vadd.f32 %v10148, %v10112
      %v10185 = vadd.f32 %v10149, %v10113
      %v10186 = vadd.f32 %v10150, %v10114
      %v10187 = vadd.f32 %v10151, %v10115
      %v10188 = vadd.f32 %v10152, %v10116
      %v10189 = vadd.f32 %v10153, %v10117
      %v10190 = vadd.f32 %v10154, %v10118
      %v10191 = vadd.f32 %v10155, %v10119
      %v10192 = vadd.f32 %v10156, %v10120
      %v10193 = vadd.f32 %v10157, %v10121
      %v10194 = vadd.f32 %v10158, %v10122
      %v10195 = vadd.f32 %v10159, %v10123
      %v10196 = vadd.f32 %v10160, %v10124
      %v10197 = vadd.f32 %v10161, %v10125
      %v10198 = vadd.f32 %v10162, %v10126
      %10199 = vst.msk [vmem:[%s224] sm:$0xff] %vm916, %v10163
      %10200 = vst.msk [vmem:[%s224 + $0x8] sm:$0xff] %vm916, %v10164
      %10201 = vst.msk [vmem:[%s224 + $0x10] sm:$0xff] %vm916, %v10165
      %10202 = vst.msk [vmem:[%s224 + $0x18] sm:$0xff] %vm916, %v10166
      %10203 = vst.msk [vmem:[%s224 + $0x20] sm:$0xff] %vm916, %v10167
      %10204 = vst.msk [vmem:[%s224 + $0x28] sm:$0xff] %vm916, %v10168
      %10205 = vst.msk [vmem:[%s224 + $0x30] sm:$0xff] %vm916, %v10169
      %10206 = vst.msk [vmem:[%s224 + $0x38] sm:$0xff] %vm916, %v10170
      %10207 = vst.msk [vmem:[%s224 + $0x40] sm:$0xff] %vm916, %v10171
      %10208 = vst.msk [vmem:[%s224 + $0x48] sm:$0xff] %vm916, %v10172
      %10209 = vst.msk [vmem:[%s224 + $0x50] sm:$0xff] %vm916, %v10173
      %10210 = vst.msk [vmem:[%s224 + $0x58] sm:$0xff] %vm916, %v10174
      %10211 = vst.msk [vmem:[%s224 + $0x60] sm:$0xff] %vm916, %v10175
      %10212 = vst.msk [vmem:[%s224 + $0x68] sm:$0xff] %vm916, %v10176
      %10213 = vst.msk [vmem:[%s224 + $0x70] sm:$0xff] %vm916, %v10177
      %10214 = vst.msk [vmem:[%s224 + $0x78] sm:$0xff] %vm916, %v10178
      %10215 = vst.msk [vmem:[%s224 + $0x80] sm:$0xff] %vm916, %v10179
      %10216 = vst.msk [vmem:[%s224 + $0x88] sm:$0xff] %vm916, %v10180
      %10217 = vst.msk [vmem:[%s224 + $0x90] sm:$0xff] %vm916, %v10181
      %10218 = vst.msk [vmem:[%s224 + $0x98] sm:$0xff] %vm916, %v10182
      %10219 = vst.msk [vmem:[%s224 + $0xa0] sm:$0xff] %vm916, %v10183
      %10220 = vst.msk [vmem:[%s224 + $0xa8] sm:$0xff] %vm916, %v10184
      %10221 = vst.msk [vmem:[%s224 + $0xb0] sm:$0xff] %vm916, %v10185
      %10222 = vst.msk [vmem:[%s224 + $0xb8] sm:$0xff] %vm916, %v10186
      %10223 = vst.msk [vmem:[%s224 + $0xc0] sm:$0xff] %vm916, %v10187
      %10224 = vst.msk [vmem:[%s224 + $0xc8] sm:$0xff] %vm916, %v10188
      %10225 = vst.msk [vmem:[%s224 + $0xd0] sm:$0xff] %vm916, %v10189
      %10226 = vst.msk [vmem:[%s224 + $0xd8] sm:$0xff] %vm916, %v10190
      %10227 = vst.msk [vmem:[%s224 + $0xe0] sm:$0xff] %vm916, %v10191
      %10228 = vst.msk [vmem:[%s224 + $0xe8] sm:$0xff] %vm916, %v10192
      %10229 = vst.msk [vmem:[%s224 + $0xf0] sm:$0xff] %vm916, %v10193
      %10230 = vst.msk [vmem:[%s224 + $0xf8] sm:$0xff] %vm916, %v10194
      %10231 = vst.msk [vmem:[%s224 + $0x100] sm:$0xff] %vm916, %v10195
      %10232 = vst.msk [vmem:[%s224 + $0x108] sm:$0xff] %vm916, %v10196
      %10233 = vst.msk [vmem:[%s224 + $0x110] sm:$0xff] %vm916, %v10197
      %10234 = vst.msk [vmem:[%s224 + $0x118] sm:$0xff] %vm916, %v10198
      %p10235 = scmp.lt.s32.totalorder %s16, 1
      %s10236 = scalar_select %p10235, %s16, 1
      %s10237 = smul.addr %s10236, 36
      %s10238 = smul.addr %s10237, 8
      %s10239 = scalar_lea.vmem %s5, %s10238
      // Predicated region
      $region45: #{residual_block_forward.1} parent=39 // pred_check
        %p10240 = pneg %p144
      $region46: #{residual_block_forward.1} parent=39 // pred_check_branch
        %10242 = sbr.rel (%p10240) target = $region48
      $region47: #{residual_block_forward.1} parent=39 // pred_region
        _
      $region48: #{residual_block_forward.1} parent=39 // pred_fallthru
        _
    $region40: #{residual_block_forward.1} parent=5 // pred_fallthru
      _
    %p10243 = scmp.le.s32.totalorder 2, %s11
    // Predicated region
    $region49: #{residual_block_forward.1} parent=5 // pred_check
      %p10244 = pneg %p10243
    $region50: #{residual_block_forward.1} parent=5 // pred_check_branch
      %10246 = sbr.rel (%p10244) target = $region52
    $region51: #{residual_block_forward.1} parent=5 // pred_region
      %s10247 = ssub.s32 %s11, 2
      // Predicated region
      $region53: #{residual_block_forward.1} parent=51 // pred_check
        %p10248 = pneg %p150
      $region54: #{residual_block_forward.1} parent=51 // pred_check_branch
        %10250 = sbr.rel (%p10248) target = $region56
      $region55: #{residual_block_forward.1} parent=51 // pred_region
        %p10251 = scmp.lt.s32.totalorder %s17, 1
        %s10252 = scalar_select %p10251, %s17, 1
        %s10253 = smul.addr %s10252, 36
        %s10254 = smul.addr %s10253, 8
        %s10255 = scalar_lea.vmem %s5, %s10254
      $region56: #{residual_block_forward.1} parent=51 // pred_fallthru
        _
    $region52: #{residual_block_forward.1} parent=5 // pred_fallthru
      _
  $region6: #{residual_block_forward.1} parent=0 // loop_footer
    %s15 = sadd.s32 1, %s11
  $region7: #{residual_block_forward.1} parent=0 // loop_footer_branch
    %10 = sbr.rel target = $region3
  $region8: #{residual_block_forward.1} parent=0 // loop_exit
    _

</llo_original>
